<compile_context>
chip_gen: v7x
topology: tpu7x:2x2x1
jax: 0.10.0
libtpu: 0.0.40
codegen_flags: <defaults>
</compile_context>

<pallas_src>
from math import ceil

import numpy as np
import jax
import jax.numpy as jnp
from jax.experimental import pallas as pl
from jax.experimental.pallas import tpu as pltpu

PAD = 128  # lane-dense channel padding


# ----------------------------------------------------------------------------
# Host-side parameter packing: every weight matrix is embedded into a (PAD, PAD)
# slab at a (row_off, col_off) band, every bias/gamma/beta into a (PAD,) slab.
# Band placement is what turns the per-block channel concat into an add.
# ----------------------------------------------------------------------------
class ParamPacker:
    def __init__(self):
        self.mats = []
        self.vecs = []

    def add_mat(self, w, row_off=0, col_off=0):
        m = np.zeros((PAD, PAD), np.float32)
        m[row_off:row_off + w.shape[0], col_off:col_off + w.shape[1]] = w
        self.mats.append(m)
        return len(self.mats) - 1

    def add_vec(self, v, off=0):
        p = np.zeros((PAD,), np.float32)
        p[off:off + v.shape[0]] = v
        self.vecs.append(p)
        return len(self.vecs) - 1

    def pack(self):
        W = np.stack(self.mats).astype(np.float32)            # (NM, 128, 128)
        V = np.stack(self.vecs).astype(np.float32)            # (NV, 128)
        if V.shape[0] % 8:                                     # tidy sublane padding
            V = np.concatenate([V, np.zeros((8 - V.shape[0] % 8, PAD), np.float32)])
        return jnp.asarray(W), jnp.asarray(V)


def _uniform(key, shape, fan_in):
    bound = 1.0 / np.sqrt(fan_in)
    return np.asarray(jax.random.uniform(key, shape, jnp.float32, -bound, bound))


def init_gnn(packer, key, cin, hidden, cout, lin):
    """GNN(cin, hidden, cout): 3x (DenseSAGEConv + BN), optional Linear.
    conv l reads its input from band [row_off_l, row_off_l + cin_l) and writes its
    output into band [col_off_l, col_off_l + cout_l)."""
    keys = jax.random.split(key, 4)
    cins = [cin, hidden, hidden]
    couts = [hidden, hidden, cout]
    row_offs = [0, 0, hidden]            # input band of each conv
    col_offs = [0, hidden, 2 * hidden]   # output band of each conv
    g = {'hidden': hidden, 'out': cout}
    for l in range(3):
        kk = jax.random.split(keys[l], 3)
        ci, co, ro, co_off = cins[l], couts[l], row_offs[l], col_offs[l]
        g[f'conv{l + 1}'] = dict(
            w_rel=packer.add_mat(_uniform(kk[0], (ci, co), ci), ro, co_off),
            w_root=packer.add_mat(_uniform(kk[1], (ci, co), ci), ro, co_off),
            b=packer.add_vec(_uniform(kk[2], (co,), ci), co_off),
            gamma=packer.add_vec(np.ones((co,), np.float32), co_off),
            beta=packer.add_vec(np.zeros((co,), np.float32), co_off),
        )
    if lin:
        ci = 2 * hidden + cout
        kk = jax.random.split(keys[3], 2)
        g['lin'] = dict(w=packer.add_mat(_uniform(kk[0], (ci, cout), ci), 0, 0),
                        b=packer.add_vec(_uniform(kk[1], (cout,), ci), 0))
    return g


def init_head(packer, key, hidden, num_classes):
    k1, k2, k3, k4 = jax.random.split(key, 4)
    cin1 = 3 * hidden
    return dict(
        lin1=dict(w=packer.add_mat(_uniform(k1, (cin1, hidden), cin1), 0, 0),
                  b=packer.add_vec(_uniform(k2, (hidden,), cin1), 0)),
        lin2=dict(w=packer.add_mat(_uniform(k3, (hidden, num_classes), hidden), 0, 0),
                  b=packer.add_vec(_uniform(k4, (num_classes,), hidden), 0)))


# ----------------------------------------------------------------------------
# Fused forward kernel (single grid step; everything lives in VMEM)
# ----------------------------------------------------------------------------
def build_kernel(cfg, num_classes):
    def kernel(x_ref, adj_ref, mask_ref, w_ref, v_ref, out_ref):
        def mat(i):
            return w_ref[i]                       # (PAD, PAD), static index

        def vec(i):
            return v_ref[pl.ds(i, 1), :]          # (1, PAD), broadcasts over rows

        def mm(x, i):
            """(B, N, PAD) @ (PAD, PAD) flattened to one MXU push."""
            B, N, C = x.shape
            y = jnp.dot(x.reshape(B * N, C), mat(i),
                        preferred_element_type=jnp.float32)
            return y.reshape(B, N, PAD)

        def sage_bn(x, adj, mask, c):
            # DenseSAGEConv(mean aggr) -> mask -> ReLU -> BatchNorm1d (training stats)
            agg = jnp.einsum('bnm,bmc->bnc', adj, x,
                             preferred_element_type=jnp.float32)
            inv_deg = pl.reciprocal(
                jnp.maximum(jnp.sum(adj, axis=-1, keepdims=True), 1.0), approx=True)
            h = mm(agg * inv_deg, c['w_rel']) + mm(x, c['w_root']) + vec(c['b'])
            # TODO(synk): DenseSAGEConv normalize=True (L2 norm) not implemented; the
            # reference module uses the default normalize=False.
            if mask is not None:
                h = h * mask[:, :, None]
            h = jnp.maximum(h, 0.0)
            mean = jnp.mean(h, axis=(0, 1), keepdims=True)
            var = jnp.mean(jnp.square(h - mean), axis=(0, 1), keepdims=True)
            h = (h - mean) * jax.lax.rsqrt(var + 1e-5)
            return h * vec(c['gamma']) + vec(c['beta'])

        def gnn(x, adj, mask, g):
            x1 = sage_bn(x, adj, mask, g['conv1'])    # channel band [0, H)
            x2 = sage_bn(x1, adj, mask, g['conv2'])   # channel band [H, 2H)
            x3 = sage_bn(x2, adj, mask, g['conv3'])   # channel band [2H, 2H+Cout)
            cat = x1 + x2 + x3                        # == torch.cat([x1,x2,x3], -1)
            if 'lin' in g:
                cat = jnp.maximum(mm(cat, g['lin']['w']) + vec(g['lin']['b']), 0.0)
            return cat

        def diff_pool(x, adj, s_logits, mask, k):
            s = s_logits[..., :k]
            m = jnp.max(s, axis=-1, keepdims=True)
            e = jnp.exp(s - m)
            s = e * pl.reciprocal(jnp.sum(e, axis=-1, keepdims=True), approx=True)
            if mask is not None:
                x = x * mask[:, :, None]
                s = s * mask[:, :, None]
            x_p = jnp.einsum('bnk,bnc->bkc', s, x, preferred_element_type=jnp.float32)
            sa = jnp.einsum('bnk,bnm->bkm', s, adj, preferred_element_type=jnp.float32)
            adj_p = jnp.einsum('bkm,bmj->bkj', sa, s, preferred_element_type=jnp.float32)
            # TODO(synk): dense_diff_pool's link_loss / ent_loss are unused by the
            # returned network output and are not computed.
            return x_p, adj_p

        x = x_ref[...]
        adj = adj_ref[...]
        mask = mask_ref[...]

        s1 = gnn(x, adj, mask, cfg['gnn1_pool'])
        x1e = gnn(x, adj, mask, cfg['gnn1_embed'])
        xp1, adj1 = diff_pool(x1e, adj, s1, mask, cfg['gnn1_pool']['out'])

        s2 = gnn(xp1, adj1, None, cfg['gnn2_pool'])
        x2e = gnn(xp1, adj1, None, cfg['gnn2_embed'])
        xp2, adj2 = diff_pool(x2e, adj1, s2, None, cfg['gnn2_pool']['out'])

        x3 = gnn(xp2, adj2, None, cfg['gnn3_embed'])

        # head: mean over clusters -> Linear+ReLU -> Linear -> log_softmax
        emb = jnp.mean(x3, axis=1)                                       # (B, PAD)
        h = jnp.maximum(
            jnp.dot(emb, mat(cfg['head']['lin1']['w']),
                    preferred_element_type=jnp.float32) + vec(cfg['head']['lin1']['b']),
            0.0)
        logits = (jnp.dot(h, mat(cfg['head']['lin2']['w']),
                          preferred_element_type=jnp.float32)
                  + vec(cfg['head']['lin2']['b']))[:, :num_classes]
        zmax = jnp.max(logits, axis=-1, keepdims=True)
        z = logits - zmax
        out_ref[...] = z - jnp.log(jnp.sum(jnp.exp(z), axis=-1, keepdims=True))

    return kernel


def diffpool_forward(cfg, num_classes, x, adj, mask, W, V):
    B = x.shape[0]
    kernel = build_kernel(cfg, num_classes)

    def full(shape):
        return pl.BlockSpec(shape, lambda i: (0,) * len(shape))

    return pl.pallas_call(
        kernel,
        grid=(1,),
        in_specs=[full(x.shape), full(adj.shape), full(mask.shape),
                  full(W.shape), full(V.shape)],
        out_specs=full((B, num_classes)),
        out_shape=jax.ShapeDtypeStruct((B, num_classes), jnp.float32),
        compiler_params=pltpu.CompilerParams(
            dimension_semantics=("arbitrary",),
            vmem_limit_bytes=32 * 1024 * 1024),
    )(x, adj, mask, W, V)


# ----------------------------------------------------------------------------
# Input construction: mimic create_mask_from_batch / reshape_x_from_batch /
# reshape_adj_from_batch from the torch module (host-side glue).
# ----------------------------------------------------------------------------
def build_dense_inputs(key, node_counts, max_nodes, num_feats):
    B = len(node_counts)
    total = sum(node_counts)
    x_flat = np.asarray(jax.random.normal(key, (total, num_feats), jnp.float32))
    batch = np.concatenate([np.full(n, i, np.int64) for i, n in enumerate(node_counts)])

    # simple deterministic ring graph per example (bidirectional edges)
    src, dst = [], []
    off = 0
    for n in node_counts:
        for j in range(n):
            a, b = off + j, off + (j + 1) % n
            src += [a, b]
            dst += [b, a]
        off += n
    edge_index = np.array([src, dst], np.int64)

    x = np.zeros((B, max_nodes, num_feats), np.float32)
    mask = np.zeros((B, max_nodes), np.float32)
    adj = np.zeros((B, max_nodes, max_nodes), np.float32)
    for i in range(B):
        nodes = x_flat[batch == i]
        x[i, :nodes.shape[0]] = nodes
        mask[i, :int((batch == i).sum())] = 1.0
        idx = np.nonzero(batch == i)[0]
        start, end = idx[0], idx[-1]
        sel = (edge_index[0] >= start) & (edge_index[0] <= end)
        ge = edge_index[:, sel] - start
        adj[i, ge[0], ge[1]] = 1.0
    return x, adj, mask


# ----------------------------------------------------------------------------
if __name__ == "__main__":
    key = jax.random.PRNGKey(0)
    num_feats, num_classes, max_nodes, hidden = 8, 3, 32, 32
    K1 = ceil(0.25 * max_nodes)   # clusters after pool 1 -> 8
    K2 = ceil(0.25 * K1)          # clusters after pool 2 -> 2

    kd, kp = jax.random.split(key)
    x_np, adj_np, mask_np = build_dense_inputs(kd, [20, 28], max_nodes, num_feats)

    # lane-dense channel padding of the node features (host-side, once)
    B = x_np.shape[0]
    x_pad = np.zeros((B, max_nodes, PAD), np.float32)
    x_pad[..., :num_feats] = x_np

    packer = ParamPacker()
    keys = jax.random.split(kp, 6)
    cfg = dict(
        gnn1_pool=init_gnn(packer, keys[0], num_feats, hidden, K1, lin=True),
        gnn1_embed=init_gnn(packer, keys[1], num_feats, hidden, hidden, lin=False),
        gnn2_pool=init_gnn(packer, keys[2], 3 * hidden, hidden, K2, lin=True),
        gnn2_embed=init_gnn(packer, keys[3], 3 * hidden, hidden, hidden, lin=False),
        gnn3_embed=init_gnn(packer, keys[4], 3 * hidden, hidden, hidden, lin=False),
        head=init_head(packer, keys[5], hidden, num_classes),
    )
    W, V = packer.pack()

    out = diffpool_forward(cfg, num_classes,
                           jnp.asarray(x_pad), jnp.asarray(adj_np),
                           jnp.asarray(mask_np), W, V)
    out = jax.block_until_ready(out)
    assert out.shape == (B, num_classes)
    assert bool(jnp.all(jnp.isfinite(out)))
    print("KERNEL_OK")
</pallas_src>

<mosaic_0001>
module attributes {stable_mosaic.version = 11 : i64} {
  func.func @kernel(%arg0: i32, %arg1: memref<2x32x128xf32, #tpu.memory_space<vmem>>, %arg2: memref<2x32x32xf32, #tpu.memory_space<vmem>>, %arg3: memref<2x32xf32, #tpu.memory_space<vmem>>, %arg4: memref<34x128x128xf32, #tpu.memory_space<vmem>>, %arg5: memref<56x128xf32, #tpu.memory_space<vmem>>, %arg6: memref<2x3xf32, #tpu.memory_space<vmem>>) attributes {dimension_semantics = [#tpu.dimension_semantics<arbitrary>], iteration_bounds = array<i64: 1>, scalar_prefetch = 0 : i64, scratch_operands = 0 : i64, tpu.core_type = #tpu.core_type<tc>, window_params = [{pipeline_mode = #tpu.pipeline_mode<synchronous>, transform_indices = @transform_0, window_bounds = array<i64: 2, 32, 128>}, {pipeline_mode = #tpu.pipeline_mode<synchronous>, transform_indices = @transform_1, window_bounds = array<i64: 2, 32, 32>}, {pipeline_mode = #tpu.pipeline_mode<synchronous>, transform_indices = @transform_2, window_bounds = array<i64: 2, 32>}, {pipeline_mode = #tpu.pipeline_mode<synchronous>, transform_indices = @transform_3, window_bounds = array<i64: 34, 128, 128>}, {pipeline_mode = #tpu.pipeline_mode<synchronous>, transform_indices = @transform_4, window_bounds = array<i64: 56, 128>}, {pipeline_mode = #tpu.pipeline_mode<synchronous>, transform_indices = @transform_5, window_bounds = array<i64: 2, 3>}]} {
    %c0 = arith.constant 0 : index
    %c0_0 = arith.constant 0 : index
    %c0_1 = arith.constant 0 : index
    %0 = vector.load %arg1[%c0, %c0_0, %c0_1] : memref<2x32x128xf32, #tpu.memory_space<vmem>>, vector<2x32x128xf32>
    %c0_2 = arith.constant 0 : index
    %c0_3 = arith.constant 0 : index
    %c0_4 = arith.constant 0 : index
    %1 = vector.load %arg2[%c0_2, %c0_3, %c0_4] : memref<2x32x32xf32, #tpu.memory_space<vmem>>, vector<2x32x32xf32>
    %c0_5 = arith.constant 0 : index
    %c0_6 = arith.constant 0 : index
    %2 = vector.load %arg3[%c0_5, %c0_6] : memref<2x32xf32, #tpu.memory_space<vmem>>, vector<2x32xf32>
    "tpu.trace_start"() <{level = 10 : i32, message = "bnm,bmc->bnc"}> : () -> ()
    %cst = arith.constant dense<0.000000e+00> : vector<2x32x128xf32>
    %3 = tpu.matmul %1, %0, %cst {dimension_numbers = #tpu.dot_dimension_numbers<[2], [1], [1], [2], [0, 0, 0, 1, 1, 2], [0], [0]>} : vector<2x32x32xf32>, vector<2x32x128xf32>, vector<2x32x128xf32> -> vector<2x32x128xf32>
    "tpu.trace_stop"() : () -> ()
    %cst_7 = arith.constant dense<0.000000e+00> : vector<2x32xf32>
    %4 = vector.multi_reduction <add>, %1, %cst_7 [2] : vector<2x32x32xf32> to vector<2x32xf32>
    %5 = vector.shape_cast %4 : vector<2x32xf32> to vector<2x32x1xf32>
    %cst_8 = arith.constant 1.000000e+00 : f32
    %6 = vector.broadcast %cst_8 : f32 to vector<2x32x1xf32>
    %7 = arith.maximumf %5, %6 : vector<2x32x1xf32>
    %8 = tpu.reciprocal %7 {approx = true} : vector<2x32x1xf32> -> vector<2x32x1xf32>
    %9 = vector.broadcast %8 : vector<2x32x1xf32> to vector<2x32x128xf32>
    %10 = arith.mulf %3, %9 : vector<2x32x128xf32>
    %11 = vector.shape_cast %10 : vector<2x32x128xf32> to vector<64x128xf32>
    %c0_9 = arith.constant 0 : index
    %c0_10 = arith.constant 0 : index
    %c0_11 = arith.constant 0 : index
    %12 = vector.load %arg4[%c0_9, %c0_10, %c0_11] : memref<34x128x128xf32, #tpu.memory_space<vmem>>, vector<1x128x128xf32>
    %13 = vector.shape_cast %12 : vector<1x128x128xf32> to vector<128x128xf32>
    %cst_12 = arith.constant dense<0.000000e+00> : vector<64x128xf32>
    %14 = tpu.matmul %11, %13, %cst_12 {dimension_numbers = #tpu.dot_dimension_numbers<[1], [0], [0], [1], [0, 0, 1, 1], [], []>} : vector<64x128xf32>, vector<128x128xf32>, vector<64x128xf32> -> vector<64x128xf32>
    %15 = vector.shape_cast %14 : vector<64x128xf32> to vector<2x32x128xf32>
    %16 = vector.shape_cast %0 : vector<2x32x128xf32> to vector<64x128xf32>
    %c1 = arith.constant 1 : index
    %c0_13 = arith.constant 0 : index
    %c0_14 = arith.constant 0 : index
    %17 = vector.load %arg4[%c1, %c0_13, %c0_14] : memref<34x128x128xf32, #tpu.memory_space<vmem>>, vector<1x128x128xf32>
    %18 = vector.shape_cast %17 : vector<1x128x128xf32> to vector<128x128xf32>
    %cst_15 = arith.constant dense<0.000000e+00> : vector<64x128xf32>
    %19 = tpu.matmul %16, %18, %cst_15 {dimension_numbers = #tpu.dot_dimension_numbers<[1], [0], [0], [1], [0, 0, 1, 1], [], []>} : vector<64x128xf32>, vector<128x128xf32>, vector<64x128xf32> -> vector<64x128xf32>
    %20 = vector.shape_cast %19 : vector<64x128xf32> to vector<2x32x128xf32>
    %21 = arith.addf %15, %20 : vector<2x32x128xf32>
    %c0_16 = arith.constant 0 : index
    %c0_17 = arith.constant 0 : index
    %22 = vector.load %arg5[%c0_16, %c0_17] : memref<56x128xf32, #tpu.memory_space<vmem>>, vector<1x128xf32>
    %23 = vector.shape_cast %22 : vector<1x128xf32> to vector<1x1x128xf32>
    %24 = vector.broadcast %23 : vector<1x1x128xf32> to vector<2x32x128xf32>
    %25 = arith.addf %21, %24 : vector<2x32x128xf32>
    %26 = vector.shape_cast %2 : vector<2x32xf32> to vector<2x32x1xf32>
    %27 = vector.broadcast %26 : vector<2x32x1xf32> to vector<2x32x128xf32>
    %28 = arith.mulf %25, %27 : vector<2x32x128xf32>
    %cst_18 = arith.constant 0.000000e+00 : f32
    %29 = vector.broadcast %cst_18 : f32 to vector<2x32x128xf32>
    %30 = arith.maximumf %28, %29 : vector<2x32x128xf32>
    %cst_19 = arith.constant dense<0.000000e+00> : vector<128xf32>
    %31 = vector.multi_reduction <add>, %30, %cst_19 [0, 1] : vector<2x32x128xf32> to vector<128xf32>
    %32 = vector.shape_cast %31 : vector<128xf32> to vector<1x1x128xf32>
    %cst_20 = arith.constant 6.400000e+01 : f32
    %33 = vector.broadcast %cst_20 : f32 to vector<1x1x128xf32>
    %34 = arith.divf %32, %33 : vector<1x1x128xf32>
    %35 = vector.broadcast %34 : vector<1x1x128xf32> to vector<2x32x128xf32>
    %36 = arith.subf %30, %35 : vector<2x32x128xf32>
    %37 = arith.mulf %36, %36 : vector<2x32x128xf32>
    %cst_21 = arith.constant dense<0.000000e+00> : vector<128xf32>
    %38 = vector.multi_reduction <add>, %37, %cst_21 [0, 1] : vector<2x32x128xf32> to vector<128xf32>
    %39 = vector.shape_cast %38 : vector<128xf32> to vector<1x1x128xf32>
    %cst_22 = arith.constant 6.400000e+01 : f32
    %40 = vector.broadcast %cst_22 : f32 to vector<1x1x128xf32>
    %41 = arith.divf %39, %40 : vector<1x1x128xf32>
    %42 = vector.broadcast %34 : vector<1x1x128xf32> to vector<2x32x128xf32>
    %43 = arith.subf %30, %42 : vector<2x32x128xf32>
    %cst_23 = arith.constant 9.99999974E-6 : f32
    %44 = vector.broadcast %cst_23 : f32 to vector<1x1x128xf32>
    %45 = arith.addf %41, %44 : vector<1x1x128xf32>
    %46 = math.rsqrt %45 : vector<1x1x128xf32>
    %47 = vector.broadcast %46 : vector<1x1x128xf32> to vector<2x32x128xf32>
    %48 = arith.mulf %43, %47 : vector<2x32x128xf32>
    %c1_24 = arith.constant 1 : index
    %c0_25 = arith.constant 0 : index
    %49 = vector.load %arg5[%c1_24, %c0_25] : memref<56x128xf32, #tpu.memory_space<vmem>>, vector<1x128xf32>
    %50 = vector.shape_cast %49 : vector<1x128xf32> to vector<1x1x128xf32>
    %51 = vector.broadcast %50 : vector<1x1x128xf32> to vector<2x32x128xf32>
    %52 = arith.mulf %48, %51 : vector<2x32x128xf32>
    %c2 = arith.constant 2 : index
    %c0_26 = arith.constant 0 : index
    %53 = vector.load %arg5[%c2, %c0_26] : memref<56x128xf32, #tpu.memory_space<vmem>>, vector<1x128xf32>
    %54 = vector.shape_cast %53 : vector<1x128xf32> to vector<1x1x128xf32>
    %55 = vector.broadcast %54 : vector<1x1x128xf32> to vector<2x32x128xf32>
    %56 = arith.addf %52, %55 : vector<2x32x128xf32>
    "tpu.trace_start"() <{level = 10 : i32, message = "bnm,bmc->bnc"}> : () -> ()
    %cst_27 = arith.constant dense<0.000000e+00> : vector<2x32x128xf32>
    %57 = tpu.matmul %1, %56, %cst_27 {dimension_numbers = #tpu.dot_dimension_numbers<[2], [1], [1], [2], [0, 0, 0, 1, 1, 2], [0], [0]>} : vector<2x32x32xf32>, vector<2x32x128xf32>, vector<2x32x128xf32> -> vector<2x32x128xf32>
    "tpu.trace_stop"() : () -> ()
    %cst_28 = arith.constant dense<0.000000e+00> : vector<2x32xf32>
    %58 = vector.multi_reduction <add>, %1, %cst_28 [2] : vector<2x32x32xf32> to vector<2x32xf32>
    %59 = vector.shape_cast %58 : vector<2x32xf32> to vector<2x32x1xf32>
    %cst_29 = arith.constant 1.000000e+00 : f32
    %60 = vector.broadcast %cst_29 : f32 to vector<2x32x1xf32>
    %61 = arith.maximumf %59, %60 : vector<2x32x1xf32>
    %62 = tpu.reciprocal %61 {approx = true} : vector<2x32x1xf32> -> vector<2x32x1xf32>
    %63 = vector.broadcast %62 : vector<2x32x1xf32> to vector<2x32x128xf32>
    %64 = arith.mulf %57, %63 : vector<2x32x128xf32>
    %65 = vector.shape_cast %64 : vector<2x32x128xf32> to vector<64x128xf32>
    %c2_30 = arith.constant 2 : index
    %c0_31 = arith.constant 0 : index
    %c0_32 = arith.constant 0 : index
    %66 = vector.load %arg4[%c2_30, %c0_31, %c0_32] : memref<34x128x128xf32, #tpu.memory_space<vmem>>, vector<1x128x128xf32>
    %67 = vector.shape_cast %66 : vector<1x128x128xf32> to vector<128x128xf32>
    %cst_33 = arith.constant dense<0.000000e+00> : vector<64x128xf32>
    %68 = tpu.matmul %65, %67, %cst_33 {dimension_numbers = #tpu.dot_dimension_numbers<[1], [0], [0], [1], [0, 0, 1, 1], [], []>} : vector<64x128xf32>, vector<128x128xf32>, vector<64x128xf32> -> vector<64x128xf32>
    %69 = vector.shape_cast %68 : vector<64x128xf32> to vector<2x32x128xf32>
    %70 = vector.shape_cast %56 : vector<2x32x128xf32> to vector<64x128xf32>
    %c3 = arith.constant 3 : index
    %c0_34 = arith.constant 0 : index
    %c0_35 = arith.constant 0 : index
    %71 = vector.load %arg4[%c3, %c0_34, %c0_35] : memref<34x128x128xf32, #tpu.memory_space<vmem>>, vector<1x128x128xf32>
    %72 = vector.shape_cast %71 : vector<1x128x128xf32> to vector<128x128xf32>
    %cst_36 = arith.constant dense<0.000000e+00> : vector<64x128xf32>
    %73 = tpu.matmul %70, %72, %cst_36 {dimension_numbers = #tpu.dot_dimension_numbers<[1], [0], [0], [1], [0, 0, 1, 1], [], []>} : vector<64x128xf32>, vector<128x128xf32>, vector<64x128xf32> -> vector<64x128xf32>
    %74 = vector.shape_cast %73 : vector<64x128xf32> to vector<2x32x128xf32>
    %75 = arith.addf %69, %74 : vector<2x32x128xf32>
    %c3_37 = arith.constant 3 : index
    %c0_38 = arith.constant 0 : index
    %76 = vector.load %arg5[%c3_37, %c0_38] : memref<56x128xf32, #tpu.memory_space<vmem>>, vector<1x128xf32>
    %77 = vector.shape_cast %76 : vector<1x128xf32> to vector<1x1x128xf32>
    %78 = vector.broadcast %77 : vector<1x1x128xf32> to vector<2x32x128xf32>
    %79 = arith.addf %75, %78 : vector<2x32x128xf32>
    %80 = vector.shape_cast %2 : vector<2x32xf32> to vector<2x32x1xf32>
    %81 = vector.broadcast %80 : vector<2x32x1xf32> to vector<2x32x128xf32>
    %82 = arith.mulf %79, %81 : vector<2x32x128xf32>
    %cst_39 = arith.constant 0.000000e+00 : f32
    %83 = vector.broadcast %cst_39 : f32 to vector<2x32x128xf32>
    %84 = arith.maximumf %82, %83 : vector<2x32x128xf32>
    %cst_40 = arith.constant dense<0.000000e+00> : vector<128xf32>
    %85 = vector.multi_reduction <add>, %84, %cst_40 [0, 1] : vector<2x32x128xf32> to vector<128xf32>
    %86 = vector.shape_cast %85 : vector<128xf32> to vector<1x1x128xf32>
    %cst_41 = arith.constant 6.400000e+01 : f32
    %87 = vector.broadcast %cst_41 : f32 to vector<1x1x128xf32>
    %88 = arith.divf %86, %87 : vector<1x1x128xf32>
    %89 = vector.broadcast %88 : vector<1x1x128xf32> to vector<2x32x128xf32>
    %90 = arith.subf %84, %89 : vector<2x32x128xf32>
    %91 = arith.mulf %90, %90 : vector<2x32x128xf32>
    %cst_42 = arith.constant dense<0.000000e+00> : vector<128xf32>
    %92 = vector.multi_reduction <add>, %91, %cst_42 [0, 1] : vector<2x32x128xf32> to vector<128xf32>
    %93 = vector.shape_cast %92 : vector<128xf32> to vector<1x1x128xf32>
    %cst_43 = arith.constant 6.400000e+01 : f32
    %94 = vector.broadcast %cst_43 : f32 to vector<1x1x128xf32>
    %95 = arith.divf %93, %94 : vector<1x1x128xf32>
    %96 = vector.broadcast %88 : vector<1x1x128xf32> to vector<2x32x128xf32>
    %97 = arith.subf %84, %96 : vector<2x32x128xf32>
    %cst_44 = arith.constant 9.99999974E-6 : f32
    %98 = vector.broadcast %cst_44 : f32 to vector<1x1x128xf32>
    %99 = arith.addf %95, %98 : vector<1x1x128xf32>
    %100 = math.rsqrt %99 : vector<1x1x128xf32>
    %101 = vector.broadcast %100 : vector<1x1x128xf32> to vector<2x32x128xf32>
    %102 = arith.mulf %97, %101 : vector<2x32x128xf32>
    %c4 = arith.constant 4 : index
    %c0_45 = arith.constant 0 : index
    %103 = vector.load %arg5[%c4, %c0_45] : memref<56x128xf32, #tpu.memory_space<vmem>>, vector<1x128xf32>
    %104 = vector.shape_cast %103 : vector<1x128xf32> to vector<1x1x128xf32>
    %105 = vector.broadcast %104 : vector<1x1x128xf32> to vector<2x32x128xf32>
    %106 = arith.mulf %102, %105 : vector<2x32x128xf32>
    %c5 = arith.constant 5 : index
    %c0_46 = arith.constant 0 : index
    %107 = vector.load %arg5[%c5, %c0_46] : memref<56x128xf32, #tpu.memory_space<vmem>>, vector<1x128xf32>
    %108 = vector.shape_cast %107 : vector<1x128xf32> to vector<1x1x128xf32>
    %109 = vector.broadcast %108 : vector<1x1x128xf32> to vector<2x32x128xf32>
    %110 = arith.addf %106, %109 : vector<2x32x128xf32>
    "tpu.trace_start"() <{level = 10 : i32, message = "bnm,bmc->bnc"}> : () -> ()
    %cst_47 = arith.constant dense<0.000000e+00> : vector<2x32x128xf32>
    %111 = tpu.matmul %1, %110, %cst_47 {dimension_numbers = #tpu.dot_dimension_numbers<[2], [1], [1], [2], [0, 0, 0, 1, 1, 2], [0], [0]>} : vector<2x32x32xf32>, vector<2x32x128xf32>, vector<2x32x128xf32> -> vector<2x32x128xf32>
    "tpu.trace_stop"() : () -> ()
    %cst_48 = arith.constant dense<0.000000e+00> : vector<2x32xf32>
    %112 = vector.multi_reduction <add>, %1, %cst_48 [2] : vector<2x32x32xf32> to vector<2x32xf32>
    %113 = vector.shape_cast %112 : vector<2x32xf32> to vector<2x32x1xf32>
    %cst_49 = arith.constant 1.000000e+00 : f32
    %114 = vector.broadcast %cst_49 : f32 to vector<2x32x1xf32>
    %115 = arith.maximumf %113, %114 : vector<2x32x1xf32>
    %116 = tpu.reciprocal %115 {approx = true} : vector<2x32x1xf32> -> vector<2x32x1xf32>
    %117 = vector.broadcast %116 : vector<2x32x1xf32> to vector<2x32x128xf32>
    %118 = arith.mulf %111, %117 : vector<2x32x128xf32>
    %119 = vector.shape_cast %118 : vector<2x32x128xf32> to vector<64x128xf32>
    %c4_50 = arith.constant 4 : index
    %c0_51 = arith.constant 0 : index
    %c0_52 = arith.constant 0 : index
    %120 = vector.load %arg4[%c4_50, %c0_51, %c0_52] : memref<34x128x128xf32, #tpu.memory_space<vmem>>, vector<1x128x128xf32>
    %121 = vector.shape_cast %120 : vector<1x128x128xf32> to vector<128x128xf32>
    %cst_53 = arith.constant dense<0.000000e+00> : vector<64x128xf32>
    %122 = tpu.matmul %119, %121, %cst_53 {dimension_numbers = #tpu.dot_dimension_numbers<[1], [0], [0], [1], [0, 0, 1, 1], [], []>} : vector<64x128xf32>, vector<128x128xf32>, vector<64x128xf32> -> vector<64x128xf32>
    %123 = vector.shape_cast %122 : vector<64x128xf32> to vector<2x32x128xf32>
    %124 = vector.shape_cast %110 : vector<2x32x128xf32> to vector<64x128xf32>
    %c5_54 = arith.constant 5 : index
    %c0_55 = arith.constant 0 : index
    %c0_56 = arith.constant 0 : index
    %125 = vector.load %arg4[%c5_54, %c0_55, %c0_56] : memref<34x128x128xf32, #tpu.memory_space<vmem>>, vector<1x128x128xf32>
    %126 = vector.shape_cast %125 : vector<1x128x128xf32> to vector<128x128xf32>
    %cst_57 = arith.constant dense<0.000000e+00> : vector<64x128xf32>
    %127 = tpu.matmul %124, %126, %cst_57 {dimension_numbers = #tpu.dot_dimension_numbers<[1], [0], [0], [1], [0, 0, 1, 1], [], []>} : vector<64x128xf32>, vector<128x128xf32>, vector<64x128xf32> -> vector<64x128xf32>
    %128 = vector.shape_cast %127 : vector<64x128xf32> to vector<2x32x128xf32>
    %129 = arith.addf %123, %128 : vector<2x32x128xf32>
    %c6 = arith.constant 6 : index
    %c0_58 = arith.constant 0 : index
    %130 = vector.load %arg5[%c6, %c0_58] : memref<56x128xf32, #tpu.memory_space<vmem>>, vector<1x128xf32>
    %131 = vector.shape_cast %130 : vector<1x128xf32> to vector<1x1x128xf32>
    %132 = vector.broadcast %131 : vector<1x1x128xf32> to vector<2x32x128xf32>
    %133 = arith.addf %129, %132 : vector<2x32x128xf32>
    %134 = vector.shape_cast %2 : vector<2x32xf32> to vector<2x32x1xf32>
    %135 = vector.broadcast %134 : vector<2x32x1xf32> to vector<2x32x128xf32>
    %136 = arith.mulf %133, %135 : vector<2x32x128xf32>
    %cst_59 = arith.constant 0.000000e+00 : f32
    %137 = vector.broadcast %cst_59 : f32 to vector<2x32x128xf32>
    %138 = arith.maximumf %136, %137 : vector<2x32x128xf32>
    %cst_60 = arith.constant dense<0.000000e+00> : vector<128xf32>
    %139 = vector.multi_reduction <add>, %138, %cst_60 [0, 1] : vector<2x32x128xf32> to vector<128xf32>
    %140 = vector.shape_cast %139 : vector<128xf32> to vector<1x1x128xf32>
    %cst_61 = arith.constant 6.400000e+01 : f32
    %141 = vector.broadcast %cst_61 : f32 to vector<1x1x128xf32>
    %142 = arith.divf %140, %141 : vector<1x1x128xf32>
    %143 = vector.broadcast %142 : vector<1x1x128xf32> to vector<2x32x128xf32>
    %144 = arith.subf %138, %143 : vector<2x32x128xf32>
    %145 = arith.mulf %144, %144 : vector<2x32x128xf32>
    %cst_62 = arith.constant dense<0.000000e+00> : vector<128xf32>
    %146 = vector.multi_reduction <add>, %145, %cst_62 [0, 1] : vector<2x32x128xf32> to vector<128xf32>
    %147 = vector.shape_cast %146 : vector<128xf32> to vector<1x1x128xf32>
    %cst_63 = arith.constant 6.400000e+01 : f32
    %148 = vector.broadcast %cst_63 : f32 to vector<1x1x128xf32>
    %149 = arith.divf %147, %148 : vector<1x1x128xf32>
    %150 = vector.broadcast %142 : vector<1x1x128xf32> to vector<2x32x128xf32>
    %151 = arith.subf %138, %150 : vector<2x32x128xf32>
    %cst_64 = arith.constant 9.99999974E-6 : f32
    %152 = vector.broadcast %cst_64 : f32 to vector<1x1x128xf32>
    %153 = arith.addf %149, %152 : vector<1x1x128xf32>
    %154 = math.rsqrt %153 : vector<1x1x128xf32>
    %155 = vector.broadcast %154 : vector<1x1x128xf32> to vector<2x32x128xf32>
    %156 = arith.mulf %151, %155 : vector<2x32x128xf32>
    %c7 = arith.constant 7 : index
    %c0_65 = arith.constant 0 : index
    %157 = vector.load %arg5[%c7, %c0_65] : memref<56x128xf32, #tpu.memory_space<vmem>>, vector<1x128xf32>
    %158 = vector.shape_cast %157 : vector<1x128xf32> to vector<1x1x128xf32>
    %159 = vector.broadcast %158 : vector<1x1x128xf32> to vector<2x32x128xf32>
    %160 = arith.mulf %156, %159 : vector<2x32x128xf32>
    %c8 = arith.constant 8 : index
    %c0_66 = arith.constant 0 : index
    %161 = vector.load %arg5[%c8, %c0_66] : memref<56x128xf32, #tpu.memory_space<vmem>>, vector<1x128xf32>
    %162 = vector.shape_cast %161 : vector<1x128xf32> to vector<1x1x128xf32>
    %163 = vector.broadcast %162 : vector<1x1x128xf32> to vector<2x32x128xf32>
    %164 = arith.addf %160, %163 : vector<2x32x128xf32>
    %165 = arith.addf %56, %110 : vector<2x32x128xf32>
    %166 = arith.addf %165, %164 : vector<2x32x128xf32>
    %167 = vector.shape_cast %166 : vector<2x32x128xf32> to vector<64x128xf32>
    %c6_67 = arith.constant 6 : index
    %c0_68 = arith.constant 0 : index
    %c0_69 = arith.constant 0 : index
    %168 = vector.load %arg4[%c6_67, %c0_68, %c0_69] : memref<34x128x128xf32, #tpu.memory_space<vmem>>, vector<1x128x128xf32>
    %169 = vector.shape_cast %168 : vector<1x128x128xf32> to vector<128x128xf32>
    %cst_70 = arith.constant dense<0.000000e+00> : vector<64x128xf32>
    %170 = tpu.matmul %167, %169, %cst_70 {dimension_numbers = #tpu.dot_dimension_numbers<[1], [0], [0], [1], [0, 0, 1, 1], [], []>} : vector<64x128xf32>, vector<128x128xf32>, vector<64x128xf32> -> vector<64x128xf32>
    %171 = vector.shape_cast %170 : vector<64x128xf32> to vector<2x32x128xf32>
    %c9 = arith.constant 9 : index
    %c0_71 = arith.constant 0 : index
    %172 = vector.load %arg5[%c9, %c0_71] : memref<56x128xf32, #tpu.memory_space<vmem>>, vector<1x128xf32>
    %173 = vector.shape_cast %172 : vector<1x128xf32> to vector<1x1x128xf32>
    %174 = vector.broadcast %173 : vector<1x1x128xf32> to vector<2x32x128xf32>
    %175 = arith.addf %171, %174 : vector<2x32x128xf32>
    %cst_72 = arith.constant 0.000000e+00 : f32
    %176 = vector.broadcast %cst_72 : f32 to vector<2x32x128xf32>
    %177 = arith.maximumf %175, %176 : vector<2x32x128xf32>
    "tpu.trace_start"() <{level = 10 : i32, message = "bnm,bmc->bnc"}> : () -> ()
    %cst_73 = arith.constant dense<0.000000e+00> : vector<2x32x128xf32>
    %178 = tpu.matmul %1, %0, %cst_73 {dimension_numbers = #tpu.dot_dimension_numbers<[2], [1], [1], [2], [0, 0, 0, 1, 1, 2], [0], [0]>} : vector<2x32x32xf32>, vector<2x32x128xf32>, vector<2x32x128xf32> -> vector<2x32x128xf32>
    "tpu.trace_stop"() : () -> ()
    %cst_74 = arith.constant dense<0.000000e+00> : vector<2x32xf32>
    %179 = vector.multi_reduction <add>, %1, %cst_74 [2] : vector<2x32x32xf32> to vector<2x32xf32>
    %180 = vector.shape_cast %179 : vector<2x32xf32> to vector<2x32x1xf32>
    %cst_75 = arith.constant 1.000000e+00 : f32
    %181 = vector.broadcast %cst_75 : f32 to vector<2x32x1xf32>
    %182 = arith.maximumf %180, %181 : vector<2x32x1xf32>
    %183 = tpu.reciprocal %182 {approx = true} : vector<2x32x1xf32> -> vector<2x32x1xf32>
    %184 = vector.broadcast %183 : vector<2x32x1xf32> to vector<2x32x128xf32>
    %185 = arith.mulf %178, %184 : vector<2x32x128xf32>
    %186 = vector.shape_cast %185 : vector<2x32x128xf32> to vector<64x128xf32>
    %c7_76 = arith.constant 7 : index
    %c0_77 = arith.constant 0 : index
    %c0_78 = arith.constant 0 : index
    %187 = vector.load %arg4[%c7_76, %c0_77, %c0_78] : memref<34x128x128xf32, #tpu.memory_space<vmem>>, vector<1x128x128xf32>
    %188 = vector.shape_cast %187 : vector<1x128x128xf32> to vector<128x128xf32>
    %cst_79 = arith.constant dense<0.000000e+00> : vector<64x128xf32>
    %189 = tpu.matmul %186, %188, %cst_79 {dimension_numbers = #tpu.dot_dimension_numbers<[1], [0], [0], [1], [0, 0, 1, 1], [], []>} : vector<64x128xf32>, vector<128x128xf32>, vector<64x128xf32> -> vector<64x128xf32>
    %190 = vector.shape_cast %189 : vector<64x128xf32> to vector<2x32x128xf32>
    %191 = vector.shape_cast %0 : vector<2x32x128xf32> to vector<64x128xf32>
    %c8_80 = arith.constant 8 : index
    %c0_81 = arith.constant 0 : index
    %c0_82 = arith.constant 0 : index
    %192 = vector.load %arg4[%c8_80, %c0_81, %c0_82] : memref<34x128x128xf32, #tpu.memory_space<vmem>>, vector<1x128x128xf32>
    %193 = vector.shape_cast %192 : vector<1x128x128xf32> to vector<128x128xf32>
    %cst_83 = arith.constant dense<0.000000e+00> : vector<64x128xf32>
    %194 = tpu.matmul %191, %193, %cst_83 {dimension_numbers = #tpu.dot_dimension_numbers<[1], [0], [0], [1], [0, 0, 1, 1], [], []>} : vector<64x128xf32>, vector<128x128xf32>, vector<64x128xf32> -> vector<64x128xf32>
    %195 = vector.shape_cast %194 : vector<64x128xf32> to vector<2x32x128xf32>
    %196 = arith.addf %190, %195 : vector<2x32x128xf32>
    %c10 = arith.constant 10 : index
    %c0_84 = arith.constant 0 : index
    %197 = vector.load %arg5[%c10, %c0_84] : memref<56x128xf32, #tpu.memory_space<vmem>>, vector<1x128xf32>
    %198 = vector.shape_cast %197 : vector<1x128xf32> to vector<1x1x128xf32>
    %199 = vector.broadcast %198 : vector<1x1x128xf32> to vector<2x32x128xf32>
    %200 = arith.addf %196, %199 : vector<2x32x128xf32>
    %201 = vector.shape_cast %2 : vector<2x32xf32> to vector<2x32x1xf32>
    %202 = vector.broadcast %201 : vector<2x32x1xf32> to vector<2x32x128xf32>
    %203 = arith.mulf %200, %202 : vector<2x32x128xf32>
    %cst_85 = arith.constant 0.000000e+00 : f32
    %204 = vector.broadcast %cst_85 : f32 to vector<2x32x128xf32>
    %205 = arith.maximumf %203, %204 : vector<2x32x128xf32>
    %cst_86 = arith.constant dense<0.000000e+00> : vector<128xf32>
    %206 = vector.multi_reduction <add>, %205, %cst_86 [0, 1] : vector<2x32x128xf32> to vector<128xf32>
    %207 = vector.shape_cast %206 : vector<128xf32> to vector<1x1x128xf32>
    %cst_87 = arith.constant 6.400000e+01 : f32
    %208 = vector.broadcast %cst_87 : f32 to vector<1x1x128xf32>
    %209 = arith.divf %207, %208 : vector<1x1x128xf32>
    %210 = vector.broadcast %209 : vector<1x1x128xf32> to vector<2x32x128xf32>
    %211 = arith.subf %205, %210 : vector<2x32x128xf32>
    %212 = arith.mulf %211, %211 : vector<2x32x128xf32>
    %cst_88 = arith.constant dense<0.000000e+00> : vector<128xf32>
    %213 = vector.multi_reduction <add>, %212, %cst_88 [0, 1] : vector<2x32x128xf32> to vector<128xf32>
    %214 = vector.shape_cast %213 : vector<128xf32> to vector<1x1x128xf32>
    %cst_89 = arith.constant 6.400000e+01 : f32
    %215 = vector.broadcast %cst_89 : f32 to vector<1x1x128xf32>
    %216 = arith.divf %214, %215 : vector<1x1x128xf32>
    %217 = vector.broadcast %209 : vector<1x1x128xf32> to vector<2x32x128xf32>
    %218 = arith.subf %205, %217 : vector<2x32x128xf32>
    %cst_90 = arith.constant 9.99999974E-6 : f32
    %219 = vector.broadcast %cst_90 : f32 to vector<1x1x128xf32>
    %220 = arith.addf %216, %219 : vector<1x1x128xf32>
    %221 = math.rsqrt %220 : vector<1x1x128xf32>
    %222 = vector.broadcast %221 : vector<1x1x128xf32> to vector<2x32x128xf32>
    %223 = arith.mulf %218, %222 : vector<2x32x128xf32>
    %c11 = arith.constant 11 : index
    %c0_91 = arith.constant 0 : index
    %224 = vector.load %arg5[%c11, %c0_91] : memref<56x128xf32, #tpu.memory_space<vmem>>, vector<1x128xf32>
    %225 = vector.shape_cast %224 : vector<1x128xf32> to vector<1x1x128xf32>
    %226 = vector.broadcast %225 : vector<1x1x128xf32> to vector<2x32x128xf32>
    %227 = arith.mulf %223, %226 : vector<2x32x128xf32>
    %c12 = arith.constant 12 : index
    %c0_92 = arith.constant 0 : index
    %228 = vector.load %arg5[%c12, %c0_92] : memref<56x128xf32, #tpu.memory_space<vmem>>, vector<1x128xf32>
    %229 = vector.shape_cast %228 : vector<1x128xf32> to vector<1x1x128xf32>
    %230 = vector.broadcast %229 : vector<1x1x128xf32> to vector<2x32x128xf32>
    %231 = arith.addf %227, %230 : vector<2x32x128xf32>
    "tpu.trace_start"() <{level = 10 : i32, message = "bnm,bmc->bnc"}> : () -> ()
    %cst_93 = arith.constant dense<0.000000e+00> : vector<2x32x128xf32>
    %232 = tpu.matmul %1, %231, %cst_93 {dimension_numbers = #tpu.dot_dimension_numbers<[2], [1], [1], [2], [0, 0, 0, 1, 1, 2], [0], [0]>} : vector<2x32x32xf32>, vector<2x32x128xf32>, vector<2x32x128xf32> -> vector<2x32x128xf32>
    "tpu.trace_stop"() : () -> ()
    %cst_94 = arith.constant dense<0.000000e+00> : vector<2x32xf32>
    %233 = vector.multi_reduction <add>, %1, %cst_94 [2] : vector<2x32x32xf32> to vector<2x32xf32>
    %234 = vector.shape_cast %233 : vector<2x32xf32> to vector<2x32x1xf32>
    %cst_95 = arith.constant 1.000000e+00 : f32
    %235 = vector.broadcast %cst_95 : f32 to vector<2x32x1xf32>
    %236 = arith.maximumf %234, %235 : vector<2x32x1xf32>
    %237 = tpu.reciprocal %236 {approx = true} : vector<2x32x1xf32> -> vector<2x32x1xf32>
    %238 = vector.broadcast %237 : vector<2x32x1xf32> to vector<2x32x128xf32>
    %239 = arith.mulf %232, %238 : vector<2x32x128xf32>
    %240 = vector.shape_cast %239 : vector<2x32x128xf32> to vector<64x128xf32>
    %c9_96 = arith.constant 9 : index
    %c0_97 = arith.constant 0 : index
    %c0_98 = arith.constant 0 : index
    %241 = vector.load %arg4[%c9_96, %c0_97, %c0_98] : memref<34x128x128xf32, #tpu.memory_space<vmem>>, vector<1x128x128xf32>
    %242 = vector.shape_cast %241 : vector<1x128x128xf32> to vector<128x128xf32>
    %cst_99 = arith.constant dense<0.000000e+00> : vector<64x128xf32>
    %243 = tpu.matmul %240, %242, %cst_99 {dimension_numbers = #tpu.dot_dimension_numbers<[1], [0], [0], [1], [0, 0, 1, 1], [], []>} : vector<64x128xf32>, vector<128x128xf32>, vector<64x128xf32> -> vector<64x128xf32>
    %244 = vector.shape_cast %243 : vector<64x128xf32> to vector<2x32x128xf32>
    %245 = vector.shape_cast %231 : vector<2x32x128xf32> to vector<64x128xf32>
    %c10_100 = arith.constant 10 : index
    %c0_101 = arith.constant 0 : index
    %c0_102 = arith.constant 0 : index
    %246 = vector.load %arg4[%c10_100, %c0_101, %c0_102] : memref<34x128x128xf32, #tpu.memory_space<vmem>>, vector<1x128x128xf32>
    %247 = vector.shape_cast %246 : vector<1x128x128xf32> to vector<128x128xf32>
    %cst_103 = arith.constant dense<0.000000e+00> : vector<64x128xf32>
    %248 = tpu.matmul %245, %247, %cst_103 {dimension_numbers = #tpu.dot_dimension_numbers<[1], [0], [0], [1], [0, 0, 1, 1], [], []>} : vector<64x128xf32>, vector<128x128xf32>, vector<64x128xf32> -> vector<64x128xf32>
    %249 = vector.shape_cast %248 : vector<64x128xf32> to vector<2x32x128xf32>
    %250 = arith.addf %244, %249 : vector<2x32x128xf32>
    %c13 = arith.constant 13 : index
    %c0_104 = arith.constant 0 : index
    %251 = vector.load %arg5[%c13, %c0_104] : memref<56x128xf32, #tpu.memory_space<vmem>>, vector<1x128xf32>
    %252 = vector.shape_cast %251 : vector<1x128xf32> to vector<1x1x128xf32>
    %253 = vector.broadcast %252 : vector<1x1x128xf32> to vector<2x32x128xf32>
    %254 = arith.addf %250, %253 : vector<2x32x128xf32>
    %255 = vector.shape_cast %2 : vector<2x32xf32> to vector<2x32x1xf32>
    %256 = vector.broadcast %255 : vector<2x32x1xf32> to vector<2x32x128xf32>
    %257 = arith.mulf %254, %256 : vector<2x32x128xf32>
    %cst_105 = arith.constant 0.000000e+00 : f32
    %258 = vector.broadcast %cst_105 : f32 to vector<2x32x128xf32>
    %259 = arith.maximumf %257, %258 : vector<2x32x128xf32>
    %cst_106 = arith.constant dense<0.000000e+00> : vector<128xf32>
    %260 = vector.multi_reduction <add>, %259, %cst_106 [0, 1] : vector<2x32x128xf32> to vector<128xf32>
    %261 = vector.shape_cast %260 : vector<128xf32> to vector<1x1x128xf32>
    %cst_107 = arith.constant 6.400000e+01 : f32
    %262 = vector.broadcast %cst_107 : f32 to vector<1x1x128xf32>
    %263 = arith.divf %261, %262 : vector<1x1x128xf32>
    %264 = vector.broadcast %263 : vector<1x1x128xf32> to vector<2x32x128xf32>
    %265 = arith.subf %259, %264 : vector<2x32x128xf32>
    %266 = arith.mulf %265, %265 : vector<2x32x128xf32>
    %cst_108 = arith.constant dense<0.000000e+00> : vector<128xf32>
    %267 = vector.multi_reduction <add>, %266, %cst_108 [0, 1] : vector<2x32x128xf32> to vector<128xf32>
    %268 = vector.shape_cast %267 : vector<128xf32> to vector<1x1x128xf32>
    %cst_109 = arith.constant 6.400000e+01 : f32
    %269 = vector.broadcast %cst_109 : f32 to vector<1x1x128xf32>
    %270 = arith.divf %268, %269 : vector<1x1x128xf32>
    %271 = vector.broadcast %263 : vector<1x1x128xf32> to vector<2x32x128xf32>
    %272 = arith.subf %259, %271 : vector<2x32x128xf32>
    %cst_110 = arith.constant 9.99999974E-6 : f32
    %273 = vector.broadcast %cst_110 : f32 to vector<1x1x128xf32>
    %274 = arith.addf %270, %273 : vector<1x1x128xf32>
    %275 = math.rsqrt %274 : vector<1x1x128xf32>
    %276 = vector.broadcast %275 : vector<1x1x128xf32> to vector<2x32x128xf32>
    %277 = arith.mulf %272, %276 : vector<2x32x128xf32>
    %c14 = arith.constant 14 : index
    %c0_111 = arith.constant 0 : index
    %278 = vector.load %arg5[%c14, %c0_111] : memref<56x128xf32, #tpu.memory_space<vmem>>, vector<1x128xf32>
    %279 = vector.shape_cast %278 : vector<1x128xf32> to vector<1x1x128xf32>
    %280 = vector.broadcast %279 : vector<1x1x128xf32> to vector<2x32x128xf32>
    %281 = arith.mulf %277, %280 : vector<2x32x128xf32>
    %c15 = arith.constant 15 : index
    %c0_112 = arith.constant 0 : index
    %282 = vector.load %arg5[%c15, %c0_112] : memref<56x128xf32, #tpu.memory_space<vmem>>, vector<1x128xf32>
    %283 = vector.shape_cast %282 : vector<1x128xf32> to vector<1x1x128xf32>
    %284 = vector.broadcast %283 : vector<1x1x128xf32> to vector<2x32x128xf32>
    %285 = arith.addf %281, %284 : vector<2x32x128xf32>
    "tpu.trace_start"() <{level = 10 : i32, message = "bnm,bmc->bnc"}> : () -> ()
    %cst_113 = arith.constant dense<0.000000e+00> : vector<2x32x128xf32>
    %286 = tpu.matmul %1, %285, %cst_113 {dimension_numbers = #tpu.dot_dimension_numbers<[2], [1], [1], [2], [0, 0, 0, 1, 1, 2], [0], [0]>} : vector<2x32x32xf32>, vector<2x32x128xf32>, vector<2x32x128xf32> -> vector<2x32x128xf32>
    "tpu.trace_stop"() : () -> ()
    %cst_114 = arith.constant dense<0.000000e+00> : vector<2x32xf32>
    %287 = vector.multi_reduction <add>, %1, %cst_114 [2] : vector<2x32x32xf32> to vector<2x32xf32>
    %288 = vector.shape_cast %287 : vector<2x32xf32> to vector<2x32x1xf32>
    %cst_115 = arith.constant 1.000000e+00 : f32
    %289 = vector.broadcast %cst_115 : f32 to vector<2x32x1xf32>
    %290 = arith.maximumf %288, %289 : vector<2x32x1xf32>
    %291 = tpu.reciprocal %290 {approx = true} : vector<2x32x1xf32> -> vector<2x32x1xf32>
    %292 = vector.broadcast %291 : vector<2x32x1xf32> to vector<2x32x128xf32>
    %293 = arith.mulf %286, %292 : vector<2x32x128xf32>
    %294 = vector.shape_cast %293 : vector<2x32x128xf32> to vector<64x128xf32>
    %c11_116 = arith.constant 11 : index
    %c0_117 = arith.constant 0 : index
    %c0_118 = arith.constant 0 : index
    %295 = vector.load %arg4[%c11_116, %c0_117, %c0_118] : memref<34x128x128xf32, #tpu.memory_space<vmem>>, vector<1x128x128xf32>
    %296 = vector.shape_cast %295 : vector<1x128x128xf32> to vector<128x128xf32>
    %cst_119 = arith.constant dense<0.000000e+00> : vector<64x128xf32>
    %297 = tpu.matmul %294, %296, %cst_119 {dimension_numbers = #tpu.dot_dimension_numbers<[1], [0], [0], [1], [0, 0, 1, 1], [], []>} : vector<64x128xf32>, vector<128x128xf32>, vector<64x128xf32> -> vector<64x128xf32>
    %298 = vector.shape_cast %297 : vector<64x128xf32> to vector<2x32x128xf32>
    %299 = vector.shape_cast %285 : vector<2x32x128xf32> to vector<64x128xf32>
    %c12_120 = arith.constant 12 : index
    %c0_121 = arith.constant 0 : index
    %c0_122 = arith.constant 0 : index
    %300 = vector.load %arg4[%c12_120, %c0_121, %c0_122] : memref<34x128x128xf32, #tpu.memory_space<vmem>>, vector<1x128x128xf32>
    %301 = vector.shape_cast %300 : vector<1x128x128xf32> to vector<128x128xf32>
    %cst_123 = arith.constant dense<0.000000e+00> : vector<64x128xf32>
    %302 = tpu.matmul %299, %301, %cst_123 {dimension_numbers = #tpu.dot_dimension_numbers<[1], [0], [0], [1], [0, 0, 1, 1], [], []>} : vector<64x128xf32>, vector<128x128xf32>, vector<64x128xf32> -> vector<64x128xf32>
    %303 = vector.shape_cast %302 : vector<64x128xf32> to vector<2x32x128xf32>
    %304 = arith.addf %298, %303 : vector<2x32x128xf32>
    %c16 = arith.constant 16 : index
    %c0_124 = arith.constant 0 : index
    %305 = vector.load %arg5[%c16, %c0_124] : memref<56x128xf32, #tpu.memory_space<vmem>>, vector<1x128xf32>
    %306 = vector.shape_cast %305 : vector<1x128xf32> to vector<1x1x128xf32>
    %307 = vector.broadcast %306 : vector<1x1x128xf32> to vector<2x32x128xf32>
    %308 = arith.addf %304, %307 : vector<2x32x128xf32>
    %309 = vector.shape_cast %2 : vector<2x32xf32> to vector<2x32x1xf32>
    %310 = vector.broadcast %309 : vector<2x32x1xf32> to vector<2x32x128xf32>
    %311 = arith.mulf %308, %310 : vector<2x32x128xf32>
    %cst_125 = arith.constant 0.000000e+00 : f32
    %312 = vector.broadcast %cst_125 : f32 to vector<2x32x128xf32>
    %313 = arith.maximumf %311, %312 : vector<2x32x128xf32>
    %cst_126 = arith.constant dense<0.000000e+00> : vector<128xf32>
    %314 = vector.multi_reduction <add>, %313, %cst_126 [0, 1] : vector<2x32x128xf32> to vector<128xf32>
    %315 = vector.shape_cast %314 : vector<128xf32> to vector<1x1x128xf32>
    %cst_127 = arith.constant 6.400000e+01 : f32
    %316 = vector.broadcast %cst_127 : f32 to vector<1x1x128xf32>
    %317 = arith.divf %315, %316 : vector<1x1x128xf32>
    %318 = vector.broadcast %317 : vector<1x1x128xf32> to vector<2x32x128xf32>
    %319 = arith.subf %313, %318 : vector<2x32x128xf32>
    %320 = arith.mulf %319, %319 : vector<2x32x128xf32>
    %cst_128 = arith.constant dense<0.000000e+00> : vector<128xf32>
    %321 = vector.multi_reduction <add>, %320, %cst_128 [0, 1] : vector<2x32x128xf32> to vector<128xf32>
    %322 = vector.shape_cast %321 : vector<128xf32> to vector<1x1x128xf32>
    %cst_129 = arith.constant 6.400000e+01 : f32
    %323 = vector.broadcast %cst_129 : f32 to vector<1x1x128xf32>
    %324 = arith.divf %322, %323 : vector<1x1x128xf32>
    %325 = vector.broadcast %317 : vector<1x1x128xf32> to vector<2x32x128xf32>
    %326 = arith.subf %313, %325 : vector<2x32x128xf32>
    %cst_130 = arith.constant 9.99999974E-6 : f32
    %327 = vector.broadcast %cst_130 : f32 to vector<1x1x128xf32>
    %328 = arith.addf %324, %327 : vector<1x1x128xf32>
    %329 = math.rsqrt %328 : vector<1x1x128xf32>
    %330 = vector.broadcast %329 : vector<1x1x128xf32> to vector<2x32x128xf32>
    %331 = arith.mulf %326, %330 : vector<2x32x128xf32>
    %c17 = arith.constant 17 : index
    %c0_131 = arith.constant 0 : index
    %332 = vector.load %arg5[%c17, %c0_131] : memref<56x128xf32, #tpu.memory_space<vmem>>, vector<1x128xf32>
    %333 = vector.shape_cast %332 : vector<1x128xf32> to vector<1x1x128xf32>
    %334 = vector.broadcast %333 : vector<1x1x128xf32> to vector<2x32x128xf32>
    %335 = arith.mulf %331, %334 : vector<2x32x128xf32>
    %c18 = arith.constant 18 : index
    %c0_132 = arith.constant 0 : index
    %336 = vector.load %arg5[%c18, %c0_132] : memref<56x128xf32, #tpu.memory_space<vmem>>, vector<1x128xf32>
    %337 = vector.shape_cast %336 : vector<1x128xf32> to vector<1x1x128xf32>
    %338 = vector.broadcast %337 : vector<1x1x128xf32> to vector<2x32x128xf32>
    %339 = arith.addf %335, %338 : vector<2x32x128xf32>
    %340 = arith.addf %231, %285 : vector<2x32x128xf32>
    %341 = arith.addf %340, %339 : vector<2x32x128xf32>
    %342 = vector.extract_strided_slice %177 {offsets = [0, 0, 0], sizes = [2, 32, 8], strides = [1, 1, 1]} : vector<2x32x128xf32> to vector<2x32x8xf32>
    %cst_133 = arith.constant dense<0xFF800000> : vector<2x32xf32>
    %343 = vector.multi_reduction <maximumf>, %342, %cst_133 [2] : vector<2x32x8xf32> to vector<2x32xf32>
    %344 = vector.shape_cast %343 : vector<2x32xf32> to vector<2x32x1xf32>
    %345 = vector.broadcast %344 : vector<2x32x1xf32> to vector<2x32x8xf32>
    %346 = arith.subf %342, %345 : vector<2x32x8xf32>
    %347 = math.exp %346 : vector<2x32x8xf32>
    %cst_134 = arith.constant dense<0.000000e+00> : vector<2x32xf32>
    %348 = vector.multi_reduction <add>, %347, %cst_134 [2] : vector<2x32x8xf32> to vector<2x32xf32>
    %349 = vector.shape_cast %348 : vector<2x32xf32> to vector<2x32x1xf32>
    %350 = tpu.reciprocal %349 {approx = true} : vector<2x32x1xf32> -> vector<2x32x1xf32>
    %351 = vector.broadcast %350 : vector<2x32x1xf32> to vector<2x32x8xf32>
    %352 = arith.mulf %347, %351 : vector<2x32x8xf32>
    %353 = vector.shape_cast %2 : vector<2x32xf32> to vector<2x32x1xf32>
    %354 = vector.broadcast %353 : vector<2x32x1xf32> to vector<2x32x128xf32>
    %355 = arith.mulf %341, %354 : vector<2x32x128xf32>
    %356 = vector.shape_cast %2 : vector<2x32xf32> to vector<2x32x1xf32>
    %357 = vector.broadcast %356 : vector<2x32x1xf32> to vector<2x32x8xf32>
    %358 = arith.mulf %352, %357 : vector<2x32x8xf32>
    "tpu.trace_start"() <{level = 10 : i32, message = "bnk,bnc->bkc"}> : () -> ()
    %cst_135 = arith.constant dense<0.000000e+00> : vector<2x8x128xf32>
    %359 = tpu.matmul %358, %355, %cst_135 {dimension_numbers = #tpu.dot_dimension_numbers<[1], [1], [2], [2], [0, 0, 0, 2, 1, 2], [0], [0]>} : vector<2x32x8xf32>, vector<2x32x128xf32>, vector<2x8x128xf32> -> vector<2x8x128xf32>
    "tpu.trace_stop"() : () -> ()
    "tpu.trace_start"() <{level = 10 : i32, message = "bnk,bnm->bkm"}> : () -> ()
    %cst_136 = arith.constant dense<0.000000e+00> : vector<2x8x32xf32>
    %360 = tpu.matmul %358, %1, %cst_136 {dimension_numbers = #tpu.dot_dimension_numbers<[1], [1], [2], [2], [0, 0, 0, 2, 1, 2], [0], [0]>} : vector<2x32x8xf32>, vector<2x32x32xf32>, vector<2x8x32xf32> -> vector<2x8x32xf32>
    "tpu.trace_stop"() : () -> ()
    "tpu.trace_start"() <{level = 10 : i32, message = "bkm,bmj->bkj"}> : () -> ()
    %cst_137 = arith.constant dense<0.000000e+00> : vector<2x8x8xf32>
    %361 = tpu.matmul %360, %358, %cst_137 {dimension_numbers = #tpu.dot_dimension_numbers<[2], [1], [1], [2], [0, 0, 0, 1, 1, 2], [0], [0]>} : vector<2x8x32xf32>, vector<2x32x8xf32>, vector<2x8x8xf32> -> vector<2x8x8xf32>
    "tpu.trace_stop"() : () -> ()
    "tpu.trace_start"() <{level = 10 : i32, message = "bnm,bmc->bnc"}> : () -> ()
    %cst_138 = arith.constant dense<0.000000e+00> : vector<2x8x128xf32>
    %362 = tpu.matmul %361, %359, %cst_138 {dimension_numbers = #tpu.dot_dimension_numbers<[2], [1], [1], [2], [0, 0, 0, 1, 1, 2], [0], [0]>} : vector<2x8x8xf32>, vector<2x8x128xf32>, vector<2x8x128xf32> -> vector<2x8x128xf32>
    "tpu.trace_stop"() : () -> ()
    %cst_139 = arith.constant dense<0.000000e+00> : vector<2x8xf32>
    %363 = vector.multi_reduction <add>, %361, %cst_139 [2] : vector<2x8x8xf32> to vector<2x8xf32>
    %364 = vector.shape_cast %363 : vector<2x8xf32> to vector<2x8x1xf32>
    %cst_140 = arith.constant 1.000000e+00 : f32
    %365 = vector.broadcast %cst_140 : f32 to vector<2x8x1xf32>
    %366 = arith.maximumf %364, %365 : vector<2x8x1xf32>
    %367 = tpu.reciprocal %366 {approx = true} : vector<2x8x1xf32> -> vector<2x8x1xf32>
    %368 = vector.broadcast %367 : vector<2x8x1xf32> to vector<2x8x128xf32>
    %369 = arith.mulf %362, %368 : vector<2x8x128xf32>
    %370 = vector.shape_cast %369 : vector<2x8x128xf32> to vector<16x128xf32>
    %c13_141 = arith.constant 13 : index
    %c0_142 = arith.constant 0 : index
    %c0_143 = arith.constant 0 : index
    %371 = vector.load %arg4[%c13_141, %c0_142, %c0_143] : memref<34x128x128xf32, #tpu.memory_space<vmem>>, vector<1x128x128xf32>
    %372 = vector.shape_cast %371 : vector<1x128x128xf32> to vector<128x128xf32>
    %cst_144 = arith.constant dense<0.000000e+00> : vector<16x128xf32>
    %373 = tpu.matmul %370, %372, %cst_144 {dimension_numbers = #tpu.dot_dimension_numbers<[1], [0], [0], [1], [0, 0, 1, 1], [], []>} : vector<16x128xf32>, vector<128x128xf32>, vector<16x128xf32> -> vector<16x128xf32>
    %374 = vector.shape_cast %373 : vector<16x128xf32> to vector<2x8x128xf32>
    %375 = vector.shape_cast %359 : vector<2x8x128xf32> to vector<16x128xf32>
    %c14_145 = arith.constant 14 : index
    %c0_146 = arith.constant 0 : index
    %c0_147 = arith.constant 0 : index
    %376 = vector.load %arg4[%c14_145, %c0_146, %c0_147] : memref<34x128x128xf32, #tpu.memory_space<vmem>>, vector<1x128x128xf32>
    %377 = vector.shape_cast %376 : vector<1x128x128xf32> to vector<128x128xf32>
    %cst_148 = arith.constant dense<0.000000e+00> : vector<16x128xf32>
    %378 = tpu.matmul %375, %377, %cst_148 {dimension_numbers = #tpu.dot_dimension_numbers<[1], [0], [0], [1], [0, 0, 1, 1], [], []>} : vector<16x128xf32>, vector<128x128xf32>, vector<16x128xf32> -> vector<16x128xf32>
    %379 = vector.shape_cast %378 : vector<16x128xf32> to vector<2x8x128xf32>
    %380 = arith.addf %374, %379 : vector<2x8x128xf32>
    %c19 = arith.constant 19 : index
    %c0_149 = arith.constant 0 : index
    %381 = vector.load %arg5[%c19, %c0_149] : memref<56x128xf32, #tpu.memory_space<vmem>>, vector<1x128xf32>
    %382 = vector.shape_cast %381 : vector<1x128xf32> to vector<1x1x128xf32>
    %383 = vector.broadcast %382 : vector<1x1x128xf32> to vector<2x8x128xf32>
    %384 = arith.addf %380, %383 : vector<2x8x128xf32>
    %cst_150 = arith.constant 0.000000e+00 : f32
    %385 = vector.broadcast %cst_150 : f32 to vector<2x8x128xf32>
    %386 = arith.maximumf %384, %385 : vector<2x8x128xf32>
    %cst_151 = arith.constant dense<0.000000e+00> : vector<128xf32>
    %387 = vector.multi_reduction <add>, %386, %cst_151 [0, 1] : vector<2x8x128xf32> to vector<128xf32>
    %388 = vector.shape_cast %387 : vector<128xf32> to vector<1x1x128xf32>
    %cst_152 = arith.constant 1.600000e+01 : f32
    %389 = vector.broadcast %cst_152 : f32 to vector<1x1x128xf32>
    %390 = arith.divf %388, %389 : vector<1x1x128xf32>
    %391 = vector.broadcast %390 : vector<1x1x128xf32> to vector<2x8x128xf32>
    %392 = arith.subf %386, %391 : vector<2x8x128xf32>
    %393 = arith.mulf %392, %392 : vector<2x8x128xf32>
    %cst_153 = arith.constant dense<0.000000e+00> : vector<128xf32>
    %394 = vector.multi_reduction <add>, %393, %cst_153 [0, 1] : vector<2x8x128xf32> to vector<128xf32>
    %395 = vector.shape_cast %394 : vector<128xf32> to vector<1x1x128xf32>
    %cst_154 = arith.constant 1.600000e+01 : f32
    %396 = vector.broadcast %cst_154 : f32 to vector<1x1x128xf32>
    %397 = arith.divf %395, %396 : vector<1x1x128xf32>
    %398 = vector.broadcast %390 : vector<1x1x128xf32> to vector<2x8x128xf32>
    %399 = arith.subf %386, %398 : vector<2x8x128xf32>
    %cst_155 = arith.constant 9.99999974E-6 : f32
    %400 = vector.broadcast %cst_155 : f32 to vector<1x1x128xf32>
    %401 = arith.addf %397, %400 : vector<1x1x128xf32>
    %402 = math.rsqrt %401 : vector<1x1x128xf32>
    %403 = vector.broadcast %402 : vector<1x1x128xf32> to vector<2x8x128xf32>
    %404 = arith.mulf %399, %403 : vector<2x8x128xf32>
    %c20 = arith.constant 20 : index
    %c0_156 = arith.constant 0 : index
    %405 = vector.load %arg5[%c20, %c0_156] : memref<56x128xf32, #tpu.memory_space<vmem>>, vector<1x128xf32>
    %406 = vector.shape_cast %405 : vector<1x128xf32> to vector<1x1x128xf32>
    %407 = vector.broadcast %406 : vector<1x1x128xf32> to vector<2x8x128xf32>
    %408 = arith.mulf %404, %407 : vector<2x8x128xf32>
    %c21 = arith.constant 21 : index
    %c0_157 = arith.constant 0 : index
    %409 = vector.load %arg5[%c21, %c0_157] : memref<56x128xf32, #tpu.memory_space<vmem>>, vector<1x128xf32>
    %410 = vector.shape_cast %409 : vector<1x128xf32> to vector<1x1x128xf32>
    %411 = vector.broadcast %410 : vector<1x1x128xf32> to vector<2x8x128xf32>
    %412 = arith.addf %408, %411 : vector<2x8x128xf32>
    "tpu.trace_start"() <{level = 10 : i32, message = "bnm,bmc->bnc"}> : () -> ()
    %cst_158 = arith.constant dense<0.000000e+00> : vector<2x8x128xf32>
    %413 = tpu.matmul %361, %412, %cst_158 {dimension_numbers = #tpu.dot_dimension_numbers<[2], [1], [1], [2], [0, 0, 0, 1, 1, 2], [0], [0]>} : vector<2x8x8xf32>, vector<2x8x128xf32>, vector<2x8x128xf32> -> vector<2x8x128xf32>
    "tpu.trace_stop"() : () -> ()
    %cst_159 = arith.constant dense<0.000000e+00> : vector<2x8xf32>
    %414 = vector.multi_reduction <add>, %361, %cst_159 [2] : vector<2x8x8xf32> to vector<2x8xf32>
    %415 = vector.shape_cast %414 : vector<2x8xf32> to vector<2x8x1xf32>
    %cst_160 = arith.constant 1.000000e+00 : f32
    %416 = vector.broadcast %cst_160 : f32 to vector<2x8x1xf32>
    %417 = arith.maximumf %415, %416 : vector<2x8x1xf32>
    %418 = tpu.reciprocal %417 {approx = true} : vector<2x8x1xf32> -> vector<2x8x1xf32>
    %419 = vector.broadcast %418 : vector<2x8x1xf32> to vector<2x8x128xf32>
    %420 = arith.mulf %413, %419 : vector<2x8x128xf32>
    %421 = vector.shape_cast %420 : vector<2x8x128xf32> to vector<16x128xf32>
    %c15_161 = arith.constant 15 : index
    %c0_162 = arith.constant 0 : index
    %c0_163 = arith.constant 0 : index
    %422 = vector.load %arg4[%c15_161, %c0_162, %c0_163] : memref<34x128x128xf32, #tpu.memory_space<vmem>>, vector<1x128x128xf32>
    %423 = vector.shape_cast %422 : vector<1x128x128xf32> to vector<128x128xf32>
    %cst_164 = arith.constant dense<0.000000e+00> : vector<16x128xf32>
    %424 = tpu.matmul %421, %423, %cst_164 {dimension_numbers = #tpu.dot_dimension_numbers<[1], [0], [0], [1], [0, 0, 1, 1], [], []>} : vector<16x128xf32>, vector<128x128xf32>, vector<16x128xf32> -> vector<16x128xf32>
    %425 = vector.shape_cast %424 : vector<16x128xf32> to vector<2x8x128xf32>
    %426 = vector.shape_cast %412 : vector<2x8x128xf32> to vector<16x128xf32>
    %c16_165 = arith.constant 16 : index
    %c0_166 = arith.constant 0 : index
    %c0_167 = arith.constant 0 : index
    %427 = vector.load %arg4[%c16_165, %c0_166, %c0_167] : memref<34x128x128xf32, #tpu.memory_space<vmem>>, vector<1x128x128xf32>
    %428 = vector.shape_cast %427 : vector<1x128x128xf32> to vector<128x128xf32>
    %cst_168 = arith.constant dense<0.000000e+00> : vector<16x128xf32>
    %429 = tpu.matmul %426, %428, %cst_168 {dimension_numbers = #tpu.dot_dimension_numbers<[1], [0], [0], [1], [0, 0, 1, 1], [], []>} : vector<16x128xf32>, vector<128x128xf32>, vector<16x128xf32> -> vector<16x128xf32>
    %430 = vector.shape_cast %429 : vector<16x128xf32> to vector<2x8x128xf32>
    %431 = arith.addf %425, %430 : vector<2x8x128xf32>
    %c22 = arith.constant 22 : index
    %c0_169 = arith.constant 0 : index
    %432 = vector.load %arg5[%c22, %c0_169] : memref<56x128xf32, #tpu.memory_space<vmem>>, vector<1x128xf32>
    %433 = vector.shape_cast %432 : vector<1x128xf32> to vector<1x1x128xf32>
    %434 = vector.broadcast %433 : vector<1x1x128xf32> to vector<2x8x128xf32>
    %435 = arith.addf %431, %434 : vector<2x8x128xf32>
    %cst_170 = arith.constant 0.000000e+00 : f32
    %436 = vector.broadcast %cst_170 : f32 to vector<2x8x128xf32>
    %437 = arith.maximumf %435, %436 : vector<2x8x128xf32>
    %cst_171 = arith.constant dense<0.000000e+00> : vector<128xf32>
    %438 = vector.multi_reduction <add>, %437, %cst_171 [0, 1] : vector<2x8x128xf32> to vector<128xf32>
    %439 = vector.shape_cast %438 : vector<128xf32> to vector<1x1x128xf32>
    %cst_172 = arith.constant 1.600000e+01 : f32
    %440 = vector.broadcast %cst_172 : f32 to vector<1x1x128xf32>
    %441 = arith.divf %439, %440 : vector<1x1x128xf32>
    %442 = vector.broadcast %441 : vector<1x1x128xf32> to vector<2x8x128xf32>
    %443 = arith.subf %437, %442 : vector<2x8x128xf32>
    %444 = arith.mulf %443, %443 : vector<2x8x128xf32>
    %cst_173 = arith.constant dense<0.000000e+00> : vector<128xf32>
    %445 = vector.multi_reduction <add>, %444, %cst_173 [0, 1] : vector<2x8x128xf32> to vector<128xf32>
    %446 = vector.shape_cast %445 : vector<128xf32> to vector<1x1x128xf32>
    %cst_174 = arith.constant 1.600000e+01 : f32
    %447 = vector.broadcast %cst_174 : f32 to vector<1x1x128xf32>
    %448 = arith.divf %446, %447 : vector<1x1x128xf32>
    %449 = vector.broadcast %441 : vector<1x1x128xf32> to vector<2x8x128xf32>
    %450 = arith.subf %437, %449 : vector<2x8x128xf32>
    %cst_175 = arith.constant 9.99999974E-6 : f32
    %451 = vector.broadcast %cst_175 : f32 to vector<1x1x128xf32>
    %452 = arith.addf %448, %451 : vector<1x1x128xf32>
    %453 = math.rsqrt %452 : vector<1x1x128xf32>
    %454 = vector.broadcast %453 : vector<1x1x128xf32> to vector<2x8x128xf32>
    %455 = arith.mulf %450, %454 : vector<2x8x128xf32>
    %c23 = arith.constant 23 : index
    %c0_176 = arith.constant 0 : index
    %456 = vector.load %arg5[%c23, %c0_176] : memref<56x128xf32, #tpu.memory_space<vmem>>, vector<1x128xf32>
    %457 = vector.shape_cast %456 : vector<1x128xf32> to vector<1x1x128xf32>
    %458 = vector.broadcast %457 : vector<1x1x128xf32> to vector<2x8x128xf32>
    %459 = arith.mulf %455, %458 : vector<2x8x128xf32>
    %c24 = arith.constant 24 : index
    %c0_177 = arith.constant 0 : index
    %460 = vector.load %arg5[%c24, %c0_177] : memref<56x128xf32, #tpu.memory_space<vmem>>, vector<1x128xf32>
    %461 = vector.shape_cast %460 : vector<1x128xf32> to vector<1x1x128xf32>
    %462 = vector.broadcast %461 : vector<1x1x128xf32> to vector<2x8x128xf32>
    %463 = arith.addf %459, %462 : vector<2x8x128xf32>
    "tpu.trace_start"() <{level = 10 : i32, message = "bnm,bmc->bnc"}> : () -> ()
    %cst_178 = arith.constant dense<0.000000e+00> : vector<2x8x128xf32>
    %464 = tpu.matmul %361, %463, %cst_178 {dimension_numbers = #tpu.dot_dimension_numbers<[2], [1], [1], [2], [0, 0, 0, 1, 1, 2], [0], [0]>} : vector<2x8x8xf32>, vector<2x8x128xf32>, vector<2x8x128xf32> -> vector<2x8x128xf32>
    "tpu.trace_stop"() : () -> ()
    %cst_179 = arith.constant dense<0.000000e+00> : vector<2x8xf32>
    %465 = vector.multi_reduction <add>, %361, %cst_179 [2] : vector<2x8x8xf32> to vector<2x8xf32>
    %466 = vector.shape_cast %465 : vector<2x8xf32> to vector<2x8x1xf32>
    %cst_180 = arith.constant 1.000000e+00 : f32
    %467 = vector.broadcast %cst_180 : f32 to vector<2x8x1xf32>
    %468 = arith.maximumf %466, %467 : vector<2x8x1xf32>
    %469 = tpu.reciprocal %468 {approx = true} : vector<2x8x1xf32> -> vector<2x8x1xf32>
    %470 = vector.broadcast %469 : vector<2x8x1xf32> to vector<2x8x128xf32>
    %471 = arith.mulf %464, %470 : vector<2x8x128xf32>
    %472 = vector.shape_cast %471 : vector<2x8x128xf32> to vector<16x128xf32>
    %c17_181 = arith.constant 17 : index
    %c0_182 = arith.constant 0 : index
    %c0_183 = arith.constant 0 : index
    %473 = vector.load %arg4[%c17_181, %c0_182, %c0_183] : memref<34x128x128xf32, #tpu.memory_space<vmem>>, vector<1x128x128xf32>
    %474 = vector.shape_cast %473 : vector<1x128x128xf32> to vector<128x128xf32>
    %cst_184 = arith.constant dense<0.000000e+00> : vector<16x128xf32>
    %475 = tpu.matmul %472, %474, %cst_184 {dimension_numbers = #tpu.dot_dimension_numbers<[1], [0], [0], [1], [0, 0, 1, 1], [], []>} : vector<16x128xf32>, vector<128x128xf32>, vector<16x128xf32> -> vector<16x128xf32>
    %476 = vector.shape_cast %475 : vector<16x128xf32> to vector<2x8x128xf32>
    %477 = vector.shape_cast %463 : vector<2x8x128xf32> to vector<16x128xf32>
    %c18_185 = arith.constant 18 : index
    %c0_186 = arith.constant 0 : index
    %c0_187 = arith.constant 0 : index
    %478 = vector.load %arg4[%c18_185, %c0_186, %c0_187] : memref<34x128x128xf32, #tpu.memory_space<vmem>>, vector<1x128x128xf32>
    %479 = vector.shape_cast %478 : vector<1x128x128xf32> to vector<128x128xf32>
    %cst_188 = arith.constant dense<0.000000e+00> : vector<16x128xf32>
    %480 = tpu.matmul %477, %479, %cst_188 {dimension_numbers = #tpu.dot_dimension_numbers<[1], [0], [0], [1], [0, 0, 1, 1], [], []>} : vector<16x128xf32>, vector<128x128xf32>, vector<16x128xf32> -> vector<16x128xf32>
    %481 = vector.shape_cast %480 : vector<16x128xf32> to vector<2x8x128xf32>
    %482 = arith.addf %476, %481 : vector<2x8x128xf32>
    %c25 = arith.constant 25 : index
    %c0_189 = arith.constant 0 : index
    %483 = vector.load %arg5[%c25, %c0_189] : memref<56x128xf32, #tpu.memory_space<vmem>>, vector<1x128xf32>
    %484 = vector.shape_cast %483 : vector<1x128xf32> to vector<1x1x128xf32>
    %485 = vector.broadcast %484 : vector<1x1x128xf32> to vector<2x8x128xf32>
    %486 = arith.addf %482, %485 : vector<2x8x128xf32>
    %cst_190 = arith.constant 0.000000e+00 : f32
    %487 = vector.broadcast %cst_190 : f32 to vector<2x8x128xf32>
    %488 = arith.maximumf %486, %487 : vector<2x8x128xf32>
    %cst_191 = arith.constant dense<0.000000e+00> : vector<128xf32>
    %489 = vector.multi_reduction <add>, %488, %cst_191 [0, 1] : vector<2x8x128xf32> to vector<128xf32>
    %490 = vector.shape_cast %489 : vector<128xf32> to vector<1x1x128xf32>
    %cst_192 = arith.constant 1.600000e+01 : f32
    %491 = vector.broadcast %cst_192 : f32 to vector<1x1x128xf32>
    %492 = arith.divf %490, %491 : vector<1x1x128xf32>
    %493 = vector.broadcast %492 : vector<1x1x128xf32> to vector<2x8x128xf32>
    %494 = arith.subf %488, %493 : vector<2x8x128xf32>
    %495 = arith.mulf %494, %494 : vector<2x8x128xf32>
    %cst_193 = arith.constant dense<0.000000e+00> : vector<128xf32>
    %496 = vector.multi_reduction <add>, %495, %cst_193 [0, 1] : vector<2x8x128xf32> to vector<128xf32>
    %497 = vector.shape_cast %496 : vector<128xf32> to vector<1x1x128xf32>
    %cst_194 = arith.constant 1.600000e+01 : f32
    %498 = vector.broadcast %cst_194 : f32 to vector<1x1x128xf32>
    %499 = arith.divf %497, %498 : vector<1x1x128xf32>
    %500 = vector.broadcast %492 : vector<1x1x128xf32> to vector<2x8x128xf32>
    %501 = arith.subf %488, %500 : vector<2x8x128xf32>
    %cst_195 = arith.constant 9.99999974E-6 : f32
    %502 = vector.broadcast %cst_195 : f32 to vector<1x1x128xf32>
    %503 = arith.addf %499, %502 : vector<1x1x128xf32>
    %504 = math.rsqrt %503 : vector<1x1x128xf32>
    %505 = vector.broadcast %504 : vector<1x1x128xf32> to vector<2x8x128xf32>
    %506 = arith.mulf %501, %505 : vector<2x8x128xf32>
    %c26 = arith.constant 26 : index
    %c0_196 = arith.constant 0 : index
    %507 = vector.load %arg5[%c26, %c0_196] : memref<56x128xf32, #tpu.memory_space<vmem>>, vector<1x128xf32>
    %508 = vector.shape_cast %507 : vector<1x128xf32> to vector<1x1x128xf32>
    %509 = vector.broadcast %508 : vector<1x1x128xf32> to vector<2x8x128xf32>
    %510 = arith.mulf %506, %509 : vector<2x8x128xf32>
    %c27 = arith.constant 27 : index
    %c0_197 = arith.constant 0 : index
    %511 = vector.load %arg5[%c27, %c0_197] : memref<56x128xf32, #tpu.memory_space<vmem>>, vector<1x128xf32>
    %512 = vector.shape_cast %511 : vector<1x128xf32> to vector<1x1x128xf32>
    %513 = vector.broadcast %512 : vector<1x1x128xf32> to vector<2x8x128xf32>
    %514 = arith.addf %510, %513 : vector<2x8x128xf32>
    %515 = arith.addf %412, %463 : vector<2x8x128xf32>
    %516 = arith.addf %515, %514 : vector<2x8x128xf32>
    %517 = vector.shape_cast %516 : vector<2x8x128xf32> to vector<16x128xf32>
    %c19_198 = arith.constant 19 : index
    %c0_199 = arith.constant 0 : index
    %c0_200 = arith.constant 0 : index
    %518 = vector.load %arg4[%c19_198, %c0_199, %c0_200] : memref<34x128x128xf32, #tpu.memory_space<vmem>>, vector<1x128x128xf32>
    %519 = vector.shape_cast %518 : vector<1x128x128xf32> to vector<128x128xf32>
    %cst_201 = arith.constant dense<0.000000e+00> : vector<16x128xf32>
    %520 = tpu.matmul %517, %519, %cst_201 {dimension_numbers = #tpu.dot_dimension_numbers<[1], [0], [0], [1], [0, 0, 1, 1], [], []>} : vector<16x128xf32>, vector<128x128xf32>, vector<16x128xf32> -> vector<16x128xf32>
    %521 = vector.shape_cast %520 : vector<16x128xf32> to vector<2x8x128xf32>
    %c28 = arith.constant 28 : index
    %c0_202 = arith.constant 0 : index
    %522 = vector.load %arg5[%c28, %c0_202] : memref<56x128xf32, #tpu.memory_space<vmem>>, vector<1x128xf32>
    %523 = vector.shape_cast %522 : vector<1x128xf32> to vector<1x1x128xf32>
    %524 = vector.broadcast %523 : vector<1x1x128xf32> to vector<2x8x128xf32>
    %525 = arith.addf %521, %524 : vector<2x8x128xf32>
    %cst_203 = arith.constant 0.000000e+00 : f32
    %526 = vector.broadcast %cst_203 : f32 to vector<2x8x128xf32>
    %527 = arith.maximumf %525, %526 : vector<2x8x128xf32>
    "tpu.trace_start"() <{level = 10 : i32, message = "bnm,bmc->bnc"}> : () -> ()
    %cst_204 = arith.constant dense<0.000000e+00> : vector<2x8x128xf32>
    %528 = tpu.matmul %361, %359, %cst_204 {dimension_numbers = #tpu.dot_dimension_numbers<[2], [1], [1], [2], [0, 0, 0, 1, 1, 2], [0], [0]>} : vector<2x8x8xf32>, vector<2x8x128xf32>, vector<2x8x128xf32> -> vector<2x8x128xf32>
    "tpu.trace_stop"() : () -> ()
    %cst_205 = arith.constant dense<0.000000e+00> : vector<2x8xf32>
    %529 = vector.multi_reduction <add>, %361, %cst_205 [2] : vector<2x8x8xf32> to vector<2x8xf32>
    %530 = vector.shape_cast %529 : vector<2x8xf32> to vector<2x8x1xf32>
    %cst_206 = arith.constant 1.000000e+00 : f32
    %531 = vector.broadcast %cst_206 : f32 to vector<2x8x1xf32>
    %532 = arith.maximumf %530, %531 : vector<2x8x1xf32>
    %533 = tpu.reciprocal %532 {approx = true} : vector<2x8x1xf32> -> vector<2x8x1xf32>
    %534 = vector.broadcast %533 : vector<2x8x1xf32> to vector<2x8x128xf32>
    %535 = arith.mulf %528, %534 : vector<2x8x128xf32>
    %536 = vector.shape_cast %535 : vector<2x8x128xf32> to vector<16x128xf32>
    %c20_207 = arith.constant 20 : index
    %c0_208 = arith.constant 0 : index
    %c0_209 = arith.constant 0 : index
    %537 = vector.load %arg4[%c20_207, %c0_208, %c0_209] : memref<34x128x128xf32, #tpu.memory_space<vmem>>, vector<1x128x128xf32>
    %538 = vector.shape_cast %537 : vector<1x128x128xf32> to vector<128x128xf32>
    %cst_210 = arith.constant dense<0.000000e+00> : vector<16x128xf32>
    %539 = tpu.matmul %536, %538, %cst_210 {dimension_numbers = #tpu.dot_dimension_numbers<[1], [0], [0], [1], [0, 0, 1, 1], [], []>} : vector<16x128xf32>, vector<128x128xf32>, vector<16x128xf32> -> vector<16x128xf32>
    %540 = vector.shape_cast %539 : vector<16x128xf32> to vector<2x8x128xf32>
    %541 = vector.shape_cast %359 : vector<2x8x128xf32> to vector<16x128xf32>
    %c21_211 = arith.constant 21 : index
    %c0_212 = arith.constant 0 : index
    %c0_213 = arith.constant 0 : index
    %542 = vector.load %arg4[%c21_211, %c0_212, %c0_213] : memref<34x128x128xf32, #tpu.memory_space<vmem>>, vector<1x128x128xf32>
    %543 = vector.shape_cast %542 : vector<1x128x128xf32> to vector<128x128xf32>
    %cst_214 = arith.constant dense<0.000000e+00> : vector<16x128xf32>
    %544 = tpu.matmul %541, %543, %cst_214 {dimension_numbers = #tpu.dot_dimension_numbers<[1], [0], [0], [1], [0, 0, 1, 1], [], []>} : vector<16x128xf32>, vector<128x128xf32>, vector<16x128xf32> -> vector<16x128xf32>
    %545 = vector.shape_cast %544 : vector<16x128xf32> to vector<2x8x128xf32>
    %546 = arith.addf %540, %545 : vector<2x8x128xf32>
    %c29 = arith.constant 29 : index
    %c0_215 = arith.constant 0 : index
    %547 = vector.load %arg5[%c29, %c0_215] : memref<56x128xf32, #tpu.memory_space<vmem>>, vector<1x128xf32>
    %548 = vector.shape_cast %547 : vector<1x128xf32> to vector<1x1x128xf32>
    %549 = vector.broadcast %548 : vector<1x1x128xf32> to vector<2x8x128xf32>
    %550 = arith.addf %546, %549 : vector<2x8x128xf32>
    %cst_216 = arith.constant 0.000000e+00 : f32
    %551 = vector.broadcast %cst_216 : f32 to vector<2x8x128xf32>
    %552 = arith.maximumf %550, %551 : vector<2x8x128xf32>
    %cst_217 = arith.constant dense<0.000000e+00> : vector<128xf32>
    %553 = vector.multi_reduction <add>, %552, %cst_217 [0, 1] : vector<2x8x128xf32> to vector<128xf32>
    %554 = vector.shape_cast %553 : vector<128xf32> to vector<1x1x128xf32>
    %cst_218 = arith.constant 1.600000e+01 : f32
    %555 = vector.broadcast %cst_218 : f32 to vector<1x1x128xf32>
    %556 = arith.divf %554, %555 : vector<1x1x128xf32>
    %557 = vector.broadcast %556 : vector<1x1x128xf32> to vector<2x8x128xf32>
    %558 = arith.subf %552, %557 : vector<2x8x128xf32>
    %559 = arith.mulf %558, %558 : vector<2x8x128xf32>
    %cst_219 = arith.constant dense<0.000000e+00> : vector<128xf32>
    %560 = vector.multi_reduction <add>, %559, %cst_219 [0, 1] : vector<2x8x128xf32> to vector<128xf32>
    %561 = vector.shape_cast %560 : vector<128xf32> to vector<1x1x128xf32>
    %cst_220 = arith.constant 1.600000e+01 : f32
    %562 = vector.broadcast %cst_220 : f32 to vector<1x1x128xf32>
    %563 = arith.divf %561, %562 : vector<1x1x128xf32>
    %564 = vector.broadcast %556 : vector<1x1x128xf32> to vector<2x8x128xf32>
    %565 = arith.subf %552, %564 : vector<2x8x128xf32>
    %cst_221 = arith.constant 9.99999974E-6 : f32
    %566 = vector.broadcast %cst_221 : f32 to vector<1x1x128xf32>
    %567 = arith.addf %563, %566 : vector<1x1x128xf32>
    %568 = math.rsqrt %567 : vector<1x1x128xf32>
    %569 = vector.broadcast %568 : vector<1x1x128xf32> to vector<2x8x128xf32>
    %570 = arith.mulf %565, %569 : vector<2x8x128xf32>
    %c30 = arith.constant 30 : index
    %c0_222 = arith.constant 0 : index
    %571 = vector.load %arg5[%c30, %c0_222] : memref<56x128xf32, #tpu.memory_space<vmem>>, vector<1x128xf32>
    %572 = vector.shape_cast %571 : vector<1x128xf32> to vector<1x1x128xf32>
    %573 = vector.broadcast %572 : vector<1x1x128xf32> to vector<2x8x128xf32>
    %574 = arith.mulf %570, %573 : vector<2x8x128xf32>
    %c31 = arith.constant 31 : index
    %c0_223 = arith.constant 0 : index
    %575 = vector.load %arg5[%c31, %c0_223] : memref<56x128xf32, #tpu.memory_space<vmem>>, vector<1x128xf32>
    %576 = vector.shape_cast %575 : vector<1x128xf32> to vector<1x1x128xf32>
    %577 = vector.broadcast %576 : vector<1x1x128xf32> to vector<2x8x128xf32>
    %578 = arith.addf %574, %577 : vector<2x8x128xf32>
    "tpu.trace_start"() <{level = 10 : i32, message = "bnm,bmc->bnc"}> : () -> ()
    %cst_224 = arith.constant dense<0.000000e+00> : vector<2x8x128xf32>
    %579 = tpu.matmul %361, %578, %cst_224 {dimension_numbers = #tpu.dot_dimension_numbers<[2], [1], [1], [2], [0, 0, 0, 1, 1, 2], [0], [0]>} : vector<2x8x8xf32>, vector<2x8x128xf32>, vector<2x8x128xf32> -> vector<2x8x128xf32>
    "tpu.trace_stop"() : () -> ()
    %cst_225 = arith.constant dense<0.000000e+00> : vector<2x8xf32>
    %580 = vector.multi_reduction <add>, %361, %cst_225 [2] : vector<2x8x8xf32> to vector<2x8xf32>
    %581 = vector.shape_cast %580 : vector<2x8xf32> to vector<2x8x1xf32>
    %cst_226 = arith.constant 1.000000e+00 : f32
    %582 = vector.broadcast %cst_226 : f32 to vector<2x8x1xf32>
    %583 = arith.maximumf %581, %582 : vector<2x8x1xf32>
    %584 = tpu.reciprocal %583 {approx = true} : vector<2x8x1xf32> -> vector<2x8x1xf32>
    %585 = vector.broadcast %584 : vector<2x8x1xf32> to vector<2x8x128xf32>
    %586 = arith.mulf %579, %585 : vector<2x8x128xf32>
    %587 = vector.shape_cast %586 : vector<2x8x128xf32> to vector<16x128xf32>
    %c22_227 = arith.constant 22 : index
    %c0_228 = arith.constant 0 : index
    %c0_229 = arith.constant 0 : index
    %588 = vector.load %arg4[%c22_227, %c0_228, %c0_229] : memref<34x128x128xf32, #tpu.memory_space<vmem>>, vector<1x128x128xf32>
    %589 = vector.shape_cast %588 : vector<1x128x128xf32> to vector<128x128xf32>
    %cst_230 = arith.constant dense<0.000000e+00> : vector<16x128xf32>
    %590 = tpu.matmul %587, %589, %cst_230 {dimension_numbers = #tpu.dot_dimension_numbers<[1], [0], [0], [1], [0, 0, 1, 1], [], []>} : vector<16x128xf32>, vector<128x128xf32>, vector<16x128xf32> -> vector<16x128xf32>
    %591 = vector.shape_cast %590 : vector<16x128xf32> to vector<2x8x128xf32>
    %592 = vector.shape_cast %578 : vector<2x8x128xf32> to vector<16x128xf32>
    %c23_231 = arith.constant 23 : index
    %c0_232 = arith.constant 0 : index
    %c0_233 = arith.constant 0 : index
    %593 = vector.load %arg4[%c23_231, %c0_232, %c0_233] : memref<34x128x128xf32, #tpu.memory_space<vmem>>, vector<1x128x128xf32>
    %594 = vector.shape_cast %593 : vector<1x128x128xf32> to vector<128x128xf32>
    %cst_234 = arith.constant dense<0.000000e+00> : vector<16x128xf32>
    %595 = tpu.matmul %592, %594, %cst_234 {dimension_numbers = #tpu.dot_dimension_numbers<[1], [0], [0], [1], [0, 0, 1, 1], [], []>} : vector<16x128xf32>, vector<128x128xf32>, vector<16x128xf32> -> vector<16x128xf32>
    %596 = vector.shape_cast %595 : vector<16x128xf32> to vector<2x8x128xf32>
    %597 = arith.addf %591, %596 : vector<2x8x128xf32>
    %c32 = arith.constant 32 : index
    %c0_235 = arith.constant 0 : index
    %598 = vector.load %arg5[%c32, %c0_235] : memref<56x128xf32, #tpu.memory_space<vmem>>, vector<1x128xf32>
    %599 = vector.shape_cast %598 : vector<1x128xf32> to vector<1x1x128xf32>
    %600 = vector.broadcast %599 : vector<1x1x128xf32> to vector<2x8x128xf32>
    %601 = arith.addf %597, %600 : vector<2x8x128xf32>
    %cst_236 = arith.constant 0.000000e+00 : f32
    %602 = vector.broadcast %cst_236 : f32 to vector<2x8x128xf32>
    %603 = arith.maximumf %601, %602 : vector<2x8x128xf32>
    %cst_237 = arith.constant dense<0.000000e+00> : vector<128xf32>
    %604 = vector.multi_reduction <add>, %603, %cst_237 [0, 1] : vector<2x8x128xf32> to vector<128xf32>
    %605 = vector.shape_cast %604 : vector<128xf32> to vector<1x1x128xf32>
    %cst_238 = arith.constant 1.600000e+01 : f32
    %606 = vector.broadcast %cst_238 : f32 to vector<1x1x128xf32>
    %607 = arith.divf %605, %606 : vector<1x1x128xf32>
    %608 = vector.broadcast %607 : vector<1x1x128xf32> to vector<2x8x128xf32>
    %609 = arith.subf %603, %608 : vector<2x8x128xf32>
    %610 = arith.mulf %609, %609 : vector<2x8x128xf32>
    %cst_239 = arith.constant dense<0.000000e+00> : vector<128xf32>
    %611 = vector.multi_reduction <add>, %610, %cst_239 [0, 1] : vector<2x8x128xf32> to vector<128xf32>
    %612 = vector.shape_cast %611 : vector<128xf32> to vector<1x1x128xf32>
    %cst_240 = arith.constant 1.600000e+01 : f32
    %613 = vector.broadcast %cst_240 : f32 to vector<1x1x128xf32>
    %614 = arith.divf %612, %613 : vector<1x1x128xf32>
    %615 = vector.broadcast %607 : vector<1x1x128xf32> to vector<2x8x128xf32>
    %616 = arith.subf %603, %615 : vector<2x8x128xf32>
    %cst_241 = arith.constant 9.99999974E-6 : f32
    %617 = vector.broadcast %cst_241 : f32 to vector<1x1x128xf32>
    %618 = arith.addf %614, %617 : vector<1x1x128xf32>
    %619 = math.rsqrt %618 : vector<1x1x128xf32>
    %620 = vector.broadcast %619 : vector<1x1x128xf32> to vector<2x8x128xf32>
    %621 = arith.mulf %616, %620 : vector<2x8x128xf32>
    %c33 = arith.constant 33 : index
    %c0_242 = arith.constant 0 : index
    %622 = vector.load %arg5[%c33, %c0_242] : memref<56x128xf32, #tpu.memory_space<vmem>>, vector<1x128xf32>
    %623 = vector.shape_cast %622 : vector<1x128xf32> to vector<1x1x128xf32>
    %624 = vector.broadcast %623 : vector<1x1x128xf32> to vector<2x8x128xf32>
    %625 = arith.mulf %621, %624 : vector<2x8x128xf32>
    %c34 = arith.constant 34 : index
    %c0_243 = arith.constant 0 : index
    %626 = vector.load %arg5[%c34, %c0_243] : memref<56x128xf32, #tpu.memory_space<vmem>>, vector<1x128xf32>
    %627 = vector.shape_cast %626 : vector<1x128xf32> to vector<1x1x128xf32>
    %628 = vector.broadcast %627 : vector<1x1x128xf32> to vector<2x8x128xf32>
    %629 = arith.addf %625, %628 : vector<2x8x128xf32>
    "tpu.trace_start"() <{level = 10 : i32, message = "bnm,bmc->bnc"}> : () -> ()
    %cst_244 = arith.constant dense<0.000000e+00> : vector<2x8x128xf32>
    %630 = tpu.matmul %361, %629, %cst_244 {dimension_numbers = #tpu.dot_dimension_numbers<[2], [1], [1], [2], [0, 0, 0, 1, 1, 2], [0], [0]>} : vector<2x8x8xf32>, vector<2x8x128xf32>, vector<2x8x128xf32> -> vector<2x8x128xf32>
    "tpu.trace_stop"() : () -> ()
    %cst_245 = arith.constant dense<0.000000e+00> : vector<2x8xf32>
    %631 = vector.multi_reduction <add>, %361, %cst_245 [2] : vector<2x8x8xf32> to vector<2x8xf32>
    %632 = vector.shape_cast %631 : vector<2x8xf32> to vector<2x8x1xf32>
    %cst_246 = arith.constant 1.000000e+00 : f32
    %633 = vector.broadcast %cst_246 : f32 to vector<2x8x1xf32>
    %634 = arith.maximumf %632, %633 : vector<2x8x1xf32>
    %635 = tpu.reciprocal %634 {approx = true} : vector<2x8x1xf32> -> vector<2x8x1xf32>
    %636 = vector.broadcast %635 : vector<2x8x1xf32> to vector<2x8x128xf32>
    %637 = arith.mulf %630, %636 : vector<2x8x128xf32>
    %638 = vector.shape_cast %637 : vector<2x8x128xf32> to vector<16x128xf32>
    %c24_247 = arith.constant 24 : index
    %c0_248 = arith.constant 0 : index
    %c0_249 = arith.constant 0 : index
    %639 = vector.load %arg4[%c24_247, %c0_248, %c0_249] : memref<34x128x128xf32, #tpu.memory_space<vmem>>, vector<1x128x128xf32>
    %640 = vector.shape_cast %639 : vector<1x128x128xf32> to vector<128x128xf32>
    %cst_250 = arith.constant dense<0.000000e+00> : vector<16x128xf32>
    %641 = tpu.matmul %638, %640, %cst_250 {dimension_numbers = #tpu.dot_dimension_numbers<[1], [0], [0], [1], [0, 0, 1, 1], [], []>} : vector<16x128xf32>, vector<128x128xf32>, vector<16x128xf32> -> vector<16x128xf32>
    %642 = vector.shape_cast %641 : vector<16x128xf32> to vector<2x8x128xf32>
    %643 = vector.shape_cast %629 : vector<2x8x128xf32> to vector<16x128xf32>
    %c25_251 = arith.constant 25 : index
    %c0_252 = arith.constant 0 : index
    %c0_253 = arith.constant 0 : index
    %644 = vector.load %arg4[%c25_251, %c0_252, %c0_253] : memref<34x128x128xf32, #tpu.memory_space<vmem>>, vector<1x128x128xf32>
    %645 = vector.shape_cast %644 : vector<1x128x128xf32> to vector<128x128xf32>
    %cst_254 = arith.constant dense<0.000000e+00> : vector<16x128xf32>
    %646 = tpu.matmul %643, %645, %cst_254 {dimension_numbers = #tpu.dot_dimension_numbers<[1], [0], [0], [1], [0, 0, 1, 1], [], []>} : vector<16x128xf32>, vector<128x128xf32>, vector<16x128xf32> -> vector<16x128xf32>
    %647 = vector.shape_cast %646 : vector<16x128xf32> to vector<2x8x128xf32>
    %648 = arith.addf %642, %647 : vector<2x8x128xf32>
    %c35 = arith.constant 35 : index
    %c0_255 = arith.constant 0 : index
    %649 = vector.load %arg5[%c35, %c0_255] : memref<56x128xf32, #tpu.memory_space<vmem>>, vector<1x128xf32>
    %650 = vector.shape_cast %649 : vector<1x128xf32> to vector<1x1x128xf32>
    %651 = vector.broadcast %650 : vector<1x1x128xf32> to vector<2x8x128xf32>
    %652 = arith.addf %648, %651 : vector<2x8x128xf32>
    %cst_256 = arith.constant 0.000000e+00 : f32
    %653 = vector.broadcast %cst_256 : f32 to vector<2x8x128xf32>
    %654 = arith.maximumf %652, %653 : vector<2x8x128xf32>
    %cst_257 = arith.constant dense<0.000000e+00> : vector<128xf32>
    %655 = vector.multi_reduction <add>, %654, %cst_257 [0, 1] : vector<2x8x128xf32> to vector<128xf32>
    %656 = vector.shape_cast %655 : vector<128xf32> to vector<1x1x128xf32>
    %cst_258 = arith.constant 1.600000e+01 : f32
    %657 = vector.broadcast %cst_258 : f32 to vector<1x1x128xf32>
    %658 = arith.divf %656, %657 : vector<1x1x128xf32>
    %659 = vector.broadcast %658 : vector<1x1x128xf32> to vector<2x8x128xf32>
    %660 = arith.subf %654, %659 : vector<2x8x128xf32>
    %661 = arith.mulf %660, %660 : vector<2x8x128xf32>
    %cst_259 = arith.constant dense<0.000000e+00> : vector<128xf32>
    %662 = vector.multi_reduction <add>, %661, %cst_259 [0, 1] : vector<2x8x128xf32> to vector<128xf32>
    %663 = vector.shape_cast %662 : vector<128xf32> to vector<1x1x128xf32>
    %cst_260 = arith.constant 1.600000e+01 : f32
    %664 = vector.broadcast %cst_260 : f32 to vector<1x1x128xf32>
    %665 = arith.divf %663, %664 : vector<1x1x128xf32>
    %666 = vector.broadcast %658 : vector<1x1x128xf32> to vector<2x8x128xf32>
    %667 = arith.subf %654, %666 : vector<2x8x128xf32>
    %cst_261 = arith.constant 9.99999974E-6 : f32
    %668 = vector.broadcast %cst_261 : f32 to vector<1x1x128xf32>
    %669 = arith.addf %665, %668 : vector<1x1x128xf32>
    %670 = math.rsqrt %669 : vector<1x1x128xf32>
    %671 = vector.broadcast %670 : vector<1x1x128xf32> to vector<2x8x128xf32>
    %672 = arith.mulf %667, %671 : vector<2x8x128xf32>
    %c36 = arith.constant 36 : index
    %c0_262 = arith.constant 0 : index
    %673 = vector.load %arg5[%c36, %c0_262] : memref<56x128xf32, #tpu.memory_space<vmem>>, vector<1x128xf32>
    %674 = vector.shape_cast %673 : vector<1x128xf32> to vector<1x1x128xf32>
    %675 = vector.broadcast %674 : vector<1x1x128xf32> to vector<2x8x128xf32>
    %676 = arith.mulf %672, %675 : vector<2x8x128xf32>
    %c37 = arith.constant 37 : index
    %c0_263 = arith.constant 0 : index
    %677 = vector.load %arg5[%c37, %c0_263] : memref<56x128xf32, #tpu.memory_space<vmem>>, vector<1x128xf32>
    %678 = vector.shape_cast %677 : vector<1x128xf32> to vector<1x1x128xf32>
    %679 = vector.broadcast %678 : vector<1x1x128xf32> to vector<2x8x128xf32>
    %680 = arith.addf %676, %679 : vector<2x8x128xf32>
    %681 = arith.addf %578, %629 : vector<2x8x128xf32>
    %682 = arith.addf %681, %680 : vector<2x8x128xf32>
    %683 = vector.extract_strided_slice %527 {offsets = [0, 0, 0], sizes = [2, 8, 2], strides = [1, 1, 1]} : vector<2x8x128xf32> to vector<2x8x2xf32>
    %cst_264 = arith.constant dense<0xFF800000> : vector<2x8xf32>
    %684 = vector.multi_reduction <maximumf>, %683, %cst_264 [2] : vector<2x8x2xf32> to vector<2x8xf32>
    %685 = vector.shape_cast %684 : vector<2x8xf32> to vector<2x8x1xf32>
    %686 = vector.broadcast %685 : vector<2x8x1xf32> to vector<2x8x2xf32>
    %687 = arith.subf %683, %686 : vector<2x8x2xf32>
    %688 = math.exp %687 : vector<2x8x2xf32>
    %cst_265 = arith.constant dense<0.000000e+00> : vector<2x8xf32>
    %689 = vector.multi_reduction <add>, %688, %cst_265 [2] : vector<2x8x2xf32> to vector<2x8xf32>
    %690 = vector.shape_cast %689 : vector<2x8xf32> to vector<2x8x1xf32>
    %691 = tpu.reciprocal %690 {approx = true} : vector<2x8x1xf32> -> vector<2x8x1xf32>
    %692 = vector.broadcast %691 : vector<2x8x1xf32> to vector<2x8x2xf32>
    %693 = arith.mulf %688, %692 : vector<2x8x2xf32>
    "tpu.trace_start"() <{level = 10 : i32, message = "bnk,bnc->bkc"}> : () -> ()
    %cst_266 = arith.constant dense<0.000000e+00> : vector<2x2x128xf32>
    %694 = tpu.matmul %693, %682, %cst_266 {dimension_numbers = #tpu.dot_dimension_numbers<[1], [1], [2], [2], [0, 0, 0, 2, 1, 2], [0], [0]>} : vector<2x8x2xf32>, vector<2x8x128xf32>, vector<2x2x128xf32> -> vector<2x2x128xf32>
    "tpu.trace_stop"() : () -> ()
    "tpu.trace_start"() <{level = 10 : i32, message = "bnk,bnm->bkm"}> : () -> ()
    %cst_267 = arith.constant dense<0.000000e+00> : vector<2x2x8xf32>
    %695 = tpu.matmul %693, %361, %cst_267 {dimension_numbers = #tpu.dot_dimension_numbers<[1], [1], [2], [2], [0, 0, 0, 2, 1, 2], [0], [0]>} : vector<2x8x2xf32>, vector<2x8x8xf32>, vector<2x2x8xf32> -> vector<2x2x8xf32>
    "tpu.trace_stop"() : () -> ()
    "tpu.trace_start"() <{level = 10 : i32, message = "bkm,bmj->bkj"}> : () -> ()
    %cst_268 = arith.constant dense<0.000000e+00> : vector<2x2x2xf32>
    %696 = tpu.matmul %695, %693, %cst_268 {dimension_numbers = #tpu.dot_dimension_numbers<[2], [1], [1], [2], [0, 0, 0, 1, 1, 2], [0], [0]>} : vector<2x2x8xf32>, vector<2x8x2xf32>, vector<2x2x2xf32> -> vector<2x2x2xf32>
    "tpu.trace_stop"() : () -> ()
    "tpu.trace_start"() <{level = 10 : i32, message = "bnm,bmc->bnc"}> : () -> ()
    %cst_269 = arith.constant dense<0.000000e+00> : vector<2x2x128xf32>
    %697 = tpu.matmul %696, %694, %cst_269 {dimension_numbers = #tpu.dot_dimension_numbers<[2], [1], [1], [2], [0, 0, 0, 1, 1, 2], [0], [0]>} : vector<2x2x2xf32>, vector<2x2x128xf32>, vector<2x2x128xf32> -> vector<2x2x128xf32>
    "tpu.trace_stop"() : () -> ()
    %cst_270 = arith.constant dense<0.000000e+00> : vector<2x2xf32>
    %698 = vector.multi_reduction <add>, %696, %cst_270 [2] : vector<2x2x2xf32> to vector<2x2xf32>
    %699 = vector.shape_cast %698 : vector<2x2xf32> to vector<2x2x1xf32>
    %cst_271 = arith.constant 1.000000e+00 : f32
    %700 = vector.broadcast %cst_271 : f32 to vector<2x2x1xf32>
    %701 = arith.maximumf %699, %700 : vector<2x2x1xf32>
    %702 = tpu.reciprocal %701 {approx = true} : vector<2x2x1xf32> -> vector<2x2x1xf32>
    %703 = vector.broadcast %702 : vector<2x2x1xf32> to vector<2x2x128xf32>
    %704 = arith.mulf %697, %703 : vector<2x2x128xf32>
    %705 = vector.shape_cast %704 : vector<2x2x128xf32> to vector<4x128xf32>
    %c26_272 = arith.constant 26 : index
    %c0_273 = arith.constant 0 : index
    %c0_274 = arith.constant 0 : index
    %706 = vector.load %arg4[%c26_272, %c0_273, %c0_274] : memref<34x128x128xf32, #tpu.memory_space<vmem>>, vector<1x128x128xf32>
    %707 = vector.shape_cast %706 : vector<1x128x128xf32> to vector<128x128xf32>
    %cst_275 = arith.constant dense<0.000000e+00> : vector<4x128xf32>
    %708 = tpu.matmul %705, %707, %cst_275 {dimension_numbers = #tpu.dot_dimension_numbers<[1], [0], [0], [1], [0, 0, 1, 1], [], []>} : vector<4x128xf32>, vector<128x128xf32>, vector<4x128xf32> -> vector<4x128xf32>
    %709 = vector.shape_cast %708 : vector<4x128xf32> to vector<2x2x128xf32>
    %710 = vector.shape_cast %694 : vector<2x2x128xf32> to vector<4x128xf32>
    %c27_276 = arith.constant 27 : index
    %c0_277 = arith.constant 0 : index
    %c0_278 = arith.constant 0 : index
    %711 = vector.load %arg4[%c27_276, %c0_277, %c0_278] : memref<34x128x128xf32, #tpu.memory_space<vmem>>, vector<1x128x128xf32>
    %712 = vector.shape_cast %711 : vector<1x128x128xf32> to vector<128x128xf32>
    %cst_279 = arith.constant dense<0.000000e+00> : vector<4x128xf32>
    %713 = tpu.matmul %710, %712, %cst_279 {dimension_numbers = #tpu.dot_dimension_numbers<[1], [0], [0], [1], [0, 0, 1, 1], [], []>} : vector<4x128xf32>, vector<128x128xf32>, vector<4x128xf32> -> vector<4x128xf32>
    %714 = vector.shape_cast %713 : vector<4x128xf32> to vector<2x2x128xf32>
    %715 = arith.addf %709, %714 : vector<2x2x128xf32>
    %c38 = arith.constant 38 : index
    %c0_280 = arith.constant 0 : index
    %716 = vector.load %arg5[%c38, %c0_280] : memref<56x128xf32, #tpu.memory_space<vmem>>, vector<1x128xf32>
    %717 = vector.shape_cast %716 : vector<1x128xf32> to vector<1x1x128xf32>
    %718 = vector.broadcast %717 : vector<1x1x128xf32> to vector<2x2x128xf32>
    %719 = arith.addf %715, %718 : vector<2x2x128xf32>
    %cst_281 = arith.constant 0.000000e+00 : f32
    %720 = vector.broadcast %cst_281 : f32 to vector<2x2x128xf32>
    %721 = arith.maximumf %719, %720 : vector<2x2x128xf32>
    %cst_282 = arith.constant dense<0.000000e+00> : vector<128xf32>
    %722 = vector.multi_reduction <add>, %721, %cst_282 [0, 1] : vector<2x2x128xf32> to vector<128xf32>
    %723 = vector.shape_cast %722 : vector<128xf32> to vector<1x1x128xf32>
    %cst_283 = arith.constant 4.000000e+00 : f32
    %724 = vector.broadcast %cst_283 : f32 to vector<1x1x128xf32>
    %725 = arith.divf %723, %724 : vector<1x1x128xf32>
    %726 = vector.broadcast %725 : vector<1x1x128xf32> to vector<2x2x128xf32>
    %727 = arith.subf %721, %726 : vector<2x2x128xf32>
    %728 = arith.mulf %727, %727 : vector<2x2x128xf32>
    %cst_284 = arith.constant dense<0.000000e+00> : vector<128xf32>
    %729 = vector.multi_reduction <add>, %728, %cst_284 [0, 1] : vector<2x2x128xf32> to vector<128xf32>
    %730 = vector.shape_cast %729 : vector<128xf32> to vector<1x1x128xf32>
    %cst_285 = arith.constant 4.000000e+00 : f32
    %731 = vector.broadcast %cst_285 : f32 to vector<1x1x128xf32>
    %732 = arith.divf %730, %731 : vector<1x1x128xf32>
    %733 = vector.broadcast %725 : vector<1x1x128xf32> to vector<2x2x128xf32>
    %734 = arith.subf %721, %733 : vector<2x2x128xf32>
    %cst_286 = arith.constant 9.99999974E-6 : f32
    %735 = vector.broadcast %cst_286 : f32 to vector<1x1x128xf32>
    %736 = arith.addf %732, %735 : vector<1x1x128xf32>
    %737 = math.rsqrt %736 : vector<1x1x128xf32>
    %738 = vector.broadcast %737 : vector<1x1x128xf32> to vector<2x2x128xf32>
    %739 = arith.mulf %734, %738 : vector<2x2x128xf32>
    %c39 = arith.constant 39 : index
    %c0_287 = arith.constant 0 : index
    %740 = vector.load %arg5[%c39, %c0_287] : memref<56x128xf32, #tpu.memory_space<vmem>>, vector<1x128xf32>
    %741 = vector.shape_cast %740 : vector<1x128xf32> to vector<1x1x128xf32>
    %742 = vector.broadcast %741 : vector<1x1x128xf32> to vector<2x2x128xf32>
    %743 = arith.mulf %739, %742 : vector<2x2x128xf32>
    %c40 = arith.constant 40 : index
    %c0_288 = arith.constant 0 : index
    %744 = vector.load %arg5[%c40, %c0_288] : memref<56x128xf32, #tpu.memory_space<vmem>>, vector<1x128xf32>
    %745 = vector.shape_cast %744 : vector<1x128xf32> to vector<1x1x128xf32>
    %746 = vector.broadcast %745 : vector<1x1x128xf32> to vector<2x2x128xf32>
    %747 = arith.addf %743, %746 : vector<2x2x128xf32>
    "tpu.trace_start"() <{level = 10 : i32, message = "bnm,bmc->bnc"}> : () -> ()
    %cst_289 = arith.constant dense<0.000000e+00> : vector<2x2x128xf32>
    %748 = tpu.matmul %696, %747, %cst_289 {dimension_numbers = #tpu.dot_dimension_numbers<[2], [1], [1], [2], [0, 0, 0, 1, 1, 2], [0], [0]>} : vector<2x2x2xf32>, vector<2x2x128xf32>, vector<2x2x128xf32> -> vector<2x2x128xf32>
    "tpu.trace_stop"() : () -> ()
    %cst_290 = arith.constant dense<0.000000e+00> : vector<2x2xf32>
    %749 = vector.multi_reduction <add>, %696, %cst_290 [2] : vector<2x2x2xf32> to vector<2x2xf32>
    %750 = vector.shape_cast %749 : vector<2x2xf32> to vector<2x2x1xf32>
    %cst_291 = arith.constant 1.000000e+00 : f32
    %751 = vector.broadcast %cst_291 : f32 to vector<2x2x1xf32>
    %752 = arith.maximumf %750, %751 : vector<2x2x1xf32>
    %753 = tpu.reciprocal %752 {approx = true} : vector<2x2x1xf32> -> vector<2x2x1xf32>
    %754 = vector.broadcast %753 : vector<2x2x1xf32> to vector<2x2x128xf32>
    %755 = arith.mulf %748, %754 : vector<2x2x128xf32>
    %756 = vector.shape_cast %755 : vector<2x2x128xf32> to vector<4x128xf32>
    %c28_292 = arith.constant 28 : index
    %c0_293 = arith.constant 0 : index
    %c0_294 = arith.constant 0 : index
    %757 = vector.load %arg4[%c28_292, %c0_293, %c0_294] : memref<34x128x128xf32, #tpu.memory_space<vmem>>, vector<1x128x128xf32>
    %758 = vector.shape_cast %757 : vector<1x128x128xf32> to vector<128x128xf32>
    %cst_295 = arith.constant dense<0.000000e+00> : vector<4x128xf32>
    %759 = tpu.matmul %756, %758, %cst_295 {dimension_numbers = #tpu.dot_dimension_numbers<[1], [0], [0], [1], [0, 0, 1, 1], [], []>} : vector<4x128xf32>, vector<128x128xf32>, vector<4x128xf32> -> vector<4x128xf32>
    %760 = vector.shape_cast %759 : vector<4x128xf32> to vector<2x2x128xf32>
    %761 = vector.shape_cast %747 : vector<2x2x128xf32> to vector<4x128xf32>
    %c29_296 = arith.constant 29 : index
    %c0_297 = arith.constant 0 : index
    %c0_298 = arith.constant 0 : index
    %762 = vector.load %arg4[%c29_296, %c0_297, %c0_298] : memref<34x128x128xf32, #tpu.memory_space<vmem>>, vector<1x128x128xf32>
    %763 = vector.shape_cast %762 : vector<1x128x128xf32> to vector<128x128xf32>
    %cst_299 = arith.constant dense<0.000000e+00> : vector<4x128xf32>
    %764 = tpu.matmul %761, %763, %cst_299 {dimension_numbers = #tpu.dot_dimension_numbers<[1], [0], [0], [1], [0, 0, 1, 1], [], []>} : vector<4x128xf32>, vector<128x128xf32>, vector<4x128xf32> -> vector<4x128xf32>
    %765 = vector.shape_cast %764 : vector<4x128xf32> to vector<2x2x128xf32>
    %766 = arith.addf %760, %765 : vector<2x2x128xf32>
    %c41 = arith.constant 41 : index
    %c0_300 = arith.constant 0 : index
    %767 = vector.load %arg5[%c41, %c0_300] : memref<56x128xf32, #tpu.memory_space<vmem>>, vector<1x128xf32>
    %768 = vector.shape_cast %767 : vector<1x128xf32> to vector<1x1x128xf32>
    %769 = vector.broadcast %768 : vector<1x1x128xf32> to vector<2x2x128xf32>
    %770 = arith.addf %766, %769 : vector<2x2x128xf32>
    %cst_301 = arith.constant 0.000000e+00 : f32
    %771 = vector.broadcast %cst_301 : f32 to vector<2x2x128xf32>
    %772 = arith.maximumf %770, %771 : vector<2x2x128xf32>
    %cst_302 = arith.constant dense<0.000000e+00> : vector<128xf32>
    %773 = vector.multi_reduction <add>, %772, %cst_302 [0, 1] : vector<2x2x128xf32> to vector<128xf32>
    %774 = vector.shape_cast %773 : vector<128xf32> to vector<1x1x128xf32>
    %cst_303 = arith.constant 4.000000e+00 : f32
    %775 = vector.broadcast %cst_303 : f32 to vector<1x1x128xf32>
    %776 = arith.divf %774, %775 : vector<1x1x128xf32>
    %777 = vector.broadcast %776 : vector<1x1x128xf32> to vector<2x2x128xf32>
    %778 = arith.subf %772, %777 : vector<2x2x128xf32>
    %779 = arith.mulf %778, %778 : vector<2x2x128xf32>
    %cst_304 = arith.constant dense<0.000000e+00> : vector<128xf32>
    %780 = vector.multi_reduction <add>, %779, %cst_304 [0, 1] : vector<2x2x128xf32> to vector<128xf32>
    %781 = vector.shape_cast %780 : vector<128xf32> to vector<1x1x128xf32>
    %cst_305 = arith.constant 4.000000e+00 : f32
    %782 = vector.broadcast %cst_305 : f32 to vector<1x1x128xf32>
    %783 = arith.divf %781, %782 : vector<1x1x128xf32>
    %784 = vector.broadcast %776 : vector<1x1x128xf32> to vector<2x2x128xf32>
    %785 = arith.subf %772, %784 : vector<2x2x128xf32>
    %cst_306 = arith.constant 9.99999974E-6 : f32
    %786 = vector.broadcast %cst_306 : f32 to vector<1x1x128xf32>
    %787 = arith.addf %783, %786 : vector<1x1x128xf32>
    %788 = math.rsqrt %787 : vector<1x1x128xf32>
    %789 = vector.broadcast %788 : vector<1x1x128xf32> to vector<2x2x128xf32>
    %790 = arith.mulf %785, %789 : vector<2x2x128xf32>
    %c42 = arith.constant 42 : index
    %c0_307 = arith.constant 0 : index
    %791 = vector.load %arg5[%c42, %c0_307] : memref<56x128xf32, #tpu.memory_space<vmem>>, vector<1x128xf32>
    %792 = vector.shape_cast %791 : vector<1x128xf32> to vector<1x1x128xf32>
    %793 = vector.broadcast %792 : vector<1x1x128xf32> to vector<2x2x128xf32>
    %794 = arith.mulf %790, %793 : vector<2x2x128xf32>
    %c43 = arith.constant 43 : index
    %c0_308 = arith.constant 0 : index
    %795 = vector.load %arg5[%c43, %c0_308] : memref<56x128xf32, #tpu.memory_space<vmem>>, vector<1x128xf32>
    %796 = vector.shape_cast %795 : vector<1x128xf32> to vector<1x1x128xf32>
    %797 = vector.broadcast %796 : vector<1x1x128xf32> to vector<2x2x128xf32>
    %798 = arith.addf %794, %797 : vector<2x2x128xf32>
    "tpu.trace_start"() <{level = 10 : i32, message = "bnm,bmc->bnc"}> : () -> ()
    %cst_309 = arith.constant dense<0.000000e+00> : vector<2x2x128xf32>
    %799 = tpu.matmul %696, %798, %cst_309 {dimension_numbers = #tpu.dot_dimension_numbers<[2], [1], [1], [2], [0, 0, 0, 1, 1, 2], [0], [0]>} : vector<2x2x2xf32>, vector<2x2x128xf32>, vector<2x2x128xf32> -> vector<2x2x128xf32>
    "tpu.trace_stop"() : () -> ()
    %cst_310 = arith.constant dense<0.000000e+00> : vector<2x2xf32>
    %800 = vector.multi_reduction <add>, %696, %cst_310 [2] : vector<2x2x2xf32> to vector<2x2xf32>
    %801 = vector.shape_cast %800 : vector<2x2xf32> to vector<2x2x1xf32>
    %cst_311 = arith.constant 1.000000e+00 : f32
    %802 = vector.broadcast %cst_311 : f32 to vector<2x2x1xf32>
    %803 = arith.maximumf %801, %802 : vector<2x2x1xf32>
    %804 = tpu.reciprocal %803 {approx = true} : vector<2x2x1xf32> -> vector<2x2x1xf32>
    %805 = vector.broadcast %804 : vector<2x2x1xf32> to vector<2x2x128xf32>
    %806 = arith.mulf %799, %805 : vector<2x2x128xf32>
    %807 = vector.shape_cast %806 : vector<2x2x128xf32> to vector<4x128xf32>
    %c30_312 = arith.constant 30 : index
    %c0_313 = arith.constant 0 : index
    %c0_314 = arith.constant 0 : index
    %808 = vector.load %arg4[%c30_312, %c0_313, %c0_314] : memref<34x128x128xf32, #tpu.memory_space<vmem>>, vector<1x128x128xf32>
    %809 = vector.shape_cast %808 : vector<1x128x128xf32> to vector<128x128xf32>
    %cst_315 = arith.constant dense<0.000000e+00> : vector<4x128xf32>
    %810 = tpu.matmul %807, %809, %cst_315 {dimension_numbers = #tpu.dot_dimension_numbers<[1], [0], [0], [1], [0, 0, 1, 1], [], []>} : vector<4x128xf32>, vector<128x128xf32>, vector<4x128xf32> -> vector<4x128xf32>
    %811 = vector.shape_cast %810 : vector<4x128xf32> to vector<2x2x128xf32>
    %812 = vector.shape_cast %798 : vector<2x2x128xf32> to vector<4x128xf32>
    %c31_316 = arith.constant 31 : index
    %c0_317 = arith.constant 0 : index
    %c0_318 = arith.constant 0 : index
    %813 = vector.load %arg4[%c31_316, %c0_317, %c0_318] : memref<34x128x128xf32, #tpu.memory_space<vmem>>, vector<1x128x128xf32>
    %814 = vector.shape_cast %813 : vector<1x128x128xf32> to vector<128x128xf32>
    %cst_319 = arith.constant dense<0.000000e+00> : vector<4x128xf32>
    %815 = tpu.matmul %812, %814, %cst_319 {dimension_numbers = #tpu.dot_dimension_numbers<[1], [0], [0], [1], [0, 0, 1, 1], [], []>} : vector<4x128xf32>, vector<128x128xf32>, vector<4x128xf32> -> vector<4x128xf32>
    %816 = vector.shape_cast %815 : vector<4x128xf32> to vector<2x2x128xf32>
    %817 = arith.addf %811, %816 : vector<2x2x128xf32>
    %c44 = arith.constant 44 : index
    %c0_320 = arith.constant 0 : index
    %818 = vector.load %arg5[%c44, %c0_320] : memref<56x128xf32, #tpu.memory_space<vmem>>, vector<1x128xf32>
    %819 = vector.shape_cast %818 : vector<1x128xf32> to vector<1x1x128xf32>
    %820 = vector.broadcast %819 : vector<1x1x128xf32> to vector<2x2x128xf32>
    %821 = arith.addf %817, %820 : vector<2x2x128xf32>
    %cst_321 = arith.constant 0.000000e+00 : f32
    %822 = vector.broadcast %cst_321 : f32 to vector<2x2x128xf32>
    %823 = arith.maximumf %821, %822 : vector<2x2x128xf32>
    %cst_322 = arith.constant dense<0.000000e+00> : vector<128xf32>
    %824 = vector.multi_reduction <add>, %823, %cst_322 [0, 1] : vector<2x2x128xf32> to vector<128xf32>
    %825 = vector.shape_cast %824 : vector<128xf32> to vector<1x1x128xf32>
    %cst_323 = arith.constant 4.000000e+00 : f32
    %826 = vector.broadcast %cst_323 : f32 to vector<1x1x128xf32>
    %827 = arith.divf %825, %826 : vector<1x1x128xf32>
    %828 = vector.broadcast %827 : vector<1x1x128xf32> to vector<2x2x128xf32>
    %829 = arith.subf %823, %828 : vector<2x2x128xf32>
    %830 = arith.mulf %829, %829 : vector<2x2x128xf32>
    %cst_324 = arith.constant dense<0.000000e+00> : vector<128xf32>
    %831 = vector.multi_reduction <add>, %830, %cst_324 [0, 1] : vector<2x2x128xf32> to vector<128xf32>
    %832 = vector.shape_cast %831 : vector<128xf32> to vector<1x1x128xf32>
    %cst_325 = arith.constant 4.000000e+00 : f32
    %833 = vector.broadcast %cst_325 : f32 to vector<1x1x128xf32>
    %834 = arith.divf %832, %833 : vector<1x1x128xf32>
    %835 = vector.broadcast %827 : vector<1x1x128xf32> to vector<2x2x128xf32>
    %836 = arith.subf %823, %835 : vector<2x2x128xf32>
    %cst_326 = arith.constant 9.99999974E-6 : f32
    %837 = vector.broadcast %cst_326 : f32 to vector<1x1x128xf32>
    %838 = arith.addf %834, %837 : vector<1x1x128xf32>
    %839 = math.rsqrt %838 : vector<1x1x128xf32>
    %840 = vector.broadcast %839 : vector<1x1x128xf32> to vector<2x2x128xf32>
    %841 = arith.mulf %836, %840 : vector<2x2x128xf32>
    %c45 = arith.constant 45 : index
    %c0_327 = arith.constant 0 : index
    %842 = vector.load %arg5[%c45, %c0_327] : memref<56x128xf32, #tpu.memory_space<vmem>>, vector<1x128xf32>
    %843 = vector.shape_cast %842 : vector<1x128xf32> to vector<1x1x128xf32>
    %844 = vector.broadcast %843 : vector<1x1x128xf32> to vector<2x2x128xf32>
    %845 = arith.mulf %841, %844 : vector<2x2x128xf32>
    %c46 = arith.constant 46 : index
    %c0_328 = arith.constant 0 : index
    %846 = vector.load %arg5[%c46, %c0_328] : memref<56x128xf32, #tpu.memory_space<vmem>>, vector<1x128xf32>
    %847 = vector.shape_cast %846 : vector<1x128xf32> to vector<1x1x128xf32>
    %848 = vector.broadcast %847 : vector<1x1x128xf32> to vector<2x2x128xf32>
    %849 = arith.addf %845, %848 : vector<2x2x128xf32>
    %850 = arith.addf %747, %798 : vector<2x2x128xf32>
    %851 = arith.addf %850, %849 : vector<2x2x128xf32>
    %cst_329 = arith.constant dense<0.000000e+00> : vector<2x128xf32>
    %852 = vector.multi_reduction <add>, %851, %cst_329 [1] : vector<2x2x128xf32> to vector<2x128xf32>
    %cst_330 = arith.constant 2.000000e+00 : f32
    %853 = vector.broadcast %cst_330 : f32 to vector<2x128xf32>
    %854 = arith.divf %852, %853 : vector<2x128xf32>
    %c32_331 = arith.constant 32 : index
    %c0_332 = arith.constant 0 : index
    %c0_333 = arith.constant 0 : index
    %855 = vector.load %arg4[%c32_331, %c0_332, %c0_333] : memref<34x128x128xf32, #tpu.memory_space<vmem>>, vector<1x128x128xf32>
    %856 = vector.shape_cast %855 : vector<1x128x128xf32> to vector<128x128xf32>
    %cst_334 = arith.constant dense<0.000000e+00> : vector<2x128xf32>
    %857 = tpu.matmul %854, %856, %cst_334 {dimension_numbers = #tpu.dot_dimension_numbers<[1], [0], [0], [1], [0, 0, 1, 1], [], []>} : vector<2x128xf32>, vector<128x128xf32>, vector<2x128xf32> -> vector<2x128xf32>
    %c47 = arith.constant 47 : index
    %c0_335 = arith.constant 0 : index
    %858 = vector.load %arg5[%c47, %c0_335] : memref<56x128xf32, #tpu.memory_space<vmem>>, vector<1x128xf32>
    %859 = vector.broadcast %858 : vector<1x128xf32> to vector<2x128xf32>
    %860 = arith.addf %857, %859 : vector<2x128xf32>
    %cst_336 = arith.constant 0.000000e+00 : f32
    %861 = vector.broadcast %cst_336 : f32 to vector<2x128xf32>
    %862 = arith.maximumf %860, %861 : vector<2x128xf32>
    %c33_337 = arith.constant 33 : index
    %c0_338 = arith.constant 0 : index
    %c0_339 = arith.constant 0 : index
    %863 = vector.load %arg4[%c33_337, %c0_338, %c0_339] : memref<34x128x128xf32, #tpu.memory_space<vmem>>, vector<1x128x128xf32>
    %864 = vector.shape_cast %863 : vector<1x128x128xf32> to vector<128x128xf32>
    %cst_340 = arith.constant dense<0.000000e+00> : vector<2x128xf32>
    %865 = tpu.matmul %862, %864, %cst_340 {dimension_numbers = #tpu.dot_dimension_numbers<[1], [0], [0], [1], [0, 0, 1, 1], [], []>} : vector<2x128xf32>, vector<128x128xf32>, vector<2x128xf32> -> vector<2x128xf32>
    %c48 = arith.constant 48 : index
    %c0_341 = arith.constant 0 : index
    %866 = vector.load %arg5[%c48, %c0_341] : memref<56x128xf32, #tpu.memory_space<vmem>>, vector<1x128xf32>
    %867 = vector.broadcast %866 : vector<1x128xf32> to vector<2x128xf32>
    %868 = arith.addf %865, %867 : vector<2x128xf32>
    %869 = vector.extract_strided_slice %868 {offsets = [0, 0], sizes = [2, 3], strides = [1, 1]} : vector<2x128xf32> to vector<2x3xf32>
    %cst_342 = arith.constant dense<0xFF800000> : vector<2xf32>
    %870 = vector.multi_reduction <maximumf>, %869, %cst_342 [1] : vector<2x3xf32> to vector<2xf32>
    %871 = vector.shape_cast %870 : vector<2xf32> to vector<2x1xf32>
    %872 = vector.broadcast %871 : vector<2x1xf32> to vector<2x3xf32>
    %873 = arith.subf %869, %872 : vector<2x3xf32>
    %874 = math.exp %873 : vector<2x3xf32>
    %cst_343 = arith.constant dense<0.000000e+00> : vector<2xf32>
    %875 = vector.multi_reduction <add>, %874, %cst_343 [1] : vector<2x3xf32> to vector<2xf32>
    %876 = vector.shape_cast %875 : vector<2xf32> to vector<2x1xf32>
    %877 = math.log %876 : vector<2x1xf32>
    %878 = vector.broadcast %877 : vector<2x1xf32> to vector<2x3xf32>
    %879 = arith.subf %873, %878 : vector<2x3xf32>
    %c0_344 = arith.constant 0 : index
    %c0_345 = arith.constant 0 : index
    %880 = vector.load %arg6[%c0_344, %c0_345] : memref<2x3xf32, #tpu.memory_space<vmem>>, vector<2x3xf32>
    tpu.vector_store %arg6[%c0_344, %c0_345], %879 {strides = array<i32>} : memref<2x3xf32, #tpu.memory_space<vmem>>, vector<2x3xf32>,
    return
  }
  func.func @transform_0(%arg0: i32) -> (i32, i32, i32) {
    %c0_i32 = arith.constant 0 : i32
    %c0_i32_0 = arith.constant 0 : i32
    %c0_i32_1 = arith.constant 0 : i32
    %c0_i32_2 = arith.constant 0 : i32
    return %c0_i32, %c0_i32_0, %c0_i32_1 : i32, i32, i32
  }
  func.func @transform_1(%arg0: i32) -> (i32, i32, i32) {
    %c0_i32 = arith.constant 0 : i32
    %c0_i32_0 = arith.constant 0 : i32
    %c0_i32_1 = arith.constant 0 : i32
    %c0_i32_2 = arith.constant 0 : i32
    return %c0_i32, %c0_i32_0, %c0_i32_1 : i32, i32, i32
  }
  func.func @transform_2(%arg0: i32) -> (i32, i32) {
    %c0_i32 = arith.constant 0 : i32
    %c0_i32_0 = arith.constant 0 : i32
    %c0_i32_1 = arith.constant 0 : i32
    return %c0_i32, %c0_i32_0 : i32, i32
  }
  func.func @transform_3(%arg0: i32) -> (i32, i32, i32) {
    %c0_i32 = arith.constant 0 : i32
    %c0_i32_0 = arith.constant 0 : i32
    %c0_i32_1 = arith.constant 0 : i32
    %c0_i32_2 = arith.constant 0 : i32
    return %c0_i32, %c0_i32_0, %c0_i32_1 : i32, i32, i32
  }
  func.func @transform_4(%arg0: i32) -> (i32, i32) {
    %c0_i32 = arith.constant 0 : i32
    %c0_i32_0 = arith.constant 0 : i32
    %c0_i32_1 = arith.constant 0 : i32
    return %c0_i32, %c0_i32_0 : i32, i32
  }
  func.func @transform_5(%arg0: i32) -> (i32, i32) {
    %c0_i32 = arith.constant 0 : i32
    %c0_i32_0 = arith.constant 0 : i32
    %c0_i32_1 = arith.constant 0 : i32
    return %c0_i32, %c0_i32_0 : i32, i32
  }
}

</mosaic_0001>

<llo_original>
// kernel: tpu_custom_call.1
$region0: #{tpu_custom_call.1}
  #allocation0 [shape = 'u32[]', space=smem, size = 0x4, offset = 0x4, fixed_abs, tag = 'smem constant byte address 0x4 - core index']
  #allocation1 [shape = 'u32[144,128]{1,0:T(1,128)}', space=vmem, size = 0x12000, scoped, tag = 'internal scratch']
  %s0 = inlined_call_operand.hbm [shape: f32[2,32,128], index: 0, kind: input, shape index: {}]
  %s1 = inlined_call_operand.hbm [shape: f32[2,32,32], index: 1, kind: input, shape index: {}]
  %s2 = inlined_call_operand.hbm [shape: f32[2,32], index: 2, kind: input, shape index: {}]
  %s3 = inlined_call_operand.hbm [shape: f32[34,128,128], index: 3, kind: input, shape index: {}]
  %s4 = inlined_call_operand.hbm [shape: f32[56,128], index: 4, kind: input, shape index: {}]
  %s5 = inlined_call_operand.hbm [shape: f32[2,3], index: 5, kind: output, shape index: {}]
  %s6 = sld [smem:[#allocation0]]
  $region50: #{tpu_custom_call.1} parent=0
    _
  %s8 = ssub.s32 1, %s6
  %s9 = scalar_select 0, %s8, %s6
  $region1: #{tpu_custom_call.1} parent=0
    #allocation2 [shape = 'u8[32768]{0}', space=vmem, size = 0x8000, scoped, tag = 'input window, operand 0, single buffered']
    #allocation3 [shape = 's32[1]{0}', space=sflag, size = 0x4, scoped, tag = 'scoped memory for tpu_custom_call.1']
    #allocation4 [shape = 's32[1]{0}', space=sflag, size = 0x4, scoped, tag = 'scoped memory for tpu_custom_call.1']
    #allocation5 [shape = 'u8[32768]{0}', space=vmem, size = 0x8000, scoped, tag = 'input window, operand 1, single buffered']
    #allocation6 [shape = 's32[1]{0}', space=sflag, size = 0x4, scoped, tag = 'scoped memory for tpu_custom_call.1']
    #allocation7 [shape = 'u8[1024]{0}', space=vmem, size = 0x400, scoped, tag = 'input window, operand 2, single buffered']
    #allocation8 [shape = 'u8[2228224]{0}', space=vmem, size = 0x220000, scoped, tag = 'input window, operand 3, single buffered']
    #allocation9 [shape = 's32[1]{0}', space=sflag, size = 0x4, scoped, tag = 'scoped memory for tpu_custom_call.1']
    #allocation10 [shape = 'u8[28672]{0}', space=vmem, size = 0x7000, scoped, tag = 'input window, operand 4, single buffered']
    #allocation11 [shape = 'u8[1024]{0}', space=vmem, size = 0x400, scoped, tag = 'output window, operand 0, single buffered']
    %10 = vsyncpa [#allocation3], 0
    %11 = vsyncpa [#allocation6], 0
    %12 = vsyncpa [#allocation9], 0
    %13 = vsyncpa [#allocation4], 0
    // Predicated region
    $region2: #{tpu_custom_call.1} parent=1 // pred_check
      _
    $region3: #{tpu_custom_call.1} parent=1 // pred_check_branch
      %15 = sbr.rel (0) target = $region5
    $region4: #{tpu_custom_call.1} parent=1 // pred_region
      %s17 = ssub.s32 1024, 1024
      %18 = vsyncadd [#allocation3], %s17
      %s19 = sshll.u32 [#allocation2], 4
      %s20 = int_to_ptr.vmem [resolvable:$true] %s19
      %25 = dma.hbm_to_vmem [thread:$0]  %s0, 1024, %s20, [#allocation3], 128, 128, 8
    $region5: #{tpu_custom_call.1} parent=1 // pred_fallthru
      _
    // Predicated region
    $region6: #{tpu_custom_call.1} parent=1 // pred_check
      _
    $region7: #{tpu_custom_call.1} parent=1 // pred_check_branch
      %27 = sbr.rel (0) target = $region9
    $region8: #{tpu_custom_call.1} parent=1 // pred_region
      %s29 = ssub.s32 1024, 1024
      %30 = vsyncadd [#allocation6], %s29
      %s31 = sshll.u32 [#allocation5], 4
      %s32 = int_to_ptr.vmem [resolvable:$true] %s31
      %37 = dma.hbm_to_vmem [thread:$0]  %s1, 1024, %s32, [#allocation6], 128, 128, 8
    $region9: #{tpu_custom_call.1} parent=1 // pred_fallthru
      _
    // Predicated region
    $region10: #{tpu_custom_call.1} parent=1 // pred_check
      _
    $region11: #{tpu_custom_call.1} parent=1 // pred_check_branch
      %39 = sbr.rel (0) target = $region13
    $region12: #{tpu_custom_call.1} parent=1 // pred_region
      %s41 = ssub.s32 32, 32
      %42 = vsyncadd [#allocation6], %s41
      %s44 = sshll.u32 [#allocation7], 4
      %s45 = int_to_ptr.vmem [resolvable:$true] %s44
      %47 = dma.hbm_to_vmem [thread:$0]  %s2, 32, %s45, [#allocation6]
    $region13: #{tpu_custom_call.1} parent=1 // pred_fallthru
      _
    // Predicated region
    $region14: #{tpu_custom_call.1} parent=1 // pred_check
      _
    $region15: #{tpu_custom_call.1} parent=1 // pred_check_branch
      %49 = sbr.rel (0) target = $region17
    $region16: #{tpu_custom_call.1} parent=1 // pred_region
      %s51 = ssub.s32 69632, 69632
      %52 = vsyncadd [#allocation9], %s51
      %s53 = sshll.u32 [#allocation8], 4
      %s54 = int_to_ptr.vmem [resolvable:$true] %s53
      %59 = dma.hbm_to_vmem [thread:$0]  %s3, 69632, %s54, [#allocation9], 128, 128, 8
    $region17: #{tpu_custom_call.1} parent=1 // pred_fallthru
      _
    // Predicated region
    $region18: #{tpu_custom_call.1} parent=1 // pred_check
      _
    $region19: #{tpu_custom_call.1} parent=1 // pred_check_branch
      %61 = sbr.rel (0) target = $region21
    $region20: #{tpu_custom_call.1} parent=1 // pred_region
      %s63 = ssub.s32 896, 896
      %64 = vsyncadd [#allocation9], %s63
      %s65 = sshll.u32 [#allocation10], 4
      %s66 = int_to_ptr.vmem [resolvable:$true] %s65
      %71 = dma.hbm_to_vmem [thread:$0]  %s4, 896, %s66, [#allocation9], 128, 128, 8
    $region21: #{tpu_custom_call.1} parent=1 // pred_fallthru
      _
    // Predicated region
    $region22: #{tpu_custom_call.1} parent=1 // pred_check
      _
    $region23: #{tpu_custom_call.1} parent=1 // pred_check_branch
      %73 = sbr.rel (0) target = $region25
    $region24: #{tpu_custom_call.1} parent=1 // pred_region
      %74 = dma.done [#allocation3], 1024
    $region25: #{tpu_custom_call.1} parent=1 // pred_fallthru
      _
    // Predicated region
    $region26: #{tpu_custom_call.1} parent=1 // pred_check
      _
    $region27: #{tpu_custom_call.1} parent=1 // pred_check_branch
      %76 = sbr.rel (0) target = $region29
    $region28: #{tpu_custom_call.1} parent=1 // pred_region
      %77 = dma.done [#allocation6], 1024
    $region29: #{tpu_custom_call.1} parent=1 // pred_fallthru
      _
    // Predicated region
    $region30: #{tpu_custom_call.1} parent=1 // pred_check
      _
    $region31: #{tpu_custom_call.1} parent=1 // pred_check_branch
      %79 = sbr.rel (0) target = $region33
    $region32: #{tpu_custom_call.1} parent=1 // pred_region
      %80 = dma.done [#allocation6], 32
    $region33: #{tpu_custom_call.1} parent=1 // pred_fallthru
      _
    // Predicated region
    $region34: #{tpu_custom_call.1} parent=1 // pred_check
      _
    $region35: #{tpu_custom_call.1} parent=1 // pred_check_branch
      %82 = sbr.rel (0) target = $region37
    $region36: #{tpu_custom_call.1} parent=1 // pred_region
      %83 = dma.done [#allocation9], 69632
    $region37: #{tpu_custom_call.1} parent=1 // pred_fallthru
      _
    // Predicated region
    $region38: #{tpu_custom_call.1} parent=1 // pred_check
      _
    $region39: #{tpu_custom_call.1} parent=1 // pred_check_branch
      %85 = sbr.rel (0) target = $region41
    $region40: #{tpu_custom_call.1} parent=1 // pred_region
      %86 = dma.done [#allocation9], 896
    $region41: #{tpu_custom_call.1} parent=1 // pred_fallthru
      _
    %v87 = vld [vmem:[#allocation2] sm:$0xff]
    %v88 = vld [vmem:[#allocation2 + $0x8] sm:$0xff]
    %v89 = vld [vmem:[#allocation2 + $0x10] sm:$0xff]
    %v90 = vld [vmem:[#allocation2 + $0x18] sm:$0xff]
    %v91 = vld [vmem:[#allocation2 + $0x20] sm:$0xff]
    %v92 = vld [vmem:[#allocation2 + $0x28] sm:$0xff]
    %v93 = vld [vmem:[#allocation2 + $0x30] sm:$0xff]
    %v94 = vld [vmem:[#allocation2 + $0x38] sm:$0xff]
    %v95 = vld [vmem:[#allocation5] sm:$0xff]
    %v96 = vld [vmem:[#allocation5 + $0x8] sm:$0xff]
    %v97 = vld [vmem:[#allocation5 + $0x10] sm:$0xff]
    %v98 = vld [vmem:[#allocation5 + $0x18] sm:$0xff]
    %v99 = vld [vmem:[#allocation5 + $0x20] sm:$0xff]
    %v100 = vld [vmem:[#allocation5 + $0x28] sm:$0xff]
    %v101 = vld [vmem:[#allocation5 + $0x30] sm:$0xff]
    %v102 = vld [vmem:[#allocation5 + $0x38] sm:$0xff]
    %v103 = vld [vmem:[#allocation7] sm:$0x3]
    %vm104 = vcmask 261120
    %v106 = vsel %vm104, %v95, 0
    %v109 = vsel %vm104, %v96, 0
    %v112 = vsel %vm104, %v97, 0
    %v115 = vsel %vm104, %v98, 0
    %117 = vmatprep.subr.mxu0 0.0
    %118 = vmatpush1.msra.mxu0 %v87
    %119 = vmatprep.subr.mxu0 0.0
    %120 = vmatpush1.msra.mxu0 %v88
    %121 = vmatprep.subr.mxu0 0.0
    %122 = vmatpush1.msra.mxu0 %v89
    %123 = vmatprep.subr.mxu0 0.0
    %124 = vmatpush1.msra.mxu0 %v90
    %125 = vmatprep.subr.mxu0 0.0
    %126 = vmatpush1.msra.mxu0 0.0
    %127 = vmatprep.subr.mxu0 0.0
    %128 = vmatpush1.msra.mxu0 0.0
    %129 = vmatprep.subr.mxu0 0.0
    %130 = vmatpush1.msra.mxu0 0.0
    %131 = vmatprep.subr.mxu0 0.0
    %132 = vmatpush1.msra.mxu0 0.0
    %133 = vmatprep.subr.mxu0 0.0
    %134 = vmatpush1.msra.mxu0 0.0
    %135 = vmatprep.subr.mxu0 0.0
    %136 = vmatpush1.msra.mxu0 0.0
    %137 = vmatprep.subr.mxu0 0.0
    %138 = vmatpush1.msra.mxu0 0.0
    %139 = vmatprep.subr.mxu0 0.0
    %140 = vmatpush1.msra.mxu0 0.0
    %141 = vmatprep.subr.mxu0 0.0
    %142 = vmatpush1.msra.mxu0 0.0
    %143 = vmatprep.subr.mxu0 0.0
    %144 = vmatpush1.msra.mxu0 0.0
    %145 = vmatprep.subr.mxu0 0.0
    %146 = vmatpush1.msra.mxu0 0.0
    %147 = vmatprep.subr.mxu0 0.0
    %148 = vmatpush1.msra.mxu0 0.0
    %149 = vmatprep.subr.mxu0 0.0
    %150 = vmatpush1.msra.mxu0 0.0
    %151 = vmatprep.subr.mxu0 0.0
    %152 = vmatpush1.msra.mxu0 0.0
    %153 = vmatprep.subr.mxu0 0.0
    %154 = vmatpush1.msra.mxu0 0.0
    %155 = vmatprep.subr.mxu0 0.0
    %156 = vmatpush1.msra.mxu0 0.0
    %157 = vmatprep.subr.mxu0 0.0
    %158 = vmatpush1.msra.mxu0 0.0
    %159 = vmatprep.subr.mxu0 0.0
    %160 = vmatpush1.msra.mxu0 0.0
    %161 = vmatprep.subr.mxu0 0.0
    %162 = vmatpush1.msra.mxu0 0.0
    %163 = vmatprep.subr.mxu0 0.0
    %164 = vmatpush1.msra.mxu0 0.0
    %165 = vmatprep.subr.mxu0 0.0
    %166 = vmatpush1.msra.mxu0 0.0
    %167 = vmatprep.subr.mxu0 0.0
    %168 = vmatpush1.msra.mxu0 0.0
    %169 = vmatprep.subr.mxu0 0.0
    %170 = vmatpush1.msra.mxu0 0.0
    %171 = vmatprep.subr.mxu0 0.0
    %172 = vmatpush1.msra.mxu0 0.0
    %173 = vmatprep.subr.mxu0 0.0
    %174 = vmatpush1.msra.mxu0 0.0
    %175 = vmatprep.subr.mxu0 0.0
    %176 = vmatpush1.msra.mxu0 0.0
    %177 = vmatprep.subr.mxu0 0.0
    %178 = vmatpush1.msra.mxu0 0.0
    %179 = vmatprep.subr.mxu0 0.0
    %180 = vmatpush1.msra.mxu0 0.0
    %181 = vmatprep.mubr.f32.mxu0 0.0
    %182 = vmatmul.mubr.f32.gmra.mrb[0].mxu0 %v106
    %v183 = vpop.f32.mrb[0].mxu0
    %v184 = vadd.f32 0.0, %v183
    %v185 = vpop.f32.mrb[0].mxu0
    %186 = vmatprep.mubr.f32.mxu0 0.0
    %187 = vmatmul.mubr.f32.gmra.mrb[0].mxu0 %v109
    %v188 = vpop.f32.mrb[0].mxu0
    %v189 = vadd.f32 0.0, %v188
    %v190 = vpop.f32.mrb[0].mxu0
    %191 = vmatprep.mubr.f32.mxu0 0.0
    %192 = vmatmul.mubr.f32.gmra.mrb[0].mxu0 %v112
    %v193 = vpop.f32.mrb[0].mxu0
    %v194 = vadd.f32 0.0, %v193
    %v195 = vpop.f32.mrb[0].mxu0
    %196 = vmatprep.mubr.f32.mxu0 0.0
    %197 = vmatmul.mubr.f32.gmra.mrb[0].mxu0 %v115
    %v198 = vpop.f32.mrb[0].mxu0
    %v199 = vadd.f32 0.0, %v198
    %v200 = vpop.f32.mrb[0].mxu0
    %201 = vdwg.mxu0
    %v203 = vsel %vm104, %v99, 0
    %v206 = vsel %vm104, %v100, 0
    %v209 = vsel %vm104, %v101, 0
    %v212 = vsel %vm104, %v102, 0
    %214 = vmatprep.subr.mxu0 0.0
    %215 = vmatpush1.msra.mxu0 %v91
    %216 = vmatprep.subr.mxu0 0.0
    %217 = vmatpush1.msra.mxu0 %v92
    %218 = vmatprep.subr.mxu0 0.0
    %219 = vmatpush1.msra.mxu0 %v93
    %220 = vmatprep.subr.mxu0 0.0
    %221 = vmatpush1.msra.mxu0 %v94
    %222 = vmatprep.subr.mxu0 0.0
    %223 = vmatpush1.msra.mxu0 0.0
    %224 = vmatprep.subr.mxu0 0.0
    %225 = vmatpush1.msra.mxu0 0.0
    %226 = vmatprep.subr.mxu0 0.0
    %227 = vmatpush1.msra.mxu0 0.0
    %228 = vmatprep.subr.mxu0 0.0
    %229 = vmatpush1.msra.mxu0 0.0
    %230 = vmatprep.subr.mxu0 0.0
    %231 = vmatpush1.msra.mxu0 0.0
    %232 = vmatprep.subr.mxu0 0.0
    %233 = vmatpush1.msra.mxu0 0.0
    %234 = vmatprep.subr.mxu0 0.0
    %235 = vmatpush1.msra.mxu0 0.0
    %236 = vmatprep.subr.mxu0 0.0
    %237 = vmatpush1.msra.mxu0 0.0
    %238 = vmatprep.subr.mxu0 0.0
    %239 = vmatpush1.msra.mxu0 0.0
    %240 = vmatprep.subr.mxu0 0.0
    %241 = vmatpush1.msra.mxu0 0.0
    %242 = vmatprep.subr.mxu0 0.0
    %243 = vmatpush1.msra.mxu0 0.0
    %244 = vmatprep.subr.mxu0 0.0
    %245 = vmatpush1.msra.mxu0 0.0
    %246 = vmatprep.subr.mxu0 0.0
    %247 = vmatpush1.msra.mxu0 0.0
    %248 = vmatprep.subr.mxu0 0.0
    %249 = vmatpush1.msra.mxu0 0.0
    %250 = vmatprep.subr.mxu0 0.0
    %251 = vmatpush1.msra.mxu0 0.0
    %252 = vmatprep.subr.mxu0 0.0
    %253 = vmatpush1.msra.mxu0 0.0
    %254 = vmatprep.subr.mxu0 0.0
    %255 = vmatpush1.msra.mxu0 0.0
    %256 = vmatprep.subr.mxu0 0.0
    %257 = vmatpush1.msra.mxu0 0.0
    %258 = vmatprep.subr.mxu0 0.0
    %259 = vmatpush1.msra.mxu0 0.0
    %260 = vmatprep.subr.mxu0 0.0
    %261 = vmatpush1.msra.mxu0 0.0
    %262 = vmatprep.subr.mxu0 0.0
    %263 = vmatpush1.msra.mxu0 0.0
    %264 = vmatprep.subr.mxu0 0.0
    %265 = vmatpush1.msra.mxu0 0.0
    %266 = vmatprep.subr.mxu0 0.0
    %267 = vmatpush1.msra.mxu0 0.0
    %268 = vmatprep.subr.mxu0 0.0
    %269 = vmatpush1.msra.mxu0 0.0
    %270 = vmatprep.subr.mxu0 0.0
    %271 = vmatpush1.msra.mxu0 0.0
    %272 = vmatprep.subr.mxu0 0.0
    %273 = vmatpush1.msra.mxu0 0.0
    %274 = vmatprep.subr.mxu0 0.0
    %275 = vmatpush1.msra.mxu0 0.0
    %276 = vmatprep.subr.mxu0 0.0
    %277 = vmatpush1.msra.mxu0 0.0
    %278 = vmatprep.mubr.f32.mxu0 0.0
    %279 = vmatmul.mubr.f32.gmra.mrb[0].mxu0 %v203
    %v280 = vpop.f32.mrb[0].mxu0
    %v281 = vadd.f32 0.0, %v280
    %v282 = vpop.f32.mrb[0].mxu0
    %283 = vmatprep.mubr.f32.mxu0 0.0
    %284 = vmatmul.mubr.f32.gmra.mrb[0].mxu0 %v206
    %v285 = vpop.f32.mrb[0].mxu0
    %v286 = vadd.f32 0.0, %v285
    %v287 = vpop.f32.mrb[0].mxu0
    %288 = vmatprep.mubr.f32.mxu0 0.0
    %289 = vmatmul.mubr.f32.gmra.mrb[0].mxu0 %v209
    %v290 = vpop.f32.mrb[0].mxu0
    %v291 = vadd.f32 0.0, %v290
    %v292 = vpop.f32.mrb[0].mxu0
    %293 = vmatprep.mubr.f32.mxu0 0.0
    %294 = vmatmul.mubr.f32.gmra.mrb[0].mxu0 %v212
    %v295 = vpop.f32.mrb[0].mxu0
    %v296 = vadd.f32 0.0, %v295
    %v297 = vpop.f32.mrb[0].mxu0
    %298 = vdwg.mxu0
    %v299 = vsel %vm104, %v95, 0.0
    %300 = vadd.xlane.f32.xlu0 %v299
    %v301 = vpop.xlane.xlu0 %300
    %v302 = vsel %vm104, %v96, 0.0
    %303 = vadd.xlane.f32.xlu0 %v302
    %v304 = vpop.xlane.xlu0 %303
    %v305 = vsel %vm104, %v97, 0.0
    %306 = vadd.xlane.f32.xlu0 %v305
    %v307 = vpop.xlane.xlu0 %306
    %v308 = vsel %vm104, %v98, 0.0
    %309 = vadd.xlane.f32.xlu0 %v308
    %v310 = vpop.xlane.xlu0 %309
    %v311 = vsel %vm104, %v99, 0.0
    %312 = vadd.xlane.f32.xlu0 %v311
    %v313 = vpop.xlane.xlu0 %312
    %v314 = vsel %vm104, %v100, 0.0
    %315 = vadd.xlane.f32.xlu0 %v314
    %v316 = vpop.xlane.xlu0 %315
    %v317 = vsel %vm104, %v101, 0.0
    %318 = vadd.xlane.f32.xlu0 %v317
    %v319 = vpop.xlane.xlu0 %318
    %v320 = vsel %vm104, %v102, 0.0
    %321 = vadd.xlane.f32.xlu0 %v320
    %v322 = vpop.xlane.xlu0 %321
    %v323 = vmax.f32 %v301, 1.0
    %v324 = vmax.f32 %v304, 1.0
    %v325 = vmax.f32 %v307, 1.0
    %v326 = vmax.f32 %v310, 1.0
    %v327 = vmax.f32 %v313, 1.0
    %v328 = vmax.f32 %v316, 1.0
    %v329 = vmax.f32 %v319, 1.0
    %v330 = vmax.f32 %v322, 1.0
    %v331 = vrcp.pop %v323
    %v332 = vrcp.pop %v324
    %v333 = vrcp.pop %v325
    %v334 = vrcp.pop %v326
    %v335 = vrcp.pop %v327
    %v336 = vrcp.pop %v328
    %v337 = vrcp.pop %v329
    %v338 = vrcp.pop %v330
    %v339 = vmul.f32 %v184, %v331
    %v340 = vmul.f32 %v189, %v332
    %v341 = vmul.f32 %v194, %v333
    %v342 = vmul.f32 %v199, %v334
    %v343 = vmul.f32 %v281, %v335
    %v344 = vmul.f32 %v286, %v336
    %v345 = vmul.f32 %v291, %v337
    %v346 = vmul.f32 %v296, %v338
    %v347 = vld [vmem:[#allocation8] sm:$0xff]
    %v348 = vld [vmem:[#allocation8 + $0x8] sm:$0xff]
    %v349 = vld [vmem:[#allocation8 + $0x10] sm:$0xff]
    %v350 = vld [vmem:[#allocation8 + $0x18] sm:$0xff]
    %v351 = vld [vmem:[#allocation8 + $0x20] sm:$0xff]
    %v352 = vld [vmem:[#allocation8 + $0x28] sm:$0xff]
    %v353 = vld [vmem:[#allocation8 + $0x30] sm:$0xff]
    %v354 = vld [vmem:[#allocation8 + $0x38] sm:$0xff]
    %v355 = vld [vmem:[#allocation8 + $0x40] sm:$0xff]
    %v356 = vld [vmem:[#allocation8 + $0x48] sm:$0xff]
    %v357 = vld [vmem:[#allocation8 + $0x50] sm:$0xff]
    %v358 = vld [vmem:[#allocation8 + $0x58] sm:$0xff]
    %v359 = vld [vmem:[#allocation8 + $0x60] sm:$0xff]
    %v360 = vld [vmem:[#allocation8 + $0x68] sm:$0xff]
    %v361 = vld [vmem:[#allocation8 + $0x70] sm:$0xff]
    %v362 = vld [vmem:[#allocation8 + $0x78] sm:$0xff]
    %363 = vmatprep.subr.mxu0 0.0
    %364 = vmatpush1.msra.mxu0 %v347
    %365 = vmatprep.subr.mxu0 0.0
    %366 = vmatpush1.msra.mxu0 %v348
    %367 = vmatprep.subr.mxu0 0.0
    %368 = vmatpush1.msra.mxu0 %v349
    %369 = vmatprep.subr.mxu0 0.0
    %370 = vmatpush1.msra.mxu0 %v350
    %371 = vmatprep.subr.mxu0 0.0
    %372 = vmatpush1.msra.mxu0 %v351
    %373 = vmatprep.subr.mxu0 0.0
    %374 = vmatpush1.msra.mxu0 %v352
    %375 = vmatprep.subr.mxu0 0.0
    %376 = vmatpush1.msra.mxu0 %v353
    %377 = vmatprep.subr.mxu0 0.0
    %378 = vmatpush1.msra.mxu0 %v354
    %379 = vmatprep.subr.mxu0 0.0
    %380 = vmatpush1.msra.mxu0 %v355
    %381 = vmatprep.subr.mxu0 0.0
    %382 = vmatpush1.msra.mxu0 %v356
    %383 = vmatprep.subr.mxu0 0.0
    %384 = vmatpush1.msra.mxu0 %v357
    %385 = vmatprep.subr.mxu0 0.0
    %386 = vmatpush1.msra.mxu0 %v358
    %387 = vmatprep.subr.mxu0 0.0
    %388 = vmatpush1.msra.mxu0 %v359
    %389 = vmatprep.subr.mxu0 0.0
    %390 = vmatpush1.msra.mxu0 %v360
    %391 = vmatprep.subr.mxu0 0.0
    %392 = vmatpush1.msra.mxu0 %v361
    %393 = vmatprep.subr.mxu0 0.0
    %394 = vmatpush1.msra.mxu0 %v362
    %395 = vmatprep.subr.mxu0 0.0
    %396 = vmatpush1.msra.mxu0 0.0
    %397 = vmatprep.subr.mxu0 0.0
    %398 = vmatpush1.msra.mxu0 0.0
    %399 = vmatprep.subr.mxu0 0.0
    %400 = vmatpush1.msra.mxu0 0.0
    %401 = vmatprep.subr.mxu0 0.0
    %402 = vmatpush1.msra.mxu0 0.0
    %403 = vmatprep.subr.mxu0 0.0
    %404 = vmatpush1.msra.mxu0 0.0
    %405 = vmatprep.subr.mxu0 0.0
    %406 = vmatpush1.msra.mxu0 0.0
    %407 = vmatprep.subr.mxu0 0.0
    %408 = vmatpush1.msra.mxu0 0.0
    %409 = vmatprep.subr.mxu0 0.0
    %410 = vmatpush1.msra.mxu0 0.0
    %411 = vmatprep.subr.mxu0 0.0
    %412 = vmatpush1.msra.mxu0 0.0
    %413 = vmatprep.subr.mxu0 0.0
    %414 = vmatpush1.msra.mxu0 0.0
    %415 = vmatprep.subr.mxu0 0.0
    %416 = vmatpush1.msra.mxu0 0.0
    %417 = vmatprep.subr.mxu0 0.0
    %418 = vmatpush1.msra.mxu0 0.0
    %419 = vmatprep.subr.mxu0 0.0
    %420 = vmatpush1.msra.mxu0 0.0
    %421 = vmatprep.subr.mxu0 0.0
    %422 = vmatpush1.msra.mxu0 0.0
    %423 = vmatprep.subr.mxu0 0.0
    %424 = vmatpush1.msra.mxu0 0.0
    %425 = vmatprep.subr.mxu0 0.0
    %426 = vmatpush1.msra.mxu0 0.0
    %427 = vmatprep.mubr.f32.mxu0 0.0
    %428 = vmatmul.mubr.f32.gmra.mrb[0].mxu0 %v339
    %v429 = vpop.f32.mrb[0].mxu0
    %v430 = vadd.f32 0.0, %v429
    %v431 = vpop.f32.mrb[0].mxu0
    %432 = vmatprep.mubr.f32.mxu0 0.0
    %433 = vmatmul.mubr.f32.gmra.mrb[0].mxu0 %v340
    %v434 = vpop.f32.mrb[0].mxu0
    %v435 = vadd.f32 0.0, %v434
    %v436 = vpop.f32.mrb[0].mxu0
    %437 = vmatprep.mubr.f32.mxu0 0.0
    %438 = vmatmul.mubr.f32.gmra.mrb[0].mxu0 %v341
    %v439 = vpop.f32.mrb[0].mxu0
    %v440 = vadd.f32 0.0, %v439
    %v441 = vpop.f32.mrb[0].mxu0
    %442 = vmatprep.mubr.f32.mxu0 0.0
    %443 = vmatmul.mubr.f32.gmra.mrb[0].mxu0 %v342
    %v444 = vpop.f32.mrb[0].mxu0
    %v445 = vadd.f32 0.0, %v444
    %v446 = vpop.f32.mrb[0].mxu0
    %447 = vmatprep.mubr.f32.mxu0 0.0
    %448 = vmatmul.mubr.f32.gmra.mrb[0].mxu0 %v343
    %v449 = vpop.f32.mrb[0].mxu0
    %v450 = vadd.f32 0.0, %v449
    %v451 = vpop.f32.mrb[0].mxu0
    %452 = vmatprep.mubr.f32.mxu0 0.0
    %453 = vmatmul.mubr.f32.gmra.mrb[0].mxu0 %v344
    %v454 = vpop.f32.mrb[0].mxu0
    %v455 = vadd.f32 0.0, %v454
    %v456 = vpop.f32.mrb[0].mxu0
    %457 = vmatprep.mubr.f32.mxu0 0.0
    %458 = vmatmul.mubr.f32.gmra.mrb[0].mxu0 %v345
    %v459 = vpop.f32.mrb[0].mxu0
    %v460 = vadd.f32 0.0, %v459
    %v461 = vpop.f32.mrb[0].mxu0
    %462 = vmatprep.mubr.f32.mxu0 0.0
    %463 = vmatmul.mubr.f32.gmra.mrb[0].mxu0 %v346
    %v464 = vpop.f32.mrb[0].mxu0
    %v465 = vadd.f32 0.0, %v464
    %v466 = vpop.f32.mrb[0].mxu0
    %467 = vdwg.mxu0
    %s468 = scalar_lea.vmem [#allocation8], 128
    %v469 = vld [vmem:[%s468] sm:$0xff]
    %v470 = vld [vmem:[%s468 + $0x8] sm:$0xff]
    %v471 = vld [vmem:[%s468 + $0x10] sm:$0xff]
    %v472 = vld [vmem:[%s468 + $0x18] sm:$0xff]
    %v473 = vld [vmem:[%s468 + $0x20] sm:$0xff]
    %v474 = vld [vmem:[%s468 + $0x28] sm:$0xff]
    %v475 = vld [vmem:[%s468 + $0x30] sm:$0xff]
    %v476 = vld [vmem:[%s468 + $0x38] sm:$0xff]
    %v477 = vld [vmem:[%s468 + $0x40] sm:$0xff]
    %v478 = vld [vmem:[%s468 + $0x48] sm:$0xff]
    %v479 = vld [vmem:[%s468 + $0x50] sm:$0xff]
    %v480 = vld [vmem:[%s468 + $0x58] sm:$0xff]
    %v481 = vld [vmem:[%s468 + $0x60] sm:$0xff]
    %v482 = vld [vmem:[%s468 + $0x68] sm:$0xff]
    %v483 = vld [vmem:[%s468 + $0x70] sm:$0xff]
    %v484 = vld [vmem:[%s468 + $0x78] sm:$0xff]
    %485 = vmatprep.subr.mxu0 0.0
    %486 = vmatpush1.msra.mxu0 %v469
    %487 = vmatprep.subr.mxu0 0.0
    %488 = vmatpush1.msra.mxu0 %v470
    %489 = vmatprep.subr.mxu0 0.0
    %490 = vmatpush1.msra.mxu0 %v471
    %491 = vmatprep.subr.mxu0 0.0
    %492 = vmatpush1.msra.mxu0 %v472
    %493 = vmatprep.subr.mxu0 0.0
    %494 = vmatpush1.msra.mxu0 %v473
    %495 = vmatprep.subr.mxu0 0.0
    %496 = vmatpush1.msra.mxu0 %v474
    %497 = vmatprep.subr.mxu0 0.0
    %498 = vmatpush1.msra.mxu0 %v475
    %499 = vmatprep.subr.mxu0 0.0
    %500 = vmatpush1.msra.mxu0 %v476
    %501 = vmatprep.subr.mxu0 0.0
    %502 = vmatpush1.msra.mxu0 %v477
    %503 = vmatprep.subr.mxu0 0.0
    %504 = vmatpush1.msra.mxu0 %v478
    %505 = vmatprep.subr.mxu0 0.0
    %506 = vmatpush1.msra.mxu0 %v479
    %507 = vmatprep.subr.mxu0 0.0
    %508 = vmatpush1.msra.mxu0 %v480
    %509 = vmatprep.subr.mxu0 0.0
    %510 = vmatpush1.msra.mxu0 %v481
    %511 = vmatprep.subr.mxu0 0.0
    %512 = vmatpush1.msra.mxu0 %v482
    %513 = vmatprep.subr.mxu0 0.0
    %514 = vmatpush1.msra.mxu0 %v483
    %515 = vmatprep.subr.mxu0 0.0
    %516 = vmatpush1.msra.mxu0 %v484
    %517 = vmatprep.subr.mxu0 0.0
    %518 = vmatpush1.msra.mxu0 0.0
    %519 = vmatprep.subr.mxu0 0.0
    %520 = vmatpush1.msra.mxu0 0.0
    %521 = vmatprep.subr.mxu0 0.0
    %522 = vmatpush1.msra.mxu0 0.0
    %523 = vmatprep.subr.mxu0 0.0
    %524 = vmatpush1.msra.mxu0 0.0
    %525 = vmatprep.subr.mxu0 0.0
    %526 = vmatpush1.msra.mxu0 0.0
    %527 = vmatprep.subr.mxu0 0.0
    %528 = vmatpush1.msra.mxu0 0.0
    %529 = vmatprep.subr.mxu0 0.0
    %530 = vmatpush1.msra.mxu0 0.0
    %531 = vmatprep.subr.mxu0 0.0
    %532 = vmatpush1.msra.mxu0 0.0
    %533 = vmatprep.subr.mxu0 0.0
    %534 = vmatpush1.msra.mxu0 0.0
    %535 = vmatprep.subr.mxu0 0.0
    %536 = vmatpush1.msra.mxu0 0.0
    %537 = vmatprep.subr.mxu0 0.0
    %538 = vmatpush1.msra.mxu0 0.0
    %539 = vmatprep.subr.mxu0 0.0
    %540 = vmatpush1.msra.mxu0 0.0
    %541 = vmatprep.subr.mxu0 0.0
    %542 = vmatpush1.msra.mxu0 0.0
    %543 = vmatprep.subr.mxu0 0.0
    %544 = vmatpush1.msra.mxu0 0.0
    %545 = vmatprep.subr.mxu0 0.0
    %546 = vmatpush1.msra.mxu0 0.0
    %547 = vmatprep.subr.mxu0 0.0
    %548 = vmatpush1.msra.mxu0 0.0
    %549 = vmatprep.mubr.f32.mxu0 0.0
    %550 = vmatmul.mubr.f32.gmra.mrb[0].mxu0 %v87
    %v551 = vpop.f32.mrb[0].mxu0
    %v552 = vadd.f32 0.0, %v551
    %v553 = vpop.f32.mrb[0].mxu0
    %554 = vmatprep.mubr.f32.mxu0 0.0
    %555 = vmatmul.mubr.f32.gmra.mrb[0].mxu0 %v88
    %v556 = vpop.f32.mrb[0].mxu0
    %v557 = vadd.f32 0.0, %v556
    %v558 = vpop.f32.mrb[0].mxu0
    %559 = vmatprep.mubr.f32.mxu0 0.0
    %560 = vmatmul.mubr.f32.gmra.mrb[0].mxu0 %v89
    %v561 = vpop.f32.mrb[0].mxu0
    %v562 = vadd.f32 0.0, %v561
    %v563 = vpop.f32.mrb[0].mxu0
    %564 = vmatprep.mubr.f32.mxu0 0.0
    %565 = vmatmul.mubr.f32.gmra.mrb[0].mxu0 %v90
    %v566 = vpop.f32.mrb[0].mxu0
    %v567 = vadd.f32 0.0, %v566
    %v568 = vpop.f32.mrb[0].mxu0
    %569 = vmatprep.mubr.f32.mxu0 0.0
    %570 = vmatmul.mubr.f32.gmra.mrb[0].mxu0 %v91
    %v571 = vpop.f32.mrb[0].mxu0
    %v572 = vadd.f32 0.0, %v571
    %v573 = vpop.f32.mrb[0].mxu0
    %574 = vmatprep.mubr.f32.mxu0 0.0
    %575 = vmatmul.mubr.f32.gmra.mrb[0].mxu0 %v92
    %v576 = vpop.f32.mrb[0].mxu0
    %v577 = vadd.f32 0.0, %v576
    %v578 = vpop.f32.mrb[0].mxu0
    %579 = vmatprep.mubr.f32.mxu0 0.0
    %580 = vmatmul.mubr.f32.gmra.mrb[0].mxu0 %v93
    %v581 = vpop.f32.mrb[0].mxu0
    %v582 = vadd.f32 0.0, %v581
    %v583 = vpop.f32.mrb[0].mxu0
    %584 = vmatprep.mubr.f32.mxu0 0.0
    %585 = vmatmul.mubr.f32.gmra.mrb[0].mxu0 %v94
    %v586 = vpop.f32.mrb[0].mxu0
    %v587 = vadd.f32 0.0, %v586
    %v588 = vpop.f32.mrb[0].mxu0
    %589 = vdwg.mxu0
    %v590 = vadd.f32 %v430, %v552
    %v591 = vadd.f32 %v435, %v557
    %v592 = vadd.f32 %v440, %v562
    %v593 = vadd.f32 %v445, %v567
    %v594 = vadd.f32 %v450, %v572
    %v595 = vadd.f32 %v455, %v577
    %v596 = vadd.f32 %v460, %v582
    %v597 = vadd.f32 %v465, %v587
    %v598 = vld [vmem:[#allocation10] sm:$0x1]
    %v599 = vlaneseq
    %v600 = vshrl.u32 %v599, 7
    %v601 = vsub.s32 0, %v600
    %v602 = vrot.slane %v598, %v601
    %v603 = vadd.f32 %v590, %v602
    %v604 = vadd.f32 %v591, %v602
    %v605 = vadd.f32 %v592, %v602
    %v606 = vadd.f32 %v593, %v602
    %v607 = vadd.f32 %v594, %v602
    %v608 = vadd.f32 %v595, %v602
    %v609 = vadd.f32 %v596, %v602
    %v610 = vadd.f32 %v597, %v602
    %v611 = vlaneseq
    %v612 = vshrl.u32 %v611, 7
    %v613 = vsub.s32 0, %v612
    %v614 = vrot.slane %v103, %v613
    %616 = vbcast.lane.b32.xlu0 %v614, 256
    %v617 = vpop.permute.xlu0 %616
    %s619 = sor.u32 256, 8
    %620 = vbcast.lane.b32.xlu0 %v614, %s619
    %v621 = vpop.permute.xlu0 %620
    %s623 = sor.u32 256, 16
    %624 = vbcast.lane.b32.xlu0 %v614, %s623
    %v625 = vpop.permute.xlu0 %624
    %s627 = sor.u32 256, 24
    %628 = vbcast.lane.b32.xlu0 %v614, %s627
    %v629 = vpop.permute.xlu0 %628
    %v630 = vlaneseq
    %v631 = vshrl.u32 %v630, 7
    %v632 = vsub.s32 1, %v631
    %v633 = vrot.slane %v103, %v632
    %635 = vbcast.lane.b32.xlu0 %v633, 256
    %v636 = vpop.permute.xlu0 %635
    %s638 = sor.u32 256, 8
    %639 = vbcast.lane.b32.xlu0 %v633, %s638
    %v640 = vpop.permute.xlu0 %639
    %s642 = sor.u32 256, 16
    %643 = vbcast.lane.b32.xlu0 %v633, %s642
    %v644 = vpop.permute.xlu0 %643
    %s646 = sor.u32 256, 24
    %647 = vbcast.lane.b32.xlu0 %v633, %s646
    %v648 = vpop.permute.xlu0 %647
    %v649 = vmul.f32 %v603, %v617
    %v650 = vmul.f32 %v604, %v621
    %v651 = vmul.f32 %v605, %v625
    %v652 = vmul.f32 %v606, %v629
    %v653 = vmul.f32 %v607, %v636
    %v654 = vmul.f32 %v608, %v640
    %v655 = vmul.f32 %v609, %v644
    %v656 = vmul.f32 %v610, %v648
    %v657 = vmax.f32 %v649, 0.0
    %v658 = vmax.f32 %v650, 0.0
    %v659 = vmax.f32 %v651, 0.0
    %v660 = vmax.f32 %v652, 0.0
    %v661 = vmax.f32 %v653, 0.0
    %v662 = vmax.f32 %v654, 0.0
    %v663 = vmax.f32 %v655, 0.0
    %v664 = vmax.f32 %v656, 0.0
    %v665 = vadd.f32 %v657, %v658
    %v666 = vadd.f32 %v665, %v659
    %v667 = vadd.f32 %v666, %v660
    %v668 = vadd.f32 %v667, %v661
    %v669 = vadd.f32 %v668, %v662
    %v670 = vadd.f32 %v669, %v663
    %v671 = vadd.f32 %v670, %v664
    %v672 = vrot.slane %v671, 4
    %v673 = vadd.f32 %v671, %v672
    %v674 = vrot.slane %v673, 2
    %v675 = vadd.f32 %v673, %v674
    %v676 = vrot.slane %v675, 1
    %v677 = vadd.f32 %v675, %v676
    %v678 = vrcp.pop 64.0
    %v679 = vmul.f32 %v677, %v678
    %v680 = vsub.f32 %v657, %v679
    %v681 = vsub.f32 %v658, %v679
    %v682 = vsub.f32 %v659, %v679
    %v683 = vsub.f32 %v660, %v679
    %v684 = vsub.f32 %v661, %v679
    %v685 = vsub.f32 %v662, %v679
    %v686 = vsub.f32 %v663, %v679
    %v687 = vsub.f32 %v664, %v679
    %v688 = vmul.f32 %v680, %v680
    %v689 = vmul.f32 %v681, %v681
    %v690 = vmul.f32 %v682, %v682
    %v691 = vmul.f32 %v683, %v683
    %v692 = vmul.f32 %v684, %v684
    %v693 = vmul.f32 %v685, %v685
    %v694 = vmul.f32 %v686, %v686
    %v695 = vmul.f32 %v687, %v687
    %v696 = vadd.f32 %v688, %v689
    %v697 = vadd.f32 %v696, %v690
    %v698 = vadd.f32 %v697, %v691
    %v699 = vadd.f32 %v698, %v692
    %v700 = vadd.f32 %v699, %v693
    %v701 = vadd.f32 %v700, %v694
    %v702 = vadd.f32 %v701, %v695
    %v703 = vrot.slane %v702, 4
    %v704 = vadd.f32 %v702, %v703
    %v705 = vrot.slane %v704, 2
    %v706 = vadd.f32 %v704, %v705
    %v707 = vrot.slane %v706, 1
    %v708 = vadd.f32 %v706, %v707
    %v709 = vmul.f32 %v708, %v678
    %v710 = vadd.f32 %v709, 1e-05
    %v711 = vrsqrt.pop %v710
    %v712 = vmul.f32 %v680, %v711
    %v713 = vmul.f32 %v681, %v711
    %v714 = vmul.f32 %v682, %v711
    %v715 = vmul.f32 %v683, %v711
    %v716 = vmul.f32 %v684, %v711
    %v717 = vmul.f32 %v685, %v711
    %v718 = vmul.f32 %v686, %v711
    %v719 = vmul.f32 %v687, %v711
    %v720 = vld [vmem:[#allocation10 + $0x1] sm:$0x1]
    %v721 = vlaneseq
    %v722 = vshrl.u32 %v721, 7
    %v723 = vsub.s32 0, %v722
    %v724 = vrot.slane %v720, %v723
    %v725 = vmul.f32 %v712, %v724
    %v726 = vmul.f32 %v713, %v724
    %v727 = vmul.f32 %v714, %v724
    %v728 = vmul.f32 %v715, %v724
    %v729 = vmul.f32 %v716, %v724
    %v730 = vmul.f32 %v717, %v724
    %v731 = vmul.f32 %v718, %v724
    %v732 = vmul.f32 %v719, %v724
    %v733 = vld [vmem:[#allocation10 + $0x2] sm:$0x1]
    %v734 = vlaneseq
    %v735 = vshrl.u32 %v734, 7
    %v736 = vsub.s32 0, %v735
    %v737 = vrot.slane %v733, %v736
    %v738 = vadd.f32 %v725, %v737
    %v739 = vadd.f32 %v726, %v737
    %v740 = vadd.f32 %v727, %v737
    %v741 = vadd.f32 %v728, %v737
    %v742 = vadd.f32 %v729, %v737
    %v743 = vadd.f32 %v730, %v737
    %v744 = vadd.f32 %v731, %v737
    %v745 = vadd.f32 %v732, %v737
    %746 = vmatprep.subr.mxu0 0.0
    %747 = vmatpush1.msra.mxu0 %v738
    %748 = vmatprep.subr.mxu0 0.0
    %749 = vmatpush1.msra.mxu0 %v739
    %750 = vmatprep.subr.mxu0 0.0
    %751 = vmatpush1.msra.mxu0 %v740
    %752 = vmatprep.subr.mxu0 0.0
    %753 = vmatpush1.msra.mxu0 %v741
    %754 = vmatprep.subr.mxu0 0.0
    %755 = vmatpush1.msra.mxu0 0.0
    %756 = vmatprep.subr.mxu0 0.0
    %757 = vmatpush1.msra.mxu0 0.0
    %758 = vmatprep.subr.mxu0 0.0
    %759 = vmatpush1.msra.mxu0 0.0
    %760 = vmatprep.subr.mxu0 0.0
    %761 = vmatpush1.msra.mxu0 0.0
    %762 = vmatprep.subr.mxu0 0.0
    %763 = vmatpush1.msra.mxu0 0.0
    %764 = vmatprep.subr.mxu0 0.0
    %765 = vmatpush1.msra.mxu0 0.0
    %766 = vmatprep.subr.mxu0 0.0
    %767 = vmatpush1.msra.mxu0 0.0
    %768 = vmatprep.subr.mxu0 0.0
    %769 = vmatpush1.msra.mxu0 0.0
    %770 = vmatprep.subr.mxu0 0.0
    %771 = vmatpush1.msra.mxu0 0.0
    %772 = vmatprep.subr.mxu0 0.0
    %773 = vmatpush1.msra.mxu0 0.0
    %774 = vmatprep.subr.mxu0 0.0
    %775 = vmatpush1.msra.mxu0 0.0
    %776 = vmatprep.subr.mxu0 0.0
    %777 = vmatpush1.msra.mxu0 0.0
    %778 = vmatprep.subr.mxu0 0.0
    %779 = vmatpush1.msra.mxu0 0.0
    %780 = vmatprep.subr.mxu0 0.0
    %781 = vmatpush1.msra.mxu0 0.0
    %782 = vmatprep.subr.mxu0 0.0
    %783 = vmatpush1.msra.mxu0 0.0
    %784 = vmatprep.subr.mxu0 0.0
    %785 = vmatpush1.msra.mxu0 0.0
    %786 = vmatprep.subr.mxu0 0.0
    %787 = vmatpush1.msra.mxu0 0.0
    %788 = vmatprep.subr.mxu0 0.0
    %789 = vmatpush1.msra.mxu0 0.0
    %790 = vmatprep.subr.mxu0 0.0
    %791 = vmatpush1.msra.mxu0 0.0
    %792 = vmatprep.subr.mxu0 0.0
    %793 = vmatpush1.msra.mxu0 0.0
    %794 = vmatprep.subr.mxu0 0.0
    %795 = vmatpush1.msra.mxu0 0.0
    %796 = vmatprep.subr.mxu0 0.0
    %797 = vmatpush1.msra.mxu0 0.0
    %798 = vmatprep.subr.mxu0 0.0
    %799 = vmatpush1.msra.mxu0 0.0
    %800 = vmatprep.subr.mxu0 0.0
    %801 = vmatpush1.msra.mxu0 0.0
    %802 = vmatprep.subr.mxu0 0.0
    %803 = vmatpush1.msra.mxu0 0.0
    %804 = vmatprep.subr.mxu0 0.0
    %805 = vmatpush1.msra.mxu0 0.0
    %806 = vmatprep.subr.mxu0 0.0
    %807 = vmatpush1.msra.mxu0 0.0
    %808 = vmatprep.subr.mxu0 0.0
    %809 = vmatpush1.msra.mxu0 0.0
    %810 = vmatprep.mubr.f32.mxu0 0.0
    %811 = vmatmul.mubr.f32.gmra.mrb[0].mxu0 %v106
    %v812 = vpop.f32.mrb[0].mxu0
    %v813 = vadd.f32 0.0, %v812
    %v814 = vpop.f32.mrb[0].mxu0
    %815 = vmatprep.mubr.f32.mxu0 0.0
    %816 = vmatmul.mubr.f32.gmra.mrb[0].mxu0 %v109
    %v817 = vpop.f32.mrb[0].mxu0
    %v818 = vadd.f32 0.0, %v817
    %v819 = vpop.f32.mrb[0].mxu0
    %820 = vmatprep.mubr.f32.mxu0 0.0
    %821 = vmatmul.mubr.f32.gmra.mrb[0].mxu0 %v112
    %v822 = vpop.f32.mrb[0].mxu0
    %v823 = vadd.f32 0.0, %v822
    %v824 = vpop.f32.mrb[0].mxu0
    %825 = vmatprep.mubr.f32.mxu0 0.0
    %826 = vmatmul.mubr.f32.gmra.mrb[0].mxu0 %v115
    %v827 = vpop.f32.mrb[0].mxu0
    %v828 = vadd.f32 0.0, %v827
    %v829 = vpop.f32.mrb[0].mxu0
    %830 = vdwg.mxu0
    %831 = vmatprep.subr.mxu0 0.0
    %832 = vmatpush1.msra.mxu0 %v742
    %833 = vmatprep.subr.mxu0 0.0
    %834 = vmatpush1.msra.mxu0 %v743
    %835 = vmatprep.subr.mxu0 0.0
    %836 = vmatpush1.msra.mxu0 %v744
    %837 = vmatprep.subr.mxu0 0.0
    %838 = vmatpush1.msra.mxu0 %v745
    %839 = vmatprep.subr.mxu0 0.0
    %840 = vmatpush1.msra.mxu0 0.0
    %841 = vmatprep.subr.mxu0 0.0
    %842 = vmatpush1.msra.mxu0 0.0
    %843 = vmatprep.subr.mxu0 0.0
    %844 = vmatpush1.msra.mxu0 0.0
    %845 = vmatprep.subr.mxu0 0.0
    %846 = vmatpush1.msra.mxu0 0.0
    %847 = vmatprep.subr.mxu0 0.0
    %848 = vmatpush1.msra.mxu0 0.0
    %849 = vmatprep.subr.mxu0 0.0
    %850 = vmatpush1.msra.mxu0 0.0
    %851 = vmatprep.subr.mxu0 0.0
    %852 = vmatpush1.msra.mxu0 0.0
    %853 = vmatprep.subr.mxu0 0.0
    %854 = vmatpush1.msra.mxu0 0.0
    %855 = vmatprep.subr.mxu0 0.0
    %856 = vmatpush1.msra.mxu0 0.0
    %857 = vmatprep.subr.mxu0 0.0
    %858 = vmatpush1.msra.mxu0 0.0
    %859 = vmatprep.subr.mxu0 0.0
    %860 = vmatpush1.msra.mxu0 0.0
    %861 = vmatprep.subr.mxu0 0.0
    %862 = vmatpush1.msra.mxu0 0.0
    %863 = vmatprep.subr.mxu0 0.0
    %864 = vmatpush1.msra.mxu0 0.0
    %865 = vmatprep.subr.mxu0 0.0
    %866 = vmatpush1.msra.mxu0 0.0
    %867 = vmatprep.subr.mxu0 0.0
    %868 = vmatpush1.msra.mxu0 0.0
    %869 = vmatprep.subr.mxu0 0.0
    %870 = vmatpush1.msra.mxu0 0.0
    %871 = vmatprep.subr.mxu0 0.0
    %872 = vmatpush1.msra.mxu0 0.0
    %873 = vmatprep.subr.mxu0 0.0
    %874 = vmatpush1.msra.mxu0 0.0
    %875 = vmatprep.subr.mxu0 0.0
    %876 = vmatpush1.msra.mxu0 0.0
    %877 = vmatprep.subr.mxu0 0.0
    %878 = vmatpush1.msra.mxu0 0.0
    %879 = vmatprep.subr.mxu0 0.0
    %880 = vmatpush1.msra.mxu0 0.0
    %881 = vmatprep.subr.mxu0 0.0
    %882 = vmatpush1.msra.mxu0 0.0
    %883 = vmatprep.subr.mxu0 0.0
    %884 = vmatpush1.msra.mxu0 0.0
    %885 = vmatprep.subr.mxu0 0.0
    %886 = vmatpush1.msra.mxu0 0.0
    %887 = vmatprep.subr.mxu0 0.0
    %888 = vmatpush1.msra.mxu0 0.0
    %889 = vmatprep.subr.mxu0 0.0
    %890 = vmatpush1.msra.mxu0 0.0
    %891 = vmatprep.subr.mxu0 0.0
    %892 = vmatpush1.msra.mxu0 0.0
    %893 = vmatprep.subr.mxu0 0.0
    %894 = vmatpush1.msra.mxu0 0.0
    %895 = vmatprep.mubr.f32.mxu0 0.0
    %896 = vmatmul.mubr.f32.gmra.mrb[0].mxu0 %v203
    %v897 = vpop.f32.mrb[0].mxu0
    %v898 = vadd.f32 0.0, %v897
    %v899 = vpop.f32.mrb[0].mxu0
    %900 = vmatprep.mubr.f32.mxu0 0.0
    %901 = vmatmul.mubr.f32.gmra.mrb[0].mxu0 %v206
    %v902 = vpop.f32.mrb[0].mxu0
    %v903 = vadd.f32 0.0, %v902
    %v904 = vpop.f32.mrb[0].mxu0
    %905 = vmatprep.mubr.f32.mxu0 0.0
    %906 = vmatmul.mubr.f32.gmra.mrb[0].mxu0 %v209
    %v907 = vpop.f32.mrb[0].mxu0
    %v908 = vadd.f32 0.0, %v907
    %v909 = vpop.f32.mrb[0].mxu0
    %910 = vmatprep.mubr.f32.mxu0 0.0
    %911 = vmatmul.mubr.f32.gmra.mrb[0].mxu0 %v212
    %v912 = vpop.f32.mrb[0].mxu0
    %v913 = vadd.f32 0.0, %v912
    %v914 = vpop.f32.mrb[0].mxu0
    %915 = vdwg.mxu0
    %v916 = vmul.f32 %v813, %v331
    %v917 = vmul.f32 %v818, %v332
    %v918 = vmul.f32 %v823, %v333
    %v919 = vmul.f32 %v828, %v334
    %v920 = vmul.f32 %v898, %v335
    %v921 = vmul.f32 %v903, %v336
    %v922 = vmul.f32 %v908, %v337
    %v923 = vmul.f32 %v913, %v338
    %s924 = scalar_lea.vmem [#allocation8], 256
    %v925 = vld [vmem:[%s924] sm:$0xff]
    %v926 = vld [vmem:[%s924 + $0x8] sm:$0xff]
    %v927 = vld [vmem:[%s924 + $0x10] sm:$0xff]
    %v928 = vld [vmem:[%s924 + $0x18] sm:$0xff]
    %v929 = vld [vmem:[%s924 + $0x20] sm:$0xff]
    %v930 = vld [vmem:[%s924 + $0x28] sm:$0xff]
    %v931 = vld [vmem:[%s924 + $0x30] sm:$0xff]
    %v932 = vld [vmem:[%s924 + $0x38] sm:$0xff]
    %v933 = vld [vmem:[%s924 + $0x40] sm:$0xff]
    %v934 = vld [vmem:[%s924 + $0x48] sm:$0xff]
    %v935 = vld [vmem:[%s924 + $0x50] sm:$0xff]
    %v936 = vld [vmem:[%s924 + $0x58] sm:$0xff]
    %v937 = vld [vmem:[%s924 + $0x60] sm:$0xff]
    %v938 = vld [vmem:[%s924 + $0x68] sm:$0xff]
    %v939 = vld [vmem:[%s924 + $0x70] sm:$0xff]
    %v940 = vld [vmem:[%s924 + $0x78] sm:$0xff]
    %941 = vmatprep.subr.mxu0 0.0
    %942 = vmatpush1.msra.mxu0 %v925
    %943 = vmatprep.subr.mxu0 0.0
    %944 = vmatpush1.msra.mxu0 %v926
    %945 = vmatprep.subr.mxu0 0.0
    %946 = vmatpush1.msra.mxu0 %v927
    %947 = vmatprep.subr.mxu0 0.0
    %948 = vmatpush1.msra.mxu0 %v928
    %949 = vmatprep.subr.mxu0 0.0
    %950 = vmatpush1.msra.mxu0 %v929
    %951 = vmatprep.subr.mxu0 0.0
    %952 = vmatpush1.msra.mxu0 %v930
    %953 = vmatprep.subr.mxu0 0.0
    %954 = vmatpush1.msra.mxu0 %v931
    %955 = vmatprep.subr.mxu0 0.0
    %956 = vmatpush1.msra.mxu0 %v932
    %957 = vmatprep.subr.mxu0 0.0
    %958 = vmatpush1.msra.mxu0 %v933
    %959 = vmatprep.subr.mxu0 0.0
    %960 = vmatpush1.msra.mxu0 %v934
    %961 = vmatprep.subr.mxu0 0.0
    %962 = vmatpush1.msra.mxu0 %v935
    %963 = vmatprep.subr.mxu0 0.0
    %964 = vmatpush1.msra.mxu0 %v936
    %965 = vmatprep.subr.mxu0 0.0
    %966 = vmatpush1.msra.mxu0 %v937
    %967 = vmatprep.subr.mxu0 0.0
    %968 = vmatpush1.msra.mxu0 %v938
    %969 = vmatprep.subr.mxu0 0.0
    %970 = vmatpush1.msra.mxu0 %v939
    %971 = vmatprep.subr.mxu0 0.0
    %972 = vmatpush1.msra.mxu0 %v940
    %973 = vmatprep.subr.mxu0 0.0
    %974 = vmatpush1.msra.mxu0 0.0
    %975 = vmatprep.subr.mxu0 0.0
    %976 = vmatpush1.msra.mxu0 0.0
    %977 = vmatprep.subr.mxu0 0.0
    %978 = vmatpush1.msra.mxu0 0.0
    %979 = vmatprep.subr.mxu0 0.0
    %980 = vmatpush1.msra.mxu0 0.0
    %981 = vmatprep.subr.mxu0 0.0
    %982 = vmatpush1.msra.mxu0 0.0
    %983 = vmatprep.subr.mxu0 0.0
    %984 = vmatpush1.msra.mxu0 0.0
    %985 = vmatprep.subr.mxu0 0.0
    %986 = vmatpush1.msra.mxu0 0.0
    %987 = vmatprep.subr.mxu0 0.0
    %988 = vmatpush1.msra.mxu0 0.0
    %989 = vmatprep.subr.mxu0 0.0
    %990 = vmatpush1.msra.mxu0 0.0
    %991 = vmatprep.subr.mxu0 0.0
    %992 = vmatpush1.msra.mxu0 0.0
    %993 = vmatprep.subr.mxu0 0.0
    %994 = vmatpush1.msra.mxu0 0.0
    %995 = vmatprep.subr.mxu0 0.0
    %996 = vmatpush1.msra.mxu0 0.0
    %997 = vmatprep.subr.mxu0 0.0
    %998 = vmatpush1.msra.mxu0 0.0
    %999 = vmatprep.subr.mxu0 0.0
    %1000 = vmatpush1.msra.mxu0 0.0
    %1001 = vmatprep.subr.mxu0 0.0
    %1002 = vmatpush1.msra.mxu0 0.0
    %1003 = vmatprep.subr.mxu0 0.0
    %1004 = vmatpush1.msra.mxu0 0.0
    %1005 = vmatprep.mubr.f32.mxu0 0.0
    %1006 = vmatmul.mubr.f32.gmra.mrb[0].mxu0 %v916
    %v1007 = vpop.f32.mrb[0].mxu0
    %v1008 = vadd.f32 0.0, %v1007
    %v1009 = vpop.f32.mrb[0].mxu0
    %1010 = vmatprep.mubr.f32.mxu0 0.0
    %1011 = vmatmul.mubr.f32.gmra.mrb[0].mxu0 %v917
    %v1012 = vpop.f32.mrb[0].mxu0
    %v1013 = vadd.f32 0.0, %v1012
    %v1014 = vpop.f32.mrb[0].mxu0
    %1015 = vmatprep.mubr.f32.mxu0 0.0
    %1016 = vmatmul.mubr.f32.gmra.mrb[0].mxu0 %v918
    %v1017 = vpop.f32.mrb[0].mxu0
    %v1018 = vadd.f32 0.0, %v1017
    %v1019 = vpop.f32.mrb[0].mxu0
    %1020 = vmatprep.mubr.f32.mxu0 0.0
    %1021 = vmatmul.mubr.f32.gmra.mrb[0].mxu0 %v919
    %v1022 = vpop.f32.mrb[0].mxu0
    %v1023 = vadd.f32 0.0, %v1022
    %v1024 = vpop.f32.mrb[0].mxu0
    %1025 = vmatprep.mubr.f32.mxu0 0.0
    %1026 = vmatmul.mubr.f32.gmra.mrb[0].mxu0 %v920
    %v1027 = vpop.f32.mrb[0].mxu0
    %v1028 = vadd.f32 0.0, %v1027
    %v1029 = vpop.f32.mrb[0].mxu0
    %1030 = vmatprep.mubr.f32.mxu0 0.0
    %1031 = vmatmul.mubr.f32.gmra.mrb[0].mxu0 %v921
    %v1032 = vpop.f32.mrb[0].mxu0
    %v1033 = vadd.f32 0.0, %v1032
    %v1034 = vpop.f32.mrb[0].mxu0
    %1035 = vmatprep.mubr.f32.mxu0 0.0
    %1036 = vmatmul.mubr.f32.gmra.mrb[0].mxu0 %v922
    %v1037 = vpop.f32.mrb[0].mxu0
    %v1038 = vadd.f32 0.0, %v1037
    %v1039 = vpop.f32.mrb[0].mxu0
    %1040 = vmatprep.mubr.f32.mxu0 0.0
    %1041 = vmatmul.mubr.f32.gmra.mrb[0].mxu0 %v923
    %v1042 = vpop.f32.mrb[0].mxu0
    %v1043 = vadd.f32 0.0, %v1042
    %v1044 = vpop.f32.mrb[0].mxu0
    %1045 = vdwg.mxu0
    %s1046 = scalar_lea.vmem [#allocation8], 384
    %v1047 = vld [vmem:[%s1046] sm:$0xff]
    %v1048 = vld [vmem:[%s1046 + $0x8] sm:$0xff]
    %v1049 = vld [vmem:[%s1046 + $0x10] sm:$0xff]
    %v1050 = vld [vmem:[%s1046 + $0x18] sm:$0xff]
    %v1051 = vld [vmem:[%s1046 + $0x20] sm:$0xff]
    %v1052 = vld [vmem:[%s1046 + $0x28] sm:$0xff]
    %v1053 = vld [vmem:[%s1046 + $0x30] sm:$0xff]
    %v1054 = vld [vmem:[%s1046 + $0x38] sm:$0xff]
    %v1055 = vld [vmem:[%s1046 + $0x40] sm:$0xff]
    %v1056 = vld [vmem:[%s1046 + $0x48] sm:$0xff]
    %v1057 = vld [vmem:[%s1046 + $0x50] sm:$0xff]
    %v1058 = vld [vmem:[%s1046 + $0x58] sm:$0xff]
    %v1059 = vld [vmem:[%s1046 + $0x60] sm:$0xff]
    %v1060 = vld [vmem:[%s1046 + $0x68] sm:$0xff]
    %v1061 = vld [vmem:[%s1046 + $0x70] sm:$0xff]
    %v1062 = vld [vmem:[%s1046 + $0x78] sm:$0xff]
    %1063 = vmatprep.subr.mxu0 0.0
    %1064 = vmatpush1.msra.mxu0 %v1047
    %1065 = vmatprep.subr.mxu0 0.0
    %1066 = vmatpush1.msra.mxu0 %v1048
    %1067 = vmatprep.subr.mxu0 0.0
    %1068 = vmatpush1.msra.mxu0 %v1049
    %1069 = vmatprep.subr.mxu0 0.0
    %1070 = vmatpush1.msra.mxu0 %v1050
    %1071 = vmatprep.subr.mxu0 0.0
    %1072 = vmatpush1.msra.mxu0 %v1051
    %1073 = vmatprep.subr.mxu0 0.0
    %1074 = vmatpush1.msra.mxu0 %v1052
    %1075 = vmatprep.subr.mxu0 0.0
    %1076 = vmatpush1.msra.mxu0 %v1053
    %1077 = vmatprep.subr.mxu0 0.0
    %1078 = vmatpush1.msra.mxu0 %v1054
    %1079 = vmatprep.subr.mxu0 0.0
    %1080 = vmatpush1.msra.mxu0 %v1055
    %1081 = vmatprep.subr.mxu0 0.0
    %1082 = vmatpush1.msra.mxu0 %v1056
    %1083 = vmatprep.subr.mxu0 0.0
    %1084 = vmatpush1.msra.mxu0 %v1057
    %1085 = vmatprep.subr.mxu0 0.0
    %1086 = vmatpush1.msra.mxu0 %v1058
    %1087 = vmatprep.subr.mxu0 0.0
    %1088 = vmatpush1.msra.mxu0 %v1059
    %1089 = vmatprep.subr.mxu0 0.0
    %1090 = vmatpush1.msra.mxu0 %v1060
    %1091 = vmatprep.subr.mxu0 0.0
    %1092 = vmatpush1.msra.mxu0 %v1061
    %1093 = vmatprep.subr.mxu0 0.0
    %1094 = vmatpush1.msra.mxu0 %v1062
    %1095 = vmatprep.subr.mxu0 0.0
    %1096 = vmatpush1.msra.mxu0 0.0
    %1097 = vmatprep.subr.mxu0 0.0
    %1098 = vmatpush1.msra.mxu0 0.0
    %1099 = vmatprep.subr.mxu0 0.0
    %1100 = vmatpush1.msra.mxu0 0.0
    %1101 = vmatprep.subr.mxu0 0.0
    %1102 = vmatpush1.msra.mxu0 0.0
    %1103 = vmatprep.subr.mxu0 0.0
    %1104 = vmatpush1.msra.mxu0 0.0
    %1105 = vmatprep.subr.mxu0 0.0
    %1106 = vmatpush1.msra.mxu0 0.0
    %1107 = vmatprep.subr.mxu0 0.0
    %1108 = vmatpush1.msra.mxu0 0.0
    %1109 = vmatprep.subr.mxu0 0.0
    %1110 = vmatpush1.msra.mxu0 0.0
    %1111 = vmatprep.subr.mxu0 0.0
    %1112 = vmatpush1.msra.mxu0 0.0
    %1113 = vmatprep.subr.mxu0 0.0
    %1114 = vmatpush1.msra.mxu0 0.0
    %1115 = vmatprep.subr.mxu0 0.0
    %1116 = vmatpush1.msra.mxu0 0.0
    %1117 = vmatprep.subr.mxu0 0.0
    %1118 = vmatpush1.msra.mxu0 0.0
    %1119 = vmatprep.subr.mxu0 0.0
    %1120 = vmatpush1.msra.mxu0 0.0
    %1121 = vmatprep.subr.mxu0 0.0
    %1122 = vmatpush1.msra.mxu0 0.0
    %1123 = vmatprep.subr.mxu0 0.0
    %1124 = vmatpush1.msra.mxu0 0.0
    %1125 = vmatprep.subr.mxu0 0.0
    %1126 = vmatpush1.msra.mxu0 0.0
    %1127 = vmatprep.mubr.f32.mxu0 0.0
    %1128 = vmatmul.mubr.f32.gmra.mrb[0].mxu0 %v738
    %v1129 = vpop.f32.mrb[0].mxu0
    %v1130 = vadd.f32 0.0, %v1129
    %v1131 = vpop.f32.mrb[0].mxu0
    %1132 = vmatprep.mubr.f32.mxu0 0.0
    %1133 = vmatmul.mubr.f32.gmra.mrb[0].mxu0 %v739
    %v1134 = vpop.f32.mrb[0].mxu0
    %v1135 = vadd.f32 0.0, %v1134
    %v1136 = vpop.f32.mrb[0].mxu0
    %1137 = vmatprep.mubr.f32.mxu0 0.0
    %1138 = vmatmul.mubr.f32.gmra.mrb[0].mxu0 %v740
    %v1139 = vpop.f32.mrb[0].mxu0
    %v1140 = vadd.f32 0.0, %v1139
    %v1141 = vpop.f32.mrb[0].mxu0
    %1142 = vmatprep.mubr.f32.mxu0 0.0
    %1143 = vmatmul.mubr.f32.gmra.mrb[0].mxu0 %v741
    %v1144 = vpop.f32.mrb[0].mxu0
    %v1145 = vadd.f32 0.0, %v1144
    %v1146 = vpop.f32.mrb[0].mxu0
    %1147 = vmatprep.mubr.f32.mxu0 0.0
    %1148 = vmatmul.mubr.f32.gmra.mrb[0].mxu0 %v742
    %v1149 = vpop.f32.mrb[0].mxu0
    %v1150 = vadd.f32 0.0, %v1149
    %v1151 = vpop.f32.mrb[0].mxu0
    %1152 = vmatprep.mubr.f32.mxu0 0.0
    %1153 = vmatmul.mubr.f32.gmra.mrb[0].mxu0 %v743
    %v1154 = vpop.f32.mrb[0].mxu0
    %v1155 = vadd.f32 0.0, %v1154
    %v1156 = vpop.f32.mrb[0].mxu0
    %1157 = vmatprep.mubr.f32.mxu0 0.0
    %1158 = vmatmul.mubr.f32.gmra.mrb[0].mxu0 %v744
    %v1159 = vpop.f32.mrb[0].mxu0
    %v1160 = vadd.f32 0.0, %v1159
    %v1161 = vpop.f32.mrb[0].mxu0
    %1162 = vmatprep.mubr.f32.mxu0 0.0
    %1163 = vmatmul.mubr.f32.gmra.mrb[0].mxu0 %v745
    %v1164 = vpop.f32.mrb[0].mxu0
    %v1165 = vadd.f32 0.0, %v1164
    %v1166 = vpop.f32.mrb[0].mxu0
    %1167 = vdwg.mxu0
    %v1168 = vadd.f32 %v1008, %v1130
    %v1169 = vadd.f32 %v1013, %v1135
    %v1170 = vadd.f32 %v1018, %v1140
    %v1171 = vadd.f32 %v1023, %v1145
    %v1172 = vadd.f32 %v1028, %v1150
    %v1173 = vadd.f32 %v1033, %v1155
    %v1174 = vadd.f32 %v1038, %v1160
    %v1175 = vadd.f32 %v1043, %v1165
    %v1176 = vld [vmem:[#allocation10 + $0x3] sm:$0x1]
    %v1177 = vlaneseq
    %v1178 = vshrl.u32 %v1177, 7
    %v1179 = vsub.s32 0, %v1178
    %v1180 = vrot.slane %v1176, %v1179
    %v1181 = vadd.f32 %v1168, %v1180
    %v1182 = vadd.f32 %v1169, %v1180
    %v1183 = vadd.f32 %v1170, %v1180
    %v1184 = vadd.f32 %v1171, %v1180
    %v1185 = vadd.f32 %v1172, %v1180
    %v1186 = vadd.f32 %v1173, %v1180
    %v1187 = vadd.f32 %v1174, %v1180
    %v1188 = vadd.f32 %v1175, %v1180
    %v1189 = vmul.f32 %v1181, %v617
    %v1190 = vmul.f32 %v1182, %v621
    %v1191 = vmul.f32 %v1183, %v625
    %v1192 = vmul.f32 %v1184, %v629
    %v1193 = vmul.f32 %v1185, %v636
    %v1194 = vmul.f32 %v1186, %v640
    %v1195 = vmul.f32 %v1187, %v644
    %v1196 = vmul.f32 %v1188, %v648
    %v1197 = vmax.f32 %v1189, 0.0
    %v1198 = vmax.f32 %v1190, 0.0
    %v1199 = vmax.f32 %v1191, 0.0
    %v1200 = vmax.f32 %v1192, 0.0
    %v1201 = vmax.f32 %v1193, 0.0
    %v1202 = vmax.f32 %v1194, 0.0
    %v1203 = vmax.f32 %v1195, 0.0
    %v1204 = vmax.f32 %v1196, 0.0
    %v1205 = vadd.f32 %v1197, %v1198
    %v1206 = vadd.f32 %v1205, %v1199
    %v1207 = vadd.f32 %v1206, %v1200
    %v1208 = vadd.f32 %v1207, %v1201
    %v1209 = vadd.f32 %v1208, %v1202
    %v1210 = vadd.f32 %v1209, %v1203
    %v1211 = vadd.f32 %v1210, %v1204
    %v1212 = vrot.slane %v1211, 4
    %v1213 = vadd.f32 %v1211, %v1212
    %v1214 = vrot.slane %v1213, 2
    %v1215 = vadd.f32 %v1213, %v1214
    %v1216 = vrot.slane %v1215, 1
    %v1217 = vadd.f32 %v1215, %v1216
    %v1218 = vmul.f32 %v1217, %v678
    %v1219 = vsub.f32 %v1197, %v1218
    %v1220 = vsub.f32 %v1198, %v1218
    %v1221 = vsub.f32 %v1199, %v1218
    %v1222 = vsub.f32 %v1200, %v1218
    %v1223 = vsub.f32 %v1201, %v1218
    %v1224 = vsub.f32 %v1202, %v1218
    %v1225 = vsub.f32 %v1203, %v1218
    %v1226 = vsub.f32 %v1204, %v1218
    %v1227 = vmul.f32 %v1219, %v1219
    %v1228 = vmul.f32 %v1220, %v1220
    %v1229 = vmul.f32 %v1221, %v1221
    %v1230 = vmul.f32 %v1222, %v1222
    %v1231 = vmul.f32 %v1223, %v1223
    %v1232 = vmul.f32 %v1224, %v1224
    %v1233 = vmul.f32 %v1225, %v1225
    %v1234 = vmul.f32 %v1226, %v1226
    %v1235 = vadd.f32 %v1227, %v1228
    %v1236 = vadd.f32 %v1235, %v1229
    %v1237 = vadd.f32 %v1236, %v1230
    %v1238 = vadd.f32 %v1237, %v1231
    %v1239 = vadd.f32 %v1238, %v1232
    %v1240 = vadd.f32 %v1239, %v1233
    %v1241 = vadd.f32 %v1240, %v1234
    %v1242 = vrot.slane %v1241, 4
    %v1243 = vadd.f32 %v1241, %v1242
    %v1244 = vrot.slane %v1243, 2
    %v1245 = vadd.f32 %v1243, %v1244
    %v1246 = vrot.slane %v1245, 1
    %v1247 = vadd.f32 %v1245, %v1246
    %v1248 = vmul.f32 %v1247, %v678
    %v1249 = vadd.f32 %v1248, 1e-05
    %v1250 = vrsqrt.pop %v1249
    %v1251 = vmul.f32 %v1219, %v1250
    %v1252 = vmul.f32 %v1220, %v1250
    %v1253 = vmul.f32 %v1221, %v1250
    %v1254 = vmul.f32 %v1222, %v1250
    %v1255 = vmul.f32 %v1223, %v1250
    %v1256 = vmul.f32 %v1224, %v1250
    %v1257 = vmul.f32 %v1225, %v1250
    %v1258 = vmul.f32 %v1226, %v1250
    %v1259 = vld [vmem:[#allocation10 + $0x4] sm:$0x1]
    %v1260 = vlaneseq
    %v1261 = vshrl.u32 %v1260, 7
    %v1262 = vsub.s32 0, %v1261
    %v1263 = vrot.slane %v1259, %v1262
    %v1264 = vmul.f32 %v1251, %v1263
    %v1265 = vmul.f32 %v1252, %v1263
    %v1266 = vmul.f32 %v1253, %v1263
    %v1267 = vmul.f32 %v1254, %v1263
    %v1268 = vmul.f32 %v1255, %v1263
    %v1269 = vmul.f32 %v1256, %v1263
    %v1270 = vmul.f32 %v1257, %v1263
    %v1271 = vmul.f32 %v1258, %v1263
    %v1272 = vld [vmem:[#allocation10 + $0x5] sm:$0x1]
    %v1273 = vlaneseq
    %v1274 = vshrl.u32 %v1273, 7
    %v1275 = vsub.s32 0, %v1274
    %v1276 = vrot.slane %v1272, %v1275
    %v1277 = vadd.f32 %v1264, %v1276
    %v1278 = vadd.f32 %v1265, %v1276
    %v1279 = vadd.f32 %v1266, %v1276
    %v1280 = vadd.f32 %v1267, %v1276
    %v1281 = vadd.f32 %v1268, %v1276
    %v1282 = vadd.f32 %v1269, %v1276
    %v1283 = vadd.f32 %v1270, %v1276
    %v1284 = vadd.f32 %v1271, %v1276
    %1285 = vmatprep.subr.mxu0 0.0
    %1286 = vmatpush1.msra.mxu0 %v1277
    %1287 = vmatprep.subr.mxu0 0.0
    %1288 = vmatpush1.msra.mxu0 %v1278
    %1289 = vmatprep.subr.mxu0 0.0
    %1290 = vmatpush1.msra.mxu0 %v1279
    %1291 = vmatprep.subr.mxu0 0.0
    %1292 = vmatpush1.msra.mxu0 %v1280
    %1293 = vmatprep.subr.mxu0 0.0
    %1294 = vmatpush1.msra.mxu0 0.0
    %1295 = vmatprep.subr.mxu0 0.0
    %1296 = vmatpush1.msra.mxu0 0.0
    %1297 = vmatprep.subr.mxu0 0.0
    %1298 = vmatpush1.msra.mxu0 0.0
    %1299 = vmatprep.subr.mxu0 0.0
    %1300 = vmatpush1.msra.mxu0 0.0
    %1301 = vmatprep.subr.mxu0 0.0
    %1302 = vmatpush1.msra.mxu0 0.0
    %1303 = vmatprep.subr.mxu0 0.0
    %1304 = vmatpush1.msra.mxu0 0.0
    %1305 = vmatprep.subr.mxu0 0.0
    %1306 = vmatpush1.msra.mxu0 0.0
    %1307 = vmatprep.subr.mxu0 0.0
    %1308 = vmatpush1.msra.mxu0 0.0
    %1309 = vmatprep.subr.mxu0 0.0
    %1310 = vmatpush1.msra.mxu0 0.0
    %1311 = vmatprep.subr.mxu0 0.0
    %1312 = vmatpush1.msra.mxu0 0.0
    %1313 = vmatprep.subr.mxu0 0.0
    %1314 = vmatpush1.msra.mxu0 0.0
    %1315 = vmatprep.subr.mxu0 0.0
    %1316 = vmatpush1.msra.mxu0 0.0
    %1317 = vmatprep.subr.mxu0 0.0
    %1318 = vmatpush1.msra.mxu0 0.0
    %1319 = vmatprep.subr.mxu0 0.0
    %1320 = vmatpush1.msra.mxu0 0.0
    %1321 = vmatprep.subr.mxu0 0.0
    %1322 = vmatpush1.msra.mxu0 0.0
    %1323 = vmatprep.subr.mxu0 0.0
    %1324 = vmatpush1.msra.mxu0 0.0
    %1325 = vmatprep.subr.mxu0 0.0
    %1326 = vmatpush1.msra.mxu0 0.0
    %1327 = vmatprep.subr.mxu0 0.0
    %1328 = vmatpush1.msra.mxu0 0.0
    %1329 = vmatprep.subr.mxu0 0.0
    %1330 = vmatpush1.msra.mxu0 0.0
    %1331 = vmatprep.subr.mxu0 0.0
    %1332 = vmatpush1.msra.mxu0 0.0
    %1333 = vmatprep.subr.mxu0 0.0
    %1334 = vmatpush1.msra.mxu0 0.0
    %1335 = vmatprep.subr.mxu0 0.0
    %1336 = vmatpush1.msra.mxu0 0.0
    %1337 = vmatprep.subr.mxu0 0.0
    %1338 = vmatpush1.msra.mxu0 0.0
    %1339 = vmatprep.subr.mxu0 0.0
    %1340 = vmatpush1.msra.mxu0 0.0
    %1341 = vmatprep.subr.mxu0 0.0
    %1342 = vmatpush1.msra.mxu0 0.0
    %1343 = vmatprep.subr.mxu0 0.0
    %1344 = vmatpush1.msra.mxu0 0.0
    %1345 = vmatprep.subr.mxu0 0.0
    %1346 = vmatpush1.msra.mxu0 0.0
    %1347 = vmatprep.subr.mxu0 0.0
    %1348 = vmatpush1.msra.mxu0 0.0
    %1349 = vmatprep.mubr.f32.mxu0 0.0
    %1350 = vmatmul.mubr.f32.gmra.mrb[0].mxu0 %v106
    %v1351 = vpop.f32.mrb[0].mxu0
    %v1352 = vadd.f32 0.0, %v1351
    %v1353 = vpop.f32.mrb[0].mxu0
    %1354 = vmatprep.mubr.f32.mxu0 0.0
    %1355 = vmatmul.mubr.f32.gmra.mrb[0].mxu0 %v109
    %v1356 = vpop.f32.mrb[0].mxu0
    %v1357 = vadd.f32 0.0, %v1356
    %v1358 = vpop.f32.mrb[0].mxu0
    %1359 = vmatprep.mubr.f32.mxu0 0.0
    %1360 = vmatmul.mubr.f32.gmra.mrb[0].mxu0 %v112
    %v1361 = vpop.f32.mrb[0].mxu0
    %v1362 = vadd.f32 0.0, %v1361
    %v1363 = vpop.f32.mrb[0].mxu0
    %1364 = vmatprep.mubr.f32.mxu0 0.0
    %1365 = vmatmul.mubr.f32.gmra.mrb[0].mxu0 %v115
    %v1366 = vpop.f32.mrb[0].mxu0
    %v1367 = vadd.f32 0.0, %v1366
    %v1368 = vpop.f32.mrb[0].mxu0
    %1369 = vdwg.mxu0
    %1370 = vmatprep.subr.mxu0 0.0
    %1371 = vmatpush1.msra.mxu0 %v1281
    %1372 = vmatprep.subr.mxu0 0.0
    %1373 = vmatpush1.msra.mxu0 %v1282
    %1374 = vmatprep.subr.mxu0 0.0
    %1375 = vmatpush1.msra.mxu0 %v1283
    %1376 = vmatprep.subr.mxu0 0.0
    %1377 = vmatpush1.msra.mxu0 %v1284
    %1378 = vmatprep.subr.mxu0 0.0
    %1379 = vmatpush1.msra.mxu0 0.0
    %1380 = vmatprep.subr.mxu0 0.0
    %1381 = vmatpush1.msra.mxu0 0.0
    %1382 = vmatprep.subr.mxu0 0.0
    %1383 = vmatpush1.msra.mxu0 0.0
    %1384 = vmatprep.subr.mxu0 0.0
    %1385 = vmatpush1.msra.mxu0 0.0
    %1386 = vmatprep.subr.mxu0 0.0
    %1387 = vmatpush1.msra.mxu0 0.0
    %1388 = vmatprep.subr.mxu0 0.0
    %1389 = vmatpush1.msra.mxu0 0.0
    %1390 = vmatprep.subr.mxu0 0.0
    %1391 = vmatpush1.msra.mxu0 0.0
    %1392 = vmatprep.subr.mxu0 0.0
    %1393 = vmatpush1.msra.mxu0 0.0
    %1394 = vmatprep.subr.mxu0 0.0
    %1395 = vmatpush1.msra.mxu0 0.0
    %1396 = vmatprep.subr.mxu0 0.0
    %1397 = vmatpush1.msra.mxu0 0.0
    %1398 = vmatprep.subr.mxu0 0.0
    %1399 = vmatpush1.msra.mxu0 0.0
    %1400 = vmatprep.subr.mxu0 0.0
    %1401 = vmatpush1.msra.mxu0 0.0
    %1402 = vmatprep.subr.mxu0 0.0
    %1403 = vmatpush1.msra.mxu0 0.0
    %1404 = vmatprep.subr.mxu0 0.0
    %1405 = vmatpush1.msra.mxu0 0.0
    %1406 = vmatprep.subr.mxu0 0.0
    %1407 = vmatpush1.msra.mxu0 0.0
    %1408 = vmatprep.subr.mxu0 0.0
    %1409 = vmatpush1.msra.mxu0 0.0
    %1410 = vmatprep.subr.mxu0 0.0
    %1411 = vmatpush1.msra.mxu0 0.0
    %1412 = vmatprep.subr.mxu0 0.0
    %1413 = vmatpush1.msra.mxu0 0.0
    %1414 = vmatprep.subr.mxu0 0.0
    %1415 = vmatpush1.msra.mxu0 0.0
    %1416 = vmatprep.subr.mxu0 0.0
    %1417 = vmatpush1.msra.mxu0 0.0
    %1418 = vmatprep.subr.mxu0 0.0
    %1419 = vmatpush1.msra.mxu0 0.0
    %1420 = vmatprep.subr.mxu0 0.0
    %1421 = vmatpush1.msra.mxu0 0.0
    %1422 = vmatprep.subr.mxu0 0.0
    %1423 = vmatpush1.msra.mxu0 0.0
    %1424 = vmatprep.subr.mxu0 0.0
    %1425 = vmatpush1.msra.mxu0 0.0
    %1426 = vmatprep.subr.mxu0 0.0
    %1427 = vmatpush1.msra.mxu0 0.0
    %1428 = vmatprep.subr.mxu0 0.0
    %1429 = vmatpush1.msra.mxu0 0.0
    %1430 = vmatprep.subr.mxu0 0.0
    %1431 = vmatpush1.msra.mxu0 0.0
    %1432 = vmatprep.subr.mxu0 0.0
    %1433 = vmatpush1.msra.mxu0 0.0
    %1434 = vmatprep.mubr.f32.mxu0 0.0
    %1435 = vmatmul.mubr.f32.gmra.mrb[0].mxu0 %v203
    %v1436 = vpop.f32.mrb[0].mxu0
    %v1437 = vadd.f32 0.0, %v1436
    %v1438 = vpop.f32.mrb[0].mxu0
    %1439 = vmatprep.mubr.f32.mxu0 0.0
    %1440 = vmatmul.mubr.f32.gmra.mrb[0].mxu0 %v206
    %v1441 = vpop.f32.mrb[0].mxu0
    %v1442 = vadd.f32 0.0, %v1441
    %v1443 = vpop.f32.mrb[0].mxu0
    %1444 = vmatprep.mubr.f32.mxu0 0.0
    %1445 = vmatmul.mubr.f32.gmra.mrb[0].mxu0 %v209
    %v1446 = vpop.f32.mrb[0].mxu0
    %v1447 = vadd.f32 0.0, %v1446
    %v1448 = vpop.f32.mrb[0].mxu0
    %1449 = vmatprep.mubr.f32.mxu0 0.0
    %1450 = vmatmul.mubr.f32.gmra.mrb[0].mxu0 %v212
    %v1451 = vpop.f32.mrb[0].mxu0
    %v1452 = vadd.f32 0.0, %v1451
    %v1453 = vpop.f32.mrb[0].mxu0
    %1454 = vdwg.mxu0
    %v1455 = vmul.f32 %v1352, %v331
    %v1456 = vmul.f32 %v1357, %v332
    %v1457 = vmul.f32 %v1362, %v333
    %v1458 = vmul.f32 %v1367, %v334
    %v1459 = vmul.f32 %v1437, %v335
    %v1460 = vmul.f32 %v1442, %v336
    %v1461 = vmul.f32 %v1447, %v337
    %v1462 = vmul.f32 %v1452, %v338
    %s1463 = scalar_lea.vmem [#allocation8], 512
    %v1464 = vld [vmem:[%s1463] sm:$0xff]
    %v1465 = vld [vmem:[%s1463 + $0x8] sm:$0xff]
    %v1466 = vld [vmem:[%s1463 + $0x10] sm:$0xff]
    %v1467 = vld [vmem:[%s1463 + $0x18] sm:$0xff]
    %v1468 = vld [vmem:[%s1463 + $0x20] sm:$0xff]
    %v1469 = vld [vmem:[%s1463 + $0x28] sm:$0xff]
    %v1470 = vld [vmem:[%s1463 + $0x30] sm:$0xff]
    %v1471 = vld [vmem:[%s1463 + $0x38] sm:$0xff]
    %v1472 = vld [vmem:[%s1463 + $0x40] sm:$0xff]
    %v1473 = vld [vmem:[%s1463 + $0x48] sm:$0xff]
    %v1474 = vld [vmem:[%s1463 + $0x50] sm:$0xff]
    %v1475 = vld [vmem:[%s1463 + $0x58] sm:$0xff]
    %v1476 = vld [vmem:[%s1463 + $0x60] sm:$0xff]
    %v1477 = vld [vmem:[%s1463 + $0x68] sm:$0xff]
    %v1478 = vld [vmem:[%s1463 + $0x70] sm:$0xff]
    %v1479 = vld [vmem:[%s1463 + $0x78] sm:$0xff]
    %1480 = vmatprep.subr.mxu0 0.0
    %1481 = vmatpush1.msra.mxu0 %v1464
    %1482 = vmatprep.subr.mxu0 0.0
    %1483 = vmatpush1.msra.mxu0 %v1465
    %1484 = vmatprep.subr.mxu0 0.0
    %1485 = vmatpush1.msra.mxu0 %v1466
    %1486 = vmatprep.subr.mxu0 0.0
    %1487 = vmatpush1.msra.mxu0 %v1467
    %1488 = vmatprep.subr.mxu0 0.0
    %1489 = vmatpush1.msra.mxu0 %v1468
    %1490 = vmatprep.subr.mxu0 0.0
    %1491 = vmatpush1.msra.mxu0 %v1469
    %1492 = vmatprep.subr.mxu0 0.0
    %1493 = vmatpush1.msra.mxu0 %v1470
    %1494 = vmatprep.subr.mxu0 0.0
    %1495 = vmatpush1.msra.mxu0 %v1471
    %1496 = vmatprep.subr.mxu0 0.0
    %1497 = vmatpush1.msra.mxu0 %v1472
    %1498 = vmatprep.subr.mxu0 0.0
    %1499 = vmatpush1.msra.mxu0 %v1473
    %1500 = vmatprep.subr.mxu0 0.0
    %1501 = vmatpush1.msra.mxu0 %v1474
    %1502 = vmatprep.subr.mxu0 0.0
    %1503 = vmatpush1.msra.mxu0 %v1475
    %1504 = vmatprep.subr.mxu0 0.0
    %1505 = vmatpush1.msra.mxu0 %v1476
    %1506 = vmatprep.subr.mxu0 0.0
    %1507 = vmatpush1.msra.mxu0 %v1477
    %1508 = vmatprep.subr.mxu0 0.0
    %1509 = vmatpush1.msra.mxu0 %v1478
    %1510 = vmatprep.subr.mxu0 0.0
    %1511 = vmatpush1.msra.mxu0 %v1479
    %1512 = vmatprep.subr.mxu0 0.0
    %1513 = vmatpush1.msra.mxu0 0.0
    %1514 = vmatprep.subr.mxu0 0.0
    %1515 = vmatpush1.msra.mxu0 0.0
    %1516 = vmatprep.subr.mxu0 0.0
    %1517 = vmatpush1.msra.mxu0 0.0
    %1518 = vmatprep.subr.mxu0 0.0
    %1519 = vmatpush1.msra.mxu0 0.0
    %1520 = vmatprep.subr.mxu0 0.0
    %1521 = vmatpush1.msra.mxu0 0.0
    %1522 = vmatprep.subr.mxu0 0.0
    %1523 = vmatpush1.msra.mxu0 0.0
    %1524 = vmatprep.subr.mxu0 0.0
    %1525 = vmatpush1.msra.mxu0 0.0
    %1526 = vmatprep.subr.mxu0 0.0
    %1527 = vmatpush1.msra.mxu0 0.0
    %1528 = vmatprep.subr.mxu0 0.0
    %1529 = vmatpush1.msra.mxu0 0.0
    %1530 = vmatprep.subr.mxu0 0.0
    %1531 = vmatpush1.msra.mxu0 0.0
    %1532 = vmatprep.subr.mxu0 0.0
    %1533 = vmatpush1.msra.mxu0 0.0
    %1534 = vmatprep.subr.mxu0 0.0
    %1535 = vmatpush1.msra.mxu0 0.0
    %1536 = vmatprep.subr.mxu0 0.0
    %1537 = vmatpush1.msra.mxu0 0.0
    %1538 = vmatprep.subr.mxu0 0.0
    %1539 = vmatpush1.msra.mxu0 0.0
    %1540 = vmatprep.subr.mxu0 0.0
    %1541 = vmatpush1.msra.mxu0 0.0
    %1542 = vmatprep.subr.mxu0 0.0
    %1543 = vmatpush1.msra.mxu0 0.0
    %1544 = vmatprep.mubr.f32.mxu0 0.0
    %1545 = vmatmul.mubr.f32.gmra.mrb[0].mxu0 %v1455
    %v1546 = vpop.f32.mrb[0].mxu0
    %v1547 = vadd.f32 0.0, %v1546
    %v1548 = vpop.f32.mrb[0].mxu0
    %1549 = vmatprep.mubr.f32.mxu0 0.0
    %1550 = vmatmul.mubr.f32.gmra.mrb[0].mxu0 %v1456
    %v1551 = vpop.f32.mrb[0].mxu0
    %v1552 = vadd.f32 0.0, %v1551
    %v1553 = vpop.f32.mrb[0].mxu0
    %1554 = vmatprep.mubr.f32.mxu0 0.0
    %1555 = vmatmul.mubr.f32.gmra.mrb[0].mxu0 %v1457
    %v1556 = vpop.f32.mrb[0].mxu0
    %v1557 = vadd.f32 0.0, %v1556
    %v1558 = vpop.f32.mrb[0].mxu0
    %1559 = vmatprep.mubr.f32.mxu0 0.0
    %1560 = vmatmul.mubr.f32.gmra.mrb[0].mxu0 %v1458
    %v1561 = vpop.f32.mrb[0].mxu0
    %v1562 = vadd.f32 0.0, %v1561
    %v1563 = vpop.f32.mrb[0].mxu0
    %1564 = vmatprep.mubr.f32.mxu0 0.0
    %1565 = vmatmul.mubr.f32.gmra.mrb[0].mxu0 %v1459
    %v1566 = vpop.f32.mrb[0].mxu0
    %v1567 = vadd.f32 0.0, %v1566
    %v1568 = vpop.f32.mrb[0].mxu0
    %1569 = vmatprep.mubr.f32.mxu0 0.0
    %1570 = vmatmul.mubr.f32.gmra.mrb[0].mxu0 %v1460
    %v1571 = vpop.f32.mrb[0].mxu0
    %v1572 = vadd.f32 0.0, %v1571
    %v1573 = vpop.f32.mrb[0].mxu0
    %1574 = vmatprep.mubr.f32.mxu0 0.0
    %1575 = vmatmul.mubr.f32.gmra.mrb[0].mxu0 %v1461
    %v1576 = vpop.f32.mrb[0].mxu0
    %v1577 = vadd.f32 0.0, %v1576
    %v1578 = vpop.f32.mrb[0].mxu0
    %1579 = vmatprep.mubr.f32.mxu0 0.0
    %1580 = vmatmul.mubr.f32.gmra.mrb[0].mxu0 %v1462
    %v1581 = vpop.f32.mrb[0].mxu0
    %v1582 = vadd.f32 0.0, %v1581
    %v1583 = vpop.f32.mrb[0].mxu0
    %1584 = vdwg.mxu0
    %s1585 = scalar_lea.vmem [#allocation8], 640
    %v1586 = vld [vmem:[%s1585] sm:$0xff]
    %v1587 = vld [vmem:[%s1585 + $0x8] sm:$0xff]
    %v1588 = vld [vmem:[%s1585 + $0x10] sm:$0xff]
    %v1589 = vld [vmem:[%s1585 + $0x18] sm:$0xff]
    %v1590 = vld [vmem:[%s1585 + $0x20] sm:$0xff]
    %v1591 = vld [vmem:[%s1585 + $0x28] sm:$0xff]
    %v1592 = vld [vmem:[%s1585 + $0x30] sm:$0xff]
    %v1593 = vld [vmem:[%s1585 + $0x38] sm:$0xff]
    %v1594 = vld [vmem:[%s1585 + $0x40] sm:$0xff]
    %v1595 = vld [vmem:[%s1585 + $0x48] sm:$0xff]
    %v1596 = vld [vmem:[%s1585 + $0x50] sm:$0xff]
    %v1597 = vld [vmem:[%s1585 + $0x58] sm:$0xff]
    %v1598 = vld [vmem:[%s1585 + $0x60] sm:$0xff]
    %v1599 = vld [vmem:[%s1585 + $0x68] sm:$0xff]
    %v1600 = vld [vmem:[%s1585 + $0x70] sm:$0xff]
    %v1601 = vld [vmem:[%s1585 + $0x78] sm:$0xff]
    %1602 = vmatprep.subr.mxu0 0.0
    %1603 = vmatpush1.msra.mxu0 %v1586
    %1604 = vmatprep.subr.mxu0 0.0
    %1605 = vmatpush1.msra.mxu0 %v1587
    %1606 = vmatprep.subr.mxu0 0.0
    %1607 = vmatpush1.msra.mxu0 %v1588
    %1608 = vmatprep.subr.mxu0 0.0
    %1609 = vmatpush1.msra.mxu0 %v1589
    %1610 = vmatprep.subr.mxu0 0.0
    %1611 = vmatpush1.msra.mxu0 %v1590
    %1612 = vmatprep.subr.mxu0 0.0
    %1613 = vmatpush1.msra.mxu0 %v1591
    %1614 = vmatprep.subr.mxu0 0.0
    %1615 = vmatpush1.msra.mxu0 %v1592
    %1616 = vmatprep.subr.mxu0 0.0
    %1617 = vmatpush1.msra.mxu0 %v1593
    %1618 = vmatprep.subr.mxu0 0.0
    %1619 = vmatpush1.msra.mxu0 %v1594
    %1620 = vmatprep.subr.mxu0 0.0
    %1621 = vmatpush1.msra.mxu0 %v1595
    %1622 = vmatprep.subr.mxu0 0.0
    %1623 = vmatpush1.msra.mxu0 %v1596
    %1624 = vmatprep.subr.mxu0 0.0
    %1625 = vmatpush1.msra.mxu0 %v1597
    %1626 = vmatprep.subr.mxu0 0.0
    %1627 = vmatpush1.msra.mxu0 %v1598
    %1628 = vmatprep.subr.mxu0 0.0
    %1629 = vmatpush1.msra.mxu0 %v1599
    %1630 = vmatprep.subr.mxu0 0.0
    %1631 = vmatpush1.msra.mxu0 %v1600
    %1632 = vmatprep.subr.mxu0 0.0
    %1633 = vmatpush1.msra.mxu0 %v1601
    %1634 = vmatprep.subr.mxu0 0.0
    %1635 = vmatpush1.msra.mxu0 0.0
    %1636 = vmatprep.subr.mxu0 0.0
    %1637 = vmatpush1.msra.mxu0 0.0
    %1638 = vmatprep.subr.mxu0 0.0
    %1639 = vmatpush1.msra.mxu0 0.0
    %1640 = vmatprep.subr.mxu0 0.0
    %1641 = vmatpush1.msra.mxu0 0.0
    %1642 = vmatprep.subr.mxu0 0.0
    %1643 = vmatpush1.msra.mxu0 0.0
    %1644 = vmatprep.subr.mxu0 0.0
    %1645 = vmatpush1.msra.mxu0 0.0
    %1646 = vmatprep.subr.mxu0 0.0
    %1647 = vmatpush1.msra.mxu0 0.0
    %1648 = vmatprep.subr.mxu0 0.0
    %1649 = vmatpush1.msra.mxu0 0.0
    %1650 = vmatprep.subr.mxu0 0.0
    %1651 = vmatpush1.msra.mxu0 0.0
    %1652 = vmatprep.subr.mxu0 0.0
    %1653 = vmatpush1.msra.mxu0 0.0
    %1654 = vmatprep.subr.mxu0 0.0
    %1655 = vmatpush1.msra.mxu0 0.0
    %1656 = vmatprep.subr.mxu0 0.0
    %1657 = vmatpush1.msra.mxu0 0.0
    %1658 = vmatprep.subr.mxu0 0.0
    %1659 = vmatpush1.msra.mxu0 0.0
    %1660 = vmatprep.subr.mxu0 0.0
    %1661 = vmatpush1.msra.mxu0 0.0
    %1662 = vmatprep.subr.mxu0 0.0
    %1663 = vmatpush1.msra.mxu0 0.0
    %1664 = vmatprep.subr.mxu0 0.0
    %1665 = vmatpush1.msra.mxu0 0.0
    %1666 = vmatprep.mubr.f32.mxu0 0.0
    %1667 = vmatmul.mubr.f32.gmra.mrb[0].mxu0 %v1277
    %v1668 = vpop.f32.mrb[0].mxu0
    %v1669 = vadd.f32 0.0, %v1668
    %v1670 = vpop.f32.mrb[0].mxu0
    %1671 = vmatprep.mubr.f32.mxu0 0.0
    %1672 = vmatmul.mubr.f32.gmra.mrb[0].mxu0 %v1278
    %v1673 = vpop.f32.mrb[0].mxu0
    %v1674 = vadd.f32 0.0, %v1673
    %v1675 = vpop.f32.mrb[0].mxu0
    %1676 = vmatprep.mubr.f32.mxu0 0.0
    %1677 = vmatmul.mubr.f32.gmra.mrb[0].mxu0 %v1279
    %v1678 = vpop.f32.mrb[0].mxu0
    %v1679 = vadd.f32 0.0, %v1678
    %v1680 = vpop.f32.mrb[0].mxu0
    %1681 = vmatprep.mubr.f32.mxu0 0.0
    %1682 = vmatmul.mubr.f32.gmra.mrb[0].mxu0 %v1280
    %v1683 = vpop.f32.mrb[0].mxu0
    %v1684 = vadd.f32 0.0, %v1683
    %v1685 = vpop.f32.mrb[0].mxu0
    %1686 = vmatprep.mubr.f32.mxu0 0.0
    %1687 = vmatmul.mubr.f32.gmra.mrb[0].mxu0 %v1281
    %v1688 = vpop.f32.mrb[0].mxu0
    %v1689 = vadd.f32 0.0, %v1688
    %v1690 = vpop.f32.mrb[0].mxu0
    %1691 = vmatprep.mubr.f32.mxu0 0.0
    %1692 = vmatmul.mubr.f32.gmra.mrb[0].mxu0 %v1282
    %v1693 = vpop.f32.mrb[0].mxu0
    %v1694 = vadd.f32 0.0, %v1693
    %v1695 = vpop.f32.mrb[0].mxu0
    %1696 = vmatprep.mubr.f32.mxu0 0.0
    %1697 = vmatmul.mubr.f32.gmra.mrb[0].mxu0 %v1283
    %v1698 = vpop.f32.mrb[0].mxu0
    %v1699 = vadd.f32 0.0, %v1698
    %v1700 = vpop.f32.mrb[0].mxu0
    %1701 = vmatprep.mubr.f32.mxu0 0.0
    %1702 = vmatmul.mubr.f32.gmra.mrb[0].mxu0 %v1284
    %v1703 = vpop.f32.mrb[0].mxu0
    %v1704 = vadd.f32 0.0, %v1703
    %v1705 = vpop.f32.mrb[0].mxu0
    %1706 = vdwg.mxu0
    %v1707 = vadd.f32 %v1547, %v1669
    %v1708 = vadd.f32 %v1552, %v1674
    %v1709 = vadd.f32 %v1557, %v1679
    %v1710 = vadd.f32 %v1562, %v1684
    %v1711 = vadd.f32 %v1567, %v1689
    %v1712 = vadd.f32 %v1572, %v1694
    %v1713 = vadd.f32 %v1577, %v1699
    %v1714 = vadd.f32 %v1582, %v1704
    %v1715 = vld [vmem:[#allocation10 + $0x6] sm:$0x1]
    %v1716 = vlaneseq
    %v1717 = vshrl.u32 %v1716, 7
    %v1718 = vsub.s32 0, %v1717
    %v1719 = vrot.slane %v1715, %v1718
    %v1720 = vadd.f32 %v1707, %v1719
    %v1721 = vadd.f32 %v1708, %v1719
    %v1722 = vadd.f32 %v1709, %v1719
    %v1723 = vadd.f32 %v1710, %v1719
    %v1724 = vadd.f32 %v1711, %v1719
    %v1725 = vadd.f32 %v1712, %v1719
    %v1726 = vadd.f32 %v1713, %v1719
    %v1727 = vadd.f32 %v1714, %v1719
    %v1728 = vmul.f32 %v1720, %v617
    %v1729 = vmul.f32 %v1721, %v621
    %v1730 = vmul.f32 %v1722, %v625
    %v1731 = vmul.f32 %v1723, %v629
    %v1732 = vmul.f32 %v1724, %v636
    %v1733 = vmul.f32 %v1725, %v640
    %v1734 = vmul.f32 %v1726, %v644
    %v1735 = vmul.f32 %v1727, %v648
    %v1736 = vmax.f32 %v1728, 0.0
    %v1737 = vmax.f32 %v1729, 0.0
    %v1738 = vmax.f32 %v1730, 0.0
    %v1739 = vmax.f32 %v1731, 0.0
    %v1740 = vmax.f32 %v1732, 0.0
    %v1741 = vmax.f32 %v1733, 0.0
    %v1742 = vmax.f32 %v1734, 0.0
    %v1743 = vmax.f32 %v1735, 0.0
    %v1744 = vadd.f32 %v1736, %v1737
    %v1745 = vadd.f32 %v1744, %v1738
    %v1746 = vadd.f32 %v1745, %v1739
    %v1747 = vadd.f32 %v1746, %v1740
    %v1748 = vadd.f32 %v1747, %v1741
    %v1749 = vadd.f32 %v1748, %v1742
    %v1750 = vadd.f32 %v1749, %v1743
    %v1751 = vrot.slane %v1750, 4
    %v1752 = vadd.f32 %v1750, %v1751
    %v1753 = vrot.slane %v1752, 2
    %v1754 = vadd.f32 %v1752, %v1753
    %v1755 = vrot.slane %v1754, 1
    %v1756 = vadd.f32 %v1754, %v1755
    %v1757 = vmul.f32 %v1756, %v678
    %v1758 = vsub.f32 %v1736, %v1757
    %v1759 = vsub.f32 %v1737, %v1757
    %v1760 = vsub.f32 %v1738, %v1757
    %v1761 = vsub.f32 %v1739, %v1757
    %v1762 = vsub.f32 %v1740, %v1757
    %v1763 = vsub.f32 %v1741, %v1757
    %v1764 = vsub.f32 %v1742, %v1757
    %v1765 = vsub.f32 %v1743, %v1757
    %v1766 = vmul.f32 %v1758, %v1758
    %v1767 = vmul.f32 %v1759, %v1759
    %v1768 = vmul.f32 %v1760, %v1760
    %v1769 = vmul.f32 %v1761, %v1761
    %v1770 = vmul.f32 %v1762, %v1762
    %v1771 = vmul.f32 %v1763, %v1763
    %v1772 = vmul.f32 %v1764, %v1764
    %v1773 = vmul.f32 %v1765, %v1765
    %v1774 = vadd.f32 %v1766, %v1767
    %v1775 = vadd.f32 %v1774, %v1768
    %v1776 = vadd.f32 %v1775, %v1769
    %v1777 = vadd.f32 %v1776, %v1770
    %v1778 = vadd.f32 %v1777, %v1771
    %v1779 = vadd.f32 %v1778, %v1772
    %v1780 = vadd.f32 %v1779, %v1773
    %v1781 = vrot.slane %v1780, 4
    %v1782 = vadd.f32 %v1780, %v1781
    %v1783 = vrot.slane %v1782, 2
    %v1784 = vadd.f32 %v1782, %v1783
    %v1785 = vrot.slane %v1784, 1
    %v1786 = vadd.f32 %v1784, %v1785
    %v1787 = vmul.f32 %v1786, %v678
    %v1788 = vadd.f32 %v1787, 1e-05
    %v1789 = vrsqrt.pop %v1788
    %v1790 = vmul.f32 %v1758, %v1789
    %v1791 = vmul.f32 %v1759, %v1789
    %v1792 = vmul.f32 %v1760, %v1789
    %v1793 = vmul.f32 %v1761, %v1789
    %v1794 = vmul.f32 %v1762, %v1789
    %v1795 = vmul.f32 %v1763, %v1789
    %v1796 = vmul.f32 %v1764, %v1789
    %v1797 = vmul.f32 %v1765, %v1789
    %v1798 = vld [vmem:[#allocation10 + $0x7] sm:$0x1]
    %v1799 = vlaneseq
    %v1800 = vshrl.u32 %v1799, 7
    %v1801 = vsub.s32 0, %v1800
    %v1802 = vrot.slane %v1798, %v1801
    %v1803 = vmul.f32 %v1790, %v1802
    %v1804 = vmul.f32 %v1791, %v1802
    %v1805 = vmul.f32 %v1792, %v1802
    %v1806 = vmul.f32 %v1793, %v1802
    %v1807 = vmul.f32 %v1794, %v1802
    %v1808 = vmul.f32 %v1795, %v1802
    %v1809 = vmul.f32 %v1796, %v1802
    %v1810 = vmul.f32 %v1797, %v1802
    %v1811 = vld [vmem:[#allocation10 + $0x8] sm:$0x1]
    %v1812 = vlaneseq
    %v1813 = vshrl.u32 %v1812, 7
    %v1814 = vsub.s32 0, %v1813
    %v1815 = vrot.slane %v1811, %v1814
    %v1816 = vadd.f32 %v1803, %v1815
    %v1817 = vadd.f32 %v1804, %v1815
    %v1818 = vadd.f32 %v1805, %v1815
    %v1819 = vadd.f32 %v1806, %v1815
    %v1820 = vadd.f32 %v1807, %v1815
    %v1821 = vadd.f32 %v1808, %v1815
    %v1822 = vadd.f32 %v1809, %v1815
    %v1823 = vadd.f32 %v1810, %v1815
    %v1824 = vadd.f32 %v738, %v1277
    %v1825 = vadd.f32 %v739, %v1278
    %v1826 = vadd.f32 %v740, %v1279
    %v1827 = vadd.f32 %v741, %v1280
    %v1828 = vadd.f32 %v742, %v1281
    %v1829 = vadd.f32 %v743, %v1282
    %v1830 = vadd.f32 %v744, %v1283
    %v1831 = vadd.f32 %v745, %v1284
    %v1832 = vadd.f32 %v1824, %v1816
    %v1833 = vadd.f32 %v1825, %v1817
    %v1834 = vadd.f32 %v1826, %v1818
    %v1835 = vadd.f32 %v1827, %v1819
    %v1836 = vadd.f32 %v1828, %v1820
    %v1837 = vadd.f32 %v1829, %v1821
    %v1838 = vadd.f32 %v1830, %v1822
    %v1839 = vadd.f32 %v1831, %v1823
    %s1840 = scalar_lea.vmem [#allocation8], 768
    %v1841 = vld [vmem:[%s1840] sm:$0xff]
    %v1842 = vld [vmem:[%s1840 + $0x8] sm:$0xff]
    %v1843 = vld [vmem:[%s1840 + $0x10] sm:$0xff]
    %v1844 = vld [vmem:[%s1840 + $0x18] sm:$0xff]
    %v1845 = vld [vmem:[%s1840 + $0x20] sm:$0xff]
    %v1846 = vld [vmem:[%s1840 + $0x28] sm:$0xff]
    %v1847 = vld [vmem:[%s1840 + $0x30] sm:$0xff]
    %v1848 = vld [vmem:[%s1840 + $0x38] sm:$0xff]
    %v1849 = vld [vmem:[%s1840 + $0x40] sm:$0xff]
    %v1850 = vld [vmem:[%s1840 + $0x48] sm:$0xff]
    %v1851 = vld [vmem:[%s1840 + $0x50] sm:$0xff]
    %v1852 = vld [vmem:[%s1840 + $0x58] sm:$0xff]
    %v1853 = vld [vmem:[%s1840 + $0x60] sm:$0xff]
    %v1854 = vld [vmem:[%s1840 + $0x68] sm:$0xff]
    %v1855 = vld [vmem:[%s1840 + $0x70] sm:$0xff]
    %v1856 = vld [vmem:[%s1840 + $0x78] sm:$0xff]
    %1857 = vmatprep.subr.mxu0 0.0
    %1858 = vmatpush1.msra.mxu0 %v1841
    %1859 = vmatprep.subr.mxu0 0.0
    %1860 = vmatpush1.msra.mxu0 %v1842
    %1861 = vmatprep.subr.mxu0 0.0
    %1862 = vmatpush1.msra.mxu0 %v1843
    %1863 = vmatprep.subr.mxu0 0.0
    %1864 = vmatpush1.msra.mxu0 %v1844
    %1865 = vmatprep.subr.mxu0 0.0
    %1866 = vmatpush1.msra.mxu0 %v1845
    %1867 = vmatprep.subr.mxu0 0.0
    %1868 = vmatpush1.msra.mxu0 %v1846
    %1869 = vmatprep.subr.mxu0 0.0
    %1870 = vmatpush1.msra.mxu0 %v1847
    %1871 = vmatprep.subr.mxu0 0.0
    %1872 = vmatpush1.msra.mxu0 %v1848
    %1873 = vmatprep.subr.mxu0 0.0
    %1874 = vmatpush1.msra.mxu0 %v1849
    %1875 = vmatprep.subr.mxu0 0.0
    %1876 = vmatpush1.msra.mxu0 %v1850
    %1877 = vmatprep.subr.mxu0 0.0
    %1878 = vmatpush1.msra.mxu0 %v1851
    %1879 = vmatprep.subr.mxu0 0.0
    %1880 = vmatpush1.msra.mxu0 %v1852
    %1881 = vmatprep.subr.mxu0 0.0
    %1882 = vmatpush1.msra.mxu0 %v1853
    %1883 = vmatprep.subr.mxu0 0.0
    %1884 = vmatpush1.msra.mxu0 %v1854
    %1885 = vmatprep.subr.mxu0 0.0
    %1886 = vmatpush1.msra.mxu0 %v1855
    %1887 = vmatprep.subr.mxu0 0.0
    %1888 = vmatpush1.msra.mxu0 %v1856
    %1889 = vmatprep.subr.mxu0 0.0
    %1890 = vmatpush1.msra.mxu0 0.0
    %1891 = vmatprep.subr.mxu0 0.0
    %1892 = vmatpush1.msra.mxu0 0.0
    %1893 = vmatprep.subr.mxu0 0.0
    %1894 = vmatpush1.msra.mxu0 0.0
    %1895 = vmatprep.subr.mxu0 0.0
    %1896 = vmatpush1.msra.mxu0 0.0
    %1897 = vmatprep.subr.mxu0 0.0
    %1898 = vmatpush1.msra.mxu0 0.0
    %1899 = vmatprep.subr.mxu0 0.0
    %1900 = vmatpush1.msra.mxu0 0.0
    %1901 = vmatprep.subr.mxu0 0.0
    %1902 = vmatpush1.msra.mxu0 0.0
    %1903 = vmatprep.subr.mxu0 0.0
    %1904 = vmatpush1.msra.mxu0 0.0
    %1905 = vmatprep.subr.mxu0 0.0
    %1906 = vmatpush1.msra.mxu0 0.0
    %1907 = vmatprep.subr.mxu0 0.0
    %1908 = vmatpush1.msra.mxu0 0.0
    %1909 = vmatprep.subr.mxu0 0.0
    %1910 = vmatpush1.msra.mxu0 0.0
    %1911 = vmatprep.subr.mxu0 0.0
    %1912 = vmatpush1.msra.mxu0 0.0
    %1913 = vmatprep.subr.mxu0 0.0
    %1914 = vmatpush1.msra.mxu0 0.0
    %1915 = vmatprep.subr.mxu0 0.0
    %1916 = vmatpush1.msra.mxu0 0.0
    %1917 = vmatprep.subr.mxu0 0.0
    %1918 = vmatpush1.msra.mxu0 0.0
    %1919 = vmatprep.subr.mxu0 0.0
    %1920 = vmatpush1.msra.mxu0 0.0
    %1921 = vmatprep.mubr.f32.mxu0 0.0
    %1922 = vmatmul.mubr.f32.gmra.mrb[0].mxu0 %v1832
    %v1923 = vpop.f32.mrb[0].mxu0
    %v1924 = vadd.f32 0.0, %v1923
    %v1925 = vpop.f32.mrb[0].mxu0
    %1926 = vmatprep.mubr.f32.mxu0 0.0
    %1927 = vmatmul.mubr.f32.gmra.mrb[0].mxu0 %v1833
    %v1928 = vpop.f32.mrb[0].mxu0
    %v1929 = vadd.f32 0.0, %v1928
    %v1930 = vpop.f32.mrb[0].mxu0
    %1931 = vmatprep.mubr.f32.mxu0 0.0
    %1932 = vmatmul.mubr.f32.gmra.mrb[0].mxu0 %v1834
    %v1933 = vpop.f32.mrb[0].mxu0
    %v1934 = vadd.f32 0.0, %v1933
    %v1935 = vpop.f32.mrb[0].mxu0
    %1936 = vmatprep.mubr.f32.mxu0 0.0
    %1937 = vmatmul.mubr.f32.gmra.mrb[0].mxu0 %v1835
    %v1938 = vpop.f32.mrb[0].mxu0
    %v1939 = vadd.f32 0.0, %v1938
    %v1940 = vpop.f32.mrb[0].mxu0
    %1941 = vmatprep.mubr.f32.mxu0 0.0
    %1942 = vmatmul.mubr.f32.gmra.mrb[0].mxu0 %v1836
    %v1943 = vpop.f32.mrb[0].mxu0
    %v1944 = vadd.f32 0.0, %v1943
    %v1945 = vpop.f32.mrb[0].mxu0
    %1946 = vmatprep.mubr.f32.mxu0 0.0
    %1947 = vmatmul.mubr.f32.gmra.mrb[0].mxu0 %v1837
    %v1948 = vpop.f32.mrb[0].mxu0
    %v1949 = vadd.f32 0.0, %v1948
    %v1950 = vpop.f32.mrb[0].mxu0
    %1951 = vmatprep.mubr.f32.mxu0 0.0
    %1952 = vmatmul.mubr.f32.gmra.mrb[0].mxu0 %v1838
    %v1953 = vpop.f32.mrb[0].mxu0
    %v1954 = vadd.f32 0.0, %v1953
    %v1955 = vpop.f32.mrb[0].mxu0
    %1956 = vmatprep.mubr.f32.mxu0 0.0
    %1957 = vmatmul.mubr.f32.gmra.mrb[0].mxu0 %v1839
    %v1958 = vpop.f32.mrb[0].mxu0
    %v1959 = vadd.f32 0.0, %v1958
    %v1960 = vpop.f32.mrb[0].mxu0
    %1961 = vdwg.mxu0
    %v1962 = vld [vmem:[#allocation10 + $0x9] sm:$0x1]
    %v1963 = vlaneseq
    %v1964 = vshrl.u32 %v1963, 7
    %v1965 = vsub.s32 0, %v1964
    %v1966 = vrot.slane %v1962, %v1965
    %v1967 = vadd.f32 %v1924, %v1966
    %v1968 = vadd.f32 %v1929, %v1966
    %v1969 = vadd.f32 %v1934, %v1966
    %v1970 = vadd.f32 %v1939, %v1966
    %v1971 = vadd.f32 %v1944, %v1966
    %v1972 = vadd.f32 %v1949, %v1966
    %v1973 = vadd.f32 %v1954, %v1966
    %v1974 = vadd.f32 %v1959, %v1966
    %v1975 = vmax.f32 %v1967, 0.0
    %v1976 = vmax.f32 %v1968, 0.0
    %v1977 = vmax.f32 %v1969, 0.0
    %v1978 = vmax.f32 %v1970, 0.0
    %v1979 = vmax.f32 %v1971, 0.0
    %v1980 = vmax.f32 %v1972, 0.0
    %v1981 = vmax.f32 %v1973, 0.0
    %v1982 = vmax.f32 %v1974, 0.0
    %s1983 = scalar_lea.vmem [#allocation8], 896
    %v1984 = vld [vmem:[%s1983] sm:$0xff]
    %v1985 = vld [vmem:[%s1983 + $0x8] sm:$0xff]
    %v1986 = vld [vmem:[%s1983 + $0x10] sm:$0xff]
    %v1987 = vld [vmem:[%s1983 + $0x18] sm:$0xff]
    %v1988 = vld [vmem:[%s1983 + $0x20] sm:$0xff]
    %v1989 = vld [vmem:[%s1983 + $0x28] sm:$0xff]
    %v1990 = vld [vmem:[%s1983 + $0x30] sm:$0xff]
    %v1991 = vld [vmem:[%s1983 + $0x38] sm:$0xff]
    %v1992 = vld [vmem:[%s1983 + $0x40] sm:$0xff]
    %v1993 = vld [vmem:[%s1983 + $0x48] sm:$0xff]
    %v1994 = vld [vmem:[%s1983 + $0x50] sm:$0xff]
    %v1995 = vld [vmem:[%s1983 + $0x58] sm:$0xff]
    %v1996 = vld [vmem:[%s1983 + $0x60] sm:$0xff]
    %v1997 = vld [vmem:[%s1983 + $0x68] sm:$0xff]
    %v1998 = vld [vmem:[%s1983 + $0x70] sm:$0xff]
    %v1999 = vld [vmem:[%s1983 + $0x78] sm:$0xff]
    %2000 = vmatprep.subr.mxu0 0.0
    %2001 = vmatpush1.msra.mxu0 %v1984
    %2002 = vmatprep.subr.mxu0 0.0
    %2003 = vmatpush1.msra.mxu0 %v1985
    %2004 = vmatprep.subr.mxu0 0.0
    %2005 = vmatpush1.msra.mxu0 %v1986
    %2006 = vmatprep.subr.mxu0 0.0
    %2007 = vmatpush1.msra.mxu0 %v1987
    %2008 = vmatprep.subr.mxu0 0.0
    %2009 = vmatpush1.msra.mxu0 %v1988
    %2010 = vmatprep.subr.mxu0 0.0
    %2011 = vmatpush1.msra.mxu0 %v1989
    %2012 = vmatprep.subr.mxu0 0.0
    %2013 = vmatpush1.msra.mxu0 %v1990
    %2014 = vmatprep.subr.mxu0 0.0
    %2015 = vmatpush1.msra.mxu0 %v1991
    %2016 = vmatprep.subr.mxu0 0.0
    %2017 = vmatpush1.msra.mxu0 %v1992
    %2018 = vmatprep.subr.mxu0 0.0
    %2019 = vmatpush1.msra.mxu0 %v1993
    %2020 = vmatprep.subr.mxu0 0.0
    %2021 = vmatpush1.msra.mxu0 %v1994
    %2022 = vmatprep.subr.mxu0 0.0
    %2023 = vmatpush1.msra.mxu0 %v1995
    %2024 = vmatprep.subr.mxu0 0.0
    %2025 = vmatpush1.msra.mxu0 %v1996
    %2026 = vmatprep.subr.mxu0 0.0
    %2027 = vmatpush1.msra.mxu0 %v1997
    %2028 = vmatprep.subr.mxu0 0.0
    %2029 = vmatpush1.msra.mxu0 %v1998
    %2030 = vmatprep.subr.mxu0 0.0
    %2031 = vmatpush1.msra.mxu0 %v1999
    %2032 = vmatprep.subr.mxu0 0.0
    %2033 = vmatpush1.msra.mxu0 0.0
    %2034 = vmatprep.subr.mxu0 0.0
    %2035 = vmatpush1.msra.mxu0 0.0
    %2036 = vmatprep.subr.mxu0 0.0
    %2037 = vmatpush1.msra.mxu0 0.0
    %2038 = vmatprep.subr.mxu0 0.0
    %2039 = vmatpush1.msra.mxu0 0.0
    %2040 = vmatprep.subr.mxu0 0.0
    %2041 = vmatpush1.msra.mxu0 0.0
    %2042 = vmatprep.subr.mxu0 0.0
    %2043 = vmatpush1.msra.mxu0 0.0
    %2044 = vmatprep.subr.mxu0 0.0
    %2045 = vmatpush1.msra.mxu0 0.0
    %2046 = vmatprep.subr.mxu0 0.0
    %2047 = vmatpush1.msra.mxu0 0.0
    %2048 = vmatprep.subr.mxu0 0.0
    %2049 = vmatpush1.msra.mxu0 0.0
    %2050 = vmatprep.subr.mxu0 0.0
    %2051 = vmatpush1.msra.mxu0 0.0
    %2052 = vmatprep.subr.mxu0 0.0
    %2053 = vmatpush1.msra.mxu0 0.0
    %2054 = vmatprep.subr.mxu0 0.0
    %2055 = vmatpush1.msra.mxu0 0.0
    %2056 = vmatprep.subr.mxu0 0.0
    %2057 = vmatpush1.msra.mxu0 0.0
    %2058 = vmatprep.subr.mxu0 0.0
    %2059 = vmatpush1.msra.mxu0 0.0
    %2060 = vmatprep.subr.mxu0 0.0
    %2061 = vmatpush1.msra.mxu0 0.0
    %2062 = vmatprep.subr.mxu0 0.0
    %2063 = vmatpush1.msra.mxu0 0.0
    %2064 = vmatprep.mubr.f32.mxu0 0.0
    %2065 = vmatmul.mubr.f32.gmra.mrb[0].mxu0 %v339
    %v2066 = vpop.f32.mrb[0].mxu0
    %v2067 = vadd.f32 0.0, %v2066
    %v2068 = vpop.f32.mrb[0].mxu0
    %2069 = vmatprep.mubr.f32.mxu0 0.0
    %2070 = vmatmul.mubr.f32.gmra.mrb[0].mxu0 %v340
    %v2071 = vpop.f32.mrb[0].mxu0
    %v2072 = vadd.f32 0.0, %v2071
    %v2073 = vpop.f32.mrb[0].mxu0
    %2074 = vmatprep.mubr.f32.mxu0 0.0
    %2075 = vmatmul.mubr.f32.gmra.mrb[0].mxu0 %v341
    %v2076 = vpop.f32.mrb[0].mxu0
    %v2077 = vadd.f32 0.0, %v2076
    %v2078 = vpop.f32.mrb[0].mxu0
    %2079 = vmatprep.mubr.f32.mxu0 0.0
    %2080 = vmatmul.mubr.f32.gmra.mrb[0].mxu0 %v342
    %v2081 = vpop.f32.mrb[0].mxu0
    %v2082 = vadd.f32 0.0, %v2081
    %v2083 = vpop.f32.mrb[0].mxu0
    %2084 = vmatprep.mubr.f32.mxu0 0.0
    %2085 = vmatmul.mubr.f32.gmra.mrb[0].mxu0 %v343
    %v2086 = vpop.f32.mrb[0].mxu0
    %v2087 = vadd.f32 0.0, %v2086
    %v2088 = vpop.f32.mrb[0].mxu0
    %2089 = vmatprep.mubr.f32.mxu0 0.0
    %2090 = vmatmul.mubr.f32.gmra.mrb[0].mxu0 %v344
    %v2091 = vpop.f32.mrb[0].mxu0
    %v2092 = vadd.f32 0.0, %v2091
    %v2093 = vpop.f32.mrb[0].mxu0
    %2094 = vmatprep.mubr.f32.mxu0 0.0
    %2095 = vmatmul.mubr.f32.gmra.mrb[0].mxu0 %v345
    %v2096 = vpop.f32.mrb[0].mxu0
    %v2097 = vadd.f32 0.0, %v2096
    %v2098 = vpop.f32.mrb[0].mxu0
    %2099 = vmatprep.mubr.f32.mxu0 0.0
    %2100 = vmatmul.mubr.f32.gmra.mrb[0].mxu0 %v346
    %v2101 = vpop.f32.mrb[0].mxu0
    %v2102 = vadd.f32 0.0, %v2101
    %v2103 = vpop.f32.mrb[0].mxu0
    %2104 = vdwg.mxu0
    %s2105 = scalar_lea.vmem [#allocation8], 1024
    %v2106 = vld [vmem:[%s2105] sm:$0xff]
    %v2107 = vld [vmem:[%s2105 + $0x8] sm:$0xff]
    %v2108 = vld [vmem:[%s2105 + $0x10] sm:$0xff]
    %v2109 = vld [vmem:[%s2105 + $0x18] sm:$0xff]
    %v2110 = vld [vmem:[%s2105 + $0x20] sm:$0xff]
    %v2111 = vld [vmem:[%s2105 + $0x28] sm:$0xff]
    %v2112 = vld [vmem:[%s2105 + $0x30] sm:$0xff]
    %v2113 = vld [vmem:[%s2105 + $0x38] sm:$0xff]
    %v2114 = vld [vmem:[%s2105 + $0x40] sm:$0xff]
    %v2115 = vld [vmem:[%s2105 + $0x48] sm:$0xff]
    %v2116 = vld [vmem:[%s2105 + $0x50] sm:$0xff]
    %v2117 = vld [vmem:[%s2105 + $0x58] sm:$0xff]
    %v2118 = vld [vmem:[%s2105 + $0x60] sm:$0xff]
    %v2119 = vld [vmem:[%s2105 + $0x68] sm:$0xff]
    %v2120 = vld [vmem:[%s2105 + $0x70] sm:$0xff]
    %v2121 = vld [vmem:[%s2105 + $0x78] sm:$0xff]
    %2122 = vmatprep.subr.mxu0 0.0
    %2123 = vmatpush1.msra.mxu0 %v2106
    %2124 = vmatprep.subr.mxu0 0.0
    %2125 = vmatpush1.msra.mxu0 %v2107
    %2126 = vmatprep.subr.mxu0 0.0
    %2127 = vmatpush1.msra.mxu0 %v2108
    %2128 = vmatprep.subr.mxu0 0.0
    %2129 = vmatpush1.msra.mxu0 %v2109
    %2130 = vmatprep.subr.mxu0 0.0
    %2131 = vmatpush1.msra.mxu0 %v2110
    %2132 = vmatprep.subr.mxu0 0.0
    %2133 = vmatpush1.msra.mxu0 %v2111
    %2134 = vmatprep.subr.mxu0 0.0
    %2135 = vmatpush1.msra.mxu0 %v2112
    %2136 = vmatprep.subr.mxu0 0.0
    %2137 = vmatpush1.msra.mxu0 %v2113
    %2138 = vmatprep.subr.mxu0 0.0
    %2139 = vmatpush1.msra.mxu0 %v2114
    %2140 = vmatprep.subr.mxu0 0.0
    %2141 = vmatpush1.msra.mxu0 %v2115
    %2142 = vmatprep.subr.mxu0 0.0
    %2143 = vmatpush1.msra.mxu0 %v2116
    %2144 = vmatprep.subr.mxu0 0.0
    %2145 = vmatpush1.msra.mxu0 %v2117
    %2146 = vmatprep.subr.mxu0 0.0
    %2147 = vmatpush1.msra.mxu0 %v2118
    %2148 = vmatprep.subr.mxu0 0.0
    %2149 = vmatpush1.msra.mxu0 %v2119
    %2150 = vmatprep.subr.mxu0 0.0
    %2151 = vmatpush1.msra.mxu0 %v2120
    %2152 = vmatprep.subr.mxu0 0.0
    %2153 = vmatpush1.msra.mxu0 %v2121
    %2154 = vmatprep.subr.mxu0 0.0
    %2155 = vmatpush1.msra.mxu0 0.0
    %2156 = vmatprep.subr.mxu0 0.0
    %2157 = vmatpush1.msra.mxu0 0.0
    %2158 = vmatprep.subr.mxu0 0.0
    %2159 = vmatpush1.msra.mxu0 0.0
    %2160 = vmatprep.subr.mxu0 0.0
    %2161 = vmatpush1.msra.mxu0 0.0
    %2162 = vmatprep.subr.mxu0 0.0
    %2163 = vmatpush1.msra.mxu0 0.0
    %2164 = vmatprep.subr.mxu0 0.0
    %2165 = vmatpush1.msra.mxu0 0.0
    %2166 = vmatprep.subr.mxu0 0.0
    %2167 = vmatpush1.msra.mxu0 0.0
    %2168 = vmatprep.subr.mxu0 0.0
    %2169 = vmatpush1.msra.mxu0 0.0
    %2170 = vmatprep.subr.mxu0 0.0
    %2171 = vmatpush1.msra.mxu0 0.0
    %2172 = vmatprep.subr.mxu0 0.0
    %2173 = vmatpush1.msra.mxu0 0.0
    %2174 = vmatprep.subr.mxu0 0.0
    %2175 = vmatpush1.msra.mxu0 0.0
    %2176 = vmatprep.subr.mxu0 0.0
    %2177 = vmatpush1.msra.mxu0 0.0
    %2178 = vmatprep.subr.mxu0 0.0
    %2179 = vmatpush1.msra.mxu0 0.0
    %2180 = vmatprep.subr.mxu0 0.0
    %2181 = vmatpush1.msra.mxu0 0.0
    %2182 = vmatprep.subr.mxu0 0.0
    %2183 = vmatpush1.msra.mxu0 0.0
    %2184 = vmatprep.subr.mxu0 0.0
    %2185 = vmatpush1.msra.mxu0 0.0
    %2186 = vmatprep.mubr.f32.mxu0 0.0
    %2187 = vmatmul.mubr.f32.gmra.mrb[0].mxu0 %v87
    %v2188 = vpop.f32.mrb[0].mxu0
    %v2189 = vadd.f32 0.0, %v2188
    %v2190 = vpop.f32.mrb[0].mxu0
    %2191 = vmatprep.mubr.f32.mxu0 0.0
    %2192 = vmatmul.mubr.f32.gmra.mrb[0].mxu0 %v88
    %v2193 = vpop.f32.mrb[0].mxu0
    %v2194 = vadd.f32 0.0, %v2193
    %v2195 = vpop.f32.mrb[0].mxu0
    %2196 = vmatprep.mubr.f32.mxu0 0.0
    %2197 = vmatmul.mubr.f32.gmra.mrb[0].mxu0 %v89
    %v2198 = vpop.f32.mrb[0].mxu0
    %v2199 = vadd.f32 0.0, %v2198
    %v2200 = vpop.f32.mrb[0].mxu0
    %2201 = vmatprep.mubr.f32.mxu0 0.0
    %2202 = vmatmul.mubr.f32.gmra.mrb[0].mxu0 %v90
    %v2203 = vpop.f32.mrb[0].mxu0
    %v2204 = vadd.f32 0.0, %v2203
    %v2205 = vpop.f32.mrb[0].mxu0
    %2206 = vmatprep.mubr.f32.mxu0 0.0
    %2207 = vmatmul.mubr.f32.gmra.mrb[0].mxu0 %v91
    %v2208 = vpop.f32.mrb[0].mxu0
    %v2209 = vadd.f32 0.0, %v2208
    %v2210 = vpop.f32.mrb[0].mxu0
    %2211 = vmatprep.mubr.f32.mxu0 0.0
    %2212 = vmatmul.mubr.f32.gmra.mrb[0].mxu0 %v92
    %v2213 = vpop.f32.mrb[0].mxu0
    %v2214 = vadd.f32 0.0, %v2213
    %v2215 = vpop.f32.mrb[0].mxu0
    %2216 = vmatprep.mubr.f32.mxu0 0.0
    %2217 = vmatmul.mubr.f32.gmra.mrb[0].mxu0 %v93
    %v2218 = vpop.f32.mrb[0].mxu0
    %v2219 = vadd.f32 0.0, %v2218
    %v2220 = vpop.f32.mrb[0].mxu0
    %2221 = vmatprep.mubr.f32.mxu0 0.0
    %2222 = vmatmul.mubr.f32.gmra.mrb[0].mxu0 %v94
    %v2223 = vpop.f32.mrb[0].mxu0
    %v2224 = vadd.f32 0.0, %v2223
    %v2225 = vpop.f32.mrb[0].mxu0
    %2226 = vdwg.mxu0
    %v2227 = vadd.f32 %v2067, %v2189
    %v2228 = vadd.f32 %v2072, %v2194
    %v2229 = vadd.f32 %v2077, %v2199
    %v2230 = vadd.f32 %v2082, %v2204
    %v2231 = vadd.f32 %v2087, %v2209
    %v2232 = vadd.f32 %v2092, %v2214
    %v2233 = vadd.f32 %v2097, %v2219
    %v2234 = vadd.f32 %v2102, %v2224
    %v2235 = vld [vmem:[#allocation10 + $0xa] sm:$0x1]
    %v2236 = vlaneseq
    %v2237 = vshrl.u32 %v2236, 7
    %v2238 = vsub.s32 0, %v2237
    %v2239 = vrot.slane %v2235, %v2238
    %v2240 = vadd.f32 %v2227, %v2239
    %v2241 = vadd.f32 %v2228, %v2239
    %v2242 = vadd.f32 %v2229, %v2239
    %v2243 = vadd.f32 %v2230, %v2239
    %v2244 = vadd.f32 %v2231, %v2239
    %v2245 = vadd.f32 %v2232, %v2239
    %v2246 = vadd.f32 %v2233, %v2239
    %v2247 = vadd.f32 %v2234, %v2239
    %v2248 = vmul.f32 %v2240, %v617
    %v2249 = vmul.f32 %v2241, %v621
    %v2250 = vmul.f32 %v2242, %v625
    %v2251 = vmul.f32 %v2243, %v629
    %v2252 = vmul.f32 %v2244, %v636
    %v2253 = vmul.f32 %v2245, %v640
    %v2254 = vmul.f32 %v2246, %v644
    %v2255 = vmul.f32 %v2247, %v648
    %v2256 = vmax.f32 %v2248, 0.0
    %v2257 = vmax.f32 %v2249, 0.0
    %v2258 = vmax.f32 %v2250, 0.0
    %v2259 = vmax.f32 %v2251, 0.0
    %v2260 = vmax.f32 %v2252, 0.0
    %v2261 = vmax.f32 %v2253, 0.0
    %v2262 = vmax.f32 %v2254, 0.0
    %v2263 = vmax.f32 %v2255, 0.0
    %v2264 = vadd.f32 %v2256, %v2257
    %v2265 = vadd.f32 %v2264, %v2258
    %v2266 = vadd.f32 %v2265, %v2259
    %v2267 = vadd.f32 %v2266, %v2260
    %v2268 = vadd.f32 %v2267, %v2261
    %v2269 = vadd.f32 %v2268, %v2262
    %v2270 = vadd.f32 %v2269, %v2263
    %v2271 = vrot.slane %v2270, 4
    %v2272 = vadd.f32 %v2270, %v2271
    %v2273 = vrot.slane %v2272, 2
    %v2274 = vadd.f32 %v2272, %v2273
    %v2275 = vrot.slane %v2274, 1
    %v2276 = vadd.f32 %v2274, %v2275
    %v2277 = vmul.f32 %v2276, %v678
    %v2278 = vsub.f32 %v2256, %v2277
    %v2279 = vsub.f32 %v2257, %v2277
    %v2280 = vsub.f32 %v2258, %v2277
    %v2281 = vsub.f32 %v2259, %v2277
    %v2282 = vsub.f32 %v2260, %v2277
    %v2283 = vsub.f32 %v2261, %v2277
    %v2284 = vsub.f32 %v2262, %v2277
    %v2285 = vsub.f32 %v2263, %v2277
    %v2286 = vmul.f32 %v2278, %v2278
    %v2287 = vmul.f32 %v2279, %v2279
    %v2288 = vmul.f32 %v2280, %v2280
    %v2289 = vmul.f32 %v2281, %v2281
    %v2290 = vmul.f32 %v2282, %v2282
    %v2291 = vmul.f32 %v2283, %v2283
    %v2292 = vmul.f32 %v2284, %v2284
    %v2293 = vmul.f32 %v2285, %v2285
    %v2294 = vadd.f32 %v2286, %v2287
    %v2295 = vadd.f32 %v2294, %v2288
    %v2296 = vadd.f32 %v2295, %v2289
    %v2297 = vadd.f32 %v2296, %v2290
    %v2298 = vadd.f32 %v2297, %v2291
    %v2299 = vadd.f32 %v2298, %v2292
    %v2300 = vadd.f32 %v2299, %v2293
    %v2301 = vrot.slane %v2300, 4
    %v2302 = vadd.f32 %v2300, %v2301
    %v2303 = vrot.slane %v2302, 2
    %v2304 = vadd.f32 %v2302, %v2303
    %v2305 = vrot.slane %v2304, 1
    %v2306 = vadd.f32 %v2304, %v2305
    %v2307 = vmul.f32 %v2306, %v678
    %v2308 = vadd.f32 %v2307, 1e-05
    %v2309 = vrsqrt.pop %v2308
    %v2310 = vmul.f32 %v2278, %v2309
    %v2311 = vmul.f32 %v2279, %v2309
    %v2312 = vmul.f32 %v2280, %v2309
    %v2313 = vmul.f32 %v2281, %v2309
    %v2314 = vmul.f32 %v2282, %v2309
    %v2315 = vmul.f32 %v2283, %v2309
    %v2316 = vmul.f32 %v2284, %v2309
    %v2317 = vmul.f32 %v2285, %v2309
    %v2318 = vld [vmem:[#allocation10 + $0xb] sm:$0x1]
    %v2319 = vlaneseq
    %v2320 = vshrl.u32 %v2319, 7
    %v2321 = vsub.s32 0, %v2320
    %v2322 = vrot.slane %v2318, %v2321
    %v2323 = vmul.f32 %v2310, %v2322
    %v2324 = vmul.f32 %v2311, %v2322
    %v2325 = vmul.f32 %v2312, %v2322
    %v2326 = vmul.f32 %v2313, %v2322
    %v2327 = vmul.f32 %v2314, %v2322
    %v2328 = vmul.f32 %v2315, %v2322
    %v2329 = vmul.f32 %v2316, %v2322
    %v2330 = vmul.f32 %v2317, %v2322
    %v2331 = vld [vmem:[#allocation10 + $0xc] sm:$0x1]
    %v2332 = vlaneseq
    %v2333 = vshrl.u32 %v2332, 7
    %v2334 = vsub.s32 0, %v2333
    %v2335 = vrot.slane %v2331, %v2334
    %v2336 = vadd.f32 %v2323, %v2335
    %v2337 = vadd.f32 %v2324, %v2335
    %v2338 = vadd.f32 %v2325, %v2335
    %v2339 = vadd.f32 %v2326, %v2335
    %v2340 = vadd.f32 %v2327, %v2335
    %v2341 = vadd.f32 %v2328, %v2335
    %v2342 = vadd.f32 %v2329, %v2335
    %v2343 = vadd.f32 %v2330, %v2335
    %2344 = vmatprep.subr.mxu0 0.0
    %2345 = vmatpush1.msra.mxu0 %v2336
    %2346 = vmatprep.subr.mxu0 0.0
    %2347 = vmatpush1.msra.mxu0 %v2337
    %2348 = vmatprep.subr.mxu0 0.0
    %2349 = vmatpush1.msra.mxu0 %v2338
    %2350 = vmatprep.subr.mxu0 0.0
    %2351 = vmatpush1.msra.mxu0 %v2339
    %2352 = vmatprep.subr.mxu0 0.0
    %2353 = vmatpush1.msra.mxu0 0.0
    %2354 = vmatprep.subr.mxu0 0.0
    %2355 = vmatpush1.msra.mxu0 0.0
    %2356 = vmatprep.subr.mxu0 0.0
    %2357 = vmatpush1.msra.mxu0 0.0
    %2358 = vmatprep.subr.mxu0 0.0
    %2359 = vmatpush1.msra.mxu0 0.0
    %2360 = vmatprep.subr.mxu0 0.0
    %2361 = vmatpush1.msra.mxu0 0.0
    %2362 = vmatprep.subr.mxu0 0.0
    %2363 = vmatpush1.msra.mxu0 0.0
    %2364 = vmatprep.subr.mxu0 0.0
    %2365 = vmatpush1.msra.mxu0 0.0
    %2366 = vmatprep.subr.mxu0 0.0
    %2367 = vmatpush1.msra.mxu0 0.0
    %2368 = vmatprep.subr.mxu0 0.0
    %2369 = vmatpush1.msra.mxu0 0.0
    %2370 = vmatprep.subr.mxu0 0.0
    %2371 = vmatpush1.msra.mxu0 0.0
    %2372 = vmatprep.subr.mxu0 0.0
    %2373 = vmatpush1.msra.mxu0 0.0
    %2374 = vmatprep.subr.mxu0 0.0
    %2375 = vmatpush1.msra.mxu0 0.0
    %2376 = vmatprep.subr.mxu0 0.0
    %2377 = vmatpush1.msra.mxu0 0.0
    %2378 = vmatprep.subr.mxu0 0.0
    %2379 = vmatpush1.msra.mxu0 0.0
    %2380 = vmatprep.subr.mxu0 0.0
    %2381 = vmatpush1.msra.mxu0 0.0
    %2382 = vmatprep.subr.mxu0 0.0
    %2383 = vmatpush1.msra.mxu0 0.0
    %2384 = vmatprep.subr.mxu0 0.0
    %2385 = vmatpush1.msra.mxu0 0.0
    %2386 = vmatprep.subr.mxu0 0.0
    %2387 = vmatpush1.msra.mxu0 0.0
    %2388 = vmatprep.subr.mxu0 0.0
    %2389 = vmatpush1.msra.mxu0 0.0
    %2390 = vmatprep.subr.mxu0 0.0
    %2391 = vmatpush1.msra.mxu0 0.0
    %2392 = vmatprep.subr.mxu0 0.0
    %2393 = vmatpush1.msra.mxu0 0.0
    %2394 = vmatprep.subr.mxu0 0.0
    %2395 = vmatpush1.msra.mxu0 0.0
    %2396 = vmatprep.subr.mxu0 0.0
    %2397 = vmatpush1.msra.mxu0 0.0
    %2398 = vmatprep.subr.mxu0 0.0
    %2399 = vmatpush1.msra.mxu0 0.0
    %2400 = vmatprep.subr.mxu0 0.0
    %2401 = vmatpush1.msra.mxu0 0.0
    %2402 = vmatprep.subr.mxu0 0.0
    %2403 = vmatpush1.msra.mxu0 0.0
    %2404 = vmatprep.subr.mxu0 0.0
    %2405 = vmatpush1.msra.mxu0 0.0
    %2406 = vmatprep.subr.mxu0 0.0
    %2407 = vmatpush1.msra.mxu0 0.0
    %2408 = vmatprep.mubr.f32.mxu0 0.0
    %2409 = vmatmul.mubr.f32.gmra.mrb[0].mxu0 %v106
    %v2410 = vpop.f32.mrb[0].mxu0
    %v2411 = vadd.f32 0.0, %v2410
    %v2412 = vpop.f32.mrb[0].mxu0
    %2413 = vmatprep.mubr.f32.mxu0 0.0
    %2414 = vmatmul.mubr.f32.gmra.mrb[0].mxu0 %v109
    %v2415 = vpop.f32.mrb[0].mxu0
    %v2416 = vadd.f32 0.0, %v2415
    %v2417 = vpop.f32.mrb[0].mxu0
    %2418 = vmatprep.mubr.f32.mxu0 0.0
    %2419 = vmatmul.mubr.f32.gmra.mrb[0].mxu0 %v112
    %v2420 = vpop.f32.mrb[0].mxu0
    %v2421 = vadd.f32 0.0, %v2420
    %v2422 = vpop.f32.mrb[0].mxu0
    %2423 = vmatprep.mubr.f32.mxu0 0.0
    %2424 = vmatmul.mubr.f32.gmra.mrb[0].mxu0 %v115
    %v2425 = vpop.f32.mrb[0].mxu0
    %v2426 = vadd.f32 0.0, %v2425
    %v2427 = vpop.f32.mrb[0].mxu0
    %2428 = vdwg.mxu0
    %2429 = vmatprep.subr.mxu0 0.0
    %2430 = vmatpush1.msra.mxu0 %v2340
    %2431 = vmatprep.subr.mxu0 0.0
    %2432 = vmatpush1.msra.mxu0 %v2341
    %2433 = vmatprep.subr.mxu0 0.0
    %2434 = vmatpush1.msra.mxu0 %v2342
    %2435 = vmatprep.subr.mxu0 0.0
    %2436 = vmatpush1.msra.mxu0 %v2343
    %2437 = vmatprep.subr.mxu0 0.0
    %2438 = vmatpush1.msra.mxu0 0.0
    %2439 = vmatprep.subr.mxu0 0.0
    %2440 = vmatpush1.msra.mxu0 0.0
    %2441 = vmatprep.subr.mxu0 0.0
    %2442 = vmatpush1.msra.mxu0 0.0
    %2443 = vmatprep.subr.mxu0 0.0
    %2444 = vmatpush1.msra.mxu0 0.0
    %2445 = vmatprep.subr.mxu0 0.0
    %2446 = vmatpush1.msra.mxu0 0.0
    %2447 = vmatprep.subr.mxu0 0.0
    %2448 = vmatpush1.msra.mxu0 0.0
    %2449 = vmatprep.subr.mxu0 0.0
    %2450 = vmatpush1.msra.mxu0 0.0
    %2451 = vmatprep.subr.mxu0 0.0
    %2452 = vmatpush1.msra.mxu0 0.0
    %2453 = vmatprep.subr.mxu0 0.0
    %2454 = vmatpush1.msra.mxu0 0.0
    %2455 = vmatprep.subr.mxu0 0.0
    %2456 = vmatpush1.msra.mxu0 0.0
    %2457 = vmatprep.subr.mxu0 0.0
    %2458 = vmatpush1.msra.mxu0 0.0
    %2459 = vmatprep.subr.mxu0 0.0
    %2460 = vmatpush1.msra.mxu0 0.0
    %2461 = vmatprep.subr.mxu0 0.0
    %2462 = vmatpush1.msra.mxu0 0.0
    %2463 = vmatprep.subr.mxu0 0.0
    %2464 = vmatpush1.msra.mxu0 0.0
    %2465 = vmatprep.subr.mxu0 0.0
    %2466 = vmatpush1.msra.mxu0 0.0
    %2467 = vmatprep.subr.mxu0 0.0
    %2468 = vmatpush1.msra.mxu0 0.0
    %2469 = vmatprep.subr.mxu0 0.0
    %2470 = vmatpush1.msra.mxu0 0.0
    %2471 = vmatprep.subr.mxu0 0.0
    %2472 = vmatpush1.msra.mxu0 0.0
    %2473 = vmatprep.subr.mxu0 0.0
    %2474 = vmatpush1.msra.mxu0 0.0
    %2475 = vmatprep.subr.mxu0 0.0
    %2476 = vmatpush1.msra.mxu0 0.0
    %2477 = vmatprep.subr.mxu0 0.0
    %2478 = vmatpush1.msra.mxu0 0.0
    %2479 = vmatprep.subr.mxu0 0.0
    %2480 = vmatpush1.msra.mxu0 0.0
    %2481 = vmatprep.subr.mxu0 0.0
    %2482 = vmatpush1.msra.mxu0 0.0
    %2483 = vmatprep.subr.mxu0 0.0
    %2484 = vmatpush1.msra.mxu0 0.0
    %2485 = vmatprep.subr.mxu0 0.0
    %2486 = vmatpush1.msra.mxu0 0.0
    %2487 = vmatprep.subr.mxu0 0.0
    %2488 = vmatpush1.msra.mxu0 0.0
    %2489 = vmatprep.subr.mxu0 0.0
    %2490 = vmatpush1.msra.mxu0 0.0
    %2491 = vmatprep.subr.mxu0 0.0
    %2492 = vmatpush1.msra.mxu0 0.0
    %2493 = vmatprep.mubr.f32.mxu0 0.0
    %2494 = vmatmul.mubr.f32.gmra.mrb[0].mxu0 %v203
    %v2495 = vpop.f32.mrb[0].mxu0
    %v2496 = vadd.f32 0.0, %v2495
    %v2497 = vpop.f32.mrb[0].mxu0
    %2498 = vmatprep.mubr.f32.mxu0 0.0
    %2499 = vmatmul.mubr.f32.gmra.mrb[0].mxu0 %v206
    %v2500 = vpop.f32.mrb[0].mxu0
    %v2501 = vadd.f32 0.0, %v2500
    %v2502 = vpop.f32.mrb[0].mxu0
    %2503 = vmatprep.mubr.f32.mxu0 0.0
    %2504 = vmatmul.mubr.f32.gmra.mrb[0].mxu0 %v209
    %v2505 = vpop.f32.mrb[0].mxu0
    %v2506 = vadd.f32 0.0, %v2505
    %v2507 = vpop.f32.mrb[0].mxu0
    %2508 = vmatprep.mubr.f32.mxu0 0.0
    %2509 = vmatmul.mubr.f32.gmra.mrb[0].mxu0 %v212
    %v2510 = vpop.f32.mrb[0].mxu0
    %v2511 = vadd.f32 0.0, %v2510
    %v2512 = vpop.f32.mrb[0].mxu0
    %2513 = vdwg.mxu0
    %v2514 = vmul.f32 %v2411, %v331
    %v2515 = vmul.f32 %v2416, %v332
    %v2516 = vmul.f32 %v2421, %v333
    %v2517 = vmul.f32 %v2426, %v334
    %v2518 = vmul.f32 %v2496, %v335
    %v2519 = vmul.f32 %v2501, %v336
    %v2520 = vmul.f32 %v2506, %v337
    %v2521 = vmul.f32 %v2511, %v338
    %s2522 = scalar_lea.vmem [#allocation8], 1152
    %v2523 = vld [vmem:[%s2522] sm:$0xff]
    %v2524 = vld [vmem:[%s2522 + $0x8] sm:$0xff]
    %v2525 = vld [vmem:[%s2522 + $0x10] sm:$0xff]
    %v2526 = vld [vmem:[%s2522 + $0x18] sm:$0xff]
    %v2527 = vld [vmem:[%s2522 + $0x20] sm:$0xff]
    %v2528 = vld [vmem:[%s2522 + $0x28] sm:$0xff]
    %v2529 = vld [vmem:[%s2522 + $0x30] sm:$0xff]
    %v2530 = vld [vmem:[%s2522 + $0x38] sm:$0xff]
    %v2531 = vld [vmem:[%s2522 + $0x40] sm:$0xff]
    %v2532 = vld [vmem:[%s2522 + $0x48] sm:$0xff]
    %v2533 = vld [vmem:[%s2522 + $0x50] sm:$0xff]
    %v2534 = vld [vmem:[%s2522 + $0x58] sm:$0xff]
    %v2535 = vld [vmem:[%s2522 + $0x60] sm:$0xff]
    %v2536 = vld [vmem:[%s2522 + $0x68] sm:$0xff]
    %v2537 = vld [vmem:[%s2522 + $0x70] sm:$0xff]
    %v2538 = vld [vmem:[%s2522 + $0x78] sm:$0xff]
    %2539 = vmatprep.subr.mxu0 0.0
    %2540 = vmatpush1.msra.mxu0 %v2523
    %2541 = vmatprep.subr.mxu0 0.0
    %2542 = vmatpush1.msra.mxu0 %v2524
    %2543 = vmatprep.subr.mxu0 0.0
    %2544 = vmatpush1.msra.mxu0 %v2525
    %2545 = vmatprep.subr.mxu0 0.0
    %2546 = vmatpush1.msra.mxu0 %v2526
    %2547 = vmatprep.subr.mxu0 0.0
    %2548 = vmatpush1.msra.mxu0 %v2527
    %2549 = vmatprep.subr.mxu0 0.0
    %2550 = vmatpush1.msra.mxu0 %v2528
    %2551 = vmatprep.subr.mxu0 0.0
    %2552 = vmatpush1.msra.mxu0 %v2529
    %2553 = vmatprep.subr.mxu0 0.0
    %2554 = vmatpush1.msra.mxu0 %v2530
    %2555 = vmatprep.subr.mxu0 0.0
    %2556 = vmatpush1.msra.mxu0 %v2531
    %2557 = vmatprep.subr.mxu0 0.0
    %2558 = vmatpush1.msra.mxu0 %v2532
    %2559 = vmatprep.subr.mxu0 0.0
    %2560 = vmatpush1.msra.mxu0 %v2533
    %2561 = vmatprep.subr.mxu0 0.0
    %2562 = vmatpush1.msra.mxu0 %v2534
    %2563 = vmatprep.subr.mxu0 0.0
    %2564 = vmatpush1.msra.mxu0 %v2535
    %2565 = vmatprep.subr.mxu0 0.0
    %2566 = vmatpush1.msra.mxu0 %v2536
    %2567 = vmatprep.subr.mxu0 0.0
    %2568 = vmatpush1.msra.mxu0 %v2537
    %2569 = vmatprep.subr.mxu0 0.0
    %2570 = vmatpush1.msra.mxu0 %v2538
    %2571 = vmatprep.subr.mxu0 0.0
    %2572 = vmatpush1.msra.mxu0 0.0
    %2573 = vmatprep.subr.mxu0 0.0
    %2574 = vmatpush1.msra.mxu0 0.0
    %2575 = vmatprep.subr.mxu0 0.0
    %2576 = vmatpush1.msra.mxu0 0.0
    %2577 = vmatprep.subr.mxu0 0.0
    %2578 = vmatpush1.msra.mxu0 0.0
    %2579 = vmatprep.subr.mxu0 0.0
    %2580 = vmatpush1.msra.mxu0 0.0
    %2581 = vmatprep.subr.mxu0 0.0
    %2582 = vmatpush1.msra.mxu0 0.0
    %2583 = vmatprep.subr.mxu0 0.0
    %2584 = vmatpush1.msra.mxu0 0.0
    %2585 = vmatprep.subr.mxu0 0.0
    %2586 = vmatpush1.msra.mxu0 0.0
    %2587 = vmatprep.subr.mxu0 0.0
    %2588 = vmatpush1.msra.mxu0 0.0
    %2589 = vmatprep.subr.mxu0 0.0
    %2590 = vmatpush1.msra.mxu0 0.0
    %2591 = vmatprep.subr.mxu0 0.0
    %2592 = vmatpush1.msra.mxu0 0.0
    %2593 = vmatprep.subr.mxu0 0.0
    %2594 = vmatpush1.msra.mxu0 0.0
    %2595 = vmatprep.subr.mxu0 0.0
    %2596 = vmatpush1.msra.mxu0 0.0
    %2597 = vmatprep.subr.mxu0 0.0
    %2598 = vmatpush1.msra.mxu0 0.0
    %2599 = vmatprep.subr.mxu0 0.0
    %2600 = vmatpush1.msra.mxu0 0.0
    %2601 = vmatprep.subr.mxu0 0.0
    %2602 = vmatpush1.msra.mxu0 0.0
    %2603 = vmatprep.mubr.f32.mxu0 0.0
    %2604 = vmatmul.mubr.f32.gmra.mrb[0].mxu0 %v2514
    %v2605 = vpop.f32.mrb[0].mxu0
    %v2606 = vadd.f32 0.0, %v2605
    %v2607 = vpop.f32.mrb[0].mxu0
    %2608 = vmatprep.mubr.f32.mxu0 0.0
    %2609 = vmatmul.mubr.f32.gmra.mrb[0].mxu0 %v2515
    %v2610 = vpop.f32.mrb[0].mxu0
    %v2611 = vadd.f32 0.0, %v2610
    %v2612 = vpop.f32.mrb[0].mxu0
    %2613 = vmatprep.mubr.f32.mxu0 0.0
    %2614 = vmatmul.mubr.f32.gmra.mrb[0].mxu0 %v2516
    %v2615 = vpop.f32.mrb[0].mxu0
    %v2616 = vadd.f32 0.0, %v2615
    %v2617 = vpop.f32.mrb[0].mxu0
    %2618 = vmatprep.mubr.f32.mxu0 0.0
    %2619 = vmatmul.mubr.f32.gmra.mrb[0].mxu0 %v2517
    %v2620 = vpop.f32.mrb[0].mxu0
    %v2621 = vadd.f32 0.0, %v2620
    %v2622 = vpop.f32.mrb[0].mxu0
    %2623 = vmatprep.mubr.f32.mxu0 0.0
    %2624 = vmatmul.mubr.f32.gmra.mrb[0].mxu0 %v2518
    %v2625 = vpop.f32.mrb[0].mxu0
    %v2626 = vadd.f32 0.0, %v2625
    %v2627 = vpop.f32.mrb[0].mxu0
    %2628 = vmatprep.mubr.f32.mxu0 0.0
    %2629 = vmatmul.mubr.f32.gmra.mrb[0].mxu0 %v2519
    %v2630 = vpop.f32.mrb[0].mxu0
    %v2631 = vadd.f32 0.0, %v2630
    %v2632 = vpop.f32.mrb[0].mxu0
    %2633 = vmatprep.mubr.f32.mxu0 0.0
    %2634 = vmatmul.mubr.f32.gmra.mrb[0].mxu0 %v2520
    %v2635 = vpop.f32.mrb[0].mxu0
    %v2636 = vadd.f32 0.0, %v2635
    %v2637 = vpop.f32.mrb[0].mxu0
    %2638 = vmatprep.mubr.f32.mxu0 0.0
    %2639 = vmatmul.mubr.f32.gmra.mrb[0].mxu0 %v2521
    %v2640 = vpop.f32.mrb[0].mxu0
    %v2641 = vadd.f32 0.0, %v2640
    %v2642 = vpop.f32.mrb[0].mxu0
    %2643 = vdwg.mxu0
    %s2644 = scalar_lea.vmem [#allocation8], 1280
    %v2645 = vld [vmem:[%s2644] sm:$0xff]
    %v2646 = vld [vmem:[%s2644 + $0x8] sm:$0xff]
    %v2647 = vld [vmem:[%s2644 + $0x10] sm:$0xff]
    %v2648 = vld [vmem:[%s2644 + $0x18] sm:$0xff]
    %v2649 = vld [vmem:[%s2644 + $0x20] sm:$0xff]
    %v2650 = vld [vmem:[%s2644 + $0x28] sm:$0xff]
    %v2651 = vld [vmem:[%s2644 + $0x30] sm:$0xff]
    %v2652 = vld [vmem:[%s2644 + $0x38] sm:$0xff]
    %v2653 = vld [vmem:[%s2644 + $0x40] sm:$0xff]
    %v2654 = vld [vmem:[%s2644 + $0x48] sm:$0xff]
    %v2655 = vld [vmem:[%s2644 + $0x50] sm:$0xff]
    %v2656 = vld [vmem:[%s2644 + $0x58] sm:$0xff]
    %v2657 = vld [vmem:[%s2644 + $0x60] sm:$0xff]
    %v2658 = vld [vmem:[%s2644 + $0x68] sm:$0xff]
    %v2659 = vld [vmem:[%s2644 + $0x70] sm:$0xff]
    %v2660 = vld [vmem:[%s2644 + $0x78] sm:$0xff]
    %2661 = vmatprep.subr.mxu0 0.0
    %2662 = vmatpush1.msra.mxu0 %v2645
    %2663 = vmatprep.subr.mxu0 0.0
    %2664 = vmatpush1.msra.mxu0 %v2646
    %2665 = vmatprep.subr.mxu0 0.0
    %2666 = vmatpush1.msra.mxu0 %v2647
    %2667 = vmatprep.subr.mxu0 0.0
    %2668 = vmatpush1.msra.mxu0 %v2648
    %2669 = vmatprep.subr.mxu0 0.0
    %2670 = vmatpush1.msra.mxu0 %v2649
    %2671 = vmatprep.subr.mxu0 0.0
    %2672 = vmatpush1.msra.mxu0 %v2650
    %2673 = vmatprep.subr.mxu0 0.0
    %2674 = vmatpush1.msra.mxu0 %v2651
    %2675 = vmatprep.subr.mxu0 0.0
    %2676 = vmatpush1.msra.mxu0 %v2652
    %2677 = vmatprep.subr.mxu0 0.0
    %2678 = vmatpush1.msra.mxu0 %v2653
    %2679 = vmatprep.subr.mxu0 0.0
    %2680 = vmatpush1.msra.mxu0 %v2654
    %2681 = vmatprep.subr.mxu0 0.0
    %2682 = vmatpush1.msra.mxu0 %v2655
    %2683 = vmatprep.subr.mxu0 0.0
    %2684 = vmatpush1.msra.mxu0 %v2656
    %2685 = vmatprep.subr.mxu0 0.0
    %2686 = vmatpush1.msra.mxu0 %v2657
    %2687 = vmatprep.subr.mxu0 0.0
    %2688 = vmatpush1.msra.mxu0 %v2658
    %2689 = vmatprep.subr.mxu0 0.0
    %2690 = vmatpush1.msra.mxu0 %v2659
    %2691 = vmatprep.subr.mxu0 0.0
    %2692 = vmatpush1.msra.mxu0 %v2660
    %2693 = vmatprep.subr.mxu0 0.0
    %2694 = vmatpush1.msra.mxu0 0.0
    %2695 = vmatprep.subr.mxu0 0.0
    %2696 = vmatpush1.msra.mxu0 0.0
    %2697 = vmatprep.subr.mxu0 0.0
    %2698 = vmatpush1.msra.mxu0 0.0
    %2699 = vmatprep.subr.mxu0 0.0
    %2700 = vmatpush1.msra.mxu0 0.0
    %2701 = vmatprep.subr.mxu0 0.0
    %2702 = vmatpush1.msra.mxu0 0.0
    %2703 = vmatprep.subr.mxu0 0.0
    %2704 = vmatpush1.msra.mxu0 0.0
    %2705 = vmatprep.subr.mxu0 0.0
    %2706 = vmatpush1.msra.mxu0 0.0
    %2707 = vmatprep.subr.mxu0 0.0
    %2708 = vmatpush1.msra.mxu0 0.0
    %2709 = vmatprep.subr.mxu0 0.0
    %2710 = vmatpush1.msra.mxu0 0.0
    %2711 = vmatprep.subr.mxu0 0.0
    %2712 = vmatpush1.msra.mxu0 0.0
    %2713 = vmatprep.subr.mxu0 0.0
    %2714 = vmatpush1.msra.mxu0 0.0
    %2715 = vmatprep.subr.mxu0 0.0
    %2716 = vmatpush1.msra.mxu0 0.0
    %2717 = vmatprep.subr.mxu0 0.0
    %2718 = vmatpush1.msra.mxu0 0.0
    %2719 = vmatprep.subr.mxu0 0.0
    %2720 = vmatpush1.msra.mxu0 0.0
    %2721 = vmatprep.subr.mxu0 0.0
    %2722 = vmatpush1.msra.mxu0 0.0
    %2723 = vmatprep.subr.mxu0 0.0
    %2724 = vmatpush1.msra.mxu0 0.0
    %2725 = vmatprep.mubr.f32.mxu0 0.0
    %2726 = vmatmul.mubr.f32.gmra.mrb[0].mxu0 %v2336
    %v2727 = vpop.f32.mrb[0].mxu0
    %v2728 = vadd.f32 0.0, %v2727
    %v2729 = vpop.f32.mrb[0].mxu0
    %2730 = vmatprep.mubr.f32.mxu0 0.0
    %2731 = vmatmul.mubr.f32.gmra.mrb[0].mxu0 %v2337
    %v2732 = vpop.f32.mrb[0].mxu0
    %v2733 = vadd.f32 0.0, %v2732
    %v2734 = vpop.f32.mrb[0].mxu0
    %2735 = vmatprep.mubr.f32.mxu0 0.0
    %2736 = vmatmul.mubr.f32.gmra.mrb[0].mxu0 %v2338
    %v2737 = vpop.f32.mrb[0].mxu0
    %v2738 = vadd.f32 0.0, %v2737
    %v2739 = vpop.f32.mrb[0].mxu0
    %2740 = vmatprep.mubr.f32.mxu0 0.0
    %2741 = vmatmul.mubr.f32.gmra.mrb[0].mxu0 %v2339
    %v2742 = vpop.f32.mrb[0].mxu0
    %v2743 = vadd.f32 0.0, %v2742
    %v2744 = vpop.f32.mrb[0].mxu0
    %2745 = vmatprep.mubr.f32.mxu0 0.0
    %2746 = vmatmul.mubr.f32.gmra.mrb[0].mxu0 %v2340
    %v2747 = vpop.f32.mrb[0].mxu0
    %v2748 = vadd.f32 0.0, %v2747
    %v2749 = vpop.f32.mrb[0].mxu0
    %2750 = vmatprep.mubr.f32.mxu0 0.0
    %2751 = vmatmul.mubr.f32.gmra.mrb[0].mxu0 %v2341
    %v2752 = vpop.f32.mrb[0].mxu0
    %v2753 = vadd.f32 0.0, %v2752
    %v2754 = vpop.f32.mrb[0].mxu0
    %2755 = vmatprep.mubr.f32.mxu0 0.0
    %2756 = vmatmul.mubr.f32.gmra.mrb[0].mxu0 %v2342
    %v2757 = vpop.f32.mrb[0].mxu0
    %v2758 = vadd.f32 0.0, %v2757
    %v2759 = vpop.f32.mrb[0].mxu0
    %2760 = vmatprep.mubr.f32.mxu0 0.0
    %2761 = vmatmul.mubr.f32.gmra.mrb[0].mxu0 %v2343
    %v2762 = vpop.f32.mrb[0].mxu0
    %v2763 = vadd.f32 0.0, %v2762
    %v2764 = vpop.f32.mrb[0].mxu0
    %2765 = vdwg.mxu0
    %v2766 = vadd.f32 %v2606, %v2728
    %v2767 = vadd.f32 %v2611, %v2733
    %v2768 = vadd.f32 %v2616, %v2738
    %v2769 = vadd.f32 %v2621, %v2743
    %v2770 = vadd.f32 %v2626, %v2748
    %v2771 = vadd.f32 %v2631, %v2753
    %v2772 = vadd.f32 %v2636, %v2758
    %v2773 = vadd.f32 %v2641, %v2763
    %v2774 = vld [vmem:[#allocation10 + $0xd] sm:$0x1]
    %v2775 = vlaneseq
    %v2776 = vshrl.u32 %v2775, 7
    %v2777 = vsub.s32 0, %v2776
    %v2778 = vrot.slane %v2774, %v2777
    %v2779 = vadd.f32 %v2766, %v2778
    %v2780 = vadd.f32 %v2767, %v2778
    %v2781 = vadd.f32 %v2768, %v2778
    %v2782 = vadd.f32 %v2769, %v2778
    %v2783 = vadd.f32 %v2770, %v2778
    %v2784 = vadd.f32 %v2771, %v2778
    %v2785 = vadd.f32 %v2772, %v2778
    %v2786 = vadd.f32 %v2773, %v2778
    %v2787 = vmul.f32 %v2779, %v617
    %v2788 = vmul.f32 %v2780, %v621
    %v2789 = vmul.f32 %v2781, %v625
    %v2790 = vmul.f32 %v2782, %v629
    %v2791 = vmul.f32 %v2783, %v636
    %v2792 = vmul.f32 %v2784, %v640
    %v2793 = vmul.f32 %v2785, %v644
    %v2794 = vmul.f32 %v2786, %v648
    %v2795 = vmax.f32 %v2787, 0.0
    %v2796 = vmax.f32 %v2788, 0.0
    %v2797 = vmax.f32 %v2789, 0.0
    %v2798 = vmax.f32 %v2790, 0.0
    %v2799 = vmax.f32 %v2791, 0.0
    %v2800 = vmax.f32 %v2792, 0.0
    %v2801 = vmax.f32 %v2793, 0.0
    %v2802 = vmax.f32 %v2794, 0.0
    %v2803 = vadd.f32 %v2795, %v2796
    %v2804 = vadd.f32 %v2803, %v2797
    %v2805 = vadd.f32 %v2804, %v2798
    %v2806 = vadd.f32 %v2805, %v2799
    %v2807 = vadd.f32 %v2806, %v2800
    %v2808 = vadd.f32 %v2807, %v2801
    %v2809 = vadd.f32 %v2808, %v2802
    %v2810 = vrot.slane %v2809, 4
    %v2811 = vadd.f32 %v2809, %v2810
    %v2812 = vrot.slane %v2811, 2
    %v2813 = vadd.f32 %v2811, %v2812
    %v2814 = vrot.slane %v2813, 1
    %v2815 = vadd.f32 %v2813, %v2814
    %v2816 = vmul.f32 %v2815, %v678
    %v2817 = vsub.f32 %v2795, %v2816
    %v2818 = vsub.f32 %v2796, %v2816
    %v2819 = vsub.f32 %v2797, %v2816
    %v2820 = vsub.f32 %v2798, %v2816
    %v2821 = vsub.f32 %v2799, %v2816
    %v2822 = vsub.f32 %v2800, %v2816
    %v2823 = vsub.f32 %v2801, %v2816
    %v2824 = vsub.f32 %v2802, %v2816
    %v2825 = vmul.f32 %v2817, %v2817
    %v2826 = vmul.f32 %v2818, %v2818
    %v2827 = vmul.f32 %v2819, %v2819
    %v2828 = vmul.f32 %v2820, %v2820
    %v2829 = vmul.f32 %v2821, %v2821
    %v2830 = vmul.f32 %v2822, %v2822
    %v2831 = vmul.f32 %v2823, %v2823
    %v2832 = vmul.f32 %v2824, %v2824
    %v2833 = vadd.f32 %v2825, %v2826
    %v2834 = vadd.f32 %v2833, %v2827
    %v2835 = vadd.f32 %v2834, %v2828
    %v2836 = vadd.f32 %v2835, %v2829
    %v2837 = vadd.f32 %v2836, %v2830
    %v2838 = vadd.f32 %v2837, %v2831
    %v2839 = vadd.f32 %v2838, %v2832
    %v2840 = vrot.slane %v2839, 4
    %v2841 = vadd.f32 %v2839, %v2840
    %v2842 = vrot.slane %v2841, 2
    %v2843 = vadd.f32 %v2841, %v2842
    %v2844 = vrot.slane %v2843, 1
    %v2845 = vadd.f32 %v2843, %v2844
    %v2846 = vmul.f32 %v2845, %v678
    %v2847 = vadd.f32 %v2846, 1e-05
    %v2848 = vrsqrt.pop %v2847
    %v2849 = vmul.f32 %v2817, %v2848
    %v2850 = vmul.f32 %v2818, %v2848
    %v2851 = vmul.f32 %v2819, %v2848
    %v2852 = vmul.f32 %v2820, %v2848
    %v2853 = vmul.f32 %v2821, %v2848
    %v2854 = vmul.f32 %v2822, %v2848
    %v2855 = vmul.f32 %v2823, %v2848
    %v2856 = vmul.f32 %v2824, %v2848
    %v2857 = vld [vmem:[#allocation10 + $0xe] sm:$0x1]
    %v2858 = vlaneseq
    %v2859 = vshrl.u32 %v2858, 7
    %v2860 = vsub.s32 0, %v2859
    %v2861 = vrot.slane %v2857, %v2860
    %v2862 = vmul.f32 %v2849, %v2861
    %v2863 = vmul.f32 %v2850, %v2861
    %v2864 = vmul.f32 %v2851, %v2861
    %v2865 = vmul.f32 %v2852, %v2861
    %v2866 = vmul.f32 %v2853, %v2861
    %v2867 = vmul.f32 %v2854, %v2861
    %v2868 = vmul.f32 %v2855, %v2861
    %v2869 = vmul.f32 %v2856, %v2861
    %v2870 = vld [vmem:[#allocation10 + $0xf] sm:$0x1]
    %v2871 = vlaneseq
    %v2872 = vshrl.u32 %v2871, 7
    %v2873 = vsub.s32 0, %v2872
    %v2874 = vrot.slane %v2870, %v2873
    %v2875 = vadd.f32 %v2862, %v2874
    %v2876 = vadd.f32 %v2863, %v2874
    %v2877 = vadd.f32 %v2864, %v2874
    %v2878 = vadd.f32 %v2865, %v2874
    %v2879 = vadd.f32 %v2866, %v2874
    %v2880 = vadd.f32 %v2867, %v2874
    %v2881 = vadd.f32 %v2868, %v2874
    %v2882 = vadd.f32 %v2869, %v2874
    %2883 = vmatprep.subr.mxu0 0.0
    %2884 = vmatpush1.msra.mxu0 %v2875
    %2885 = vmatprep.subr.mxu0 0.0
    %2886 = vmatpush1.msra.mxu0 %v2876
    %2887 = vmatprep.subr.mxu0 0.0
    %2888 = vmatpush1.msra.mxu0 %v2877
    %2889 = vmatprep.subr.mxu0 0.0
    %2890 = vmatpush1.msra.mxu0 %v2878
    %2891 = vmatprep.subr.mxu0 0.0
    %2892 = vmatpush1.msra.mxu0 0.0
    %2893 = vmatprep.subr.mxu0 0.0
    %2894 = vmatpush1.msra.mxu0 0.0
    %2895 = vmatprep.subr.mxu0 0.0
    %2896 = vmatpush1.msra.mxu0 0.0
    %2897 = vmatprep.subr.mxu0 0.0
    %2898 = vmatpush1.msra.mxu0 0.0
    %2899 = vmatprep.subr.mxu0 0.0
    %2900 = vmatpush1.msra.mxu0 0.0
    %2901 = vmatprep.subr.mxu0 0.0
    %2902 = vmatpush1.msra.mxu0 0.0
    %2903 = vmatprep.subr.mxu0 0.0
    %2904 = vmatpush1.msra.mxu0 0.0
    %2905 = vmatprep.subr.mxu0 0.0
    %2906 = vmatpush1.msra.mxu0 0.0
    %2907 = vmatprep.subr.mxu0 0.0
    %2908 = vmatpush1.msra.mxu0 0.0
    %2909 = vmatprep.subr.mxu0 0.0
    %2910 = vmatpush1.msra.mxu0 0.0
    %2911 = vmatprep.subr.mxu0 0.0
    %2912 = vmatpush1.msra.mxu0 0.0
    %2913 = vmatprep.subr.mxu0 0.0
    %2914 = vmatpush1.msra.mxu0 0.0
    %2915 = vmatprep.subr.mxu0 0.0
    %2916 = vmatpush1.msra.mxu0 0.0
    %2917 = vmatprep.subr.mxu0 0.0
    %2918 = vmatpush1.msra.mxu0 0.0
    %2919 = vmatprep.subr.mxu0 0.0
    %2920 = vmatpush1.msra.mxu0 0.0
    %2921 = vmatprep.subr.mxu0 0.0
    %2922 = vmatpush1.msra.mxu0 0.0
    %2923 = vmatprep.subr.mxu0 0.0
    %2924 = vmatpush1.msra.mxu0 0.0
    %2925 = vmatprep.subr.mxu0 0.0
    %2926 = vmatpush1.msra.mxu0 0.0
    %2927 = vmatprep.subr.mxu0 0.0
    %2928 = vmatpush1.msra.mxu0 0.0
    %2929 = vmatprep.subr.mxu0 0.0
    %2930 = vmatpush1.msra.mxu0 0.0
    %2931 = vmatprep.subr.mxu0 0.0
    %2932 = vmatpush1.msra.mxu0 0.0
    %2933 = vmatprep.subr.mxu0 0.0
    %2934 = vmatpush1.msra.mxu0 0.0
    %2935 = vmatprep.subr.mxu0 0.0
    %2936 = vmatpush1.msra.mxu0 0.0
    %2937 = vmatprep.subr.mxu0 0.0
    %2938 = vmatpush1.msra.mxu0 0.0
    %2939 = vmatprep.subr.mxu0 0.0
    %2940 = vmatpush1.msra.mxu0 0.0
    %2941 = vmatprep.subr.mxu0 0.0
    %2942 = vmatpush1.msra.mxu0 0.0
    %2943 = vmatprep.subr.mxu0 0.0
    %2944 = vmatpush1.msra.mxu0 0.0
    %2945 = vmatprep.subr.mxu0 0.0
    %2946 = vmatpush1.msra.mxu0 0.0
    %2947 = vmatprep.mubr.f32.mxu0 0.0
    %2948 = vmatmul.mubr.f32.gmra.mrb[0].mxu0 %v106
    %v2949 = vpop.f32.mrb[0].mxu0
    %v2950 = vadd.f32 0.0, %v2949
    %v2951 = vpop.f32.mrb[0].mxu0
    %2952 = vmatprep.mubr.f32.mxu0 0.0
    %2953 = vmatmul.mubr.f32.gmra.mrb[0].mxu0 %v109
    %v2954 = vpop.f32.mrb[0].mxu0
    %v2955 = vadd.f32 0.0, %v2954
    %v2956 = vpop.f32.mrb[0].mxu0
    %2957 = vmatprep.mubr.f32.mxu0 0.0
    %2958 = vmatmul.mubr.f32.gmra.mrb[0].mxu0 %v112
    %v2959 = vpop.f32.mrb[0].mxu0
    %v2960 = vadd.f32 0.0, %v2959
    %v2961 = vpop.f32.mrb[0].mxu0
    %2962 = vmatprep.mubr.f32.mxu0 0.0
    %2963 = vmatmul.mubr.f32.gmra.mrb[0].mxu0 %v115
    %v2964 = vpop.f32.mrb[0].mxu0
    %v2965 = vadd.f32 0.0, %v2964
    %v2966 = vpop.f32.mrb[0].mxu0
    %2967 = vdwg.mxu0
    %2968 = vmatprep.subr.mxu0 0.0
    %2969 = vmatpush1.msra.mxu0 %v2879
    %2970 = vmatprep.subr.mxu0 0.0
    %2971 = vmatpush1.msra.mxu0 %v2880
    %2972 = vmatprep.subr.mxu0 0.0
    %2973 = vmatpush1.msra.mxu0 %v2881
    %2974 = vmatprep.subr.mxu0 0.0
    %2975 = vmatpush1.msra.mxu0 %v2882
    %2976 = vmatprep.subr.mxu0 0.0
    %2977 = vmatpush1.msra.mxu0 0.0
    %2978 = vmatprep.subr.mxu0 0.0
    %2979 = vmatpush1.msra.mxu0 0.0
    %2980 = vmatprep.subr.mxu0 0.0
    %2981 = vmatpush1.msra.mxu0 0.0
    %2982 = vmatprep.subr.mxu0 0.0
    %2983 = vmatpush1.msra.mxu0 0.0
    %2984 = vmatprep.subr.mxu0 0.0
    %2985 = vmatpush1.msra.mxu0 0.0
    %2986 = vmatprep.subr.mxu0 0.0
    %2987 = vmatpush1.msra.mxu0 0.0
    %2988 = vmatprep.subr.mxu0 0.0
    %2989 = vmatpush1.msra.mxu0 0.0
    %2990 = vmatprep.subr.mxu0 0.0
    %2991 = vmatpush1.msra.mxu0 0.0
    %2992 = vmatprep.subr.mxu0 0.0
    %2993 = vmatpush1.msra.mxu0 0.0
    %2994 = vmatprep.subr.mxu0 0.0
    %2995 = vmatpush1.msra.mxu0 0.0
    %2996 = vmatprep.subr.mxu0 0.0
    %2997 = vmatpush1.msra.mxu0 0.0
    %2998 = vmatprep.subr.mxu0 0.0
    %2999 = vmatpush1.msra.mxu0 0.0
    %3000 = vmatprep.subr.mxu0 0.0
    %3001 = vmatpush1.msra.mxu0 0.0
    %3002 = vmatprep.subr.mxu0 0.0
    %3003 = vmatpush1.msra.mxu0 0.0
    %3004 = vmatprep.subr.mxu0 0.0
    %3005 = vmatpush1.msra.mxu0 0.0
    %3006 = vmatprep.subr.mxu0 0.0
    %3007 = vmatpush1.msra.mxu0 0.0
    %3008 = vmatprep.subr.mxu0 0.0
    %3009 = vmatpush1.msra.mxu0 0.0
    %3010 = vmatprep.subr.mxu0 0.0
    %3011 = vmatpush1.msra.mxu0 0.0
    %3012 = vmatprep.subr.mxu0 0.0
    %3013 = vmatpush1.msra.mxu0 0.0
    %3014 = vmatprep.subr.mxu0 0.0
    %3015 = vmatpush1.msra.mxu0 0.0
    %3016 = vmatprep.subr.mxu0 0.0
    %3017 = vmatpush1.msra.mxu0 0.0
    %3018 = vmatprep.subr.mxu0 0.0
    %3019 = vmatpush1.msra.mxu0 0.0
    %3020 = vmatprep.subr.mxu0 0.0
    %3021 = vmatpush1.msra.mxu0 0.0
    %3022 = vmatprep.subr.mxu0 0.0
    %3023 = vmatpush1.msra.mxu0 0.0
    %3024 = vmatprep.subr.mxu0 0.0
    %3025 = vmatpush1.msra.mxu0 0.0
    %3026 = vmatprep.subr.mxu0 0.0
    %3027 = vmatpush1.msra.mxu0 0.0
    %3028 = vmatprep.subr.mxu0 0.0
    %3029 = vmatpush1.msra.mxu0 0.0
    %3030 = vmatprep.subr.mxu0 0.0
    %3031 = vmatpush1.msra.mxu0 0.0
    %3032 = vmatprep.mubr.f32.mxu0 0.0
    %3033 = vmatmul.mubr.f32.gmra.mrb[0].mxu0 %v203
    %v3034 = vpop.f32.mrb[0].mxu0
    %v3035 = vadd.f32 0.0, %v3034
    %v3036 = vpop.f32.mrb[0].mxu0
    %3037 = vmatprep.mubr.f32.mxu0 0.0
    %3038 = vmatmul.mubr.f32.gmra.mrb[0].mxu0 %v206
    %v3039 = vpop.f32.mrb[0].mxu0
    %v3040 = vadd.f32 0.0, %v3039
    %v3041 = vpop.f32.mrb[0].mxu0
    %3042 = vmatprep.mubr.f32.mxu0 0.0
    %3043 = vmatmul.mubr.f32.gmra.mrb[0].mxu0 %v209
    %v3044 = vpop.f32.mrb[0].mxu0
    %v3045 = vadd.f32 0.0, %v3044
    %v3046 = vpop.f32.mrb[0].mxu0
    %3047 = vmatprep.mubr.f32.mxu0 0.0
    %3048 = vmatmul.mubr.f32.gmra.mrb[0].mxu0 %v212
    %v3049 = vpop.f32.mrb[0].mxu0
    %v3050 = vadd.f32 0.0, %v3049
    %v3051 = vpop.f32.mrb[0].mxu0
    %3052 = vdwg.mxu0
    %v3053 = vmul.f32 %v2950, %v331
    %v3054 = vmul.f32 %v2955, %v332
    %v3055 = vmul.f32 %v2960, %v333
    %v3056 = vmul.f32 %v2965, %v334
    %v3057 = vmul.f32 %v3035, %v335
    %v3058 = vmul.f32 %v3040, %v336
    %v3059 = vmul.f32 %v3045, %v337
    %v3060 = vmul.f32 %v3050, %v338
    %s3061 = scalar_lea.vmem [#allocation8], 1408
    %v3062 = vld [vmem:[%s3061] sm:$0xff]
    %v3063 = vld [vmem:[%s3061 + $0x8] sm:$0xff]
    %v3064 = vld [vmem:[%s3061 + $0x10] sm:$0xff]
    %v3065 = vld [vmem:[%s3061 + $0x18] sm:$0xff]
    %v3066 = vld [vmem:[%s3061 + $0x20] sm:$0xff]
    %v3067 = vld [vmem:[%s3061 + $0x28] sm:$0xff]
    %v3068 = vld [vmem:[%s3061 + $0x30] sm:$0xff]
    %v3069 = vld [vmem:[%s3061 + $0x38] sm:$0xff]
    %v3070 = vld [vmem:[%s3061 + $0x40] sm:$0xff]
    %v3071 = vld [vmem:[%s3061 + $0x48] sm:$0xff]
    %v3072 = vld [vmem:[%s3061 + $0x50] sm:$0xff]
    %v3073 = vld [vmem:[%s3061 + $0x58] sm:$0xff]
    %v3074 = vld [vmem:[%s3061 + $0x60] sm:$0xff]
    %v3075 = vld [vmem:[%s3061 + $0x68] sm:$0xff]
    %v3076 = vld [vmem:[%s3061 + $0x70] sm:$0xff]
    %v3077 = vld [vmem:[%s3061 + $0x78] sm:$0xff]
    %3078 = vmatprep.subr.mxu0 0.0
    %3079 = vmatpush1.msra.mxu0 %v3062
    %3080 = vmatprep.subr.mxu0 0.0
    %3081 = vmatpush1.msra.mxu0 %v3063
    %3082 = vmatprep.subr.mxu0 0.0
    %3083 = vmatpush1.msra.mxu0 %v3064
    %3084 = vmatprep.subr.mxu0 0.0
    %3085 = vmatpush1.msra.mxu0 %v3065
    %3086 = vmatprep.subr.mxu0 0.0
    %3087 = vmatpush1.msra.mxu0 %v3066
    %3088 = vmatprep.subr.mxu0 0.0
    %3089 = vmatpush1.msra.mxu0 %v3067
    %3090 = vmatprep.subr.mxu0 0.0
    %3091 = vmatpush1.msra.mxu0 %v3068
    %3092 = vmatprep.subr.mxu0 0.0
    %3093 = vmatpush1.msra.mxu0 %v3069
    %3094 = vmatprep.subr.mxu0 0.0
    %3095 = vmatpush1.msra.mxu0 %v3070
    %3096 = vmatprep.subr.mxu0 0.0
    %3097 = vmatpush1.msra.mxu0 %v3071
    %3098 = vmatprep.subr.mxu0 0.0
    %3099 = vmatpush1.msra.mxu0 %v3072
    %3100 = vmatprep.subr.mxu0 0.0
    %3101 = vmatpush1.msra.mxu0 %v3073
    %3102 = vmatprep.subr.mxu0 0.0
    %3103 = vmatpush1.msra.mxu0 %v3074
    %3104 = vmatprep.subr.mxu0 0.0
    %3105 = vmatpush1.msra.mxu0 %v3075
    %3106 = vmatprep.subr.mxu0 0.0
    %3107 = vmatpush1.msra.mxu0 %v3076
    %3108 = vmatprep.subr.mxu0 0.0
    %3109 = vmatpush1.msra.mxu0 %v3077
    %3110 = vmatprep.subr.mxu0 0.0
    %3111 = vmatpush1.msra.mxu0 0.0
    %3112 = vmatprep.subr.mxu0 0.0
    %3113 = vmatpush1.msra.mxu0 0.0
    %3114 = vmatprep.subr.mxu0 0.0
    %3115 = vmatpush1.msra.mxu0 0.0
    %3116 = vmatprep.subr.mxu0 0.0
    %3117 = vmatpush1.msra.mxu0 0.0
    %3118 = vmatprep.subr.mxu0 0.0
    %3119 = vmatpush1.msra.mxu0 0.0
    %3120 = vmatprep.subr.mxu0 0.0
    %3121 = vmatpush1.msra.mxu0 0.0
    %3122 = vmatprep.subr.mxu0 0.0
    %3123 = vmatpush1.msra.mxu0 0.0
    %3124 = vmatprep.subr.mxu0 0.0
    %3125 = vmatpush1.msra.mxu0 0.0
    %3126 = vmatprep.subr.mxu0 0.0
    %3127 = vmatpush1.msra.mxu0 0.0
    %3128 = vmatprep.subr.mxu0 0.0
    %3129 = vmatpush1.msra.mxu0 0.0
    %3130 = vmatprep.subr.mxu0 0.0
    %3131 = vmatpush1.msra.mxu0 0.0
    %3132 = vmatprep.subr.mxu0 0.0
    %3133 = vmatpush1.msra.mxu0 0.0
    %3134 = vmatprep.subr.mxu0 0.0
    %3135 = vmatpush1.msra.mxu0 0.0
    %3136 = vmatprep.subr.mxu0 0.0
    %3137 = vmatpush1.msra.mxu0 0.0
    %3138 = vmatprep.subr.mxu0 0.0
    %3139 = vmatpush1.msra.mxu0 0.0
    %3140 = vmatprep.subr.mxu0 0.0
    %3141 = vmatpush1.msra.mxu0 0.0
    %3142 = vmatprep.mubr.f32.mxu0 0.0
    %3143 = vmatmul.mubr.f32.gmra.mrb[0].mxu0 %v3053
    %v3144 = vpop.f32.mrb[0].mxu0
    %v3145 = vadd.f32 0.0, %v3144
    %v3146 = vpop.f32.mrb[0].mxu0
    %3147 = vmatprep.mubr.f32.mxu0 0.0
    %3148 = vmatmul.mubr.f32.gmra.mrb[0].mxu0 %v3054
    %v3149 = vpop.f32.mrb[0].mxu0
    %v3150 = vadd.f32 0.0, %v3149
    %v3151 = vpop.f32.mrb[0].mxu0
    %3152 = vmatprep.mubr.f32.mxu0 0.0
    %3153 = vmatmul.mubr.f32.gmra.mrb[0].mxu0 %v3055
    %v3154 = vpop.f32.mrb[0].mxu0
    %v3155 = vadd.f32 0.0, %v3154
    %v3156 = vpop.f32.mrb[0].mxu0
    %3157 = vmatprep.mubr.f32.mxu0 0.0
    %3158 = vmatmul.mubr.f32.gmra.mrb[0].mxu0 %v3056
    %v3159 = vpop.f32.mrb[0].mxu0
    %v3160 = vadd.f32 0.0, %v3159
    %v3161 = vpop.f32.mrb[0].mxu0
    %3162 = vmatprep.mubr.f32.mxu0 0.0
    %3163 = vmatmul.mubr.f32.gmra.mrb[0].mxu0 %v3057
    %v3164 = vpop.f32.mrb[0].mxu0
    %v3165 = vadd.f32 0.0, %v3164
    %v3166 = vpop.f32.mrb[0].mxu0
    %3167 = vmatprep.mubr.f32.mxu0 0.0
    %3168 = vmatmul.mubr.f32.gmra.mrb[0].mxu0 %v3058
    %v3169 = vpop.f32.mrb[0].mxu0
    %v3170 = vadd.f32 0.0, %v3169
    %v3171 = vpop.f32.mrb[0].mxu0
    %3172 = vmatprep.mubr.f32.mxu0 0.0
    %3173 = vmatmul.mubr.f32.gmra.mrb[0].mxu0 %v3059
    %v3174 = vpop.f32.mrb[0].mxu0
    %v3175 = vadd.f32 0.0, %v3174
    %v3176 = vpop.f32.mrb[0].mxu0
    %3177 = vmatprep.mubr.f32.mxu0 0.0
    %3178 = vmatmul.mubr.f32.gmra.mrb[0].mxu0 %v3060
    %v3179 = vpop.f32.mrb[0].mxu0
    %v3180 = vadd.f32 0.0, %v3179
    %v3181 = vpop.f32.mrb[0].mxu0
    %3182 = vdwg.mxu0
    %s3183 = scalar_lea.vmem [#allocation8], 1536
    %v3184 = vld [vmem:[%s3183] sm:$0xff]
    %v3185 = vld [vmem:[%s3183 + $0x8] sm:$0xff]
    %v3186 = vld [vmem:[%s3183 + $0x10] sm:$0xff]
    %v3187 = vld [vmem:[%s3183 + $0x18] sm:$0xff]
    %v3188 = vld [vmem:[%s3183 + $0x20] sm:$0xff]
    %v3189 = vld [vmem:[%s3183 + $0x28] sm:$0xff]
    %v3190 = vld [vmem:[%s3183 + $0x30] sm:$0xff]
    %v3191 = vld [vmem:[%s3183 + $0x38] sm:$0xff]
    %v3192 = vld [vmem:[%s3183 + $0x40] sm:$0xff]
    %v3193 = vld [vmem:[%s3183 + $0x48] sm:$0xff]
    %v3194 = vld [vmem:[%s3183 + $0x50] sm:$0xff]
    %v3195 = vld [vmem:[%s3183 + $0x58] sm:$0xff]
    %v3196 = vld [vmem:[%s3183 + $0x60] sm:$0xff]
    %v3197 = vld [vmem:[%s3183 + $0x68] sm:$0xff]
    %v3198 = vld [vmem:[%s3183 + $0x70] sm:$0xff]
    %v3199 = vld [vmem:[%s3183 + $0x78] sm:$0xff]
    %3200 = vmatprep.subr.mxu0 0.0
    %3201 = vmatpush1.msra.mxu0 %v3184
    %3202 = vmatprep.subr.mxu0 0.0
    %3203 = vmatpush1.msra.mxu0 %v3185
    %3204 = vmatprep.subr.mxu0 0.0
    %3205 = vmatpush1.msra.mxu0 %v3186
    %3206 = vmatprep.subr.mxu0 0.0
    %3207 = vmatpush1.msra.mxu0 %v3187
    %3208 = vmatprep.subr.mxu0 0.0
    %3209 = vmatpush1.msra.mxu0 %v3188
    %3210 = vmatprep.subr.mxu0 0.0
    %3211 = vmatpush1.msra.mxu0 %v3189
    %3212 = vmatprep.subr.mxu0 0.0
    %3213 = vmatpush1.msra.mxu0 %v3190
    %3214 = vmatprep.subr.mxu0 0.0
    %3215 = vmatpush1.msra.mxu0 %v3191
    %3216 = vmatprep.subr.mxu0 0.0
    %3217 = vmatpush1.msra.mxu0 %v3192
    %3218 = vmatprep.subr.mxu0 0.0
    %3219 = vmatpush1.msra.mxu0 %v3193
    %3220 = vmatprep.subr.mxu0 0.0
    %3221 = vmatpush1.msra.mxu0 %v3194
    %3222 = vmatprep.subr.mxu0 0.0
    %3223 = vmatpush1.msra.mxu0 %v3195
    %3224 = vmatprep.subr.mxu0 0.0
    %3225 = vmatpush1.msra.mxu0 %v3196
    %3226 = vmatprep.subr.mxu0 0.0
    %3227 = vmatpush1.msra.mxu0 %v3197
    %3228 = vmatprep.subr.mxu0 0.0
    %3229 = vmatpush1.msra.mxu0 %v3198
    %3230 = vmatprep.subr.mxu0 0.0
    %3231 = vmatpush1.msra.mxu0 %v3199
    %3232 = vmatprep.subr.mxu0 0.0
    %3233 = vmatpush1.msra.mxu0 0.0
    %3234 = vmatprep.subr.mxu0 0.0
    %3235 = vmatpush1.msra.mxu0 0.0
    %3236 = vmatprep.subr.mxu0 0.0
    %3237 = vmatpush1.msra.mxu0 0.0
    %3238 = vmatprep.subr.mxu0 0.0
    %3239 = vmatpush1.msra.mxu0 0.0
    %3240 = vmatprep.subr.mxu0 0.0
    %3241 = vmatpush1.msra.mxu0 0.0
    %3242 = vmatprep.subr.mxu0 0.0
    %3243 = vmatpush1.msra.mxu0 0.0
    %3244 = vmatprep.subr.mxu0 0.0
    %3245 = vmatpush1.msra.mxu0 0.0
    %3246 = vmatprep.subr.mxu0 0.0
    %3247 = vmatpush1.msra.mxu0 0.0
    %3248 = vmatprep.subr.mxu0 0.0
    %3249 = vmatpush1.msra.mxu0 0.0
    %3250 = vmatprep.subr.mxu0 0.0
    %3251 = vmatpush1.msra.mxu0 0.0
    %3252 = vmatprep.subr.mxu0 0.0
    %3253 = vmatpush1.msra.mxu0 0.0
    %3254 = vmatprep.subr.mxu0 0.0
    %3255 = vmatpush1.msra.mxu0 0.0
    %3256 = vmatprep.subr.mxu0 0.0
    %3257 = vmatpush1.msra.mxu0 0.0
    %3258 = vmatprep.subr.mxu0 0.0
    %3259 = vmatpush1.msra.mxu0 0.0
    %3260 = vmatprep.subr.mxu0 0.0
    %3261 = vmatpush1.msra.mxu0 0.0
    %3262 = vmatprep.subr.mxu0 0.0
    %3263 = vmatpush1.msra.mxu0 0.0
    %3264 = vmatprep.mubr.f32.mxu0 0.0
    %3265 = vmatmul.mubr.f32.gmra.mrb[0].mxu0 %v2875
    %v3266 = vpop.f32.mrb[0].mxu0
    %v3267 = vadd.f32 0.0, %v3266
    %v3268 = vpop.f32.mrb[0].mxu0
    %3269 = vmatprep.mubr.f32.mxu0 0.0
    %3270 = vmatmul.mubr.f32.gmra.mrb[0].mxu0 %v2876
    %v3271 = vpop.f32.mrb[0].mxu0
    %v3272 = vadd.f32 0.0, %v3271
    %v3273 = vpop.f32.mrb[0].mxu0
    %3274 = vmatprep.mubr.f32.mxu0 0.0
    %3275 = vmatmul.mubr.f32.gmra.mrb[0].mxu0 %v2877
    %v3276 = vpop.f32.mrb[0].mxu0
    %v3277 = vadd.f32 0.0, %v3276
    %v3278 = vpop.f32.mrb[0].mxu0
    %3279 = vmatprep.mubr.f32.mxu0 0.0
    %3280 = vmatmul.mubr.f32.gmra.mrb[0].mxu0 %v2878
    %v3281 = vpop.f32.mrb[0].mxu0
    %v3282 = vadd.f32 0.0, %v3281
    %v3283 = vpop.f32.mrb[0].mxu0
    %3284 = vmatprep.mubr.f32.mxu0 0.0
    %3285 = vmatmul.mubr.f32.gmra.mrb[0].mxu0 %v2879
    %v3286 = vpop.f32.mrb[0].mxu0
    %v3287 = vadd.f32 0.0, %v3286
    %v3288 = vpop.f32.mrb[0].mxu0
    %3289 = vmatprep.mubr.f32.mxu0 0.0
    %3290 = vmatmul.mubr.f32.gmra.mrb[0].mxu0 %v2880
    %v3291 = vpop.f32.mrb[0].mxu0
    %v3292 = vadd.f32 0.0, %v3291
    %v3293 = vpop.f32.mrb[0].mxu0
    %3294 = vmatprep.mubr.f32.mxu0 0.0
    %3295 = vmatmul.mubr.f32.gmra.mrb[0].mxu0 %v2881
    %v3296 = vpop.f32.mrb[0].mxu0
    %v3297 = vadd.f32 0.0, %v3296
    %v3298 = vpop.f32.mrb[0].mxu0
    %3299 = vmatprep.mubr.f32.mxu0 0.0
    %3300 = vmatmul.mubr.f32.gmra.mrb[0].mxu0 %v2882
    %v3301 = vpop.f32.mrb[0].mxu0
    %v3302 = vadd.f32 0.0, %v3301
    %v3303 = vpop.f32.mrb[0].mxu0
    %3304 = vdwg.mxu0
    %v3305 = vadd.f32 %v3145, %v3267
    %v3306 = vadd.f32 %v3150, %v3272
    %v3307 = vadd.f32 %v3155, %v3277
    %v3308 = vadd.f32 %v3160, %v3282
    %v3309 = vadd.f32 %v3165, %v3287
    %v3310 = vadd.f32 %v3170, %v3292
    %v3311 = vadd.f32 %v3175, %v3297
    %v3312 = vadd.f32 %v3180, %v3302
    %v3313 = vld [vmem:[#allocation10 + $0x10] sm:$0x1]
    %v3314 = vlaneseq
    %v3315 = vshrl.u32 %v3314, 7
    %v3316 = vsub.s32 0, %v3315
    %v3317 = vrot.slane %v3313, %v3316
    %v3318 = vadd.f32 %v3305, %v3317
    %v3319 = vadd.f32 %v3306, %v3317
    %v3320 = vadd.f32 %v3307, %v3317
    %v3321 = vadd.f32 %v3308, %v3317
    %v3322 = vadd.f32 %v3309, %v3317
    %v3323 = vadd.f32 %v3310, %v3317
    %v3324 = vadd.f32 %v3311, %v3317
    %v3325 = vadd.f32 %v3312, %v3317
    %v3326 = vmul.f32 %v3318, %v617
    %v3327 = vmul.f32 %v3319, %v621
    %v3328 = vmul.f32 %v3320, %v625
    %v3329 = vmul.f32 %v3321, %v629
    %v3330 = vmul.f32 %v3322, %v636
    %v3331 = vmul.f32 %v3323, %v640
    %v3332 = vmul.f32 %v3324, %v644
    %v3333 = vmul.f32 %v3325, %v648
    %v3334 = vmax.f32 %v3326, 0.0
    %v3335 = vmax.f32 %v3327, 0.0
    %v3336 = vmax.f32 %v3328, 0.0
    %v3337 = vmax.f32 %v3329, 0.0
    %v3338 = vmax.f32 %v3330, 0.0
    %v3339 = vmax.f32 %v3331, 0.0
    %v3340 = vmax.f32 %v3332, 0.0
    %v3341 = vmax.f32 %v3333, 0.0
    %v3342 = vadd.f32 %v3334, %v3335
    %v3343 = vadd.f32 %v3342, %v3336
    %v3344 = vadd.f32 %v3343, %v3337
    %v3345 = vadd.f32 %v3344, %v3338
    %v3346 = vadd.f32 %v3345, %v3339
    %v3347 = vadd.f32 %v3346, %v3340
    %v3348 = vadd.f32 %v3347, %v3341
    %v3349 = vrot.slane %v3348, 4
    %v3350 = vadd.f32 %v3348, %v3349
    %v3351 = vrot.slane %v3350, 2
    %v3352 = vadd.f32 %v3350, %v3351
    %v3353 = vrot.slane %v3352, 1
    %v3354 = vadd.f32 %v3352, %v3353
    %v3355 = vmul.f32 %v3354, %v678
    %v3356 = vsub.f32 %v3334, %v3355
    %v3357 = vsub.f32 %v3335, %v3355
    %v3358 = vsub.f32 %v3336, %v3355
    %v3359 = vsub.f32 %v3337, %v3355
    %v3360 = vsub.f32 %v3338, %v3355
    %v3361 = vsub.f32 %v3339, %v3355
    %v3362 = vsub.f32 %v3340, %v3355
    %v3363 = vsub.f32 %v3341, %v3355
    %v3364 = vmul.f32 %v3356, %v3356
    %v3365 = vmul.f32 %v3357, %v3357
    %v3366 = vmul.f32 %v3358, %v3358
    %v3367 = vmul.f32 %v3359, %v3359
    %v3368 = vmul.f32 %v3360, %v3360
    %v3369 = vmul.f32 %v3361, %v3361
    %v3370 = vmul.f32 %v3362, %v3362
    %v3371 = vmul.f32 %v3363, %v3363
    %v3372 = vadd.f32 %v3364, %v3365
    %v3373 = vadd.f32 %v3372, %v3366
    %v3374 = vadd.f32 %v3373, %v3367
    %v3375 = vadd.f32 %v3374, %v3368
    %v3376 = vadd.f32 %v3375, %v3369
    %v3377 = vadd.f32 %v3376, %v3370
    %v3378 = vadd.f32 %v3377, %v3371
    %v3379 = vrot.slane %v3378, 4
    %v3380 = vadd.f32 %v3378, %v3379
    %v3381 = vrot.slane %v3380, 2
    %v3382 = vadd.f32 %v3380, %v3381
    %v3383 = vrot.slane %v3382, 1
    %v3384 = vadd.f32 %v3382, %v3383
    %v3385 = vmul.f32 %v3384, %v678
    %v3386 = vadd.f32 %v3385, 1e-05
    %v3387 = vrsqrt.pop %v3386
    %v3388 = vmul.f32 %v3356, %v3387
    %v3389 = vmul.f32 %v3357, %v3387
    %v3390 = vmul.f32 %v3358, %v3387
    %v3391 = vmul.f32 %v3359, %v3387
    %v3392 = vmul.f32 %v3360, %v3387
    %v3393 = vmul.f32 %v3361, %v3387
    %v3394 = vmul.f32 %v3362, %v3387
    %v3395 = vmul.f32 %v3363, %v3387
    %v3396 = vld [vmem:[#allocation10 + $0x11] sm:$0x1]
    %v3397 = vlaneseq
    %v3398 = vshrl.u32 %v3397, 7
    %v3399 = vsub.s32 0, %v3398
    %v3400 = vrot.slane %v3396, %v3399
    %v3401 = vmul.f32 %v3388, %v3400
    %v3402 = vmul.f32 %v3389, %v3400
    %v3403 = vmul.f32 %v3390, %v3400
    %v3404 = vmul.f32 %v3391, %v3400
    %v3405 = vmul.f32 %v3392, %v3400
    %v3406 = vmul.f32 %v3393, %v3400
    %v3407 = vmul.f32 %v3394, %v3400
    %v3408 = vmul.f32 %v3395, %v3400
    %v3409 = vld [vmem:[#allocation10 + $0x12] sm:$0x1]
    %v3410 = vlaneseq
    %v3411 = vshrl.u32 %v3410, 7
    %v3412 = vsub.s32 0, %v3411
    %v3413 = vrot.slane %v3409, %v3412
    %v3414 = vadd.f32 %v3401, %v3413
    %v3415 = vadd.f32 %v3402, %v3413
    %v3416 = vadd.f32 %v3403, %v3413
    %v3417 = vadd.f32 %v3404, %v3413
    %v3418 = vadd.f32 %v3405, %v3413
    %v3419 = vadd.f32 %v3406, %v3413
    %v3420 = vadd.f32 %v3407, %v3413
    %v3421 = vadd.f32 %v3408, %v3413
    %v3422 = vadd.f32 %v2336, %v2875
    %v3423 = vadd.f32 %v2337, %v2876
    %v3424 = vadd.f32 %v2338, %v2877
    %v3425 = vadd.f32 %v2339, %v2878
    %v3426 = vadd.f32 %v2340, %v2879
    %v3427 = vadd.f32 %v2341, %v2880
    %v3428 = vadd.f32 %v2342, %v2881
    %v3429 = vadd.f32 %v2343, %v2882
    %v3430 = vadd.f32 %v3422, %v3414
    %v3431 = vadd.f32 %v3423, %v3415
    %v3432 = vadd.f32 %v3424, %v3416
    %v3433 = vadd.f32 %v3425, %v3417
    %v3434 = vadd.f32 %v3426, %v3418
    %v3435 = vadd.f32 %v3427, %v3419
    %v3436 = vadd.f32 %v3428, %v3420
    %v3437 = vadd.f32 %v3429, %v3421
    %vm3438 = vcmask 64512
    %v3439 = vsel %vm3438, %v1975, -inf
    %3440 = vmax.xlane.f32.xlu0 %v3439
    %v3441 = vpop.xlane.xlu0 %3440
    %v3442 = vsel %vm3438, %v1976, -inf
    %3443 = vmax.xlane.f32.xlu0 %v3442
    %v3444 = vpop.xlane.xlu0 %3443
    %v3445 = vsel %vm3438, %v1977, -inf
    %3446 = vmax.xlane.f32.xlu0 %v3445
    %v3447 = vpop.xlane.xlu0 %3446
    %v3448 = vsel %vm3438, %v1978, -inf
    %3449 = vmax.xlane.f32.xlu0 %v3448
    %v3450 = vpop.xlane.xlu0 %3449
    %v3451 = vsel %vm3438, %v1979, -inf
    %3452 = vmax.xlane.f32.xlu0 %v3451
    %v3453 = vpop.xlane.xlu0 %3452
    %v3454 = vsel %vm3438, %v1980, -inf
    %3455 = vmax.xlane.f32.xlu0 %v3454
    %v3456 = vpop.xlane.xlu0 %3455
    %v3457 = vsel %vm3438, %v1981, -inf
    %3458 = vmax.xlane.f32.xlu0 %v3457
    %v3459 = vpop.xlane.xlu0 %3458
    %v3460 = vsel %vm3438, %v1982, -inf
    %3461 = vmax.xlane.f32.xlu0 %v3460
    %v3462 = vpop.xlane.xlu0 %3461
    %v3463 = vsub.f32 %v1975, %v3441
    %v3464 = vsub.f32 %v1976, %v3444
    %v3465 = vsub.f32 %v1977, %v3447
    %v3466 = vsub.f32 %v1978, %v3450
    %v3467 = vsub.f32 %v1979, %v3453
    %v3468 = vsub.f32 %v1980, %v3456
    %v3469 = vsub.f32 %v1981, %v3459
    %v3470 = vsub.f32 %v1982, %v3462
    %v3471 = vmul.f32 %v3463, 1.442695
    %v3472 = vpow.pop %v3471
    %v3473 = vmul.f32 %v3464, 1.442695
    %v3474 = vpow.pop %v3473
    %v3475 = vmul.f32 %v3465, 1.442695
    %v3476 = vpow.pop %v3475
    %v3477 = vmul.f32 %v3466, 1.442695
    %v3478 = vpow.pop %v3477
    %v3479 = vmul.f32 %v3467, 1.442695
    %v3480 = vpow.pop %v3479
    %v3481 = vmul.f32 %v3468, 1.442695
    %v3482 = vpow.pop %v3481
    %v3483 = vmul.f32 %v3469, 1.442695
    %v3484 = vpow.pop %v3483
    %v3485 = vmul.f32 %v3470, 1.442695
    %v3486 = vpow.pop %v3485
    %v3487 = vsel %vm3438, %v3472, 0.0
    %3488 = vadd.xlane.f32.xlu0 %v3487
    %v3489 = vpop.xlane.xlu0 %3488
    %v3490 = vsel %vm3438, %v3474, 0.0
    %3491 = vadd.xlane.f32.xlu0 %v3490
    %v3492 = vpop.xlane.xlu0 %3491
    %v3493 = vsel %vm3438, %v3476, 0.0
    %3494 = vadd.xlane.f32.xlu0 %v3493
    %v3495 = vpop.xlane.xlu0 %3494
    %v3496 = vsel %vm3438, %v3478, 0.0
    %3497 = vadd.xlane.f32.xlu0 %v3496
    %v3498 = vpop.xlane.xlu0 %3497
    %v3499 = vsel %vm3438, %v3480, 0.0
    %3500 = vadd.xlane.f32.xlu0 %v3499
    %v3501 = vpop.xlane.xlu0 %3500
    %v3502 = vsel %vm3438, %v3482, 0.0
    %3503 = vadd.xlane.f32.xlu0 %v3502
    %v3504 = vpop.xlane.xlu0 %3503
    %v3505 = vsel %vm3438, %v3484, 0.0
    %3506 = vadd.xlane.f32.xlu0 %v3505
    %v3507 = vpop.xlane.xlu0 %3506
    %v3508 = vsel %vm3438, %v3486, 0.0
    %3509 = vadd.xlane.f32.xlu0 %v3508
    %v3510 = vpop.xlane.xlu0 %3509
    %v3511 = vrcp.pop %v3489
    %v3512 = vrcp.pop %v3492
    %v3513 = vrcp.pop %v3495
    %v3514 = vrcp.pop %v3498
    %v3515 = vrcp.pop %v3501
    %v3516 = vrcp.pop %v3504
    %v3517 = vrcp.pop %v3507
    %v3518 = vrcp.pop %v3510
    %v3519 = vmul.f32 %v3472, %v3511
    %v3520 = vmul.f32 %v3474, %v3512
    %v3521 = vmul.f32 %v3476, %v3513
    %v3522 = vmul.f32 %v3478, %v3514
    %v3523 = vmul.f32 %v3480, %v3515
    %v3524 = vmul.f32 %v3482, %v3516
    %v3525 = vmul.f32 %v3484, %v3517
    %v3526 = vmul.f32 %v3486, %v3518
    %v3527 = vmul.f32 %v3430, %v617
    %v3528 = vmul.f32 %v3431, %v621
    %v3529 = vmul.f32 %v3432, %v625
    %v3530 = vmul.f32 %v3433, %v629
    %v3531 = vmul.f32 %v3434, %v636
    %v3532 = vmul.f32 %v3435, %v640
    %v3533 = vmul.f32 %v3436, %v644
    %v3534 = vmul.f32 %v3437, %v648
    %v3535 = vmul.f32 %v3519, %v617
    %v3536 = vmul.f32 %v3520, %v621
    %v3537 = vmul.f32 %v3521, %v625
    %v3538 = vmul.f32 %v3522, %v629
    %v3539 = vmul.f32 %v3523, %v636
    %v3540 = vmul.f32 %v3524, %v640
    %v3541 = vmul.f32 %v3525, %v644
    %v3542 = vmul.f32 %v3526, %v648
    %3543 = vxpose.xlu0.b32.start [1/16] %v3535, 128
    %3544 = vxpose.xlu0.b32.cont [2/16] %v3536, 128
    %3545 = vxpose.xlu0.b32.cont [3/16] %v3537, 128
    %3546 = vxpose.xlu0.b32.cont [4/16] %v3538, 128
    %3547 = vxpose.xlu0.b32.cont [5/16] 0.0, 128
    %3548 = vxpose.xlu0.b32.cont [6/16] 0.0, 128
    %3549 = vxpose.xlu0.b32.cont [7/16] 0.0, 128
    %3550 = vxpose.xlu0.b32.cont [8/16] 0.0, 128
    %3551 = vxpose.xlu0.b32.cont [9/16] 0.0, 128
    %3552 = vxpose.xlu0.b32.cont [10/16] 0.0, 128
    %3553 = vxpose.xlu0.b32.cont [11/16] 0.0, 128
    %3554 = vxpose.xlu0.b32.cont [12/16] 0.0, 128
    %3555 = vxpose.xlu0.b32.cont [13/16] 0.0, 128
    %3556 = vxpose.xlu0.b32.cont [14/16] 0.0, 128
    %3557 = vxpose.xlu0.b32.cont [15/16] 0.0, 128
    %3558 = vxpose.xlu0.b32.end [16/16] 0.0, 128
    %v3559 = vpop.trf.xlu0
    %v3560 = vpop.trf.xlu0
    %v3561 = vpop.trf.xlu0
    %v3562 = vpop.trf.xlu0
    %v3563 = vpop.trf.xlu0
    %v3564 = vpop.trf.xlu0
    %v3565 = vpop.trf.xlu0
    %v3566 = vpop.trf.xlu0
    %v3567 = vpop.trf.xlu0
    %v3568 = vpop.trf.xlu0
    %v3569 = vpop.trf.xlu0
    %v3570 = vpop.trf.xlu0
    %v3571 = vpop.trf.xlu0
    %v3572 = vpop.trf.xlu0
    %v3573 = vpop.trf.xlu0
    %v3574 = vpop.trf.xlu0
    %v3576 = vsel %vm104, %v3559, 0
    %3578 = vmatprep.subr.mxu0 0.0
    %3579 = vmatpush1.msra.mxu0 %v3527
    %3580 = vmatprep.subr.mxu0 0.0
    %3581 = vmatpush1.msra.mxu0 %v3528
    %3582 = vmatprep.subr.mxu0 0.0
    %3583 = vmatpush1.msra.mxu0 %v3529
    %3584 = vmatprep.subr.mxu0 0.0
    %3585 = vmatpush1.msra.mxu0 %v3530
    %3586 = vmatprep.subr.mxu0 0.0
    %3587 = vmatpush1.msra.mxu0 0.0
    %3588 = vmatprep.subr.mxu0 0.0
    %3589 = vmatpush1.msra.mxu0 0.0
    %3590 = vmatprep.subr.mxu0 0.0
    %3591 = vmatpush1.msra.mxu0 0.0
    %3592 = vmatprep.subr.mxu0 0.0
    %3593 = vmatpush1.msra.mxu0 0.0
    %3594 = vmatprep.subr.mxu0 0.0
    %3595 = vmatpush1.msra.mxu0 0.0
    %3596 = vmatprep.subr.mxu0 0.0
    %3597 = vmatpush1.msra.mxu0 0.0
    %3598 = vmatprep.subr.mxu0 0.0
    %3599 = vmatpush1.msra.mxu0 0.0
    %3600 = vmatprep.subr.mxu0 0.0
    %3601 = vmatpush1.msra.mxu0 0.0
    %3602 = vmatprep.subr.mxu0 0.0
    %3603 = vmatpush1.msra.mxu0 0.0
    %3604 = vmatprep.subr.mxu0 0.0
    %3605 = vmatpush1.msra.mxu0 0.0
    %3606 = vmatprep.subr.mxu0 0.0
    %3607 = vmatpush1.msra.mxu0 0.0
    %3608 = vmatprep.subr.mxu0 0.0
    %3609 = vmatpush1.msra.mxu0 0.0
    %3610 = vmatprep.subr.mxu0 0.0
    %3611 = vmatpush1.msra.mxu0 0.0
    %3612 = vmatprep.subr.mxu0 0.0
    %3613 = vmatpush1.msra.mxu0 0.0
    %3614 = vmatprep.subr.mxu0 0.0
    %3615 = vmatpush1.msra.mxu0 0.0
    %3616 = vmatprep.subr.mxu0 0.0
    %3617 = vmatpush1.msra.mxu0 0.0
    %3618 = vmatprep.subr.mxu0 0.0
    %3619 = vmatpush1.msra.mxu0 0.0
    %3620 = vmatprep.subr.mxu0 0.0
    %3621 = vmatpush1.msra.mxu0 0.0
    %3622 = vmatprep.subr.mxu0 0.0
    %3623 = vmatpush1.msra.mxu0 0.0
    %3624 = vmatprep.subr.mxu0 0.0
    %3625 = vmatpush1.msra.mxu0 0.0
    %3626 = vmatprep.subr.mxu0 0.0
    %3627 = vmatpush1.msra.mxu0 0.0
    %3628 = vmatprep.subr.mxu0 0.0
    %3629 = vmatpush1.msra.mxu0 0.0
    %3630 = vmatprep.subr.mxu0 0.0
    %3631 = vmatpush1.msra.mxu0 0.0
    %3632 = vmatprep.subr.mxu0 0.0
    %3633 = vmatpush1.msra.mxu0 0.0
    %3634 = vmatprep.subr.mxu0 0.0
    %3635 = vmatpush1.msra.mxu0 0.0
    %3636 = vmatprep.subr.mxu0 0.0
    %3637 = vmatpush1.msra.mxu0 0.0
    %3638 = vmatprep.subr.mxu0 0.0
    %3639 = vmatpush1.msra.mxu0 0.0
    %3640 = vmatprep.subr.mxu0 0.0
    %3641 = vmatpush1.msra.mxu0 0.0
    %3642 = vmatprep.mubr.f32.mxu0 0.0
    %3643 = vmatmul.mubr.f32.gmra.mrb[0].mxu0 %v3576
    %v3644 = vpop.f32.mrb[0].mxu0
    %v3645 = vadd.f32 0.0, %v3644
    %v3646 = vpop.f32.mrb[0].mxu0
    %3647 = vdwg.mxu0
    %3648 = vxpose.xlu0.b32.start [1/16] %v3539, 128
    %3649 = vxpose.xlu0.b32.cont [2/16] %v3540, 128
    %3650 = vxpose.xlu0.b32.cont [3/16] %v3541, 128
    %3651 = vxpose.xlu0.b32.cont [4/16] %v3542, 128
    %3652 = vxpose.xlu0.b32.cont [5/16] 0.0, 128
    %3653 = vxpose.xlu0.b32.cont [6/16] 0.0, 128
    %3654 = vxpose.xlu0.b32.cont [7/16] 0.0, 128
    %3655 = vxpose.xlu0.b32.cont [8/16] 0.0, 128
    %3656 = vxpose.xlu0.b32.cont [9/16] 0.0, 128
    %3657 = vxpose.xlu0.b32.cont [10/16] 0.0, 128
    %3658 = vxpose.xlu0.b32.cont [11/16] 0.0, 128
    %3659 = vxpose.xlu0.b32.cont [12/16] 0.0, 128
    %3660 = vxpose.xlu0.b32.cont [13/16] 0.0, 128
    %3661 = vxpose.xlu0.b32.cont [14/16] 0.0, 128
    %3662 = vxpose.xlu0.b32.cont [15/16] 0.0, 128
    %3663 = vxpose.xlu0.b32.end [16/16] 0.0, 128
    %v3664 = vpop.trf.xlu0
    %v3665 = vpop.trf.xlu0
    %v3666 = vpop.trf.xlu0
    %v3667 = vpop.trf.xlu0
    %v3668 = vpop.trf.xlu0
    %v3669 = vpop.trf.xlu0
    %v3670 = vpop.trf.xlu0
    %v3671 = vpop.trf.xlu0
    %v3672 = vpop.trf.xlu0
    %v3673 = vpop.trf.xlu0
    %v3674 = vpop.trf.xlu0
    %v3675 = vpop.trf.xlu0
    %v3676 = vpop.trf.xlu0
    %v3677 = vpop.trf.xlu0
    %v3678 = vpop.trf.xlu0
    %v3679 = vpop.trf.xlu0
    %v3681 = vsel %vm104, %v3664, 0
    %3683 = vmatprep.subr.mxu0 0.0
    %3684 = vmatpush1.msra.mxu0 %v3531
    %3685 = vmatprep.subr.mxu0 0.0
    %3686 = vmatpush1.msra.mxu0 %v3532
    %3687 = vmatprep.subr.mxu0 0.0
    %3688 = vmatpush1.msra.mxu0 %v3533
    %3689 = vmatprep.subr.mxu0 0.0
    %3690 = vmatpush1.msra.mxu0 %v3534
    %3691 = vmatprep.subr.mxu0 0.0
    %3692 = vmatpush1.msra.mxu0 0.0
    %3693 = vmatprep.subr.mxu0 0.0
    %3694 = vmatpush1.msra.mxu0 0.0
    %3695 = vmatprep.subr.mxu0 0.0
    %3696 = vmatpush1.msra.mxu0 0.0
    %3697 = vmatprep.subr.mxu0 0.0
    %3698 = vmatpush1.msra.mxu0 0.0
    %3699 = vmatprep.subr.mxu0 0.0
    %3700 = vmatpush1.msra.mxu0 0.0
    %3701 = vmatprep.subr.mxu0 0.0
    %3702 = vmatpush1.msra.mxu0 0.0
    %3703 = vmatprep.subr.mxu0 0.0
    %3704 = vmatpush1.msra.mxu0 0.0
    %3705 = vmatprep.subr.mxu0 0.0
    %3706 = vmatpush1.msra.mxu0 0.0
    %3707 = vmatprep.subr.mxu0 0.0
    %3708 = vmatpush1.msra.mxu0 0.0
    %3709 = vmatprep.subr.mxu0 0.0
    %3710 = vmatpush1.msra.mxu0 0.0
    %3711 = vmatprep.subr.mxu0 0.0
    %3712 = vmatpush1.msra.mxu0 0.0
    %3713 = vmatprep.subr.mxu0 0.0
    %3714 = vmatpush1.msra.mxu0 0.0
    %3715 = vmatprep.subr.mxu0 0.0
    %3716 = vmatpush1.msra.mxu0 0.0
    %3717 = vmatprep.subr.mxu0 0.0
    %3718 = vmatpush1.msra.mxu0 0.0
    %3719 = vmatprep.subr.mxu0 0.0
    %3720 = vmatpush1.msra.mxu0 0.0
    %3721 = vmatprep.subr.mxu0 0.0
    %3722 = vmatpush1.msra.mxu0 0.0
    %3723 = vmatprep.subr.mxu0 0.0
    %3724 = vmatpush1.msra.mxu0 0.0
    %3725 = vmatprep.subr.mxu0 0.0
    %3726 = vmatpush1.msra.mxu0 0.0
    %3727 = vmatprep.subr.mxu0 0.0
    %3728 = vmatpush1.msra.mxu0 0.0
    %3729 = vmatprep.subr.mxu0 0.0
    %3730 = vmatpush1.msra.mxu0 0.0
    %3731 = vmatprep.subr.mxu0 0.0
    %3732 = vmatpush1.msra.mxu0 0.0
    %3733 = vmatprep.subr.mxu0 0.0
    %3734 = vmatpush1.msra.mxu0 0.0
    %3735 = vmatprep.subr.mxu0 0.0
    %3736 = vmatpush1.msra.mxu0 0.0
    %3737 = vmatprep.subr.mxu0 0.0
    %3738 = vmatpush1.msra.mxu0 0.0
    %3739 = vmatprep.subr.mxu0 0.0
    %3740 = vmatpush1.msra.mxu0 0.0
    %3741 = vmatprep.subr.mxu0 0.0
    %3742 = vmatpush1.msra.mxu0 0.0
    %3743 = vmatprep.subr.mxu0 0.0
    %3744 = vmatpush1.msra.mxu0 0.0
    %3745 = vmatprep.subr.mxu0 0.0
    %3746 = vmatpush1.msra.mxu0 0.0
    %3747 = vmatprep.mubr.f32.mxu0 0.0
    %3748 = vmatmul.mubr.f32.gmra.mrb[0].mxu0 %v3681
    %v3749 = vpop.f32.mrb[0].mxu0
    %v3750 = vadd.f32 0.0, %v3749
    %v3751 = vpop.f32.mrb[0].mxu0
    %3752 = vdwg.mxu0
    %3753 = vmatprep.subr.mxu0 0.0
    %3754 = vmatpush1.msra.mxu0 %v95
    %3755 = vmatprep.subr.mxu0 0.0
    %3756 = vmatpush1.msra.mxu0 %v96
    %3757 = vmatprep.subr.mxu0 0.0
    %3758 = vmatpush1.msra.mxu0 %v97
    %3759 = vmatprep.subr.mxu0 0.0
    %3760 = vmatpush1.msra.mxu0 %v98
    %3761 = vmatprep.subr.mxu0 0.0
    %3762 = vmatpush1.msra.mxu0 0.0
    %3763 = vmatprep.subr.mxu0 0.0
    %3764 = vmatpush1.msra.mxu0 0.0
    %3765 = vmatprep.subr.mxu0 0.0
    %3766 = vmatpush1.msra.mxu0 0.0
    %3767 = vmatprep.subr.mxu0 0.0
    %3768 = vmatpush1.msra.mxu0 0.0
    %3769 = vmatprep.subr.mxu0 0.0
    %3770 = vmatpush1.msra.mxu0 0.0
    %3771 = vmatprep.subr.mxu0 0.0
    %3772 = vmatpush1.msra.mxu0 0.0
    %3773 = vmatprep.subr.mxu0 0.0
    %3774 = vmatpush1.msra.mxu0 0.0
    %3775 = vmatprep.subr.mxu0 0.0
    %3776 = vmatpush1.msra.mxu0 0.0
    %3777 = vmatprep.subr.mxu0 0.0
    %3778 = vmatpush1.msra.mxu0 0.0
    %3779 = vmatprep.subr.mxu0 0.0
    %3780 = vmatpush1.msra.mxu0 0.0
    %3781 = vmatprep.subr.mxu0 0.0
    %3782 = vmatpush1.msra.mxu0 0.0
    %3783 = vmatprep.subr.mxu0 0.0
    %3784 = vmatpush1.msra.mxu0 0.0
    %3785 = vmatprep.subr.mxu0 0.0
    %3786 = vmatpush1.msra.mxu0 0.0
    %3787 = vmatprep.subr.mxu0 0.0
    %3788 = vmatpush1.msra.mxu0 0.0
    %3789 = vmatprep.subr.mxu0 0.0
    %3790 = vmatpush1.msra.mxu0 0.0
    %3791 = vmatprep.subr.mxu0 0.0
    %3792 = vmatpush1.msra.mxu0 0.0
    %3793 = vmatprep.subr.mxu0 0.0
    %3794 = vmatpush1.msra.mxu0 0.0
    %3795 = vmatprep.subr.mxu0 0.0
    %3796 = vmatpush1.msra.mxu0 0.0
    %3797 = vmatprep.subr.mxu0 0.0
    %3798 = vmatpush1.msra.mxu0 0.0
    %3799 = vmatprep.subr.mxu0 0.0
    %3800 = vmatpush1.msra.mxu0 0.0
    %3801 = vmatprep.subr.mxu0 0.0
    %3802 = vmatpush1.msra.mxu0 0.0
    %3803 = vmatprep.subr.mxu0 0.0
    %3804 = vmatpush1.msra.mxu0 0.0
    %3805 = vmatprep.subr.mxu0 0.0
    %3806 = vmatpush1.msra.mxu0 0.0
    %3807 = vmatprep.subr.mxu0 0.0
    %3808 = vmatpush1.msra.mxu0 0.0
    %3809 = vmatprep.subr.mxu0 0.0
    %3810 = vmatpush1.msra.mxu0 0.0
    %3811 = vmatprep.subr.mxu0 0.0
    %3812 = vmatpush1.msra.mxu0 0.0
    %3813 = vmatprep.subr.mxu0 0.0
    %3814 = vmatpush1.msra.mxu0 0.0
    %3815 = vmatprep.subr.mxu0 0.0
    %3816 = vmatpush1.msra.mxu0 0.0
    %3817 = vmatprep.mubr.f32.mxu0 0.0
    %3818 = vmatmul.mubr.f32.gmra.mrb[0].mxu0 %v3576
    %v3819 = vpop.f32.mrb[0].mxu0
    %v3820 = vadd.f32 0.0, %v3819
    %v3821 = vpop.f32.mrb[0].mxu0
    %3822 = vdwg.mxu0
    %3823 = vmatprep.subr.mxu0 0.0
    %3824 = vmatpush1.msra.mxu0 %v99
    %3825 = vmatprep.subr.mxu0 0.0
    %3826 = vmatpush1.msra.mxu0 %v100
    %3827 = vmatprep.subr.mxu0 0.0
    %3828 = vmatpush1.msra.mxu0 %v101
    %3829 = vmatprep.subr.mxu0 0.0
    %3830 = vmatpush1.msra.mxu0 %v102
    %3831 = vmatprep.subr.mxu0 0.0
    %3832 = vmatpush1.msra.mxu0 0.0
    %3833 = vmatprep.subr.mxu0 0.0
    %3834 = vmatpush1.msra.mxu0 0.0
    %3835 = vmatprep.subr.mxu0 0.0
    %3836 = vmatpush1.msra.mxu0 0.0
    %3837 = vmatprep.subr.mxu0 0.0
    %3838 = vmatpush1.msra.mxu0 0.0
    %3839 = vmatprep.subr.mxu0 0.0
    %3840 = vmatpush1.msra.mxu0 0.0
    %3841 = vmatprep.subr.mxu0 0.0
    %3842 = vmatpush1.msra.mxu0 0.0
    %3843 = vmatprep.subr.mxu0 0.0
    %3844 = vmatpush1.msra.mxu0 0.0
    %3845 = vmatprep.subr.mxu0 0.0
    %3846 = vmatpush1.msra.mxu0 0.0
    %3847 = vmatprep.subr.mxu0 0.0
    %3848 = vmatpush1.msra.mxu0 0.0
    %3849 = vmatprep.subr.mxu0 0.0
    %3850 = vmatpush1.msra.mxu0 0.0
    %3851 = vmatprep.subr.mxu0 0.0
    %3852 = vmatpush1.msra.mxu0 0.0
    %3853 = vmatprep.subr.mxu0 0.0
    %3854 = vmatpush1.msra.mxu0 0.0
    %3855 = vmatprep.subr.mxu0 0.0
    %3856 = vmatpush1.msra.mxu0 0.0
    %3857 = vmatprep.subr.mxu0 0.0
    %3858 = vmatpush1.msra.mxu0 0.0
    %3859 = vmatprep.subr.mxu0 0.0
    %3860 = vmatpush1.msra.mxu0 0.0
    %3861 = vmatprep.subr.mxu0 0.0
    %3862 = vmatpush1.msra.mxu0 0.0
    %3863 = vmatprep.subr.mxu0 0.0
    %3864 = vmatpush1.msra.mxu0 0.0
    %3865 = vmatprep.subr.mxu0 0.0
    %3866 = vmatpush1.msra.mxu0 0.0
    %3867 = vmatprep.subr.mxu0 0.0
    %3868 = vmatpush1.msra.mxu0 0.0
    %3869 = vmatprep.subr.mxu0 0.0
    %3870 = vmatpush1.msra.mxu0 0.0
    %3871 = vmatprep.subr.mxu0 0.0
    %3872 = vmatpush1.msra.mxu0 0.0
    %3873 = vmatprep.subr.mxu0 0.0
    %3874 = vmatpush1.msra.mxu0 0.0
    %3875 = vmatprep.subr.mxu0 0.0
    %3876 = vmatpush1.msra.mxu0 0.0
    %3877 = vmatprep.subr.mxu0 0.0
    %3878 = vmatpush1.msra.mxu0 0.0
    %3879 = vmatprep.subr.mxu0 0.0
    %3880 = vmatpush1.msra.mxu0 0.0
    %3881 = vmatprep.subr.mxu0 0.0
    %3882 = vmatpush1.msra.mxu0 0.0
    %3883 = vmatprep.subr.mxu0 0.0
    %3884 = vmatpush1.msra.mxu0 0.0
    %3885 = vmatprep.subr.mxu0 0.0
    %3886 = vmatpush1.msra.mxu0 0.0
    %3887 = vmatprep.mubr.f32.mxu0 0.0
    %3888 = vmatmul.mubr.f32.gmra.mrb[0].mxu0 %v3681
    %v3889 = vpop.f32.mrb[0].mxu0
    %v3890 = vadd.f32 0.0, %v3889
    %v3891 = vpop.f32.mrb[0].mxu0
    %3892 = vdwg.mxu0
    %v3894 = vsel %vm104, %v3820, 0
    %3896 = vmatprep.subr.mxu0 0.0
    %3897 = vmatpush1.msra.mxu0 %v3535
    %3898 = vmatprep.subr.mxu0 0.0
    %3899 = vmatpush1.msra.mxu0 %v3536
    %3900 = vmatprep.subr.mxu0 0.0
    %3901 = vmatpush1.msra.mxu0 %v3537
    %3902 = vmatprep.subr.mxu0 0.0
    %3903 = vmatpush1.msra.mxu0 %v3538
    %3904 = vmatprep.subr.mxu0 0.0
    %3905 = vmatpush1.msra.mxu0 0.0
    %3906 = vmatprep.subr.mxu0 0.0
    %3907 = vmatpush1.msra.mxu0 0.0
    %3908 = vmatprep.subr.mxu0 0.0
    %3909 = vmatpush1.msra.mxu0 0.0
    %3910 = vmatprep.subr.mxu0 0.0
    %3911 = vmatpush1.msra.mxu0 0.0
    %3912 = vmatprep.subr.mxu0 0.0
    %3913 = vmatpush1.msra.mxu0 0.0
    %3914 = vmatprep.subr.mxu0 0.0
    %3915 = vmatpush1.msra.mxu0 0.0
    %3916 = vmatprep.subr.mxu0 0.0
    %3917 = vmatpush1.msra.mxu0 0.0
    %3918 = vmatprep.subr.mxu0 0.0
    %3919 = vmatpush1.msra.mxu0 0.0
    %3920 = vmatprep.subr.mxu0 0.0
    %3921 = vmatpush1.msra.mxu0 0.0
    %3922 = vmatprep.subr.mxu0 0.0
    %3923 = vmatpush1.msra.mxu0 0.0
    %3924 = vmatprep.subr.mxu0 0.0
    %3925 = vmatpush1.msra.mxu0 0.0
    %3926 = vmatprep.subr.mxu0 0.0
    %3927 = vmatpush1.msra.mxu0 0.0
    %3928 = vmatprep.subr.mxu0 0.0
    %3929 = vmatpush1.msra.mxu0 0.0
    %3930 = vmatprep.subr.mxu0 0.0
    %3931 = vmatpush1.msra.mxu0 0.0
    %3932 = vmatprep.subr.mxu0 0.0
    %3933 = vmatpush1.msra.mxu0 0.0
    %3934 = vmatprep.subr.mxu0 0.0
    %3935 = vmatpush1.msra.mxu0 0.0
    %3936 = vmatprep.subr.mxu0 0.0
    %3937 = vmatpush1.msra.mxu0 0.0
    %3938 = vmatprep.subr.mxu0 0.0
    %3939 = vmatpush1.msra.mxu0 0.0
    %3940 = vmatprep.subr.mxu0 0.0
    %3941 = vmatpush1.msra.mxu0 0.0
    %3942 = vmatprep.subr.mxu0 0.0
    %3943 = vmatpush1.msra.mxu0 0.0
    %3944 = vmatprep.subr.mxu0 0.0
    %3945 = vmatpush1.msra.mxu0 0.0
    %3946 = vmatprep.subr.mxu0 0.0
    %3947 = vmatpush1.msra.mxu0 0.0
    %3948 = vmatprep.subr.mxu0 0.0
    %3949 = vmatpush1.msra.mxu0 0.0
    %3950 = vmatprep.subr.mxu0 0.0
    %3951 = vmatpush1.msra.mxu0 0.0
    %3952 = vmatprep.subr.mxu0 0.0
    %3953 = vmatpush1.msra.mxu0 0.0
    %3954 = vmatprep.subr.mxu0 0.0
    %3955 = vmatpush1.msra.mxu0 0.0
    %3956 = vmatprep.subr.mxu0 0.0
    %3957 = vmatpush1.msra.mxu0 0.0
    %3958 = vmatprep.subr.mxu0 0.0
    %3959 = vmatpush1.msra.mxu0 0.0
    %3960 = vmatprep.mubr.f32.mxu0 0.0
    %3961 = vmatmul.mubr.f32.gmra.mrb[0].mxu0 %v3894
    %v3962 = vpop.f32.mrb[0].mxu0
    %v3963 = vadd.f32 0.0, %v3962
    %v3964 = vpop.f32.mrb[0].mxu0
    %3965 = vdwg.mxu0
    %v3967 = vsel %vm104, %v3890, 0
    %3969 = vmatprep.subr.mxu0 0.0
    %3970 = vmatpush1.msra.mxu0 %v3539
    %3971 = vmatprep.subr.mxu0 0.0
    %3972 = vmatpush1.msra.mxu0 %v3540
    %3973 = vmatprep.subr.mxu0 0.0
    %3974 = vmatpush1.msra.mxu0 %v3541
    %3975 = vmatprep.subr.mxu0 0.0
    %3976 = vmatpush1.msra.mxu0 %v3542
    %3977 = vmatprep.subr.mxu0 0.0
    %3978 = vmatpush1.msra.mxu0 0.0
    %3979 = vmatprep.subr.mxu0 0.0
    %3980 = vmatpush1.msra.mxu0 0.0
    %3981 = vmatprep.subr.mxu0 0.0
    %3982 = vmatpush1.msra.mxu0 0.0
    %3983 = vmatprep.subr.mxu0 0.0
    %3984 = vmatpush1.msra.mxu0 0.0
    %3985 = vmatprep.subr.mxu0 0.0
    %3986 = vmatpush1.msra.mxu0 0.0
    %3987 = vmatprep.subr.mxu0 0.0
    %3988 = vmatpush1.msra.mxu0 0.0
    %3989 = vmatprep.subr.mxu0 0.0
    %3990 = vmatpush1.msra.mxu0 0.0
    %3991 = vmatprep.subr.mxu0 0.0
    %3992 = vmatpush1.msra.mxu0 0.0
    %3993 = vmatprep.subr.mxu0 0.0
    %3994 = vmatpush1.msra.mxu0 0.0
    %3995 = vmatprep.subr.mxu0 0.0
    %3996 = vmatpush1.msra.mxu0 0.0
    %3997 = vmatprep.subr.mxu0 0.0
    %3998 = vmatpush1.msra.mxu0 0.0
    %3999 = vmatprep.subr.mxu0 0.0
    %4000 = vmatpush1.msra.mxu0 0.0
    %4001 = vmatprep.subr.mxu0 0.0
    %4002 = vmatpush1.msra.mxu0 0.0
    %4003 = vmatprep.subr.mxu0 0.0
    %4004 = vmatpush1.msra.mxu0 0.0
    %4005 = vmatprep.subr.mxu0 0.0
    %4006 = vmatpush1.msra.mxu0 0.0
    %4007 = vmatprep.subr.mxu0 0.0
    %4008 = vmatpush1.msra.mxu0 0.0
    %4009 = vmatprep.subr.mxu0 0.0
    %4010 = vmatpush1.msra.mxu0 0.0
    %4011 = vmatprep.subr.mxu0 0.0
    %4012 = vmatpush1.msra.mxu0 0.0
    %4013 = vmatprep.subr.mxu0 0.0
    %4014 = vmatpush1.msra.mxu0 0.0
    %4015 = vmatprep.subr.mxu0 0.0
    %4016 = vmatpush1.msra.mxu0 0.0
    %4017 = vmatprep.subr.mxu0 0.0
    %4018 = vmatpush1.msra.mxu0 0.0
    %4019 = vmatprep.subr.mxu0 0.0
    %4020 = vmatpush1.msra.mxu0 0.0
    %4021 = vmatprep.subr.mxu0 0.0
    %4022 = vmatpush1.msra.mxu0 0.0
    %4023 = vmatprep.subr.mxu0 0.0
    %4024 = vmatpush1.msra.mxu0 0.0
    %4025 = vmatprep.subr.mxu0 0.0
    %4026 = vmatpush1.msra.mxu0 0.0
    %4027 = vmatprep.subr.mxu0 0.0
    %4028 = vmatpush1.msra.mxu0 0.0
    %4029 = vmatprep.subr.mxu0 0.0
    %4030 = vmatpush1.msra.mxu0 0.0
    %4031 = vmatprep.subr.mxu0 0.0
    %4032 = vmatpush1.msra.mxu0 0.0
    %4033 = vmatprep.mubr.f32.mxu0 0.0
    %4034 = vmatmul.mubr.f32.gmra.mrb[0].mxu0 %v3967
    %v4035 = vpop.f32.mrb[0].mxu0
    %v4036 = vadd.f32 0.0, %v4035
    %v4037 = vpop.f32.mrb[0].mxu0
    %4038 = vdwg.mxu0
    %v4040 = vsel %vm3438, %v3963, 0
    %4042 = vmatprep.subr.mxu0 0.0
    %4043 = vmatpush1.msra.mxu0 %v3645
    %4044 = vmatprep.subr.mxu0 0.0
    %4045 = vmatpush1.msra.mxu0 0.0
    %4046 = vmatprep.subr.mxu0 0.0
    %4047 = vmatpush1.msra.mxu0 0.0
    %4048 = vmatprep.subr.mxu0 0.0
    %4049 = vmatpush1.msra.mxu0 0.0
    %4050 = vmatprep.subr.mxu0 0.0
    %4051 = vmatpush1.msra.mxu0 0.0
    %4052 = vmatprep.subr.mxu0 0.0
    %4053 = vmatpush1.msra.mxu0 0.0
    %4054 = vmatprep.subr.mxu0 0.0
    %4055 = vmatpush1.msra.mxu0 0.0
    %4056 = vmatprep.subr.mxu0 0.0
    %4057 = vmatpush1.msra.mxu0 0.0
    %4058 = vmatprep.subr.mxu0 0.0
    %4059 = vmatpush1.msra.mxu0 0.0
    %4060 = vmatprep.subr.mxu0 0.0
    %4061 = vmatpush1.msra.mxu0 0.0
    %4062 = vmatprep.subr.mxu0 0.0
    %4063 = vmatpush1.msra.mxu0 0.0
    %4064 = vmatprep.subr.mxu0 0.0
    %4065 = vmatpush1.msra.mxu0 0.0
    %4066 = vmatprep.subr.mxu0 0.0
    %4067 = vmatpush1.msra.mxu0 0.0
    %4068 = vmatprep.subr.mxu0 0.0
    %4069 = vmatpush1.msra.mxu0 0.0
    %4070 = vmatprep.subr.mxu0 0.0
    %4071 = vmatpush1.msra.mxu0 0.0
    %4072 = vmatprep.subr.mxu0 0.0
    %4073 = vmatpush1.msra.mxu0 0.0
    %4074 = vmatprep.subr.mxu0 0.0
    %4075 = vmatpush1.msra.mxu0 0.0
    %4076 = vmatprep.subr.mxu0 0.0
    %4077 = vmatpush1.msra.mxu0 0.0
    %4078 = vmatprep.subr.mxu0 0.0
    %4079 = vmatpush1.msra.mxu0 0.0
    %4080 = vmatprep.subr.mxu0 0.0
    %4081 = vmatpush1.msra.mxu0 0.0
    %4082 = vmatprep.subr.mxu0 0.0
    %4083 = vmatpush1.msra.mxu0 0.0
    %4084 = vmatprep.subr.mxu0 0.0
    %4085 = vmatpush1.msra.mxu0 0.0
    %4086 = vmatprep.subr.mxu0 0.0
    %4087 = vmatpush1.msra.mxu0 0.0
    %4088 = vmatprep.subr.mxu0 0.0
    %4089 = vmatpush1.msra.mxu0 0.0
    %4090 = vmatprep.subr.mxu0 0.0
    %4091 = vmatpush1.msra.mxu0 0.0
    %4092 = vmatprep.subr.mxu0 0.0
    %4093 = vmatpush1.msra.mxu0 0.0
    %4094 = vmatprep.subr.mxu0 0.0
    %4095 = vmatpush1.msra.mxu0 0.0
    %4096 = vmatprep.subr.mxu0 0.0
    %4097 = vmatpush1.msra.mxu0 0.0
    %4098 = vmatprep.subr.mxu0 0.0
    %4099 = vmatpush1.msra.mxu0 0.0
    %4100 = vmatprep.subr.mxu0 0.0
    %4101 = vmatpush1.msra.mxu0 0.0
    %4102 = vmatprep.subr.mxu0 0.0
    %4103 = vmatpush1.msra.mxu0 0.0
    %4104 = vmatprep.subr.mxu0 0.0
    %4105 = vmatpush1.msra.mxu0 0.0
    %4106 = vmatprep.mubr.f32.mxu0 0.0
    %4107 = vmatmul.mubr.f32.gmra.mrb[0].mxu0 %v4040
    %v4108 = vpop.f32.mrb[0].mxu0
    %v4109 = vadd.f32 0.0, %v4108
    %v4110 = vpop.f32.mrb[0].mxu0
    %4111 = vdwg.mxu0
    %v4113 = vsel %vm3438, %v4036, 0
    %4115 = vmatprep.subr.mxu0 0.0
    %4116 = vmatpush1.msra.mxu0 %v3750
    %4117 = vmatprep.subr.mxu0 0.0
    %4118 = vmatpush1.msra.mxu0 0.0
    %4119 = vmatprep.subr.mxu0 0.0
    %4120 = vmatpush1.msra.mxu0 0.0
    %4121 = vmatprep.subr.mxu0 0.0
    %4122 = vmatpush1.msra.mxu0 0.0
    %4123 = vmatprep.subr.mxu0 0.0
    %4124 = vmatpush1.msra.mxu0 0.0
    %4125 = vmatprep.subr.mxu0 0.0
    %4126 = vmatpush1.msra.mxu0 0.0
    %4127 = vmatprep.subr.mxu0 0.0
    %4128 = vmatpush1.msra.mxu0 0.0
    %4129 = vmatprep.subr.mxu0 0.0
    %4130 = vmatpush1.msra.mxu0 0.0
    %4131 = vmatprep.subr.mxu0 0.0
    %4132 = vmatpush1.msra.mxu0 0.0
    %4133 = vmatprep.subr.mxu0 0.0
    %4134 = vmatpush1.msra.mxu0 0.0
    %4135 = vmatprep.subr.mxu0 0.0
    %4136 = vmatpush1.msra.mxu0 0.0
    %4137 = vmatprep.subr.mxu0 0.0
    %4138 = vmatpush1.msra.mxu0 0.0
    %4139 = vmatprep.subr.mxu0 0.0
    %4140 = vmatpush1.msra.mxu0 0.0
    %4141 = vmatprep.subr.mxu0 0.0
    %4142 = vmatpush1.msra.mxu0 0.0
    %4143 = vmatprep.subr.mxu0 0.0
    %4144 = vmatpush1.msra.mxu0 0.0
    %4145 = vmatprep.subr.mxu0 0.0
    %4146 = vmatpush1.msra.mxu0 0.0
    %4147 = vmatprep.subr.mxu0 0.0
    %4148 = vmatpush1.msra.mxu0 0.0
    %4149 = vmatprep.subr.mxu0 0.0
    %4150 = vmatpush1.msra.mxu0 0.0
    %4151 = vmatprep.subr.mxu0 0.0
    %4152 = vmatpush1.msra.mxu0 0.0
    %4153 = vmatprep.subr.mxu0 0.0
    %4154 = vmatpush1.msra.mxu0 0.0
    %4155 = vmatprep.subr.mxu0 0.0
    %4156 = vmatpush1.msra.mxu0 0.0
    %4157 = vmatprep.subr.mxu0 0.0
    %4158 = vmatpush1.msra.mxu0 0.0
    %4159 = vmatprep.subr.mxu0 0.0
    %4160 = vmatpush1.msra.mxu0 0.0
    %4161 = vmatprep.subr.mxu0 0.0
    %4162 = vmatpush1.msra.mxu0 0.0
    %4163 = vmatprep.subr.mxu0 0.0
    %4164 = vmatpush1.msra.mxu0 0.0
    %4165 = vmatprep.subr.mxu0 0.0
    %4166 = vmatpush1.msra.mxu0 0.0
    %4167 = vmatprep.subr.mxu0 0.0
    %4168 = vmatpush1.msra.mxu0 0.0
    %4169 = vmatprep.subr.mxu0 0.0
    %4170 = vmatpush1.msra.mxu0 0.0
    %4171 = vmatprep.subr.mxu0 0.0
    %4172 = vmatpush1.msra.mxu0 0.0
    %4173 = vmatprep.subr.mxu0 0.0
    %4174 = vmatpush1.msra.mxu0 0.0
    %4175 = vmatprep.subr.mxu0 0.0
    %4176 = vmatpush1.msra.mxu0 0.0
    %4177 = vmatprep.subr.mxu0 0.0
    %4178 = vmatpush1.msra.mxu0 0.0
    %4179 = vmatprep.mubr.f32.mxu0 0.0
    %4180 = vmatmul.mubr.f32.gmra.mrb[0].mxu0 %v4113
    %v4181 = vpop.f32.mrb[0].mxu0
    %v4182 = vadd.f32 0.0, %v4181
    %v4183 = vpop.f32.mrb[0].mxu0
    %4184 = vdwg.mxu0
    %v4185 = vsel %vm3438, %v3963, 0.0
    %4186 = vadd.xlane.f32.xlu0 %v4185
    %v4187 = vpop.xlane.xlu0 %4186
    %v4188 = vsel %vm3438, %v4036, 0.0
    %4189 = vadd.xlane.f32.xlu0 %v4188
    %v4190 = vpop.xlane.xlu0 %4189
    %v4191 = vmax.f32 %v4187, 1.0
    %v4192 = vmax.f32 %v4190, 1.0
    %v4193 = vrcp.pop %v4191
    %v4194 = vrcp.pop %v4192
    %v4195 = vmul.f32 %v4109, %v4193
    %v4196 = vmul.f32 %v4182, %v4194
    %s4197 = scalar_lea.vmem [#allocation8], 1664
    %v4198 = vld [vmem:[%s4197] sm:$0xff]
    %v4199 = vld [vmem:[%s4197 + $0x8] sm:$0xff]
    %v4200 = vld [vmem:[%s4197 + $0x10] sm:$0xff]
    %v4201 = vld [vmem:[%s4197 + $0x18] sm:$0xff]
    %v4202 = vld [vmem:[%s4197 + $0x20] sm:$0xff]
    %v4203 = vld [vmem:[%s4197 + $0x28] sm:$0xff]
    %v4204 = vld [vmem:[%s4197 + $0x30] sm:$0xff]
    %v4205 = vld [vmem:[%s4197 + $0x38] sm:$0xff]
    %v4206 = vld [vmem:[%s4197 + $0x40] sm:$0xff]
    %v4207 = vld [vmem:[%s4197 + $0x48] sm:$0xff]
    %v4208 = vld [vmem:[%s4197 + $0x50] sm:$0xff]
    %v4209 = vld [vmem:[%s4197 + $0x58] sm:$0xff]
    %v4210 = vld [vmem:[%s4197 + $0x60] sm:$0xff]
    %v4211 = vld [vmem:[%s4197 + $0x68] sm:$0xff]
    %v4212 = vld [vmem:[%s4197 + $0x70] sm:$0xff]
    %v4213 = vld [vmem:[%s4197 + $0x78] sm:$0xff]
    %4214 = vmatprep.subr.mxu0 0.0
    %4215 = vmatpush1.msra.mxu0 %v4198
    %4216 = vmatprep.subr.mxu0 0.0
    %4217 = vmatpush1.msra.mxu0 %v4199
    %4218 = vmatprep.subr.mxu0 0.0
    %4219 = vmatpush1.msra.mxu0 %v4200
    %4220 = vmatprep.subr.mxu0 0.0
    %4221 = vmatpush1.msra.mxu0 %v4201
    %4222 = vmatprep.subr.mxu0 0.0
    %4223 = vmatpush1.msra.mxu0 %v4202
    %4224 = vmatprep.subr.mxu0 0.0
    %4225 = vmatpush1.msra.mxu0 %v4203
    %4226 = vmatprep.subr.mxu0 0.0
    %4227 = vmatpush1.msra.mxu0 %v4204
    %4228 = vmatprep.subr.mxu0 0.0
    %4229 = vmatpush1.msra.mxu0 %v4205
    %4230 = vmatprep.subr.mxu0 0.0
    %4231 = vmatpush1.msra.mxu0 %v4206
    %4232 = vmatprep.subr.mxu0 0.0
    %4233 = vmatpush1.msra.mxu0 %v4207
    %4234 = vmatprep.subr.mxu0 0.0
    %4235 = vmatpush1.msra.mxu0 %v4208
    %4236 = vmatprep.subr.mxu0 0.0
    %4237 = vmatpush1.msra.mxu0 %v4209
    %4238 = vmatprep.subr.mxu0 0.0
    %4239 = vmatpush1.msra.mxu0 %v4210
    %4240 = vmatprep.subr.mxu0 0.0
    %4241 = vmatpush1.msra.mxu0 %v4211
    %4242 = vmatprep.subr.mxu0 0.0
    %4243 = vmatpush1.msra.mxu0 %v4212
    %4244 = vmatprep.subr.mxu0 0.0
    %4245 = vmatpush1.msra.mxu0 %v4213
    %4246 = vmatprep.subr.mxu0 0.0
    %4247 = vmatpush1.msra.mxu0 0.0
    %4248 = vmatprep.subr.mxu0 0.0
    %4249 = vmatpush1.msra.mxu0 0.0
    %4250 = vmatprep.subr.mxu0 0.0
    %4251 = vmatpush1.msra.mxu0 0.0
    %4252 = vmatprep.subr.mxu0 0.0
    %4253 = vmatpush1.msra.mxu0 0.0
    %4254 = vmatprep.subr.mxu0 0.0
    %4255 = vmatpush1.msra.mxu0 0.0
    %4256 = vmatprep.subr.mxu0 0.0
    %4257 = vmatpush1.msra.mxu0 0.0
    %4258 = vmatprep.subr.mxu0 0.0
    %4259 = vmatpush1.msra.mxu0 0.0
    %4260 = vmatprep.subr.mxu0 0.0
    %4261 = vmatpush1.msra.mxu0 0.0
    %4262 = vmatprep.subr.mxu0 0.0
    %4263 = vmatpush1.msra.mxu0 0.0
    %4264 = vmatprep.subr.mxu0 0.0
    %4265 = vmatpush1.msra.mxu0 0.0
    %4266 = vmatprep.subr.mxu0 0.0
    %4267 = vmatpush1.msra.mxu0 0.0
    %4268 = vmatprep.subr.mxu0 0.0
    %4269 = vmatpush1.msra.mxu0 0.0
    %4270 = vmatprep.subr.mxu0 0.0
    %4271 = vmatpush1.msra.mxu0 0.0
    %4272 = vmatprep.subr.mxu0 0.0
    %4273 = vmatpush1.msra.mxu0 0.0
    %4274 = vmatprep.subr.mxu0 0.0
    %4275 = vmatpush1.msra.mxu0 0.0
    %4276 = vmatprep.subr.mxu0 0.0
    %4277 = vmatpush1.msra.mxu0 0.0
    %4278 = vmatprep.mubr.f32.mxu0 0.0
    %4279 = vmatmul.mubr.f32.gmra.mrb[0].mxu0 %v4195
    %v4280 = vpop.f32.mrb[0].mxu0
    %v4281 = vadd.f32 0.0, %v4280
    %v4282 = vpop.f32.mrb[0].mxu0
    %4283 = vmatprep.mubr.f32.mxu0 0.0
    %4284 = vmatmul.mubr.f32.gmra.mrb[0].mxu0 %v4196
    %v4285 = vpop.f32.mrb[0].mxu0
    %v4286 = vadd.f32 0.0, %v4285
    %v4287 = vpop.f32.mrb[0].mxu0
    %4288 = vdwg.mxu0
    %s4289 = scalar_lea.vmem [#allocation8], 1792
    %v4290 = vld [vmem:[%s4289] sm:$0xff]
    %v4291 = vld [vmem:[%s4289 + $0x8] sm:$0xff]
    %v4292 = vld [vmem:[%s4289 + $0x10] sm:$0xff]
    %v4293 = vld [vmem:[%s4289 + $0x18] sm:$0xff]
    %v4294 = vld [vmem:[%s4289 + $0x20] sm:$0xff]
    %v4295 = vld [vmem:[%s4289 + $0x28] sm:$0xff]
    %v4296 = vld [vmem:[%s4289 + $0x30] sm:$0xff]
    %v4297 = vld [vmem:[%s4289 + $0x38] sm:$0xff]
    %v4298 = vld [vmem:[%s4289 + $0x40] sm:$0xff]
    %v4299 = vld [vmem:[%s4289 + $0x48] sm:$0xff]
    %v4300 = vld [vmem:[%s4289 + $0x50] sm:$0xff]
    %v4301 = vld [vmem:[%s4289 + $0x58] sm:$0xff]
    %v4302 = vld [vmem:[%s4289 + $0x60] sm:$0xff]
    %v4303 = vld [vmem:[%s4289 + $0x68] sm:$0xff]
    %v4304 = vld [vmem:[%s4289 + $0x70] sm:$0xff]
    %v4305 = vld [vmem:[%s4289 + $0x78] sm:$0xff]
    %4306 = vmatprep.subr.mxu0 0.0
    %4307 = vmatpush1.msra.mxu0 %v4290
    %4308 = vmatprep.subr.mxu0 0.0
    %4309 = vmatpush1.msra.mxu0 %v4291
    %4310 = vmatprep.subr.mxu0 0.0
    %4311 = vmatpush1.msra.mxu0 %v4292
    %4312 = vmatprep.subr.mxu0 0.0
    %4313 = vmatpush1.msra.mxu0 %v4293
    %4314 = vmatprep.subr.mxu0 0.0
    %4315 = vmatpush1.msra.mxu0 %v4294
    %4316 = vmatprep.subr.mxu0 0.0
    %4317 = vmatpush1.msra.mxu0 %v4295
    %4318 = vmatprep.subr.mxu0 0.0
    %4319 = vmatpush1.msra.mxu0 %v4296
    %4320 = vmatprep.subr.mxu0 0.0
    %4321 = vmatpush1.msra.mxu0 %v4297
    %4322 = vmatprep.subr.mxu0 0.0
    %4323 = vmatpush1.msra.mxu0 %v4298
    %4324 = vmatprep.subr.mxu0 0.0
    %4325 = vmatpush1.msra.mxu0 %v4299
    %4326 = vmatprep.subr.mxu0 0.0
    %4327 = vmatpush1.msra.mxu0 %v4300
    %4328 = vmatprep.subr.mxu0 0.0
    %4329 = vmatpush1.msra.mxu0 %v4301
    %4330 = vmatprep.subr.mxu0 0.0
    %4331 = vmatpush1.msra.mxu0 %v4302
    %4332 = vmatprep.subr.mxu0 0.0
    %4333 = vmatpush1.msra.mxu0 %v4303
    %4334 = vmatprep.subr.mxu0 0.0
    %4335 = vmatpush1.msra.mxu0 %v4304
    %4336 = vmatprep.subr.mxu0 0.0
    %4337 = vmatpush1.msra.mxu0 %v4305
    %4338 = vmatprep.subr.mxu0 0.0
    %4339 = vmatpush1.msra.mxu0 0.0
    %4340 = vmatprep.subr.mxu0 0.0
    %4341 = vmatpush1.msra.mxu0 0.0
    %4342 = vmatprep.subr.mxu0 0.0
    %4343 = vmatpush1.msra.mxu0 0.0
    %4344 = vmatprep.subr.mxu0 0.0
    %4345 = vmatpush1.msra.mxu0 0.0
    %4346 = vmatprep.subr.mxu0 0.0
    %4347 = vmatpush1.msra.mxu0 0.0
    %4348 = vmatprep.subr.mxu0 0.0
    %4349 = vmatpush1.msra.mxu0 0.0
    %4350 = vmatprep.subr.mxu0 0.0
    %4351 = vmatpush1.msra.mxu0 0.0
    %4352 = vmatprep.subr.mxu0 0.0
    %4353 = vmatpush1.msra.mxu0 0.0
    %4354 = vmatprep.subr.mxu0 0.0
    %4355 = vmatpush1.msra.mxu0 0.0
    %4356 = vmatprep.subr.mxu0 0.0
    %4357 = vmatpush1.msra.mxu0 0.0
    %4358 = vmatprep.subr.mxu0 0.0
    %4359 = vmatpush1.msra.mxu0 0.0
    %4360 = vmatprep.subr.mxu0 0.0
    %4361 = vmatpush1.msra.mxu0 0.0
    %4362 = vmatprep.subr.mxu0 0.0
    %4363 = vmatpush1.msra.mxu0 0.0
    %4364 = vmatprep.subr.mxu0 0.0
    %4365 = vmatpush1.msra.mxu0 0.0
    %4366 = vmatprep.subr.mxu0 0.0
    %4367 = vmatpush1.msra.mxu0 0.0
    %4368 = vmatprep.subr.mxu0 0.0
    %4369 = vmatpush1.msra.mxu0 0.0
    %4370 = vmatprep.mubr.f32.mxu0 0.0
    %4371 = vmatmul.mubr.f32.gmra.mrb[0].mxu0 %v3645
    %v4372 = vpop.f32.mrb[0].mxu0
    %v4373 = vadd.f32 0.0, %v4372
    %v4374 = vpop.f32.mrb[0].mxu0
    %4375 = vmatprep.mubr.f32.mxu0 0.0
    %4376 = vmatmul.mubr.f32.gmra.mrb[0].mxu0 %v3750
    %v4377 = vpop.f32.mrb[0].mxu0
    %v4378 = vadd.f32 0.0, %v4377
    %v4379 = vpop.f32.mrb[0].mxu0
    %4380 = vdwg.mxu0
    %v4381 = vadd.f32 %v4281, %v4373
    %v4382 = vadd.f32 %v4286, %v4378
    %v4383 = vld [vmem:[#allocation10 + $0x13] sm:$0x1]
    %v4384 = vlaneseq
    %v4385 = vshrl.u32 %v4384, 7
    %v4386 = vsub.s32 0, %v4385
    %v4387 = vrot.slane %v4383, %v4386
    %v4388 = vadd.f32 %v4381, %v4387
    %v4389 = vadd.f32 %v4382, %v4387
    %v4390 = vmax.f32 %v4388, 0.0
    %v4391 = vmax.f32 %v4389, 0.0
    %v4392 = vadd.f32 %v4390, %v4391
    %v4393 = vrot.slane %v4392, 4
    %v4394 = vadd.f32 %v4392, %v4393
    %v4395 = vrot.slane %v4394, 2
    %v4396 = vadd.f32 %v4394, %v4395
    %v4397 = vrot.slane %v4396, 1
    %v4398 = vadd.f32 %v4396, %v4397
    %v4399 = vrcp.pop 16.0
    %v4400 = vmul.f32 %v4398, %v4399
    %v4401 = vsub.f32 %v4390, %v4400
    %v4402 = vsub.f32 %v4391, %v4400
    %v4403 = vmul.f32 %v4401, %v4401
    %v4404 = vmul.f32 %v4402, %v4402
    %v4405 = vadd.f32 %v4403, %v4404
    %v4406 = vrot.slane %v4405, 4
    %v4407 = vadd.f32 %v4405, %v4406
    %v4408 = vrot.slane %v4407, 2
    %v4409 = vadd.f32 %v4407, %v4408
    %v4410 = vrot.slane %v4409, 1
    %v4411 = vadd.f32 %v4409, %v4410
    %v4412 = vmul.f32 %v4411, %v4399
    %v4413 = vadd.f32 %v4412, 1e-05
    %v4414 = vrsqrt.pop %v4413
    %v4415 = vmul.f32 %v4401, %v4414
    %v4416 = vmul.f32 %v4402, %v4414
    %v4417 = vld [vmem:[#allocation10 + $0x14] sm:$0x1]
    %v4418 = vlaneseq
    %v4419 = vshrl.u32 %v4418, 7
    %v4420 = vsub.s32 0, %v4419
    %v4421 = vrot.slane %v4417, %v4420
    %v4422 = vmul.f32 %v4415, %v4421
    %v4423 = vmul.f32 %v4416, %v4421
    %v4424 = vld [vmem:[#allocation10 + $0x15] sm:$0x1]
    %v4425 = vlaneseq
    %v4426 = vshrl.u32 %v4425, 7
    %v4427 = vsub.s32 0, %v4426
    %v4428 = vrot.slane %v4424, %v4427
    %v4429 = vadd.f32 %v4422, %v4428
    %v4430 = vadd.f32 %v4423, %v4428
    %4431 = vmatprep.subr.mxu0 0.0
    %4432 = vmatpush1.msra.mxu0 %v4429
    %4433 = vmatprep.subr.mxu0 0.0
    %4434 = vmatpush1.msra.mxu0 0.0
    %4435 = vmatprep.subr.mxu0 0.0
    %4436 = vmatpush1.msra.mxu0 0.0
    %4437 = vmatprep.subr.mxu0 0.0
    %4438 = vmatpush1.msra.mxu0 0.0
    %4439 = vmatprep.subr.mxu0 0.0
    %4440 = vmatpush1.msra.mxu0 0.0
    %4441 = vmatprep.subr.mxu0 0.0
    %4442 = vmatpush1.msra.mxu0 0.0
    %4443 = vmatprep.subr.mxu0 0.0
    %4444 = vmatpush1.msra.mxu0 0.0
    %4445 = vmatprep.subr.mxu0 0.0
    %4446 = vmatpush1.msra.mxu0 0.0
    %4447 = vmatprep.subr.mxu0 0.0
    %4448 = vmatpush1.msra.mxu0 0.0
    %4449 = vmatprep.subr.mxu0 0.0
    %4450 = vmatpush1.msra.mxu0 0.0
    %4451 = vmatprep.subr.mxu0 0.0
    %4452 = vmatpush1.msra.mxu0 0.0
    %4453 = vmatprep.subr.mxu0 0.0
    %4454 = vmatpush1.msra.mxu0 0.0
    %4455 = vmatprep.subr.mxu0 0.0
    %4456 = vmatpush1.msra.mxu0 0.0
    %4457 = vmatprep.subr.mxu0 0.0
    %4458 = vmatpush1.msra.mxu0 0.0
    %4459 = vmatprep.subr.mxu0 0.0
    %4460 = vmatpush1.msra.mxu0 0.0
    %4461 = vmatprep.subr.mxu0 0.0
    %4462 = vmatpush1.msra.mxu0 0.0
    %4463 = vmatprep.subr.mxu0 0.0
    %4464 = vmatpush1.msra.mxu0 0.0
    %4465 = vmatprep.subr.mxu0 0.0
    %4466 = vmatpush1.msra.mxu0 0.0
    %4467 = vmatprep.subr.mxu0 0.0
    %4468 = vmatpush1.msra.mxu0 0.0
    %4469 = vmatprep.subr.mxu0 0.0
    %4470 = vmatpush1.msra.mxu0 0.0
    %4471 = vmatprep.subr.mxu0 0.0
    %4472 = vmatpush1.msra.mxu0 0.0
    %4473 = vmatprep.subr.mxu0 0.0
    %4474 = vmatpush1.msra.mxu0 0.0
    %4475 = vmatprep.subr.mxu0 0.0
    %4476 = vmatpush1.msra.mxu0 0.0
    %4477 = vmatprep.subr.mxu0 0.0
    %4478 = vmatpush1.msra.mxu0 0.0
    %4479 = vmatprep.subr.mxu0 0.0
    %4480 = vmatpush1.msra.mxu0 0.0
    %4481 = vmatprep.subr.mxu0 0.0
    %4482 = vmatpush1.msra.mxu0 0.0
    %4483 = vmatprep.subr.mxu0 0.0
    %4484 = vmatpush1.msra.mxu0 0.0
    %4485 = vmatprep.subr.mxu0 0.0
    %4486 = vmatpush1.msra.mxu0 0.0
    %4487 = vmatprep.subr.mxu0 0.0
    %4488 = vmatpush1.msra.mxu0 0.0
    %4489 = vmatprep.subr.mxu0 0.0
    %4490 = vmatpush1.msra.mxu0 0.0
    %4491 = vmatprep.subr.mxu0 0.0
    %4492 = vmatpush1.msra.mxu0 0.0
    %4493 = vmatprep.subr.mxu0 0.0
    %4494 = vmatpush1.msra.mxu0 0.0
    %4495 = vmatprep.mubr.f32.mxu0 0.0
    %4496 = vmatmul.mubr.f32.gmra.mrb[0].mxu0 %v4040
    %v4497 = vpop.f32.mrb[0].mxu0
    %v4498 = vadd.f32 0.0, %v4497
    %v4499 = vpop.f32.mrb[0].mxu0
    %4500 = vdwg.mxu0
    %4501 = vmatprep.subr.mxu0 0.0
    %4502 = vmatpush1.msra.mxu0 %v4430
    %4503 = vmatprep.subr.mxu0 0.0
    %4504 = vmatpush1.msra.mxu0 0.0
    %4505 = vmatprep.subr.mxu0 0.0
    %4506 = vmatpush1.msra.mxu0 0.0
    %4507 = vmatprep.subr.mxu0 0.0
    %4508 = vmatpush1.msra.mxu0 0.0
    %4509 = vmatprep.subr.mxu0 0.0
    %4510 = vmatpush1.msra.mxu0 0.0
    %4511 = vmatprep.subr.mxu0 0.0
    %4512 = vmatpush1.msra.mxu0 0.0
    %4513 = vmatprep.subr.mxu0 0.0
    %4514 = vmatpush1.msra.mxu0 0.0
    %4515 = vmatprep.subr.mxu0 0.0
    %4516 = vmatpush1.msra.mxu0 0.0
    %4517 = vmatprep.subr.mxu0 0.0
    %4518 = vmatpush1.msra.mxu0 0.0
    %4519 = vmatprep.subr.mxu0 0.0
    %4520 = vmatpush1.msra.mxu0 0.0
    %4521 = vmatprep.subr.mxu0 0.0
    %4522 = vmatpush1.msra.mxu0 0.0
    %4523 = vmatprep.subr.mxu0 0.0
    %4524 = vmatpush1.msra.mxu0 0.0
    %4525 = vmatprep.subr.mxu0 0.0
    %4526 = vmatpush1.msra.mxu0 0.0
    %4527 = vmatprep.subr.mxu0 0.0
    %4528 = vmatpush1.msra.mxu0 0.0
    %4529 = vmatprep.subr.mxu0 0.0
    %4530 = vmatpush1.msra.mxu0 0.0
    %4531 = vmatprep.subr.mxu0 0.0
    %4532 = vmatpush1.msra.mxu0 0.0
    %4533 = vmatprep.subr.mxu0 0.0
    %4534 = vmatpush1.msra.mxu0 0.0
    %4535 = vmatprep.subr.mxu0 0.0
    %4536 = vmatpush1.msra.mxu0 0.0
    %4537 = vmatprep.subr.mxu0 0.0
    %4538 = vmatpush1.msra.mxu0 0.0
    %4539 = vmatprep.subr.mxu0 0.0
    %4540 = vmatpush1.msra.mxu0 0.0
    %4541 = vmatprep.subr.mxu0 0.0
    %4542 = vmatpush1.msra.mxu0 0.0
    %4543 = vmatprep.subr.mxu0 0.0
    %4544 = vmatpush1.msra.mxu0 0.0
    %4545 = vmatprep.subr.mxu0 0.0
    %4546 = vmatpush1.msra.mxu0 0.0
    %4547 = vmatprep.subr.mxu0 0.0
    %4548 = vmatpush1.msra.mxu0 0.0
    %4549 = vmatprep.subr.mxu0 0.0
    %4550 = vmatpush1.msra.mxu0 0.0
    %4551 = vmatprep.subr.mxu0 0.0
    %4552 = vmatpush1.msra.mxu0 0.0
    %4553 = vmatprep.subr.mxu0 0.0
    %4554 = vmatpush1.msra.mxu0 0.0
    %4555 = vmatprep.subr.mxu0 0.0
    %4556 = vmatpush1.msra.mxu0 0.0
    %4557 = vmatprep.subr.mxu0 0.0
    %4558 = vmatpush1.msra.mxu0 0.0
    %4559 = vmatprep.subr.mxu0 0.0
    %4560 = vmatpush1.msra.mxu0 0.0
    %4561 = vmatprep.subr.mxu0 0.0
    %4562 = vmatpush1.msra.mxu0 0.0
    %4563 = vmatprep.subr.mxu0 0.0
    %4564 = vmatpush1.msra.mxu0 0.0
    %4565 = vmatprep.mubr.f32.mxu0 0.0
    %4566 = vmatmul.mubr.f32.gmra.mrb[0].mxu0 %v4113
    %v4567 = vpop.f32.mrb[0].mxu0
    %v4568 = vadd.f32 0.0, %v4567
    %v4569 = vpop.f32.mrb[0].mxu0
    %4570 = vdwg.mxu0
    %v4571 = vmul.f32 %v4498, %v4193
    %v4572 = vmul.f32 %v4568, %v4194
    %s4573 = scalar_lea.vmem [#allocation8], 1920
    %v4574 = vld [vmem:[%s4573] sm:$0xff]
    %v4575 = vld [vmem:[%s4573 + $0x8] sm:$0xff]
    %v4576 = vld [vmem:[%s4573 + $0x10] sm:$0xff]
    %v4577 = vld [vmem:[%s4573 + $0x18] sm:$0xff]
    %v4578 = vld [vmem:[%s4573 + $0x20] sm:$0xff]
    %v4579 = vld [vmem:[%s4573 + $0x28] sm:$0xff]
    %v4580 = vld [vmem:[%s4573 + $0x30] sm:$0xff]
    %v4581 = vld [vmem:[%s4573 + $0x38] sm:$0xff]
    %v4582 = vld [vmem:[%s4573 + $0x40] sm:$0xff]
    %v4583 = vld [vmem:[%s4573 + $0x48] sm:$0xff]
    %v4584 = vld [vmem:[%s4573 + $0x50] sm:$0xff]
    %v4585 = vld [vmem:[%s4573 + $0x58] sm:$0xff]
    %v4586 = vld [vmem:[%s4573 + $0x60] sm:$0xff]
    %v4587 = vld [vmem:[%s4573 + $0x68] sm:$0xff]
    %v4588 = vld [vmem:[%s4573 + $0x70] sm:$0xff]
    %v4589 = vld [vmem:[%s4573 + $0x78] sm:$0xff]
    %4590 = vmatprep.subr.mxu0 0.0
    %4591 = vmatpush1.msra.mxu0 %v4574
    %4592 = vmatprep.subr.mxu0 0.0
    %4593 = vmatpush1.msra.mxu0 %v4575
    %4594 = vmatprep.subr.mxu0 0.0
    %4595 = vmatpush1.msra.mxu0 %v4576
    %4596 = vmatprep.subr.mxu0 0.0
    %4597 = vmatpush1.msra.mxu0 %v4577
    %4598 = vmatprep.subr.mxu0 0.0
    %4599 = vmatpush1.msra.mxu0 %v4578
    %4600 = vmatprep.subr.mxu0 0.0
    %4601 = vmatpush1.msra.mxu0 %v4579
    %4602 = vmatprep.subr.mxu0 0.0
    %4603 = vmatpush1.msra.mxu0 %v4580
    %4604 = vmatprep.subr.mxu0 0.0
    %4605 = vmatpush1.msra.mxu0 %v4581
    %4606 = vmatprep.subr.mxu0 0.0
    %4607 = vmatpush1.msra.mxu0 %v4582
    %4608 = vmatprep.subr.mxu0 0.0
    %4609 = vmatpush1.msra.mxu0 %v4583
    %4610 = vmatprep.subr.mxu0 0.0
    %4611 = vmatpush1.msra.mxu0 %v4584
    %4612 = vmatprep.subr.mxu0 0.0
    %4613 = vmatpush1.msra.mxu0 %v4585
    %4614 = vmatprep.subr.mxu0 0.0
    %4615 = vmatpush1.msra.mxu0 %v4586
    %4616 = vmatprep.subr.mxu0 0.0
    %4617 = vmatpush1.msra.mxu0 %v4587
    %4618 = vmatprep.subr.mxu0 0.0
    %4619 = vmatpush1.msra.mxu0 %v4588
    %4620 = vmatprep.subr.mxu0 0.0
    %4621 = vmatpush1.msra.mxu0 %v4589
    %4622 = vmatprep.subr.mxu0 0.0
    %4623 = vmatpush1.msra.mxu0 0.0
    %4624 = vmatprep.subr.mxu0 0.0
    %4625 = vmatpush1.msra.mxu0 0.0
    %4626 = vmatprep.subr.mxu0 0.0
    %4627 = vmatpush1.msra.mxu0 0.0
    %4628 = vmatprep.subr.mxu0 0.0
    %4629 = vmatpush1.msra.mxu0 0.0
    %4630 = vmatprep.subr.mxu0 0.0
    %4631 = vmatpush1.msra.mxu0 0.0
    %4632 = vmatprep.subr.mxu0 0.0
    %4633 = vmatpush1.msra.mxu0 0.0
    %4634 = vmatprep.subr.mxu0 0.0
    %4635 = vmatpush1.msra.mxu0 0.0
    %4636 = vmatprep.subr.mxu0 0.0
    %4637 = vmatpush1.msra.mxu0 0.0
    %4638 = vmatprep.subr.mxu0 0.0
    %4639 = vmatpush1.msra.mxu0 0.0
    %4640 = vmatprep.subr.mxu0 0.0
    %4641 = vmatpush1.msra.mxu0 0.0
    %4642 = vmatprep.subr.mxu0 0.0
    %4643 = vmatpush1.msra.mxu0 0.0
    %4644 = vmatprep.subr.mxu0 0.0
    %4645 = vmatpush1.msra.mxu0 0.0
    %4646 = vmatprep.subr.mxu0 0.0
    %4647 = vmatpush1.msra.mxu0 0.0
    %4648 = vmatprep.subr.mxu0 0.0
    %4649 = vmatpush1.msra.mxu0 0.0
    %4650 = vmatprep.subr.mxu0 0.0
    %4651 = vmatpush1.msra.mxu0 0.0
    %4652 = vmatprep.subr.mxu0 0.0
    %4653 = vmatpush1.msra.mxu0 0.0
    %4654 = vmatprep.mubr.f32.mxu0 0.0
    %4655 = vmatmul.mubr.f32.gmra.mrb[0].mxu0 %v4571
    %v4656 = vpop.f32.mrb[0].mxu0
    %v4657 = vadd.f32 0.0, %v4656
    %v4658 = vpop.f32.mrb[0].mxu0
    %4659 = vmatprep.mubr.f32.mxu0 0.0
    %4660 = vmatmul.mubr.f32.gmra.mrb[0].mxu0 %v4572
    %v4661 = vpop.f32.mrb[0].mxu0
    %v4662 = vadd.f32 0.0, %v4661
    %v4663 = vpop.f32.mrb[0].mxu0
    %4664 = vdwg.mxu0
    %s4665 = scalar_lea.vmem [#allocation8], 2048
    %v4666 = vld [vmem:[%s4665] sm:$0xff]
    %v4667 = vld [vmem:[%s4665 + $0x8] sm:$0xff]
    %v4668 = vld [vmem:[%s4665 + $0x10] sm:$0xff]
    %v4669 = vld [vmem:[%s4665 + $0x18] sm:$0xff]
    %v4670 = vld [vmem:[%s4665 + $0x20] sm:$0xff]
    %v4671 = vld [vmem:[%s4665 + $0x28] sm:$0xff]
    %v4672 = vld [vmem:[%s4665 + $0x30] sm:$0xff]
    %v4673 = vld [vmem:[%s4665 + $0x38] sm:$0xff]
    %v4674 = vld [vmem:[%s4665 + $0x40] sm:$0xff]
    %v4675 = vld [vmem:[%s4665 + $0x48] sm:$0xff]
    %v4676 = vld [vmem:[%s4665 + $0x50] sm:$0xff]
    %v4677 = vld [vmem:[%s4665 + $0x58] sm:$0xff]
    %v4678 = vld [vmem:[%s4665 + $0x60] sm:$0xff]
    %v4679 = vld [vmem:[%s4665 + $0x68] sm:$0xff]
    %v4680 = vld [vmem:[%s4665 + $0x70] sm:$0xff]
    %v4681 = vld [vmem:[%s4665 + $0x78] sm:$0xff]
    %4682 = vmatprep.subr.mxu0 0.0
    %4683 = vmatpush1.msra.mxu0 %v4666
    %4684 = vmatprep.subr.mxu0 0.0
    %4685 = vmatpush1.msra.mxu0 %v4667
    %4686 = vmatprep.subr.mxu0 0.0
    %4687 = vmatpush1.msra.mxu0 %v4668
    %4688 = vmatprep.subr.mxu0 0.0
    %4689 = vmatpush1.msra.mxu0 %v4669
    %4690 = vmatprep.subr.mxu0 0.0
    %4691 = vmatpush1.msra.mxu0 %v4670
    %4692 = vmatprep.subr.mxu0 0.0
    %4693 = vmatpush1.msra.mxu0 %v4671
    %4694 = vmatprep.subr.mxu0 0.0
    %4695 = vmatpush1.msra.mxu0 %v4672
    %4696 = vmatprep.subr.mxu0 0.0
    %4697 = vmatpush1.msra.mxu0 %v4673
    %4698 = vmatprep.subr.mxu0 0.0
    %4699 = vmatpush1.msra.mxu0 %v4674
    %4700 = vmatprep.subr.mxu0 0.0
    %4701 = vmatpush1.msra.mxu0 %v4675
    %4702 = vmatprep.subr.mxu0 0.0
    %4703 = vmatpush1.msra.mxu0 %v4676
    %4704 = vmatprep.subr.mxu0 0.0
    %4705 = vmatpush1.msra.mxu0 %v4677
    %4706 = vmatprep.subr.mxu0 0.0
    %4707 = vmatpush1.msra.mxu0 %v4678
    %4708 = vmatprep.subr.mxu0 0.0
    %4709 = vmatpush1.msra.mxu0 %v4679
    %4710 = vmatprep.subr.mxu0 0.0
    %4711 = vmatpush1.msra.mxu0 %v4680
    %4712 = vmatprep.subr.mxu0 0.0
    %4713 = vmatpush1.msra.mxu0 %v4681
    %4714 = vmatprep.subr.mxu0 0.0
    %4715 = vmatpush1.msra.mxu0 0.0
    %4716 = vmatprep.subr.mxu0 0.0
    %4717 = vmatpush1.msra.mxu0 0.0
    %4718 = vmatprep.subr.mxu0 0.0
    %4719 = vmatpush1.msra.mxu0 0.0
    %4720 = vmatprep.subr.mxu0 0.0
    %4721 = vmatpush1.msra.mxu0 0.0
    %4722 = vmatprep.subr.mxu0 0.0
    %4723 = vmatpush1.msra.mxu0 0.0
    %4724 = vmatprep.subr.mxu0 0.0
    %4725 = vmatpush1.msra.mxu0 0.0
    %4726 = vmatprep.subr.mxu0 0.0
    %4727 = vmatpush1.msra.mxu0 0.0
    %4728 = vmatprep.subr.mxu0 0.0
    %4729 = vmatpush1.msra.mxu0 0.0
    %4730 = vmatprep.subr.mxu0 0.0
    %4731 = vmatpush1.msra.mxu0 0.0
    %4732 = vmatprep.subr.mxu0 0.0
    %4733 = vmatpush1.msra.mxu0 0.0
    %4734 = vmatprep.subr.mxu0 0.0
    %4735 = vmatpush1.msra.mxu0 0.0
    %4736 = vmatprep.subr.mxu0 0.0
    %4737 = vmatpush1.msra.mxu0 0.0
    %4738 = vmatprep.subr.mxu0 0.0
    %4739 = vmatpush1.msra.mxu0 0.0
    %4740 = vmatprep.subr.mxu0 0.0
    %4741 = vmatpush1.msra.mxu0 0.0
    %4742 = vmatprep.subr.mxu0 0.0
    %4743 = vmatpush1.msra.mxu0 0.0
    %4744 = vmatprep.subr.mxu0 0.0
    %4745 = vmatpush1.msra.mxu0 0.0
    %4746 = vmatprep.mubr.f32.mxu0 0.0
    %4747 = vmatmul.mubr.f32.gmra.mrb[0].mxu0 %v4429
    %v4748 = vpop.f32.mrb[0].mxu0
    %v4749 = vadd.f32 0.0, %v4748
    %v4750 = vpop.f32.mrb[0].mxu0
    %4751 = vmatprep.mubr.f32.mxu0 0.0
    %4752 = vmatmul.mubr.f32.gmra.mrb[0].mxu0 %v4430
    %v4753 = vpop.f32.mrb[0].mxu0
    %v4754 = vadd.f32 0.0, %v4753
    %v4755 = vpop.f32.mrb[0].mxu0
    %4756 = vdwg.mxu0
    %v4757 = vadd.f32 %v4657, %v4749
    %v4758 = vadd.f32 %v4662, %v4754
    %v4759 = vld [vmem:[#allocation10 + $0x16] sm:$0x1]
    %v4760 = vlaneseq
    %v4761 = vshrl.u32 %v4760, 7
    %v4762 = vsub.s32 0, %v4761
    %v4763 = vrot.slane %v4759, %v4762
    %v4764 = vadd.f32 %v4757, %v4763
    %v4765 = vadd.f32 %v4758, %v4763
    %v4766 = vmax.f32 %v4764, 0.0
    %v4767 = vmax.f32 %v4765, 0.0
    %v4768 = vadd.f32 %v4766, %v4767
    %v4769 = vrot.slane %v4768, 4
    %v4770 = vadd.f32 %v4768, %v4769
    %v4771 = vrot.slane %v4770, 2
    %v4772 = vadd.f32 %v4770, %v4771
    %v4773 = vrot.slane %v4772, 1
    %v4774 = vadd.f32 %v4772, %v4773
    %v4775 = vmul.f32 %v4774, %v4399
    %v4776 = vsub.f32 %v4766, %v4775
    %v4777 = vsub.f32 %v4767, %v4775
    %v4778 = vmul.f32 %v4776, %v4776
    %v4779 = vmul.f32 %v4777, %v4777
    %v4780 = vadd.f32 %v4778, %v4779
    %v4781 = vrot.slane %v4780, 4
    %v4782 = vadd.f32 %v4780, %v4781
    %v4783 = vrot.slane %v4782, 2
    %v4784 = vadd.f32 %v4782, %v4783
    %v4785 = vrot.slane %v4784, 1
    %v4786 = vadd.f32 %v4784, %v4785
    %v4787 = vmul.f32 %v4786, %v4399
    %v4788 = vadd.f32 %v4787, 1e-05
    %v4789 = vrsqrt.pop %v4788
    %v4790 = vmul.f32 %v4776, %v4789
    %v4791 = vmul.f32 %v4777, %v4789
    %v4792 = vld [vmem:[#allocation10 + $0x17] sm:$0x1]
    %v4793 = vlaneseq
    %v4794 = vshrl.u32 %v4793, 7
    %v4795 = vsub.s32 0, %v4794
    %v4796 = vrot.slane %v4792, %v4795
    %v4797 = vmul.f32 %v4790, %v4796
    %v4798 = vmul.f32 %v4791, %v4796
    %v4799 = vld [vmem:[#allocation10 + $0x18] sm:$0x1]
    %v4800 = vlaneseq
    %v4801 = vshrl.u32 %v4800, 7
    %v4802 = vsub.s32 0, %v4801
    %v4803 = vrot.slane %v4799, %v4802
    %v4804 = vadd.f32 %v4797, %v4803
    %v4805 = vadd.f32 %v4798, %v4803
    %4806 = vmatprep.subr.mxu0 0.0
    %4807 = vmatpush1.msra.mxu0 %v4804
    %4808 = vmatprep.subr.mxu0 0.0
    %4809 = vmatpush1.msra.mxu0 0.0
    %4810 = vmatprep.subr.mxu0 0.0
    %4811 = vmatpush1.msra.mxu0 0.0
    %4812 = vmatprep.subr.mxu0 0.0
    %4813 = vmatpush1.msra.mxu0 0.0
    %4814 = vmatprep.subr.mxu0 0.0
    %4815 = vmatpush1.msra.mxu0 0.0
    %4816 = vmatprep.subr.mxu0 0.0
    %4817 = vmatpush1.msra.mxu0 0.0
    %4818 = vmatprep.subr.mxu0 0.0
    %4819 = vmatpush1.msra.mxu0 0.0
    %4820 = vmatprep.subr.mxu0 0.0
    %4821 = vmatpush1.msra.mxu0 0.0
    %4822 = vmatprep.subr.mxu0 0.0
    %4823 = vmatpush1.msra.mxu0 0.0
    %4824 = vmatprep.subr.mxu0 0.0
    %4825 = vmatpush1.msra.mxu0 0.0
    %4826 = vmatprep.subr.mxu0 0.0
    %4827 = vmatpush1.msra.mxu0 0.0
    %4828 = vmatprep.subr.mxu0 0.0
    %4829 = vmatpush1.msra.mxu0 0.0
    %4830 = vmatprep.subr.mxu0 0.0
    %4831 = vmatpush1.msra.mxu0 0.0
    %4832 = vmatprep.subr.mxu0 0.0
    %4833 = vmatpush1.msra.mxu0 0.0
    %4834 = vmatprep.subr.mxu0 0.0
    %4835 = vmatpush1.msra.mxu0 0.0
    %4836 = vmatprep.subr.mxu0 0.0
    %4837 = vmatpush1.msra.mxu0 0.0
    %4838 = vmatprep.subr.mxu0 0.0
    %4839 = vmatpush1.msra.mxu0 0.0
    %4840 = vmatprep.subr.mxu0 0.0
    %4841 = vmatpush1.msra.mxu0 0.0
    %4842 = vmatprep.subr.mxu0 0.0
    %4843 = vmatpush1.msra.mxu0 0.0
    %4844 = vmatprep.subr.mxu0 0.0
    %4845 = vmatpush1.msra.mxu0 0.0
    %4846 = vmatprep.subr.mxu0 0.0
    %4847 = vmatpush1.msra.mxu0 0.0
    %4848 = vmatprep.subr.mxu0 0.0
    %4849 = vmatpush1.msra.mxu0 0.0
    %4850 = vmatprep.subr.mxu0 0.0
    %4851 = vmatpush1.msra.mxu0 0.0
    %4852 = vmatprep.subr.mxu0 0.0
    %4853 = vmatpush1.msra.mxu0 0.0
    %4854 = vmatprep.subr.mxu0 0.0
    %4855 = vmatpush1.msra.mxu0 0.0
    %4856 = vmatprep.subr.mxu0 0.0
    %4857 = vmatpush1.msra.mxu0 0.0
    %4858 = vmatprep.subr.mxu0 0.0
    %4859 = vmatpush1.msra.mxu0 0.0
    %4860 = vmatprep.subr.mxu0 0.0
    %4861 = vmatpush1.msra.mxu0 0.0
    %4862 = vmatprep.subr.mxu0 0.0
    %4863 = vmatpush1.msra.mxu0 0.0
    %4864 = vmatprep.subr.mxu0 0.0
    %4865 = vmatpush1.msra.mxu0 0.0
    %4866 = vmatprep.subr.mxu0 0.0
    %4867 = vmatpush1.msra.mxu0 0.0
    %4868 = vmatprep.subr.mxu0 0.0
    %4869 = vmatpush1.msra.mxu0 0.0
    %4870 = vmatprep.mubr.f32.mxu0 0.0
    %4871 = vmatmul.mubr.f32.gmra.mrb[0].mxu0 %v4040
    %v4872 = vpop.f32.mrb[0].mxu0
    %v4873 = vadd.f32 0.0, %v4872
    %v4874 = vpop.f32.mrb[0].mxu0
    %4875 = vdwg.mxu0
    %4876 = vmatprep.subr.mxu0 0.0
    %4877 = vmatpush1.msra.mxu0 %v4805
    %4878 = vmatprep.subr.mxu0 0.0
    %4879 = vmatpush1.msra.mxu0 0.0
    %4880 = vmatprep.subr.mxu0 0.0
    %4881 = vmatpush1.msra.mxu0 0.0
    %4882 = vmatprep.subr.mxu0 0.0
    %4883 = vmatpush1.msra.mxu0 0.0
    %4884 = vmatprep.subr.mxu0 0.0
    %4885 = vmatpush1.msra.mxu0 0.0
    %4886 = vmatprep.subr.mxu0 0.0
    %4887 = vmatpush1.msra.mxu0 0.0
    %4888 = vmatprep.subr.mxu0 0.0
    %4889 = vmatpush1.msra.mxu0 0.0
    %4890 = vmatprep.subr.mxu0 0.0
    %4891 = vmatpush1.msra.mxu0 0.0
    %4892 = vmatprep.subr.mxu0 0.0
    %4893 = vmatpush1.msra.mxu0 0.0
    %4894 = vmatprep.subr.mxu0 0.0
    %4895 = vmatpush1.msra.mxu0 0.0
    %4896 = vmatprep.subr.mxu0 0.0
    %4897 = vmatpush1.msra.mxu0 0.0
    %4898 = vmatprep.subr.mxu0 0.0
    %4899 = vmatpush1.msra.mxu0 0.0
    %4900 = vmatprep.subr.mxu0 0.0
    %4901 = vmatpush1.msra.mxu0 0.0
    %4902 = vmatprep.subr.mxu0 0.0
    %4903 = vmatpush1.msra.mxu0 0.0
    %4904 = vmatprep.subr.mxu0 0.0
    %4905 = vmatpush1.msra.mxu0 0.0
    %4906 = vmatprep.subr.mxu0 0.0
    %4907 = vmatpush1.msra.mxu0 0.0
    %4908 = vmatprep.subr.mxu0 0.0
    %4909 = vmatpush1.msra.mxu0 0.0
    %4910 = vmatprep.subr.mxu0 0.0
    %4911 = vmatpush1.msra.mxu0 0.0
    %4912 = vmatprep.subr.mxu0 0.0
    %4913 = vmatpush1.msra.mxu0 0.0
    %4914 = vmatprep.subr.mxu0 0.0
    %4915 = vmatpush1.msra.mxu0 0.0
    %4916 = vmatprep.subr.mxu0 0.0
    %4917 = vmatpush1.msra.mxu0 0.0
    %4918 = vmatprep.subr.mxu0 0.0
    %4919 = vmatpush1.msra.mxu0 0.0
    %4920 = vmatprep.subr.mxu0 0.0
    %4921 = vmatpush1.msra.mxu0 0.0
    %4922 = vmatprep.subr.mxu0 0.0
    %4923 = vmatpush1.msra.mxu0 0.0
    %4924 = vmatprep.subr.mxu0 0.0
    %4925 = vmatpush1.msra.mxu0 0.0
    %4926 = vmatprep.subr.mxu0 0.0
    %4927 = vmatpush1.msra.mxu0 0.0
    %4928 = vmatprep.subr.mxu0 0.0
    %4929 = vmatpush1.msra.mxu0 0.0
    %4930 = vmatprep.subr.mxu0 0.0
    %4931 = vmatpush1.msra.mxu0 0.0
    %4932 = vmatprep.subr.mxu0 0.0
    %4933 = vmatpush1.msra.mxu0 0.0
    %4934 = vmatprep.subr.mxu0 0.0
    %4935 = vmatpush1.msra.mxu0 0.0
    %4936 = vmatprep.subr.mxu0 0.0
    %4937 = vmatpush1.msra.mxu0 0.0
    %4938 = vmatprep.subr.mxu0 0.0
    %4939 = vmatpush1.msra.mxu0 0.0
    %4940 = vmatprep.mubr.f32.mxu0 0.0
    %4941 = vmatmul.mubr.f32.gmra.mrb[0].mxu0 %v4113
    %v4942 = vpop.f32.mrb[0].mxu0
    %v4943 = vadd.f32 0.0, %v4942
    %v4944 = vpop.f32.mrb[0].mxu0
    %4945 = vdwg.mxu0
    %v4946 = vmul.f32 %v4873, %v4193
    %v4947 = vmul.f32 %v4943, %v4194
    %s4948 = scalar_lea.vmem [#allocation8], 2176
    %v4949 = vld [vmem:[%s4948] sm:$0xff]
    %v4950 = vld [vmem:[%s4948 + $0x8] sm:$0xff]
    %v4951 = vld [vmem:[%s4948 + $0x10] sm:$0xff]
    %v4952 = vld [vmem:[%s4948 + $0x18] sm:$0xff]
    %v4953 = vld [vmem:[%s4948 + $0x20] sm:$0xff]
    %v4954 = vld [vmem:[%s4948 + $0x28] sm:$0xff]
    %v4955 = vld [vmem:[%s4948 + $0x30] sm:$0xff]
    %v4956 = vld [vmem:[%s4948 + $0x38] sm:$0xff]
    %v4957 = vld [vmem:[%s4948 + $0x40] sm:$0xff]
    %v4958 = vld [vmem:[%s4948 + $0x48] sm:$0xff]
    %v4959 = vld [vmem:[%s4948 + $0x50] sm:$0xff]
    %v4960 = vld [vmem:[%s4948 + $0x58] sm:$0xff]
    %v4961 = vld [vmem:[%s4948 + $0x60] sm:$0xff]
    %v4962 = vld [vmem:[%s4948 + $0x68] sm:$0xff]
    %v4963 = vld [vmem:[%s4948 + $0x70] sm:$0xff]
    %v4964 = vld [vmem:[%s4948 + $0x78] sm:$0xff]
    %4965 = vmatprep.subr.mxu0 0.0
    %4966 = vmatpush1.msra.mxu0 %v4949
    %4967 = vmatprep.subr.mxu0 0.0
    %4968 = vmatpush1.msra.mxu0 %v4950
    %4969 = vmatprep.subr.mxu0 0.0
    %4970 = vmatpush1.msra.mxu0 %v4951
    %4971 = vmatprep.subr.mxu0 0.0
    %4972 = vmatpush1.msra.mxu0 %v4952
    %4973 = vmatprep.subr.mxu0 0.0
    %4974 = vmatpush1.msra.mxu0 %v4953
    %4975 = vmatprep.subr.mxu0 0.0
    %4976 = vmatpush1.msra.mxu0 %v4954
    %4977 = vmatprep.subr.mxu0 0.0
    %4978 = vmatpush1.msra.mxu0 %v4955
    %4979 = vmatprep.subr.mxu0 0.0
    %4980 = vmatpush1.msra.mxu0 %v4956
    %4981 = vmatprep.subr.mxu0 0.0
    %4982 = vmatpush1.msra.mxu0 %v4957
    %4983 = vmatprep.subr.mxu0 0.0
    %4984 = vmatpush1.msra.mxu0 %v4958
    %4985 = vmatprep.subr.mxu0 0.0
    %4986 = vmatpush1.msra.mxu0 %v4959
    %4987 = vmatprep.subr.mxu0 0.0
    %4988 = vmatpush1.msra.mxu0 %v4960
    %4989 = vmatprep.subr.mxu0 0.0
    %4990 = vmatpush1.msra.mxu0 %v4961
    %4991 = vmatprep.subr.mxu0 0.0
    %4992 = vmatpush1.msra.mxu0 %v4962
    %4993 = vmatprep.subr.mxu0 0.0
    %4994 = vmatpush1.msra.mxu0 %v4963
    %4995 = vmatprep.subr.mxu0 0.0
    %4996 = vmatpush1.msra.mxu0 %v4964
    %4997 = vmatprep.subr.mxu0 0.0
    %4998 = vmatpush1.msra.mxu0 0.0
    %4999 = vmatprep.subr.mxu0 0.0
    %5000 = vmatpush1.msra.mxu0 0.0
    %5001 = vmatprep.subr.mxu0 0.0
    %5002 = vmatpush1.msra.mxu0 0.0
    %5003 = vmatprep.subr.mxu0 0.0
    %5004 = vmatpush1.msra.mxu0 0.0
    %5005 = vmatprep.subr.mxu0 0.0
    %5006 = vmatpush1.msra.mxu0 0.0
    %5007 = vmatprep.subr.mxu0 0.0
    %5008 = vmatpush1.msra.mxu0 0.0
    %5009 = vmatprep.subr.mxu0 0.0
    %5010 = vmatpush1.msra.mxu0 0.0
    %5011 = vmatprep.subr.mxu0 0.0
    %5012 = vmatpush1.msra.mxu0 0.0
    %5013 = vmatprep.subr.mxu0 0.0
    %5014 = vmatpush1.msra.mxu0 0.0
    %5015 = vmatprep.subr.mxu0 0.0
    %5016 = vmatpush1.msra.mxu0 0.0
    %5017 = vmatprep.subr.mxu0 0.0
    %5018 = vmatpush1.msra.mxu0 0.0
    %5019 = vmatprep.subr.mxu0 0.0
    %5020 = vmatpush1.msra.mxu0 0.0
    %5021 = vmatprep.subr.mxu0 0.0
    %5022 = vmatpush1.msra.mxu0 0.0
    %5023 = vmatprep.subr.mxu0 0.0
    %5024 = vmatpush1.msra.mxu0 0.0
    %5025 = vmatprep.subr.mxu0 0.0
    %5026 = vmatpush1.msra.mxu0 0.0
    %5027 = vmatprep.subr.mxu0 0.0
    %5028 = vmatpush1.msra.mxu0 0.0
    %5029 = vmatprep.mubr.f32.mxu0 0.0
    %5030 = vmatmul.mubr.f32.gmra.mrb[0].mxu0 %v4946
    %v5031 = vpop.f32.mrb[0].mxu0
    %v5032 = vadd.f32 0.0, %v5031
    %v5033 = vpop.f32.mrb[0].mxu0
    %5034 = vmatprep.mubr.f32.mxu0 0.0
    %5035 = vmatmul.mubr.f32.gmra.mrb[0].mxu0 %v4947
    %v5036 = vpop.f32.mrb[0].mxu0
    %v5037 = vadd.f32 0.0, %v5036
    %v5038 = vpop.f32.mrb[0].mxu0
    %5039 = vdwg.mxu0
    %s5040 = scalar_lea.vmem [#allocation8], 2304
    %v5041 = vld [vmem:[%s5040] sm:$0xff]
    %v5042 = vld [vmem:[%s5040 + $0x8] sm:$0xff]
    %v5043 = vld [vmem:[%s5040 + $0x10] sm:$0xff]
    %v5044 = vld [vmem:[%s5040 + $0x18] sm:$0xff]
    %v5045 = vld [vmem:[%s5040 + $0x20] sm:$0xff]
    %v5046 = vld [vmem:[%s5040 + $0x28] sm:$0xff]
    %v5047 = vld [vmem:[%s5040 + $0x30] sm:$0xff]
    %v5048 = vld [vmem:[%s5040 + $0x38] sm:$0xff]
    %v5049 = vld [vmem:[%s5040 + $0x40] sm:$0xff]
    %v5050 = vld [vmem:[%s5040 + $0x48] sm:$0xff]
    %v5051 = vld [vmem:[%s5040 + $0x50] sm:$0xff]
    %v5052 = vld [vmem:[%s5040 + $0x58] sm:$0xff]
    %v5053 = vld [vmem:[%s5040 + $0x60] sm:$0xff]
    %v5054 = vld [vmem:[%s5040 + $0x68] sm:$0xff]
    %v5055 = vld [vmem:[%s5040 + $0x70] sm:$0xff]
    %v5056 = vld [vmem:[%s5040 + $0x78] sm:$0xff]
    %5057 = vmatprep.subr.mxu0 0.0
    %5058 = vmatpush1.msra.mxu0 %v5041
    %5059 = vmatprep.subr.mxu0 0.0
    %5060 = vmatpush1.msra.mxu0 %v5042
    %5061 = vmatprep.subr.mxu0 0.0
    %5062 = vmatpush1.msra.mxu0 %v5043
    %5063 = vmatprep.subr.mxu0 0.0
    %5064 = vmatpush1.msra.mxu0 %v5044
    %5065 = vmatprep.subr.mxu0 0.0
    %5066 = vmatpush1.msra.mxu0 %v5045
    %5067 = vmatprep.subr.mxu0 0.0
    %5068 = vmatpush1.msra.mxu0 %v5046
    %5069 = vmatprep.subr.mxu0 0.0
    %5070 = vmatpush1.msra.mxu0 %v5047
    %5071 = vmatprep.subr.mxu0 0.0
    %5072 = vmatpush1.msra.mxu0 %v5048
    %5073 = vmatprep.subr.mxu0 0.0
    %5074 = vmatpush1.msra.mxu0 %v5049
    %5075 = vmatprep.subr.mxu0 0.0
    %5076 = vmatpush1.msra.mxu0 %v5050
    %5077 = vmatprep.subr.mxu0 0.0
    %5078 = vmatpush1.msra.mxu0 %v5051
    %5079 = vmatprep.subr.mxu0 0.0
    %5080 = vmatpush1.msra.mxu0 %v5052
    %5081 = vmatprep.subr.mxu0 0.0
    %5082 = vmatpush1.msra.mxu0 %v5053
    %5083 = vmatprep.subr.mxu0 0.0
    %5084 = vmatpush1.msra.mxu0 %v5054
    %5085 = vmatprep.subr.mxu0 0.0
    %5086 = vmatpush1.msra.mxu0 %v5055
    %5087 = vmatprep.subr.mxu0 0.0
    %5088 = vmatpush1.msra.mxu0 %v5056
    %5089 = vmatprep.subr.mxu0 0.0
    %5090 = vmatpush1.msra.mxu0 0.0
    %5091 = vmatprep.subr.mxu0 0.0
    %5092 = vmatpush1.msra.mxu0 0.0
    %5093 = vmatprep.subr.mxu0 0.0
    %5094 = vmatpush1.msra.mxu0 0.0
    %5095 = vmatprep.subr.mxu0 0.0
    %5096 = vmatpush1.msra.mxu0 0.0
    %5097 = vmatprep.subr.mxu0 0.0
    %5098 = vmatpush1.msra.mxu0 0.0
    %5099 = vmatprep.subr.mxu0 0.0
    %5100 = vmatpush1.msra.mxu0 0.0
    %5101 = vmatprep.subr.mxu0 0.0
    %5102 = vmatpush1.msra.mxu0 0.0
    %5103 = vmatprep.subr.mxu0 0.0
    %5104 = vmatpush1.msra.mxu0 0.0
    %5105 = vmatprep.subr.mxu0 0.0
    %5106 = vmatpush1.msra.mxu0 0.0
    %5107 = vmatprep.subr.mxu0 0.0
    %5108 = vmatpush1.msra.mxu0 0.0
    %5109 = vmatprep.subr.mxu0 0.0
    %5110 = vmatpush1.msra.mxu0 0.0
    %5111 = vmatprep.subr.mxu0 0.0
    %5112 = vmatpush1.msra.mxu0 0.0
    %5113 = vmatprep.subr.mxu0 0.0
    %5114 = vmatpush1.msra.mxu0 0.0
    %5115 = vmatprep.subr.mxu0 0.0
    %5116 = vmatpush1.msra.mxu0 0.0
    %5117 = vmatprep.subr.mxu0 0.0
    %5118 = vmatpush1.msra.mxu0 0.0
    %5119 = vmatprep.subr.mxu0 0.0
    %5120 = vmatpush1.msra.mxu0 0.0
    %5121 = vmatprep.mubr.f32.mxu0 0.0
    %5122 = vmatmul.mubr.f32.gmra.mrb[0].mxu0 %v4804
    %v5123 = vpop.f32.mrb[0].mxu0
    %v5124 = vadd.f32 0.0, %v5123
    %v5125 = vpop.f32.mrb[0].mxu0
    %5126 = vmatprep.mubr.f32.mxu0 0.0
    %5127 = vmatmul.mubr.f32.gmra.mrb[0].mxu0 %v4805
    %v5128 = vpop.f32.mrb[0].mxu0
    %v5129 = vadd.f32 0.0, %v5128
    %v5130 = vpop.f32.mrb[0].mxu0
    %5131 = vdwg.mxu0
    %v5132 = vadd.f32 %v5032, %v5124
    %v5133 = vadd.f32 %v5037, %v5129
    %v5134 = vld [vmem:[#allocation10 + $0x19] sm:$0x1]
    %v5135 = vlaneseq
    %v5136 = vshrl.u32 %v5135, 7
    %v5137 = vsub.s32 0, %v5136
    %v5138 = vrot.slane %v5134, %v5137
    %v5139 = vadd.f32 %v5132, %v5138
    %v5140 = vadd.f32 %v5133, %v5138
    %v5141 = vmax.f32 %v5139, 0.0
    %v5142 = vmax.f32 %v5140, 0.0
    %v5143 = vadd.f32 %v5141, %v5142
    %v5144 = vrot.slane %v5143, 4
    %v5145 = vadd.f32 %v5143, %v5144
    %v5146 = vrot.slane %v5145, 2
    %v5147 = vadd.f32 %v5145, %v5146
    %v5148 = vrot.slane %v5147, 1
    %v5149 = vadd.f32 %v5147, %v5148
    %v5150 = vmul.f32 %v5149, %v4399
    %v5151 = vsub.f32 %v5141, %v5150
    %v5152 = vsub.f32 %v5142, %v5150
    %v5153 = vmul.f32 %v5151, %v5151
    %v5154 = vmul.f32 %v5152, %v5152
    %v5155 = vadd.f32 %v5153, %v5154
    %v5156 = vrot.slane %v5155, 4
    %v5157 = vadd.f32 %v5155, %v5156
    %v5158 = vrot.slane %v5157, 2
    %v5159 = vadd.f32 %v5157, %v5158
    %v5160 = vrot.slane %v5159, 1
    %v5161 = vadd.f32 %v5159, %v5160
    %v5162 = vmul.f32 %v5161, %v4399
    %v5163 = vadd.f32 %v5162, 1e-05
    %v5164 = vrsqrt.pop %v5163
    %v5165 = vmul.f32 %v5151, %v5164
    %v5166 = vmul.f32 %v5152, %v5164
    %v5167 = vld [vmem:[#allocation10 + $0x1a] sm:$0x1]
    %v5168 = vlaneseq
    %v5169 = vshrl.u32 %v5168, 7
    %v5170 = vsub.s32 0, %v5169
    %v5171 = vrot.slane %v5167, %v5170
    %v5172 = vmul.f32 %v5165, %v5171
    %v5173 = vmul.f32 %v5166, %v5171
    %v5174 = vld [vmem:[#allocation10 + $0x1b] sm:$0x1]
    %v5175 = vlaneseq
    %v5176 = vshrl.u32 %v5175, 7
    %v5177 = vsub.s32 0, %v5176
    %v5178 = vrot.slane %v5174, %v5177
    %v5179 = vadd.f32 %v5172, %v5178
    %v5180 = vadd.f32 %v5173, %v5178
    %v5181 = vadd.f32 %v4429, %v4804
    %v5182 = vadd.f32 %v4430, %v4805
    %v5183 = vadd.f32 %v5181, %v5179
    %v5184 = vadd.f32 %v5182, %v5180
    %s5185 = scalar_lea.vmem [#allocation8], 2432
    %v5186 = vld [vmem:[%s5185] sm:$0xff]
    %v5187 = vld [vmem:[%s5185 + $0x8] sm:$0xff]
    %v5188 = vld [vmem:[%s5185 + $0x10] sm:$0xff]
    %v5189 = vld [vmem:[%s5185 + $0x18] sm:$0xff]
    %v5190 = vld [vmem:[%s5185 + $0x20] sm:$0xff]
    %v5191 = vld [vmem:[%s5185 + $0x28] sm:$0xff]
    %v5192 = vld [vmem:[%s5185 + $0x30] sm:$0xff]
    %v5193 = vld [vmem:[%s5185 + $0x38] sm:$0xff]
    %v5194 = vld [vmem:[%s5185 + $0x40] sm:$0xff]
    %v5195 = vld [vmem:[%s5185 + $0x48] sm:$0xff]
    %v5196 = vld [vmem:[%s5185 + $0x50] sm:$0xff]
    %v5197 = vld [vmem:[%s5185 + $0x58] sm:$0xff]
    %v5198 = vld [vmem:[%s5185 + $0x60] sm:$0xff]
    %v5199 = vld [vmem:[%s5185 + $0x68] sm:$0xff]
    %v5200 = vld [vmem:[%s5185 + $0x70] sm:$0xff]
    %v5201 = vld [vmem:[%s5185 + $0x78] sm:$0xff]
    %5202 = vmatprep.subr.mxu0 0.0
    %5203 = vmatpush1.msra.mxu0 %v5186
    %5204 = vmatprep.subr.mxu0 0.0
    %5205 = vmatpush1.msra.mxu0 %v5187
    %5206 = vmatprep.subr.mxu0 0.0
    %5207 = vmatpush1.msra.mxu0 %v5188
    %5208 = vmatprep.subr.mxu0 0.0
    %5209 = vmatpush1.msra.mxu0 %v5189
    %5210 = vmatprep.subr.mxu0 0.0
    %5211 = vmatpush1.msra.mxu0 %v5190
    %5212 = vmatprep.subr.mxu0 0.0
    %5213 = vmatpush1.msra.mxu0 %v5191
    %5214 = vmatprep.subr.mxu0 0.0
    %5215 = vmatpush1.msra.mxu0 %v5192
    %5216 = vmatprep.subr.mxu0 0.0
    %5217 = vmatpush1.msra.mxu0 %v5193
    %5218 = vmatprep.subr.mxu0 0.0
    %5219 = vmatpush1.msra.mxu0 %v5194
    %5220 = vmatprep.subr.mxu0 0.0
    %5221 = vmatpush1.msra.mxu0 %v5195
    %5222 = vmatprep.subr.mxu0 0.0
    %5223 = vmatpush1.msra.mxu0 %v5196
    %5224 = vmatprep.subr.mxu0 0.0
    %5225 = vmatpush1.msra.mxu0 %v5197
    %5226 = vmatprep.subr.mxu0 0.0
    %5227 = vmatpush1.msra.mxu0 %v5198
    %5228 = vmatprep.subr.mxu0 0.0
    %5229 = vmatpush1.msra.mxu0 %v5199
    %5230 = vmatprep.subr.mxu0 0.0
    %5231 = vmatpush1.msra.mxu0 %v5200
    %5232 = vmatprep.subr.mxu0 0.0
    %5233 = vmatpush1.msra.mxu0 %v5201
    %5234 = vmatprep.subr.mxu0 0.0
    %5235 = vmatpush1.msra.mxu0 0.0
    %5236 = vmatprep.subr.mxu0 0.0
    %5237 = vmatpush1.msra.mxu0 0.0
    %5238 = vmatprep.subr.mxu0 0.0
    %5239 = vmatpush1.msra.mxu0 0.0
    %5240 = vmatprep.subr.mxu0 0.0
    %5241 = vmatpush1.msra.mxu0 0.0
    %5242 = vmatprep.subr.mxu0 0.0
    %5243 = vmatpush1.msra.mxu0 0.0
    %5244 = vmatprep.subr.mxu0 0.0
    %5245 = vmatpush1.msra.mxu0 0.0
    %5246 = vmatprep.subr.mxu0 0.0
    %5247 = vmatpush1.msra.mxu0 0.0
    %5248 = vmatprep.subr.mxu0 0.0
    %5249 = vmatpush1.msra.mxu0 0.0
    %5250 = vmatprep.subr.mxu0 0.0
    %5251 = vmatpush1.msra.mxu0 0.0
    %5252 = vmatprep.subr.mxu0 0.0
    %5253 = vmatpush1.msra.mxu0 0.0
    %5254 = vmatprep.subr.mxu0 0.0
    %5255 = vmatpush1.msra.mxu0 0.0
    %5256 = vmatprep.subr.mxu0 0.0
    %5257 = vmatpush1.msra.mxu0 0.0
    %5258 = vmatprep.subr.mxu0 0.0
    %5259 = vmatpush1.msra.mxu0 0.0
    %5260 = vmatprep.subr.mxu0 0.0
    %5261 = vmatpush1.msra.mxu0 0.0
    %5262 = vmatprep.subr.mxu0 0.0
    %5263 = vmatpush1.msra.mxu0 0.0
    %5264 = vmatprep.subr.mxu0 0.0
    %5265 = vmatpush1.msra.mxu0 0.0
    %5266 = vmatprep.mubr.f32.mxu0 0.0
    %5267 = vmatmul.mubr.f32.gmra.mrb[0].mxu0 %v5183
    %v5268 = vpop.f32.mrb[0].mxu0
    %v5269 = vadd.f32 0.0, %v5268
    %v5270 = vpop.f32.mrb[0].mxu0
    %5271 = vmatprep.mubr.f32.mxu0 0.0
    %5272 = vmatmul.mubr.f32.gmra.mrb[0].mxu0 %v5184
    %v5273 = vpop.f32.mrb[0].mxu0
    %v5274 = vadd.f32 0.0, %v5273
    %v5275 = vpop.f32.mrb[0].mxu0
    %5276 = vdwg.mxu0
    %v5277 = vld [vmem:[#allocation10 + $0x1c] sm:$0x1]
    %v5278 = vlaneseq
    %v5279 = vshrl.u32 %v5278, 7
    %v5280 = vsub.s32 0, %v5279
    %v5281 = vrot.slane %v5277, %v5280
    %v5282 = vadd.f32 %v5269, %v5281
    %v5283 = vadd.f32 %v5274, %v5281
    %v5284 = vmax.f32 %v5282, 0.0
    %v5285 = vmax.f32 %v5283, 0.0
    %s5286 = scalar_lea.vmem [#allocation8], 2560
    %v5287 = vld [vmem:[%s5286] sm:$0xff]
    %v5288 = vld [vmem:[%s5286 + $0x8] sm:$0xff]
    %v5289 = vld [vmem:[%s5286 + $0x10] sm:$0xff]
    %v5290 = vld [vmem:[%s5286 + $0x18] sm:$0xff]
    %v5291 = vld [vmem:[%s5286 + $0x20] sm:$0xff]
    %v5292 = vld [vmem:[%s5286 + $0x28] sm:$0xff]
    %v5293 = vld [vmem:[%s5286 + $0x30] sm:$0xff]
    %v5294 = vld [vmem:[%s5286 + $0x38] sm:$0xff]
    %v5295 = vld [vmem:[%s5286 + $0x40] sm:$0xff]
    %v5296 = vld [vmem:[%s5286 + $0x48] sm:$0xff]
    %v5297 = vld [vmem:[%s5286 + $0x50] sm:$0xff]
    %v5298 = vld [vmem:[%s5286 + $0x58] sm:$0xff]
    %v5299 = vld [vmem:[%s5286 + $0x60] sm:$0xff]
    %v5300 = vld [vmem:[%s5286 + $0x68] sm:$0xff]
    %v5301 = vld [vmem:[%s5286 + $0x70] sm:$0xff]
    %v5302 = vld [vmem:[%s5286 + $0x78] sm:$0xff]
    %5303 = vmatprep.subr.mxu0 0.0
    %5304 = vmatpush1.msra.mxu0 %v5287
    %5305 = vmatprep.subr.mxu0 0.0
    %5306 = vmatpush1.msra.mxu0 %v5288
    %5307 = vmatprep.subr.mxu0 0.0
    %5308 = vmatpush1.msra.mxu0 %v5289
    %5309 = vmatprep.subr.mxu0 0.0
    %5310 = vmatpush1.msra.mxu0 %v5290
    %5311 = vmatprep.subr.mxu0 0.0
    %5312 = vmatpush1.msra.mxu0 %v5291
    %5313 = vmatprep.subr.mxu0 0.0
    %5314 = vmatpush1.msra.mxu0 %v5292
    %5315 = vmatprep.subr.mxu0 0.0
    %5316 = vmatpush1.msra.mxu0 %v5293
    %5317 = vmatprep.subr.mxu0 0.0
    %5318 = vmatpush1.msra.mxu0 %v5294
    %5319 = vmatprep.subr.mxu0 0.0
    %5320 = vmatpush1.msra.mxu0 %v5295
    %5321 = vmatprep.subr.mxu0 0.0
    %5322 = vmatpush1.msra.mxu0 %v5296
    %5323 = vmatprep.subr.mxu0 0.0
    %5324 = vmatpush1.msra.mxu0 %v5297
    %5325 = vmatprep.subr.mxu0 0.0
    %5326 = vmatpush1.msra.mxu0 %v5298
    %5327 = vmatprep.subr.mxu0 0.0
    %5328 = vmatpush1.msra.mxu0 %v5299
    %5329 = vmatprep.subr.mxu0 0.0
    %5330 = vmatpush1.msra.mxu0 %v5300
    %5331 = vmatprep.subr.mxu0 0.0
    %5332 = vmatpush1.msra.mxu0 %v5301
    %5333 = vmatprep.subr.mxu0 0.0
    %5334 = vmatpush1.msra.mxu0 %v5302
    %5335 = vmatprep.subr.mxu0 0.0
    %5336 = vmatpush1.msra.mxu0 0.0
    %5337 = vmatprep.subr.mxu0 0.0
    %5338 = vmatpush1.msra.mxu0 0.0
    %5339 = vmatprep.subr.mxu0 0.0
    %5340 = vmatpush1.msra.mxu0 0.0
    %5341 = vmatprep.subr.mxu0 0.0
    %5342 = vmatpush1.msra.mxu0 0.0
    %5343 = vmatprep.subr.mxu0 0.0
    %5344 = vmatpush1.msra.mxu0 0.0
    %5345 = vmatprep.subr.mxu0 0.0
    %5346 = vmatpush1.msra.mxu0 0.0
    %5347 = vmatprep.subr.mxu0 0.0
    %5348 = vmatpush1.msra.mxu0 0.0
    %5349 = vmatprep.subr.mxu0 0.0
    %5350 = vmatpush1.msra.mxu0 0.0
    %5351 = vmatprep.subr.mxu0 0.0
    %5352 = vmatpush1.msra.mxu0 0.0
    %5353 = vmatprep.subr.mxu0 0.0
    %5354 = vmatpush1.msra.mxu0 0.0
    %5355 = vmatprep.subr.mxu0 0.0
    %5356 = vmatpush1.msra.mxu0 0.0
    %5357 = vmatprep.subr.mxu0 0.0
    %5358 = vmatpush1.msra.mxu0 0.0
    %5359 = vmatprep.subr.mxu0 0.0
    %5360 = vmatpush1.msra.mxu0 0.0
    %5361 = vmatprep.subr.mxu0 0.0
    %5362 = vmatpush1.msra.mxu0 0.0
    %5363 = vmatprep.subr.mxu0 0.0
    %5364 = vmatpush1.msra.mxu0 0.0
    %5365 = vmatprep.subr.mxu0 0.0
    %5366 = vmatpush1.msra.mxu0 0.0
    %5367 = vmatprep.mubr.f32.mxu0 0.0
    %5368 = vmatmul.mubr.f32.gmra.mrb[0].mxu0 %v4195
    %v5369 = vpop.f32.mrb[0].mxu0
    %v5370 = vadd.f32 0.0, %v5369
    %v5371 = vpop.f32.mrb[0].mxu0
    %5372 = vmatprep.mubr.f32.mxu0 0.0
    %5373 = vmatmul.mubr.f32.gmra.mrb[0].mxu0 %v4196
    %v5374 = vpop.f32.mrb[0].mxu0
    %v5375 = vadd.f32 0.0, %v5374
    %v5376 = vpop.f32.mrb[0].mxu0
    %5377 = vdwg.mxu0
    %s5378 = scalar_lea.vmem [#allocation8], 2688
    %v5379 = vld [vmem:[%s5378] sm:$0xff]
    %v5380 = vld [vmem:[%s5378 + $0x8] sm:$0xff]
    %v5381 = vld [vmem:[%s5378 + $0x10] sm:$0xff]
    %v5382 = vld [vmem:[%s5378 + $0x18] sm:$0xff]
    %v5383 = vld [vmem:[%s5378 + $0x20] sm:$0xff]
    %v5384 = vld [vmem:[%s5378 + $0x28] sm:$0xff]
    %v5385 = vld [vmem:[%s5378 + $0x30] sm:$0xff]
    %v5386 = vld [vmem:[%s5378 + $0x38] sm:$0xff]
    %v5387 = vld [vmem:[%s5378 + $0x40] sm:$0xff]
    %v5388 = vld [vmem:[%s5378 + $0x48] sm:$0xff]
    %v5389 = vld [vmem:[%s5378 + $0x50] sm:$0xff]
    %v5390 = vld [vmem:[%s5378 + $0x58] sm:$0xff]
    %v5391 = vld [vmem:[%s5378 + $0x60] sm:$0xff]
    %v5392 = vld [vmem:[%s5378 + $0x68] sm:$0xff]
    %v5393 = vld [vmem:[%s5378 + $0x70] sm:$0xff]
    %v5394 = vld [vmem:[%s5378 + $0x78] sm:$0xff]
    %5395 = vmatprep.subr.mxu0 0.0
    %5396 = vmatpush1.msra.mxu0 %v5379
    %5397 = vmatprep.subr.mxu0 0.0
    %5398 = vmatpush1.msra.mxu0 %v5380
    %5399 = vmatprep.subr.mxu0 0.0
    %5400 = vmatpush1.msra.mxu0 %v5381
    %5401 = vmatprep.subr.mxu0 0.0
    %5402 = vmatpush1.msra.mxu0 %v5382
    %5403 = vmatprep.subr.mxu0 0.0
    %5404 = vmatpush1.msra.mxu0 %v5383
    %5405 = vmatprep.subr.mxu0 0.0
    %5406 = vmatpush1.msra.mxu0 %v5384
    %5407 = vmatprep.subr.mxu0 0.0
    %5408 = vmatpush1.msra.mxu0 %v5385
    %5409 = vmatprep.subr.mxu0 0.0
    %5410 = vmatpush1.msra.mxu0 %v5386
    %5411 = vmatprep.subr.mxu0 0.0
    %5412 = vmatpush1.msra.mxu0 %v5387
    %5413 = vmatprep.subr.mxu0 0.0
    %5414 = vmatpush1.msra.mxu0 %v5388
    %5415 = vmatprep.subr.mxu0 0.0
    %5416 = vmatpush1.msra.mxu0 %v5389
    %5417 = vmatprep.subr.mxu0 0.0
    %5418 = vmatpush1.msra.mxu0 %v5390
    %5419 = vmatprep.subr.mxu0 0.0
    %5420 = vmatpush1.msra.mxu0 %v5391
    %5421 = vmatprep.subr.mxu0 0.0
    %5422 = vmatpush1.msra.mxu0 %v5392
    %5423 = vmatprep.subr.mxu0 0.0
    %5424 = vmatpush1.msra.mxu0 %v5393
    %5425 = vmatprep.subr.mxu0 0.0
    %5426 = vmatpush1.msra.mxu0 %v5394
    %5427 = vmatprep.subr.mxu0 0.0
    %5428 = vmatpush1.msra.mxu0 0.0
    %5429 = vmatprep.subr.mxu0 0.0
    %5430 = vmatpush1.msra.mxu0 0.0
    %5431 = vmatprep.subr.mxu0 0.0
    %5432 = vmatpush1.msra.mxu0 0.0
    %5433 = vmatprep.subr.mxu0 0.0
    %5434 = vmatpush1.msra.mxu0 0.0
    %5435 = vmatprep.subr.mxu0 0.0
    %5436 = vmatpush1.msra.mxu0 0.0
    %5437 = vmatprep.subr.mxu0 0.0
    %5438 = vmatpush1.msra.mxu0 0.0
    %5439 = vmatprep.subr.mxu0 0.0
    %5440 = vmatpush1.msra.mxu0 0.0
    %5441 = vmatprep.subr.mxu0 0.0
    %5442 = vmatpush1.msra.mxu0 0.0
    %5443 = vmatprep.subr.mxu0 0.0
    %5444 = vmatpush1.msra.mxu0 0.0
    %5445 = vmatprep.subr.mxu0 0.0
    %5446 = vmatpush1.msra.mxu0 0.0
    %5447 = vmatprep.subr.mxu0 0.0
    %5448 = vmatpush1.msra.mxu0 0.0
    %5449 = vmatprep.subr.mxu0 0.0
    %5450 = vmatpush1.msra.mxu0 0.0
    %5451 = vmatprep.subr.mxu0 0.0
    %5452 = vmatpush1.msra.mxu0 0.0
    %5453 = vmatprep.subr.mxu0 0.0
    %5454 = vmatpush1.msra.mxu0 0.0
    %5455 = vmatprep.subr.mxu0 0.0
    %5456 = vmatpush1.msra.mxu0 0.0
    %5457 = vmatprep.subr.mxu0 0.0
    %5458 = vmatpush1.msra.mxu0 0.0
    %5459 = vmatprep.mubr.f32.mxu0 0.0
    %5460 = vmatmul.mubr.f32.gmra.mrb[0].mxu0 %v3645
    %v5461 = vpop.f32.mrb[0].mxu0
    %v5462 = vadd.f32 0.0, %v5461
    %v5463 = vpop.f32.mrb[0].mxu0
    %5464 = vmatprep.mubr.f32.mxu0 0.0
    %5465 = vmatmul.mubr.f32.gmra.mrb[0].mxu0 %v3750
    %v5466 = vpop.f32.mrb[0].mxu0
    %v5467 = vadd.f32 0.0, %v5466
    %v5468 = vpop.f32.mrb[0].mxu0
    %5469 = vdwg.mxu0
    %v5470 = vadd.f32 %v5370, %v5462
    %v5471 = vadd.f32 %v5375, %v5467
    %v5472 = vld [vmem:[#allocation10 + $0x1d] sm:$0x1]
    %v5473 = vlaneseq
    %v5474 = vshrl.u32 %v5473, 7
    %v5475 = vsub.s32 0, %v5474
    %v5476 = vrot.slane %v5472, %v5475
    %v5477 = vadd.f32 %v5470, %v5476
    %v5478 = vadd.f32 %v5471, %v5476
    %v5479 = vmax.f32 %v5477, 0.0
    %v5480 = vmax.f32 %v5478, 0.0
    %v5481 = vadd.f32 %v5479, %v5480
    %v5482 = vrot.slane %v5481, 4
    %v5483 = vadd.f32 %v5481, %v5482
    %v5484 = vrot.slane %v5483, 2
    %v5485 = vadd.f32 %v5483, %v5484
    %v5486 = vrot.slane %v5485, 1
    %v5487 = vadd.f32 %v5485, %v5486
    %v5488 = vmul.f32 %v5487, %v4399
    %v5489 = vsub.f32 %v5479, %v5488
    %v5490 = vsub.f32 %v5480, %v5488
    %v5491 = vmul.f32 %v5489, %v5489
    %v5492 = vmul.f32 %v5490, %v5490
    %v5493 = vadd.f32 %v5491, %v5492
    %v5494 = vrot.slane %v5493, 4
    %v5495 = vadd.f32 %v5493, %v5494
    %v5496 = vrot.slane %v5495, 2
    %v5497 = vadd.f32 %v5495, %v5496
    %v5498 = vrot.slane %v5497, 1
    %v5499 = vadd.f32 %v5497, %v5498
    %v5500 = vmul.f32 %v5499, %v4399
    %v5501 = vadd.f32 %v5500, 1e-05
    %v5502 = vrsqrt.pop %v5501
    %v5503 = vmul.f32 %v5489, %v5502
    %v5504 = vmul.f32 %v5490, %v5502
    %v5505 = vld [vmem:[#allocation10 + $0x1e] sm:$0x1]
    %v5506 = vlaneseq
    %v5507 = vshrl.u32 %v5506, 7
    %v5508 = vsub.s32 0, %v5507
    %v5509 = vrot.slane %v5505, %v5508
    %v5510 = vmul.f32 %v5503, %v5509
    %v5511 = vmul.f32 %v5504, %v5509
    %v5512 = vld [vmem:[#allocation10 + $0x1f] sm:$0x1]
    %v5513 = vlaneseq
    %v5514 = vshrl.u32 %v5513, 7
    %v5515 = vsub.s32 0, %v5514
    %v5516 = vrot.slane %v5512, %v5515
    %v5517 = vadd.f32 %v5510, %v5516
    %v5518 = vadd.f32 %v5511, %v5516
    %5519 = vmatprep.subr.mxu0 0.0
    %5520 = vmatpush1.msra.mxu0 %v5517
    %5521 = vmatprep.subr.mxu0 0.0
    %5522 = vmatpush1.msra.mxu0 0.0
    %5523 = vmatprep.subr.mxu0 0.0
    %5524 = vmatpush1.msra.mxu0 0.0
    %5525 = vmatprep.subr.mxu0 0.0
    %5526 = vmatpush1.msra.mxu0 0.0
    %5527 = vmatprep.subr.mxu0 0.0
    %5528 = vmatpush1.msra.mxu0 0.0
    %5529 = vmatprep.subr.mxu0 0.0
    %5530 = vmatpush1.msra.mxu0 0.0
    %5531 = vmatprep.subr.mxu0 0.0
    %5532 = vmatpush1.msra.mxu0 0.0
    %5533 = vmatprep.subr.mxu0 0.0
    %5534 = vmatpush1.msra.mxu0 0.0
    %5535 = vmatprep.subr.mxu0 0.0
    %5536 = vmatpush1.msra.mxu0 0.0
    %5537 = vmatprep.subr.mxu0 0.0
    %5538 = vmatpush1.msra.mxu0 0.0
    %5539 = vmatprep.subr.mxu0 0.0
    %5540 = vmatpush1.msra.mxu0 0.0
    %5541 = vmatprep.subr.mxu0 0.0
    %5542 = vmatpush1.msra.mxu0 0.0
    %5543 = vmatprep.subr.mxu0 0.0
    %5544 = vmatpush1.msra.mxu0 0.0
    %5545 = vmatprep.subr.mxu0 0.0
    %5546 = vmatpush1.msra.mxu0 0.0
    %5547 = vmatprep.subr.mxu0 0.0
    %5548 = vmatpush1.msra.mxu0 0.0
    %5549 = vmatprep.subr.mxu0 0.0
    %5550 = vmatpush1.msra.mxu0 0.0
    %5551 = vmatprep.subr.mxu0 0.0
    %5552 = vmatpush1.msra.mxu0 0.0
    %5553 = vmatprep.subr.mxu0 0.0
    %5554 = vmatpush1.msra.mxu0 0.0
    %5555 = vmatprep.subr.mxu0 0.0
    %5556 = vmatpush1.msra.mxu0 0.0
    %5557 = vmatprep.subr.mxu0 0.0
    %5558 = vmatpush1.msra.mxu0 0.0
    %5559 = vmatprep.subr.mxu0 0.0
    %5560 = vmatpush1.msra.mxu0 0.0
    %5561 = vmatprep.subr.mxu0 0.0
    %5562 = vmatpush1.msra.mxu0 0.0
    %5563 = vmatprep.subr.mxu0 0.0
    %5564 = vmatpush1.msra.mxu0 0.0
    %5565 = vmatprep.subr.mxu0 0.0
    %5566 = vmatpush1.msra.mxu0 0.0
    %5567 = vmatprep.subr.mxu0 0.0
    %5568 = vmatpush1.msra.mxu0 0.0
    %5569 = vmatprep.subr.mxu0 0.0
    %5570 = vmatpush1.msra.mxu0 0.0
    %5571 = vmatprep.subr.mxu0 0.0
    %5572 = vmatpush1.msra.mxu0 0.0
    %5573 = vmatprep.subr.mxu0 0.0
    %5574 = vmatpush1.msra.mxu0 0.0
    %5575 = vmatprep.subr.mxu0 0.0
    %5576 = vmatpush1.msra.mxu0 0.0
    %5577 = vmatprep.subr.mxu0 0.0
    %5578 = vmatpush1.msra.mxu0 0.0
    %5579 = vmatprep.subr.mxu0 0.0
    %5580 = vmatpush1.msra.mxu0 0.0
    %5581 = vmatprep.subr.mxu0 0.0
    %5582 = vmatpush1.msra.mxu0 0.0
    %5583 = vmatprep.mubr.f32.mxu0 0.0
    %5584 = vmatmul.mubr.f32.gmra.mrb[0].mxu0 %v4040
    %v5585 = vpop.f32.mrb[0].mxu0
    %v5586 = vadd.f32 0.0, %v5585
    %v5587 = vpop.f32.mrb[0].mxu0
    %5588 = vdwg.mxu0
    %5589 = vmatprep.subr.mxu0 0.0
    %5590 = vmatpush1.msra.mxu0 %v5518
    %5591 = vmatprep.subr.mxu0 0.0
    %5592 = vmatpush1.msra.mxu0 0.0
    %5593 = vmatprep.subr.mxu0 0.0
    %5594 = vmatpush1.msra.mxu0 0.0
    %5595 = vmatprep.subr.mxu0 0.0
    %5596 = vmatpush1.msra.mxu0 0.0
    %5597 = vmatprep.subr.mxu0 0.0
    %5598 = vmatpush1.msra.mxu0 0.0
    %5599 = vmatprep.subr.mxu0 0.0
    %5600 = vmatpush1.msra.mxu0 0.0
    %5601 = vmatprep.subr.mxu0 0.0
    %5602 = vmatpush1.msra.mxu0 0.0
    %5603 = vmatprep.subr.mxu0 0.0
    %5604 = vmatpush1.msra.mxu0 0.0
    %5605 = vmatprep.subr.mxu0 0.0
    %5606 = vmatpush1.msra.mxu0 0.0
    %5607 = vmatprep.subr.mxu0 0.0
    %5608 = vmatpush1.msra.mxu0 0.0
    %5609 = vmatprep.subr.mxu0 0.0
    %5610 = vmatpush1.msra.mxu0 0.0
    %5611 = vmatprep.subr.mxu0 0.0
    %5612 = vmatpush1.msra.mxu0 0.0
    %5613 = vmatprep.subr.mxu0 0.0
    %5614 = vmatpush1.msra.mxu0 0.0
    %5615 = vmatprep.subr.mxu0 0.0
    %5616 = vmatpush1.msra.mxu0 0.0
    %5617 = vmatprep.subr.mxu0 0.0
    %5618 = vmatpush1.msra.mxu0 0.0
    %5619 = vmatprep.subr.mxu0 0.0
    %5620 = vmatpush1.msra.mxu0 0.0
    %5621 = vmatprep.subr.mxu0 0.0
    %5622 = vmatpush1.msra.mxu0 0.0
    %5623 = vmatprep.subr.mxu0 0.0
    %5624 = vmatpush1.msra.mxu0 0.0
    %5625 = vmatprep.subr.mxu0 0.0
    %5626 = vmatpush1.msra.mxu0 0.0
    %5627 = vmatprep.subr.mxu0 0.0
    %5628 = vmatpush1.msra.mxu0 0.0
    %5629 = vmatprep.subr.mxu0 0.0
    %5630 = vmatpush1.msra.mxu0 0.0
    %5631 = vmatprep.subr.mxu0 0.0
    %5632 = vmatpush1.msra.mxu0 0.0
    %5633 = vmatprep.subr.mxu0 0.0
    %5634 = vmatpush1.msra.mxu0 0.0
    %5635 = vmatprep.subr.mxu0 0.0
    %5636 = vmatpush1.msra.mxu0 0.0
    %5637 = vmatprep.subr.mxu0 0.0
    %5638 = vmatpush1.msra.mxu0 0.0
    %5639 = vmatprep.subr.mxu0 0.0
    %5640 = vmatpush1.msra.mxu0 0.0
    %5641 = vmatprep.subr.mxu0 0.0
    %5642 = vmatpush1.msra.mxu0 0.0
    %5643 = vmatprep.subr.mxu0 0.0
    %5644 = vmatpush1.msra.mxu0 0.0
    %5645 = vmatprep.subr.mxu0 0.0
    %5646 = vmatpush1.msra.mxu0 0.0
    %5647 = vmatprep.subr.mxu0 0.0
    %5648 = vmatpush1.msra.mxu0 0.0
    %5649 = vmatprep.subr.mxu0 0.0
    %5650 = vmatpush1.msra.mxu0 0.0
    %5651 = vmatprep.subr.mxu0 0.0
    %5652 = vmatpush1.msra.mxu0 0.0
    %5653 = vmatprep.mubr.f32.mxu0 0.0
    %5654 = vmatmul.mubr.f32.gmra.mrb[0].mxu0 %v4113
    %v5655 = vpop.f32.mrb[0].mxu0
    %v5656 = vadd.f32 0.0, %v5655
    %v5657 = vpop.f32.mrb[0].mxu0
    %5658 = vdwg.mxu0
    %v5659 = vmul.f32 %v5586, %v4193
    %v5660 = vmul.f32 %v5656, %v4194
    %s5661 = scalar_lea.vmem [#allocation8], 2816
    %v5662 = vld [vmem:[%s5661] sm:$0xff]
    %v5663 = vld [vmem:[%s5661 + $0x8] sm:$0xff]
    %v5664 = vld [vmem:[%s5661 + $0x10] sm:$0xff]
    %v5665 = vld [vmem:[%s5661 + $0x18] sm:$0xff]
    %v5666 = vld [vmem:[%s5661 + $0x20] sm:$0xff]
    %v5667 = vld [vmem:[%s5661 + $0x28] sm:$0xff]
    %v5668 = vld [vmem:[%s5661 + $0x30] sm:$0xff]
    %v5669 = vld [vmem:[%s5661 + $0x38] sm:$0xff]
    %v5670 = vld [vmem:[%s5661 + $0x40] sm:$0xff]
    %v5671 = vld [vmem:[%s5661 + $0x48] sm:$0xff]
    %v5672 = vld [vmem:[%s5661 + $0x50] sm:$0xff]
    %v5673 = vld [vmem:[%s5661 + $0x58] sm:$0xff]
    %v5674 = vld [vmem:[%s5661 + $0x60] sm:$0xff]
    %v5675 = vld [vmem:[%s5661 + $0x68] sm:$0xff]
    %v5676 = vld [vmem:[%s5661 + $0x70] sm:$0xff]
    %v5677 = vld [vmem:[%s5661 + $0x78] sm:$0xff]
    %5678 = vmatprep.subr.mxu0 0.0
    %5679 = vmatpush1.msra.mxu0 %v5662
    %5680 = vmatprep.subr.mxu0 0.0
    %5681 = vmatpush1.msra.mxu0 %v5663
    %5682 = vmatprep.subr.mxu0 0.0
    %5683 = vmatpush1.msra.mxu0 %v5664
    %5684 = vmatprep.subr.mxu0 0.0
    %5685 = vmatpush1.msra.mxu0 %v5665
    %5686 = vmatprep.subr.mxu0 0.0
    %5687 = vmatpush1.msra.mxu0 %v5666
    %5688 = vmatprep.subr.mxu0 0.0
    %5689 = vmatpush1.msra.mxu0 %v5667
    %5690 = vmatprep.subr.mxu0 0.0
    %5691 = vmatpush1.msra.mxu0 %v5668
    %5692 = vmatprep.subr.mxu0 0.0
    %5693 = vmatpush1.msra.mxu0 %v5669
    %5694 = vmatprep.subr.mxu0 0.0
    %5695 = vmatpush1.msra.mxu0 %v5670
    %5696 = vmatprep.subr.mxu0 0.0
    %5697 = vmatpush1.msra.mxu0 %v5671
    %5698 = vmatprep.subr.mxu0 0.0
    %5699 = vmatpush1.msra.mxu0 %v5672
    %5700 = vmatprep.subr.mxu0 0.0
    %5701 = vmatpush1.msra.mxu0 %v5673
    %5702 = vmatprep.subr.mxu0 0.0
    %5703 = vmatpush1.msra.mxu0 %v5674
    %5704 = vmatprep.subr.mxu0 0.0
    %5705 = vmatpush1.msra.mxu0 %v5675
    %5706 = vmatprep.subr.mxu0 0.0
    %5707 = vmatpush1.msra.mxu0 %v5676
    %5708 = vmatprep.subr.mxu0 0.0
    %5709 = vmatpush1.msra.mxu0 %v5677
    %5710 = vmatprep.subr.mxu0 0.0
    %5711 = vmatpush1.msra.mxu0 0.0
    %5712 = vmatprep.subr.mxu0 0.0
    %5713 = vmatpush1.msra.mxu0 0.0
    %5714 = vmatprep.subr.mxu0 0.0
    %5715 = vmatpush1.msra.mxu0 0.0
    %5716 = vmatprep.subr.mxu0 0.0
    %5717 = vmatpush1.msra.mxu0 0.0
    %5718 = vmatprep.subr.mxu0 0.0
    %5719 = vmatpush1.msra.mxu0 0.0
    %5720 = vmatprep.subr.mxu0 0.0
    %5721 = vmatpush1.msra.mxu0 0.0
    %5722 = vmatprep.subr.mxu0 0.0
    %5723 = vmatpush1.msra.mxu0 0.0
    %5724 = vmatprep.subr.mxu0 0.0
    %5725 = vmatpush1.msra.mxu0 0.0
    %5726 = vmatprep.subr.mxu0 0.0
    %5727 = vmatpush1.msra.mxu0 0.0
    %5728 = vmatprep.subr.mxu0 0.0
    %5729 = vmatpush1.msra.mxu0 0.0
    %5730 = vmatprep.subr.mxu0 0.0
    %5731 = vmatpush1.msra.mxu0 0.0
    %5732 = vmatprep.subr.mxu0 0.0
    %5733 = vmatpush1.msra.mxu0 0.0
    %5734 = vmatprep.subr.mxu0 0.0
    %5735 = vmatpush1.msra.mxu0 0.0
    %5736 = vmatprep.subr.mxu0 0.0
    %5737 = vmatpush1.msra.mxu0 0.0
    %5738 = vmatprep.subr.mxu0 0.0
    %5739 = vmatpush1.msra.mxu0 0.0
    %5740 = vmatprep.subr.mxu0 0.0
    %5741 = vmatpush1.msra.mxu0 0.0
    %5742 = vmatprep.mubr.f32.mxu0 0.0
    %5743 = vmatmul.mubr.f32.gmra.mrb[0].mxu0 %v5659
    %v5744 = vpop.f32.mrb[0].mxu0
    %v5745 = vadd.f32 0.0, %v5744
    %v5746 = vpop.f32.mrb[0].mxu0
    %5747 = vmatprep.mubr.f32.mxu0 0.0
    %5748 = vmatmul.mubr.f32.gmra.mrb[0].mxu0 %v5660
    %v5749 = vpop.f32.mrb[0].mxu0
    %v5750 = vadd.f32 0.0, %v5749
    %v5751 = vpop.f32.mrb[0].mxu0
    %5752 = vdwg.mxu0
    %s5753 = scalar_lea.vmem [#allocation8], 2944
    %v5754 = vld [vmem:[%s5753] sm:$0xff]
    %v5755 = vld [vmem:[%s5753 + $0x8] sm:$0xff]
    %v5756 = vld [vmem:[%s5753 + $0x10] sm:$0xff]
    %v5757 = vld [vmem:[%s5753 + $0x18] sm:$0xff]
    %v5758 = vld [vmem:[%s5753 + $0x20] sm:$0xff]
    %v5759 = vld [vmem:[%s5753 + $0x28] sm:$0xff]
    %v5760 = vld [vmem:[%s5753 + $0x30] sm:$0xff]
    %v5761 = vld [vmem:[%s5753 + $0x38] sm:$0xff]
    %v5762 = vld [vmem:[%s5753 + $0x40] sm:$0xff]
    %v5763 = vld [vmem:[%s5753 + $0x48] sm:$0xff]
    %v5764 = vld [vmem:[%s5753 + $0x50] sm:$0xff]
    %v5765 = vld [vmem:[%s5753 + $0x58] sm:$0xff]
    %v5766 = vld [vmem:[%s5753 + $0x60] sm:$0xff]
    %v5767 = vld [vmem:[%s5753 + $0x68] sm:$0xff]
    %v5768 = vld [vmem:[%s5753 + $0x70] sm:$0xff]
    %v5769 = vld [vmem:[%s5753 + $0x78] sm:$0xff]
    %5770 = vmatprep.subr.mxu0 0.0
    %5771 = vmatpush1.msra.mxu0 %v5754
    %5772 = vmatprep.subr.mxu0 0.0
    %5773 = vmatpush1.msra.mxu0 %v5755
    %5774 = vmatprep.subr.mxu0 0.0
    %5775 = vmatpush1.msra.mxu0 %v5756
    %5776 = vmatprep.subr.mxu0 0.0
    %5777 = vmatpush1.msra.mxu0 %v5757
    %5778 = vmatprep.subr.mxu0 0.0
    %5779 = vmatpush1.msra.mxu0 %v5758
    %5780 = vmatprep.subr.mxu0 0.0
    %5781 = vmatpush1.msra.mxu0 %v5759
    %5782 = vmatprep.subr.mxu0 0.0
    %5783 = vmatpush1.msra.mxu0 %v5760
    %5784 = vmatprep.subr.mxu0 0.0
    %5785 = vmatpush1.msra.mxu0 %v5761
    %5786 = vmatprep.subr.mxu0 0.0
    %5787 = vmatpush1.msra.mxu0 %v5762
    %5788 = vmatprep.subr.mxu0 0.0
    %5789 = vmatpush1.msra.mxu0 %v5763
    %5790 = vmatprep.subr.mxu0 0.0
    %5791 = vmatpush1.msra.mxu0 %v5764
    %5792 = vmatprep.subr.mxu0 0.0
    %5793 = vmatpush1.msra.mxu0 %v5765
    %5794 = vmatprep.subr.mxu0 0.0
    %5795 = vmatpush1.msra.mxu0 %v5766
    %5796 = vmatprep.subr.mxu0 0.0
    %5797 = vmatpush1.msra.mxu0 %v5767
    %5798 = vmatprep.subr.mxu0 0.0
    %5799 = vmatpush1.msra.mxu0 %v5768
    %5800 = vmatprep.subr.mxu0 0.0
    %5801 = vmatpush1.msra.mxu0 %v5769
    %5802 = vmatprep.subr.mxu0 0.0
    %5803 = vmatpush1.msra.mxu0 0.0
    %5804 = vmatprep.subr.mxu0 0.0
    %5805 = vmatpush1.msra.mxu0 0.0
    %5806 = vmatprep.subr.mxu0 0.0
    %5807 = vmatpush1.msra.mxu0 0.0
    %5808 = vmatprep.subr.mxu0 0.0
    %5809 = vmatpush1.msra.mxu0 0.0
    %5810 = vmatprep.subr.mxu0 0.0
    %5811 = vmatpush1.msra.mxu0 0.0
    %5812 = vmatprep.subr.mxu0 0.0
    %5813 = vmatpush1.msra.mxu0 0.0
    %5814 = vmatprep.subr.mxu0 0.0
    %5815 = vmatpush1.msra.mxu0 0.0
    %5816 = vmatprep.subr.mxu0 0.0
    %5817 = vmatpush1.msra.mxu0 0.0
    %5818 = vmatprep.subr.mxu0 0.0
    %5819 = vmatpush1.msra.mxu0 0.0
    %5820 = vmatprep.subr.mxu0 0.0
    %5821 = vmatpush1.msra.mxu0 0.0
    %5822 = vmatprep.subr.mxu0 0.0
    %5823 = vmatpush1.msra.mxu0 0.0
    %5824 = vmatprep.subr.mxu0 0.0
    %5825 = vmatpush1.msra.mxu0 0.0
    %5826 = vmatprep.subr.mxu0 0.0
    %5827 = vmatpush1.msra.mxu0 0.0
    %5828 = vmatprep.subr.mxu0 0.0
    %5829 = vmatpush1.msra.mxu0 0.0
    %5830 = vmatprep.subr.mxu0 0.0
    %5831 = vmatpush1.msra.mxu0 0.0
    %5832 = vmatprep.subr.mxu0 0.0
    %5833 = vmatpush1.msra.mxu0 0.0
    %5834 = vmatprep.mubr.f32.mxu0 0.0
    %5835 = vmatmul.mubr.f32.gmra.mrb[0].mxu0 %v5517
    %v5836 = vpop.f32.mrb[0].mxu0
    %v5837 = vadd.f32 0.0, %v5836
    %v5838 = vpop.f32.mrb[0].mxu0
    %5839 = vmatprep.mubr.f32.mxu0 0.0
    %5840 = vmatmul.mubr.f32.gmra.mrb[0].mxu0 %v5518
    %v5841 = vpop.f32.mrb[0].mxu0
    %v5842 = vadd.f32 0.0, %v5841
    %v5843 = vpop.f32.mrb[0].mxu0
    %5844 = vdwg.mxu0
    %v5845 = vadd.f32 %v5745, %v5837
    %v5846 = vadd.f32 %v5750, %v5842
    %v5847 = vld [vmem:[#allocation10 + $0x20] sm:$0x1]
    %v5848 = vlaneseq
    %v5849 = vshrl.u32 %v5848, 7
    %v5850 = vsub.s32 0, %v5849
    %v5851 = vrot.slane %v5847, %v5850
    %v5852 = vadd.f32 %v5845, %v5851
    %v5853 = vadd.f32 %v5846, %v5851
    %v5854 = vmax.f32 %v5852, 0.0
    %v5855 = vmax.f32 %v5853, 0.0
    %v5856 = vadd.f32 %v5854, %v5855
    %v5857 = vrot.slane %v5856, 4
    %v5858 = vadd.f32 %v5856, %v5857
    %v5859 = vrot.slane %v5858, 2
    %v5860 = vadd.f32 %v5858, %v5859
    %v5861 = vrot.slane %v5860, 1
    %v5862 = vadd.f32 %v5860, %v5861
    %v5863 = vmul.f32 %v5862, %v4399
    %v5864 = vsub.f32 %v5854, %v5863
    %v5865 = vsub.f32 %v5855, %v5863
    %v5866 = vmul.f32 %v5864, %v5864
    %v5867 = vmul.f32 %v5865, %v5865
    %v5868 = vadd.f32 %v5866, %v5867
    %v5869 = vrot.slane %v5868, 4
    %v5870 = vadd.f32 %v5868, %v5869
    %v5871 = vrot.slane %v5870, 2
    %v5872 = vadd.f32 %v5870, %v5871
    %v5873 = vrot.slane %v5872, 1
    %v5874 = vadd.f32 %v5872, %v5873
    %v5875 = vmul.f32 %v5874, %v4399
    %v5876 = vadd.f32 %v5875, 1e-05
    %v5877 = vrsqrt.pop %v5876
    %v5878 = vmul.f32 %v5864, %v5877
    %v5879 = vmul.f32 %v5865, %v5877
    %v5880 = vld [vmem:[#allocation10 + $0x21] sm:$0x1]
    %v5881 = vlaneseq
    %v5882 = vshrl.u32 %v5881, 7
    %v5883 = vsub.s32 0, %v5882
    %v5884 = vrot.slane %v5880, %v5883
    %v5885 = vmul.f32 %v5878, %v5884
    %v5886 = vmul.f32 %v5879, %v5884
    %v5887 = vld [vmem:[#allocation10 + $0x22] sm:$0x1]
    %v5888 = vlaneseq
    %v5889 = vshrl.u32 %v5888, 7
    %v5890 = vsub.s32 0, %v5889
    %v5891 = vrot.slane %v5887, %v5890
    %v5892 = vadd.f32 %v5885, %v5891
    %v5893 = vadd.f32 %v5886, %v5891
    %5894 = vmatprep.subr.mxu0 0.0
    %5895 = vmatpush1.msra.mxu0 %v5892
    %5896 = vmatprep.subr.mxu0 0.0
    %5897 = vmatpush1.msra.mxu0 0.0
    %5898 = vmatprep.subr.mxu0 0.0
    %5899 = vmatpush1.msra.mxu0 0.0
    %5900 = vmatprep.subr.mxu0 0.0
    %5901 = vmatpush1.msra.mxu0 0.0
    %5902 = vmatprep.subr.mxu0 0.0
    %5903 = vmatpush1.msra.mxu0 0.0
    %5904 = vmatprep.subr.mxu0 0.0
    %5905 = vmatpush1.msra.mxu0 0.0
    %5906 = vmatprep.subr.mxu0 0.0
    %5907 = vmatpush1.msra.mxu0 0.0
    %5908 = vmatprep.subr.mxu0 0.0
    %5909 = vmatpush1.msra.mxu0 0.0
    %5910 = vmatprep.subr.mxu0 0.0
    %5911 = vmatpush1.msra.mxu0 0.0
    %5912 = vmatprep.subr.mxu0 0.0
    %5913 = vmatpush1.msra.mxu0 0.0
    %5914 = vmatprep.subr.mxu0 0.0
    %5915 = vmatpush1.msra.mxu0 0.0
    %5916 = vmatprep.subr.mxu0 0.0
    %5917 = vmatpush1.msra.mxu0 0.0
    %5918 = vmatprep.subr.mxu0 0.0
    %5919 = vmatpush1.msra.mxu0 0.0
    %5920 = vmatprep.subr.mxu0 0.0
    %5921 = vmatpush1.msra.mxu0 0.0
    %5922 = vmatprep.subr.mxu0 0.0
    %5923 = vmatpush1.msra.mxu0 0.0
    %5924 = vmatprep.subr.mxu0 0.0
    %5925 = vmatpush1.msra.mxu0 0.0
    %5926 = vmatprep.subr.mxu0 0.0
    %5927 = vmatpush1.msra.mxu0 0.0
    %5928 = vmatprep.subr.mxu0 0.0
    %5929 = vmatpush1.msra.mxu0 0.0
    %5930 = vmatprep.subr.mxu0 0.0
    %5931 = vmatpush1.msra.mxu0 0.0
    %5932 = vmatprep.subr.mxu0 0.0
    %5933 = vmatpush1.msra.mxu0 0.0
    %5934 = vmatprep.subr.mxu0 0.0
    %5935 = vmatpush1.msra.mxu0 0.0
    %5936 = vmatprep.subr.mxu0 0.0
    %5937 = vmatpush1.msra.mxu0 0.0
    %5938 = vmatprep.subr.mxu0 0.0
    %5939 = vmatpush1.msra.mxu0 0.0
    %5940 = vmatprep.subr.mxu0 0.0
    %5941 = vmatpush1.msra.mxu0 0.0
    %5942 = vmatprep.subr.mxu0 0.0
    %5943 = vmatpush1.msra.mxu0 0.0
    %5944 = vmatprep.subr.mxu0 0.0
    %5945 = vmatpush1.msra.mxu0 0.0
    %5946 = vmatprep.subr.mxu0 0.0
    %5947 = vmatpush1.msra.mxu0 0.0
    %5948 = vmatprep.subr.mxu0 0.0
    %5949 = vmatpush1.msra.mxu0 0.0
    %5950 = vmatprep.subr.mxu0 0.0
    %5951 = vmatpush1.msra.mxu0 0.0
    %5952 = vmatprep.subr.mxu0 0.0
    %5953 = vmatpush1.msra.mxu0 0.0
    %5954 = vmatprep.subr.mxu0 0.0
    %5955 = vmatpush1.msra.mxu0 0.0
    %5956 = vmatprep.subr.mxu0 0.0
    %5957 = vmatpush1.msra.mxu0 0.0
    %5958 = vmatprep.mubr.f32.mxu0 0.0
    %5959 = vmatmul.mubr.f32.gmra.mrb[0].mxu0 %v4040
    %v5960 = vpop.f32.mrb[0].mxu0
    %v5961 = vadd.f32 0.0, %v5960
    %v5962 = vpop.f32.mrb[0].mxu0
    %5963 = vdwg.mxu0
    %5964 = vmatprep.subr.mxu0 0.0
    %5965 = vmatpush1.msra.mxu0 %v5893
    %5966 = vmatprep.subr.mxu0 0.0
    %5967 = vmatpush1.msra.mxu0 0.0
    %5968 = vmatprep.subr.mxu0 0.0
    %5969 = vmatpush1.msra.mxu0 0.0
    %5970 = vmatprep.subr.mxu0 0.0
    %5971 = vmatpush1.msra.mxu0 0.0
    %5972 = vmatprep.subr.mxu0 0.0
    %5973 = vmatpush1.msra.mxu0 0.0
    %5974 = vmatprep.subr.mxu0 0.0
    %5975 = vmatpush1.msra.mxu0 0.0
    %5976 = vmatprep.subr.mxu0 0.0
    %5977 = vmatpush1.msra.mxu0 0.0
    %5978 = vmatprep.subr.mxu0 0.0
    %5979 = vmatpush1.msra.mxu0 0.0
    %5980 = vmatprep.subr.mxu0 0.0
    %5981 = vmatpush1.msra.mxu0 0.0
    %5982 = vmatprep.subr.mxu0 0.0
    %5983 = vmatpush1.msra.mxu0 0.0
    %5984 = vmatprep.subr.mxu0 0.0
    %5985 = vmatpush1.msra.mxu0 0.0
    %5986 = vmatprep.subr.mxu0 0.0
    %5987 = vmatpush1.msra.mxu0 0.0
    %5988 = vmatprep.subr.mxu0 0.0
    %5989 = vmatpush1.msra.mxu0 0.0
    %5990 = vmatprep.subr.mxu0 0.0
    %5991 = vmatpush1.msra.mxu0 0.0
    %5992 = vmatprep.subr.mxu0 0.0
    %5993 = vmatpush1.msra.mxu0 0.0
    %5994 = vmatprep.subr.mxu0 0.0
    %5995 = vmatpush1.msra.mxu0 0.0
    %5996 = vmatprep.subr.mxu0 0.0
    %5997 = vmatpush1.msra.mxu0 0.0
    %5998 = vmatprep.subr.mxu0 0.0
    %5999 = vmatpush1.msra.mxu0 0.0
    %6000 = vmatprep.subr.mxu0 0.0
    %6001 = vmatpush1.msra.mxu0 0.0
    %6002 = vmatprep.subr.mxu0 0.0
    %6003 = vmatpush1.msra.mxu0 0.0
    %6004 = vmatprep.subr.mxu0 0.0
    %6005 = vmatpush1.msra.mxu0 0.0
    %6006 = vmatprep.subr.mxu0 0.0
    %6007 = vmatpush1.msra.mxu0 0.0
    %6008 = vmatprep.subr.mxu0 0.0
    %6009 = vmatpush1.msra.mxu0 0.0
    %6010 = vmatprep.subr.mxu0 0.0
    %6011 = vmatpush1.msra.mxu0 0.0
    %6012 = vmatprep.subr.mxu0 0.0
    %6013 = vmatpush1.msra.mxu0 0.0
    %6014 = vmatprep.subr.mxu0 0.0
    %6015 = vmatpush1.msra.mxu0 0.0
    %6016 = vmatprep.subr.mxu0 0.0
    %6017 = vmatpush1.msra.mxu0 0.0
    %6018 = vmatprep.subr.mxu0 0.0
    %6019 = vmatpush1.msra.mxu0 0.0
    %6020 = vmatprep.subr.mxu0 0.0
    %6021 = vmatpush1.msra.mxu0 0.0
    %6022 = vmatprep.subr.mxu0 0.0
    %6023 = vmatpush1.msra.mxu0 0.0
    %6024 = vmatprep.subr.mxu0 0.0
    %6025 = vmatpush1.msra.mxu0 0.0
    %6026 = vmatprep.subr.mxu0 0.0
    %6027 = vmatpush1.msra.mxu0 0.0
    %6028 = vmatprep.mubr.f32.mxu0 0.0
    %6029 = vmatmul.mubr.f32.gmra.mrb[0].mxu0 %v4113
    %v6030 = vpop.f32.mrb[0].mxu0
    %v6031 = vadd.f32 0.0, %v6030
    %v6032 = vpop.f32.mrb[0].mxu0
    %6033 = vdwg.mxu0
    %v6034 = vmul.f32 %v5961, %v4193
    %v6035 = vmul.f32 %v6031, %v4194
    %s6036 = scalar_lea.vmem [#allocation8], 3072
    %v6037 = vld [vmem:[%s6036] sm:$0xff]
    %v6038 = vld [vmem:[%s6036 + $0x8] sm:$0xff]
    %v6039 = vld [vmem:[%s6036 + $0x10] sm:$0xff]
    %v6040 = vld [vmem:[%s6036 + $0x18] sm:$0xff]
    %v6041 = vld [vmem:[%s6036 + $0x20] sm:$0xff]
    %v6042 = vld [vmem:[%s6036 + $0x28] sm:$0xff]
    %v6043 = vld [vmem:[%s6036 + $0x30] sm:$0xff]
    %v6044 = vld [vmem:[%s6036 + $0x38] sm:$0xff]
    %v6045 = vld [vmem:[%s6036 + $0x40] sm:$0xff]
    %v6046 = vld [vmem:[%s6036 + $0x48] sm:$0xff]
    %v6047 = vld [vmem:[%s6036 + $0x50] sm:$0xff]
    %v6048 = vld [vmem:[%s6036 + $0x58] sm:$0xff]
    %v6049 = vld [vmem:[%s6036 + $0x60] sm:$0xff]
    %v6050 = vld [vmem:[%s6036 + $0x68] sm:$0xff]
    %v6051 = vld [vmem:[%s6036 + $0x70] sm:$0xff]
    %v6052 = vld [vmem:[%s6036 + $0x78] sm:$0xff]
    %6053 = vmatprep.subr.mxu0 0.0
    %6054 = vmatpush1.msra.mxu0 %v6037
    %6055 = vmatprep.subr.mxu0 0.0
    %6056 = vmatpush1.msra.mxu0 %v6038
    %6057 = vmatprep.subr.mxu0 0.0
    %6058 = vmatpush1.msra.mxu0 %v6039
    %6059 = vmatprep.subr.mxu0 0.0
    %6060 = vmatpush1.msra.mxu0 %v6040
    %6061 = vmatprep.subr.mxu0 0.0
    %6062 = vmatpush1.msra.mxu0 %v6041
    %6063 = vmatprep.subr.mxu0 0.0
    %6064 = vmatpush1.msra.mxu0 %v6042
    %6065 = vmatprep.subr.mxu0 0.0
    %6066 = vmatpush1.msra.mxu0 %v6043
    %6067 = vmatprep.subr.mxu0 0.0
    %6068 = vmatpush1.msra.mxu0 %v6044
    %6069 = vmatprep.subr.mxu0 0.0
    %6070 = vmatpush1.msra.mxu0 %v6045
    %6071 = vmatprep.subr.mxu0 0.0
    %6072 = vmatpush1.msra.mxu0 %v6046
    %6073 = vmatprep.subr.mxu0 0.0
    %6074 = vmatpush1.msra.mxu0 %v6047
    %6075 = vmatprep.subr.mxu0 0.0
    %6076 = vmatpush1.msra.mxu0 %v6048
    %6077 = vmatprep.subr.mxu0 0.0
    %6078 = vmatpush1.msra.mxu0 %v6049
    %6079 = vmatprep.subr.mxu0 0.0
    %6080 = vmatpush1.msra.mxu0 %v6050
    %6081 = vmatprep.subr.mxu0 0.0
    %6082 = vmatpush1.msra.mxu0 %v6051
    %6083 = vmatprep.subr.mxu0 0.0
    %6084 = vmatpush1.msra.mxu0 %v6052
    %6085 = vmatprep.subr.mxu0 0.0
    %6086 = vmatpush1.msra.mxu0 0.0
    %6087 = vmatprep.subr.mxu0 0.0
    %6088 = vmatpush1.msra.mxu0 0.0
    %6089 = vmatprep.subr.mxu0 0.0
    %6090 = vmatpush1.msra.mxu0 0.0
    %6091 = vmatprep.subr.mxu0 0.0
    %6092 = vmatpush1.msra.mxu0 0.0
    %6093 = vmatprep.subr.mxu0 0.0
    %6094 = vmatpush1.msra.mxu0 0.0
    %6095 = vmatprep.subr.mxu0 0.0
    %6096 = vmatpush1.msra.mxu0 0.0
    %6097 = vmatprep.subr.mxu0 0.0
    %6098 = vmatpush1.msra.mxu0 0.0
    %6099 = vmatprep.subr.mxu0 0.0
    %6100 = vmatpush1.msra.mxu0 0.0
    %6101 = vmatprep.subr.mxu0 0.0
    %6102 = vmatpush1.msra.mxu0 0.0
    %6103 = vmatprep.subr.mxu0 0.0
    %6104 = vmatpush1.msra.mxu0 0.0
    %6105 = vmatprep.subr.mxu0 0.0
    %6106 = vmatpush1.msra.mxu0 0.0
    %6107 = vmatprep.subr.mxu0 0.0
    %6108 = vmatpush1.msra.mxu0 0.0
    %6109 = vmatprep.subr.mxu0 0.0
    %6110 = vmatpush1.msra.mxu0 0.0
    %6111 = vmatprep.subr.mxu0 0.0
    %6112 = vmatpush1.msra.mxu0 0.0
    %6113 = vmatprep.subr.mxu0 0.0
    %6114 = vmatpush1.msra.mxu0 0.0
    %6115 = vmatprep.subr.mxu0 0.0
    %6116 = vmatpush1.msra.mxu0 0.0
    %6117 = vmatprep.mubr.f32.mxu0 0.0
    %6118 = vmatmul.mubr.f32.gmra.mrb[0].mxu0 %v6034
    %v6119 = vpop.f32.mrb[0].mxu0
    %v6120 = vadd.f32 0.0, %v6119
    %v6121 = vpop.f32.mrb[0].mxu0
    %6122 = vmatprep.mubr.f32.mxu0 0.0
    %6123 = vmatmul.mubr.f32.gmra.mrb[0].mxu0 %v6035
    %v6124 = vpop.f32.mrb[0].mxu0
    %v6125 = vadd.f32 0.0, %v6124
    %v6126 = vpop.f32.mrb[0].mxu0
    %6127 = vdwg.mxu0
    %s6128 = scalar_lea.vmem [#allocation8], 3200
    %v6129 = vld [vmem:[%s6128] sm:$0xff]
    %v6130 = vld [vmem:[%s6128 + $0x8] sm:$0xff]
    %v6131 = vld [vmem:[%s6128 + $0x10] sm:$0xff]
    %v6132 = vld [vmem:[%s6128 + $0x18] sm:$0xff]
    %v6133 = vld [vmem:[%s6128 + $0x20] sm:$0xff]
    %v6134 = vld [vmem:[%s6128 + $0x28] sm:$0xff]
    %v6135 = vld [vmem:[%s6128 + $0x30] sm:$0xff]
    %v6136 = vld [vmem:[%s6128 + $0x38] sm:$0xff]
    %v6137 = vld [vmem:[%s6128 + $0x40] sm:$0xff]
    %v6138 = vld [vmem:[%s6128 + $0x48] sm:$0xff]
    %v6139 = vld [vmem:[%s6128 + $0x50] sm:$0xff]
    %v6140 = vld [vmem:[%s6128 + $0x58] sm:$0xff]
    %v6141 = vld [vmem:[%s6128 + $0x60] sm:$0xff]
    %v6142 = vld [vmem:[%s6128 + $0x68] sm:$0xff]
    %v6143 = vld [vmem:[%s6128 + $0x70] sm:$0xff]
    %v6144 = vld [vmem:[%s6128 + $0x78] sm:$0xff]
    %6145 = vmatprep.subr.mxu0 0.0
    %6146 = vmatpush1.msra.mxu0 %v6129
    %6147 = vmatprep.subr.mxu0 0.0
    %6148 = vmatpush1.msra.mxu0 %v6130
    %6149 = vmatprep.subr.mxu0 0.0
    %6150 = vmatpush1.msra.mxu0 %v6131
    %6151 = vmatprep.subr.mxu0 0.0
    %6152 = vmatpush1.msra.mxu0 %v6132
    %6153 = vmatprep.subr.mxu0 0.0
    %6154 = vmatpush1.msra.mxu0 %v6133
    %6155 = vmatprep.subr.mxu0 0.0
    %6156 = vmatpush1.msra.mxu0 %v6134
    %6157 = vmatprep.subr.mxu0 0.0
    %6158 = vmatpush1.msra.mxu0 %v6135
    %6159 = vmatprep.subr.mxu0 0.0
    %6160 = vmatpush1.msra.mxu0 %v6136
    %6161 = vmatprep.subr.mxu0 0.0
    %6162 = vmatpush1.msra.mxu0 %v6137
    %6163 = vmatprep.subr.mxu0 0.0
    %6164 = vmatpush1.msra.mxu0 %v6138
    %6165 = vmatprep.subr.mxu0 0.0
    %6166 = vmatpush1.msra.mxu0 %v6139
    %6167 = vmatprep.subr.mxu0 0.0
    %6168 = vmatpush1.msra.mxu0 %v6140
    %6169 = vmatprep.subr.mxu0 0.0
    %6170 = vmatpush1.msra.mxu0 %v6141
    %6171 = vmatprep.subr.mxu0 0.0
    %6172 = vmatpush1.msra.mxu0 %v6142
    %6173 = vmatprep.subr.mxu0 0.0
    %6174 = vmatpush1.msra.mxu0 %v6143
    %6175 = vmatprep.subr.mxu0 0.0
    %6176 = vmatpush1.msra.mxu0 %v6144
    %6177 = vmatprep.subr.mxu0 0.0
    %6178 = vmatpush1.msra.mxu0 0.0
    %6179 = vmatprep.subr.mxu0 0.0
    %6180 = vmatpush1.msra.mxu0 0.0
    %6181 = vmatprep.subr.mxu0 0.0
    %6182 = vmatpush1.msra.mxu0 0.0
    %6183 = vmatprep.subr.mxu0 0.0
    %6184 = vmatpush1.msra.mxu0 0.0
    %6185 = vmatprep.subr.mxu0 0.0
    %6186 = vmatpush1.msra.mxu0 0.0
    %6187 = vmatprep.subr.mxu0 0.0
    %6188 = vmatpush1.msra.mxu0 0.0
    %6189 = vmatprep.subr.mxu0 0.0
    %6190 = vmatpush1.msra.mxu0 0.0
    %6191 = vmatprep.subr.mxu0 0.0
    %6192 = vmatpush1.msra.mxu0 0.0
    %6193 = vmatprep.subr.mxu0 0.0
    %6194 = vmatpush1.msra.mxu0 0.0
    %6195 = vmatprep.subr.mxu0 0.0
    %6196 = vmatpush1.msra.mxu0 0.0
    %6197 = vmatprep.subr.mxu0 0.0
    %6198 = vmatpush1.msra.mxu0 0.0
    %6199 = vmatprep.subr.mxu0 0.0
    %6200 = vmatpush1.msra.mxu0 0.0
    %6201 = vmatprep.subr.mxu0 0.0
    %6202 = vmatpush1.msra.mxu0 0.0
    %6203 = vmatprep.subr.mxu0 0.0
    %6204 = vmatpush1.msra.mxu0 0.0
    %6205 = vmatprep.subr.mxu0 0.0
    %6206 = vmatpush1.msra.mxu0 0.0
    %6207 = vmatprep.subr.mxu0 0.0
    %6208 = vmatpush1.msra.mxu0 0.0
    %6209 = vmatprep.mubr.f32.mxu0 0.0
    %6210 = vmatmul.mubr.f32.gmra.mrb[0].mxu0 %v5892
    %v6211 = vpop.f32.mrb[0].mxu0
    %v6212 = vadd.f32 0.0, %v6211
    %v6213 = vpop.f32.mrb[0].mxu0
    %6214 = vmatprep.mubr.f32.mxu0 0.0
    %6215 = vmatmul.mubr.f32.gmra.mrb[0].mxu0 %v5893
    %v6216 = vpop.f32.mrb[0].mxu0
    %v6217 = vadd.f32 0.0, %v6216
    %v6218 = vpop.f32.mrb[0].mxu0
    %6219 = vdwg.mxu0
    %v6220 = vadd.f32 %v6120, %v6212
    %v6221 = vadd.f32 %v6125, %v6217
    %v6222 = vld [vmem:[#allocation10 + $0x23] sm:$0x1]
    %v6223 = vlaneseq
    %v6224 = vshrl.u32 %v6223, 7
    %v6225 = vsub.s32 0, %v6224
    %v6226 = vrot.slane %v6222, %v6225
    %v6227 = vadd.f32 %v6220, %v6226
    %v6228 = vadd.f32 %v6221, %v6226
    %v6229 = vmax.f32 %v6227, 0.0
    %v6230 = vmax.f32 %v6228, 0.0
    %v6231 = vadd.f32 %v6229, %v6230
    %v6232 = vrot.slane %v6231, 4
    %v6233 = vadd.f32 %v6231, %v6232
    %v6234 = vrot.slane %v6233, 2
    %v6235 = vadd.f32 %v6233, %v6234
    %v6236 = vrot.slane %v6235, 1
    %v6237 = vadd.f32 %v6235, %v6236
    %v6238 = vmul.f32 %v6237, %v4399
    %v6239 = vsub.f32 %v6229, %v6238
    %v6240 = vsub.f32 %v6230, %v6238
    %v6241 = vmul.f32 %v6239, %v6239
    %v6242 = vmul.f32 %v6240, %v6240
    %v6243 = vadd.f32 %v6241, %v6242
    %v6244 = vrot.slane %v6243, 4
    %v6245 = vadd.f32 %v6243, %v6244
    %v6246 = vrot.slane %v6245, 2
    %v6247 = vadd.f32 %v6245, %v6246
    %v6248 = vrot.slane %v6247, 1
    %v6249 = vadd.f32 %v6247, %v6248
    %v6250 = vmul.f32 %v6249, %v4399
    %v6251 = vadd.f32 %v6250, 1e-05
    %v6252 = vrsqrt.pop %v6251
    %v6253 = vmul.f32 %v6239, %v6252
    %v6254 = vmul.f32 %v6240, %v6252
    %v6255 = vld [vmem:[#allocation10 + $0x24] sm:$0x1]
    %v6256 = vlaneseq
    %v6257 = vshrl.u32 %v6256, 7
    %v6258 = vsub.s32 0, %v6257
    %v6259 = vrot.slane %v6255, %v6258
    %v6260 = vmul.f32 %v6253, %v6259
    %v6261 = vmul.f32 %v6254, %v6259
    %v6262 = vld [vmem:[#allocation10 + $0x25] sm:$0x1]
    %v6263 = vlaneseq
    %v6264 = vshrl.u32 %v6263, 7
    %v6265 = vsub.s32 0, %v6264
    %v6266 = vrot.slane %v6262, %v6265
    %v6267 = vadd.f32 %v6260, %v6266
    %v6268 = vadd.f32 %v6261, %v6266
    %v6269 = vadd.f32 %v5517, %v5892
    %v6270 = vadd.f32 %v5518, %v5893
    %v6271 = vadd.f32 %v6269, %v6267
    %v6272 = vadd.f32 %v6270, %v6268
    %vm6273 = vcmask 15360
    %v6274 = vsel %vm6273, %v5284, -inf
    %6275 = vmax.xlane.f32.xlu0 %v6274
    %v6276 = vpop.xlane.xlu0 %6275
    %v6277 = vsel %vm6273, %v5285, -inf
    %6278 = vmax.xlane.f32.xlu0 %v6277
    %v6279 = vpop.xlane.xlu0 %6278
    %v6280 = vsub.f32 %v5284, %v6276
    %v6281 = vsub.f32 %v5285, %v6279
    %v6282 = vmul.f32 %v6280, 1.442695
    %v6283 = vpow.pop %v6282
    %v6284 = vmul.f32 %v6281, 1.442695
    %v6285 = vpow.pop %v6284
    %v6286 = vsel %vm6273, %v6283, 0.0
    %6287 = vadd.xlane.f32.xlu0 %v6286
    %v6288 = vpop.xlane.xlu0 %6287
    %v6289 = vsel %vm6273, %v6285, 0.0
    %6290 = vadd.xlane.f32.xlu0 %v6289
    %v6291 = vpop.xlane.xlu0 %6290
    %v6292 = vrcp.pop %v6288
    %v6293 = vrcp.pop %v6291
    %v6294 = vmul.f32 %v6283, %v6292
    %v6295 = vmul.f32 %v6285, %v6293
    %6296 = vxpose.xlu0.b32.start [1/16] %v6294, 128
    %6297 = vxpose.xlu0.b32.cont [2/16] 0.0, 128
    %6298 = vxpose.xlu0.b32.cont [3/16] 0.0, 128
    %6299 = vxpose.xlu0.b32.cont [4/16] 0.0, 128
    %6300 = vxpose.xlu0.b32.cont [5/16] 0.0, 128
    %6301 = vxpose.xlu0.b32.cont [6/16] 0.0, 128
    %6302 = vxpose.xlu0.b32.cont [7/16] 0.0, 128
    %6303 = vxpose.xlu0.b32.cont [8/16] 0.0, 128
    %6304 = vxpose.xlu0.b32.cont [9/16] 0.0, 128
    %6305 = vxpose.xlu0.b32.cont [10/16] 0.0, 128
    %6306 = vxpose.xlu0.b32.cont [11/16] 0.0, 128
    %6307 = vxpose.xlu0.b32.cont [12/16] 0.0, 128
    %6308 = vxpose.xlu0.b32.cont [13/16] 0.0, 128
    %6309 = vxpose.xlu0.b32.cont [14/16] 0.0, 128
    %6310 = vxpose.xlu0.b32.cont [15/16] 0.0, 128
    %6311 = vxpose.xlu0.b32.end [16/16] 0.0, 128
    %v6312 = vpop.trf.xlu0
    %v6313 = vpop.trf.xlu0
    %v6314 = vpop.trf.xlu0
    %v6315 = vpop.trf.xlu0
    %v6316 = vpop.trf.xlu0
    %v6317 = vpop.trf.xlu0
    %v6318 = vpop.trf.xlu0
    %v6319 = vpop.trf.xlu0
    %v6320 = vpop.trf.xlu0
    %v6321 = vpop.trf.xlu0
    %v6322 = vpop.trf.xlu0
    %v6323 = vpop.trf.xlu0
    %v6324 = vpop.trf.xlu0
    %v6325 = vpop.trf.xlu0
    %v6326 = vpop.trf.xlu0
    %v6327 = vpop.trf.xlu0
    %v6329 = vsel %vm3438, %v6312, 0
    %6331 = vmatprep.subr.mxu0 0.0
    %6332 = vmatpush1.msra.mxu0 %v6271
    %6333 = vmatprep.subr.mxu0 0.0
    %6334 = vmatpush1.msra.mxu0 0.0
    %6335 = vmatprep.subr.mxu0 0.0
    %6336 = vmatpush1.msra.mxu0 0.0
    %6337 = vmatprep.subr.mxu0 0.0
    %6338 = vmatpush1.msra.mxu0 0.0
    %6339 = vmatprep.subr.mxu0 0.0
    %6340 = vmatpush1.msra.mxu0 0.0
    %6341 = vmatprep.subr.mxu0 0.0
    %6342 = vmatpush1.msra.mxu0 0.0
    %6343 = vmatprep.subr.mxu0 0.0
    %6344 = vmatpush1.msra.mxu0 0.0
    %6345 = vmatprep.subr.mxu0 0.0
    %6346 = vmatpush1.msra.mxu0 0.0
    %6347 = vmatprep.subr.mxu0 0.0
    %6348 = vmatpush1.msra.mxu0 0.0
    %6349 = vmatprep.subr.mxu0 0.0
    %6350 = vmatpush1.msra.mxu0 0.0
    %6351 = vmatprep.subr.mxu0 0.0
    %6352 = vmatpush1.msra.mxu0 0.0
    %6353 = vmatprep.subr.mxu0 0.0
    %6354 = vmatpush1.msra.mxu0 0.0
    %6355 = vmatprep.subr.mxu0 0.0
    %6356 = vmatpush1.msra.mxu0 0.0
    %6357 = vmatprep.subr.mxu0 0.0
    %6358 = vmatpush1.msra.mxu0 0.0
    %6359 = vmatprep.subr.mxu0 0.0
    %6360 = vmatpush1.msra.mxu0 0.0
    %6361 = vmatprep.subr.mxu0 0.0
    %6362 = vmatpush1.msra.mxu0 0.0
    %6363 = vmatprep.subr.mxu0 0.0
    %6364 = vmatpush1.msra.mxu0 0.0
    %6365 = vmatprep.subr.mxu0 0.0
    %6366 = vmatpush1.msra.mxu0 0.0
    %6367 = vmatprep.subr.mxu0 0.0
    %6368 = vmatpush1.msra.mxu0 0.0
    %6369 = vmatprep.subr.mxu0 0.0
    %6370 = vmatpush1.msra.mxu0 0.0
    %6371 = vmatprep.subr.mxu0 0.0
    %6372 = vmatpush1.msra.mxu0 0.0
    %6373 = vmatprep.subr.mxu0 0.0
    %6374 = vmatpush1.msra.mxu0 0.0
    %6375 = vmatprep.subr.mxu0 0.0
    %6376 = vmatpush1.msra.mxu0 0.0
    %6377 = vmatprep.subr.mxu0 0.0
    %6378 = vmatpush1.msra.mxu0 0.0
    %6379 = vmatprep.subr.mxu0 0.0
    %6380 = vmatpush1.msra.mxu0 0.0
    %6381 = vmatprep.subr.mxu0 0.0
    %6382 = vmatpush1.msra.mxu0 0.0
    %6383 = vmatprep.subr.mxu0 0.0
    %6384 = vmatpush1.msra.mxu0 0.0
    %6385 = vmatprep.subr.mxu0 0.0
    %6386 = vmatpush1.msra.mxu0 0.0
    %6387 = vmatprep.subr.mxu0 0.0
    %6388 = vmatpush1.msra.mxu0 0.0
    %6389 = vmatprep.subr.mxu0 0.0
    %6390 = vmatpush1.msra.mxu0 0.0
    %6391 = vmatprep.subr.mxu0 0.0
    %6392 = vmatpush1.msra.mxu0 0.0
    %6393 = vmatprep.subr.mxu0 0.0
    %6394 = vmatpush1.msra.mxu0 0.0
    %6395 = vmatprep.mubr.f32.mxu0 0.0
    %6396 = vmatmul.mubr.f32.gmra.mrb[0].mxu0 %v6329
    %v6397 = vpop.f32.mrb[0].mxu0
    %v6398 = vadd.f32 0.0, %v6397
    %v6399 = vpop.f32.mrb[0].mxu0
    %6400 = vdwg.mxu0
    %6401 = vxpose.xlu0.b32.start [1/16] %v6295, 128
    %6402 = vxpose.xlu0.b32.cont [2/16] 0.0, 128
    %6403 = vxpose.xlu0.b32.cont [3/16] 0.0, 128
    %6404 = vxpose.xlu0.b32.cont [4/16] 0.0, 128
    %6405 = vxpose.xlu0.b32.cont [5/16] 0.0, 128
    %6406 = vxpose.xlu0.b32.cont [6/16] 0.0, 128
    %6407 = vxpose.xlu0.b32.cont [7/16] 0.0, 128
    %6408 = vxpose.xlu0.b32.cont [8/16] 0.0, 128
    %6409 = vxpose.xlu0.b32.cont [9/16] 0.0, 128
    %6410 = vxpose.xlu0.b32.cont [10/16] 0.0, 128
    %6411 = vxpose.xlu0.b32.cont [11/16] 0.0, 128
    %6412 = vxpose.xlu0.b32.cont [12/16] 0.0, 128
    %6413 = vxpose.xlu0.b32.cont [13/16] 0.0, 128
    %6414 = vxpose.xlu0.b32.cont [14/16] 0.0, 128
    %6415 = vxpose.xlu0.b32.cont [15/16] 0.0, 128
    %6416 = vxpose.xlu0.b32.end [16/16] 0.0, 128
    %v6417 = vpop.trf.xlu0
    %v6418 = vpop.trf.xlu0
    %v6419 = vpop.trf.xlu0
    %v6420 = vpop.trf.xlu0
    %v6421 = vpop.trf.xlu0
    %v6422 = vpop.trf.xlu0
    %v6423 = vpop.trf.xlu0
    %v6424 = vpop.trf.xlu0
    %v6425 = vpop.trf.xlu0
    %v6426 = vpop.trf.xlu0
    %v6427 = vpop.trf.xlu0
    %v6428 = vpop.trf.xlu0
    %v6429 = vpop.trf.xlu0
    %v6430 = vpop.trf.xlu0
    %v6431 = vpop.trf.xlu0
    %v6432 = vpop.trf.xlu0
    %v6434 = vsel %vm3438, %v6417, 0
    %6436 = vmatprep.subr.mxu0 0.0
    %6437 = vmatpush1.msra.mxu0 %v6272
    %6438 = vmatprep.subr.mxu0 0.0
    %6439 = vmatpush1.msra.mxu0 0.0
    %6440 = vmatprep.subr.mxu0 0.0
    %6441 = vmatpush1.msra.mxu0 0.0
    %6442 = vmatprep.subr.mxu0 0.0
    %6443 = vmatpush1.msra.mxu0 0.0
    %6444 = vmatprep.subr.mxu0 0.0
    %6445 = vmatpush1.msra.mxu0 0.0
    %6446 = vmatprep.subr.mxu0 0.0
    %6447 = vmatpush1.msra.mxu0 0.0
    %6448 = vmatprep.subr.mxu0 0.0
    %6449 = vmatpush1.msra.mxu0 0.0
    %6450 = vmatprep.subr.mxu0 0.0
    %6451 = vmatpush1.msra.mxu0 0.0
    %6452 = vmatprep.subr.mxu0 0.0
    %6453 = vmatpush1.msra.mxu0 0.0
    %6454 = vmatprep.subr.mxu0 0.0
    %6455 = vmatpush1.msra.mxu0 0.0
    %6456 = vmatprep.subr.mxu0 0.0
    %6457 = vmatpush1.msra.mxu0 0.0
    %6458 = vmatprep.subr.mxu0 0.0
    %6459 = vmatpush1.msra.mxu0 0.0
    %6460 = vmatprep.subr.mxu0 0.0
    %6461 = vmatpush1.msra.mxu0 0.0
    %6462 = vmatprep.subr.mxu0 0.0
    %6463 = vmatpush1.msra.mxu0 0.0
    %6464 = vmatprep.subr.mxu0 0.0
    %6465 = vmatpush1.msra.mxu0 0.0
    %6466 = vmatprep.subr.mxu0 0.0
    %6467 = vmatpush1.msra.mxu0 0.0
    %6468 = vmatprep.subr.mxu0 0.0
    %6469 = vmatpush1.msra.mxu0 0.0
    %6470 = vmatprep.subr.mxu0 0.0
    %6471 = vmatpush1.msra.mxu0 0.0
    %6472 = vmatprep.subr.mxu0 0.0
    %6473 = vmatpush1.msra.mxu0 0.0
    %6474 = vmatprep.subr.mxu0 0.0
    %6475 = vmatpush1.msra.mxu0 0.0
    %6476 = vmatprep.subr.mxu0 0.0
    %6477 = vmatpush1.msra.mxu0 0.0
    %6478 = vmatprep.subr.mxu0 0.0
    %6479 = vmatpush1.msra.mxu0 0.0
    %6480 = vmatprep.subr.mxu0 0.0
    %6481 = vmatpush1.msra.mxu0 0.0
    %6482 = vmatprep.subr.mxu0 0.0
    %6483 = vmatpush1.msra.mxu0 0.0
    %6484 = vmatprep.subr.mxu0 0.0
    %6485 = vmatpush1.msra.mxu0 0.0
    %6486 = vmatprep.subr.mxu0 0.0
    %6487 = vmatpush1.msra.mxu0 0.0
    %6488 = vmatprep.subr.mxu0 0.0
    %6489 = vmatpush1.msra.mxu0 0.0
    %6490 = vmatprep.subr.mxu0 0.0
    %6491 = vmatpush1.msra.mxu0 0.0
    %6492 = vmatprep.subr.mxu0 0.0
    %6493 = vmatpush1.msra.mxu0 0.0
    %6494 = vmatprep.subr.mxu0 0.0
    %6495 = vmatpush1.msra.mxu0 0.0
    %6496 = vmatprep.subr.mxu0 0.0
    %6497 = vmatpush1.msra.mxu0 0.0
    %6498 = vmatprep.subr.mxu0 0.0
    %6499 = vmatpush1.msra.mxu0 0.0
    %6500 = vmatprep.mubr.f32.mxu0 0.0
    %6501 = vmatmul.mubr.f32.gmra.mrb[0].mxu0 %v6434
    %v6502 = vpop.f32.mrb[0].mxu0
    %v6503 = vadd.f32 0.0, %v6502
    %v6504 = vpop.f32.mrb[0].mxu0
    %6505 = vdwg.mxu0
    %6506 = vmatprep.subr.mxu0 0.0
    %6507 = vmatpush1.msra.mxu0 %v3963
    %6508 = vmatprep.subr.mxu0 0.0
    %6509 = vmatpush1.msra.mxu0 0.0
    %6510 = vmatprep.subr.mxu0 0.0
    %6511 = vmatpush1.msra.mxu0 0.0
    %6512 = vmatprep.subr.mxu0 0.0
    %6513 = vmatpush1.msra.mxu0 0.0
    %6514 = vmatprep.subr.mxu0 0.0
    %6515 = vmatpush1.msra.mxu0 0.0
    %6516 = vmatprep.subr.mxu0 0.0
    %6517 = vmatpush1.msra.mxu0 0.0
    %6518 = vmatprep.subr.mxu0 0.0
    %6519 = vmatpush1.msra.mxu0 0.0
    %6520 = vmatprep.subr.mxu0 0.0
    %6521 = vmatpush1.msra.mxu0 0.0
    %6522 = vmatprep.subr.mxu0 0.0
    %6523 = vmatpush1.msra.mxu0 0.0
    %6524 = vmatprep.subr.mxu0 0.0
    %6525 = vmatpush1.msra.mxu0 0.0
    %6526 = vmatprep.subr.mxu0 0.0
    %6527 = vmatpush1.msra.mxu0 0.0
    %6528 = vmatprep.subr.mxu0 0.0
    %6529 = vmatpush1.msra.mxu0 0.0
    %6530 = vmatprep.subr.mxu0 0.0
    %6531 = vmatpush1.msra.mxu0 0.0
    %6532 = vmatprep.subr.mxu0 0.0
    %6533 = vmatpush1.msra.mxu0 0.0
    %6534 = vmatprep.subr.mxu0 0.0
    %6535 = vmatpush1.msra.mxu0 0.0
    %6536 = vmatprep.subr.mxu0 0.0
    %6537 = vmatpush1.msra.mxu0 0.0
    %6538 = vmatprep.subr.mxu0 0.0
    %6539 = vmatpush1.msra.mxu0 0.0
    %6540 = vmatprep.subr.mxu0 0.0
    %6541 = vmatpush1.msra.mxu0 0.0
    %6542 = vmatprep.subr.mxu0 0.0
    %6543 = vmatpush1.msra.mxu0 0.0
    %6544 = vmatprep.subr.mxu0 0.0
    %6545 = vmatpush1.msra.mxu0 0.0
    %6546 = vmatprep.subr.mxu0 0.0
    %6547 = vmatpush1.msra.mxu0 0.0
    %6548 = vmatprep.subr.mxu0 0.0
    %6549 = vmatpush1.msra.mxu0 0.0
    %6550 = vmatprep.subr.mxu0 0.0
    %6551 = vmatpush1.msra.mxu0 0.0
    %6552 = vmatprep.subr.mxu0 0.0
    %6553 = vmatpush1.msra.mxu0 0.0
    %6554 = vmatprep.subr.mxu0 0.0
    %6555 = vmatpush1.msra.mxu0 0.0
    %6556 = vmatprep.subr.mxu0 0.0
    %6557 = vmatpush1.msra.mxu0 0.0
    %6558 = vmatprep.subr.mxu0 0.0
    %6559 = vmatpush1.msra.mxu0 0.0
    %6560 = vmatprep.subr.mxu0 0.0
    %6561 = vmatpush1.msra.mxu0 0.0
    %6562 = vmatprep.subr.mxu0 0.0
    %6563 = vmatpush1.msra.mxu0 0.0
    %6564 = vmatprep.subr.mxu0 0.0
    %6565 = vmatpush1.msra.mxu0 0.0
    %6566 = vmatprep.subr.mxu0 0.0
    %6567 = vmatpush1.msra.mxu0 0.0
    %6568 = vmatprep.subr.mxu0 0.0
    %6569 = vmatpush1.msra.mxu0 0.0
    %6570 = vmatprep.mubr.f32.mxu0 0.0
    %6571 = vmatmul.mubr.f32.gmra.mrb[0].mxu0 %v6329
    %v6572 = vpop.f32.mrb[0].mxu0
    %v6573 = vadd.f32 0.0, %v6572
    %v6574 = vpop.f32.mrb[0].mxu0
    %6575 = vdwg.mxu0
    %6576 = vmatprep.subr.mxu0 0.0
    %6577 = vmatpush1.msra.mxu0 %v4036
    %6578 = vmatprep.subr.mxu0 0.0
    %6579 = vmatpush1.msra.mxu0 0.0
    %6580 = vmatprep.subr.mxu0 0.0
    %6581 = vmatpush1.msra.mxu0 0.0
    %6582 = vmatprep.subr.mxu0 0.0
    %6583 = vmatpush1.msra.mxu0 0.0
    %6584 = vmatprep.subr.mxu0 0.0
    %6585 = vmatpush1.msra.mxu0 0.0
    %6586 = vmatprep.subr.mxu0 0.0
    %6587 = vmatpush1.msra.mxu0 0.0
    %6588 = vmatprep.subr.mxu0 0.0
    %6589 = vmatpush1.msra.mxu0 0.0
    %6590 = vmatprep.subr.mxu0 0.0
    %6591 = vmatpush1.msra.mxu0 0.0
    %6592 = vmatprep.subr.mxu0 0.0
    %6593 = vmatpush1.msra.mxu0 0.0
    %6594 = vmatprep.subr.mxu0 0.0
    %6595 = vmatpush1.msra.mxu0 0.0
    %6596 = vmatprep.subr.mxu0 0.0
    %6597 = vmatpush1.msra.mxu0 0.0
    %6598 = vmatprep.subr.mxu0 0.0
    %6599 = vmatpush1.msra.mxu0 0.0
    %6600 = vmatprep.subr.mxu0 0.0
    %6601 = vmatpush1.msra.mxu0 0.0
    %6602 = vmatprep.subr.mxu0 0.0
    %6603 = vmatpush1.msra.mxu0 0.0
    %6604 = vmatprep.subr.mxu0 0.0
    %6605 = vmatpush1.msra.mxu0 0.0
    %6606 = vmatprep.subr.mxu0 0.0
    %6607 = vmatpush1.msra.mxu0 0.0
    %6608 = vmatprep.subr.mxu0 0.0
    %6609 = vmatpush1.msra.mxu0 0.0
    %6610 = vmatprep.subr.mxu0 0.0
    %6611 = vmatpush1.msra.mxu0 0.0
    %6612 = vmatprep.subr.mxu0 0.0
    %6613 = vmatpush1.msra.mxu0 0.0
    %6614 = vmatprep.subr.mxu0 0.0
    %6615 = vmatpush1.msra.mxu0 0.0
    %6616 = vmatprep.subr.mxu0 0.0
    %6617 = vmatpush1.msra.mxu0 0.0
    %6618 = vmatprep.subr.mxu0 0.0
    %6619 = vmatpush1.msra.mxu0 0.0
    %6620 = vmatprep.subr.mxu0 0.0
    %6621 = vmatpush1.msra.mxu0 0.0
    %6622 = vmatprep.subr.mxu0 0.0
    %6623 = vmatpush1.msra.mxu0 0.0
    %6624 = vmatprep.subr.mxu0 0.0
    %6625 = vmatpush1.msra.mxu0 0.0
    %6626 = vmatprep.subr.mxu0 0.0
    %6627 = vmatpush1.msra.mxu0 0.0
    %6628 = vmatprep.subr.mxu0 0.0
    %6629 = vmatpush1.msra.mxu0 0.0
    %6630 = vmatprep.subr.mxu0 0.0
    %6631 = vmatpush1.msra.mxu0 0.0
    %6632 = vmatprep.subr.mxu0 0.0
    %6633 = vmatpush1.msra.mxu0 0.0
    %6634 = vmatprep.subr.mxu0 0.0
    %6635 = vmatpush1.msra.mxu0 0.0
    %6636 = vmatprep.subr.mxu0 0.0
    %6637 = vmatpush1.msra.mxu0 0.0
    %6638 = vmatprep.subr.mxu0 0.0
    %6639 = vmatpush1.msra.mxu0 0.0
    %6640 = vmatprep.mubr.f32.mxu0 0.0
    %6641 = vmatmul.mubr.f32.gmra.mrb[0].mxu0 %v6434
    %v6642 = vpop.f32.mrb[0].mxu0
    %v6643 = vadd.f32 0.0, %v6642
    %v6644 = vpop.f32.mrb[0].mxu0
    %6645 = vdwg.mxu0
    %v6647 = vsel %vm3438, %v6573, 0
    %6649 = vmatprep.subr.mxu0 0.0
    %6650 = vmatpush1.msra.mxu0 %v6294
    %6651 = vmatprep.subr.mxu0 0.0
    %6652 = vmatpush1.msra.mxu0 0.0
    %6653 = vmatprep.subr.mxu0 0.0
    %6654 = vmatpush1.msra.mxu0 0.0
    %6655 = vmatprep.subr.mxu0 0.0
    %6656 = vmatpush1.msra.mxu0 0.0
    %6657 = vmatprep.subr.mxu0 0.0
    %6658 = vmatpush1.msra.mxu0 0.0
    %6659 = vmatprep.subr.mxu0 0.0
    %6660 = vmatpush1.msra.mxu0 0.0
    %6661 = vmatprep.subr.mxu0 0.0
    %6662 = vmatpush1.msra.mxu0 0.0
    %6663 = vmatprep.subr.mxu0 0.0
    %6664 = vmatpush1.msra.mxu0 0.0
    %6665 = vmatprep.subr.mxu0 0.0
    %6666 = vmatpush1.msra.mxu0 0.0
    %6667 = vmatprep.subr.mxu0 0.0
    %6668 = vmatpush1.msra.mxu0 0.0
    %6669 = vmatprep.subr.mxu0 0.0
    %6670 = vmatpush1.msra.mxu0 0.0
    %6671 = vmatprep.subr.mxu0 0.0
    %6672 = vmatpush1.msra.mxu0 0.0
    %6673 = vmatprep.subr.mxu0 0.0
    %6674 = vmatpush1.msra.mxu0 0.0
    %6675 = vmatprep.subr.mxu0 0.0
    %6676 = vmatpush1.msra.mxu0 0.0
    %6677 = vmatprep.subr.mxu0 0.0
    %6678 = vmatpush1.msra.mxu0 0.0
    %6679 = vmatprep.subr.mxu0 0.0
    %6680 = vmatpush1.msra.mxu0 0.0
    %6681 = vmatprep.subr.mxu0 0.0
    %6682 = vmatpush1.msra.mxu0 0.0
    %6683 = vmatprep.subr.mxu0 0.0
    %6684 = vmatpush1.msra.mxu0 0.0
    %6685 = vmatprep.subr.mxu0 0.0
    %6686 = vmatpush1.msra.mxu0 0.0
    %6687 = vmatprep.subr.mxu0 0.0
    %6688 = vmatpush1.msra.mxu0 0.0
    %6689 = vmatprep.subr.mxu0 0.0
    %6690 = vmatpush1.msra.mxu0 0.0
    %6691 = vmatprep.subr.mxu0 0.0
    %6692 = vmatpush1.msra.mxu0 0.0
    %6693 = vmatprep.subr.mxu0 0.0
    %6694 = vmatpush1.msra.mxu0 0.0
    %6695 = vmatprep.subr.mxu0 0.0
    %6696 = vmatpush1.msra.mxu0 0.0
    %6697 = vmatprep.subr.mxu0 0.0
    %6698 = vmatpush1.msra.mxu0 0.0
    %6699 = vmatprep.subr.mxu0 0.0
    %6700 = vmatpush1.msra.mxu0 0.0
    %6701 = vmatprep.subr.mxu0 0.0
    %6702 = vmatpush1.msra.mxu0 0.0
    %6703 = vmatprep.subr.mxu0 0.0
    %6704 = vmatpush1.msra.mxu0 0.0
    %6705 = vmatprep.subr.mxu0 0.0
    %6706 = vmatpush1.msra.mxu0 0.0
    %6707 = vmatprep.subr.mxu0 0.0
    %6708 = vmatpush1.msra.mxu0 0.0
    %6709 = vmatprep.subr.mxu0 0.0
    %6710 = vmatpush1.msra.mxu0 0.0
    %6711 = vmatprep.subr.mxu0 0.0
    %6712 = vmatpush1.msra.mxu0 0.0
    %6713 = vmatprep.mubr.f32.mxu0 0.0
    %6714 = vmatmul.mubr.f32.gmra.mrb[0].mxu0 %v6647
    %v6715 = vpop.f32.mrb[0].mxu0
    %v6716 = vadd.f32 0.0, %v6715
    %v6717 = vpop.f32.mrb[0].mxu0
    %6718 = vdwg.mxu0
    %v6720 = vsel %vm3438, %v6643, 0
    %6722 = vmatprep.subr.mxu0 0.0
    %6723 = vmatpush1.msra.mxu0 %v6295
    %6724 = vmatprep.subr.mxu0 0.0
    %6725 = vmatpush1.msra.mxu0 0.0
    %6726 = vmatprep.subr.mxu0 0.0
    %6727 = vmatpush1.msra.mxu0 0.0
    %6728 = vmatprep.subr.mxu0 0.0
    %6729 = vmatpush1.msra.mxu0 0.0
    %6730 = vmatprep.subr.mxu0 0.0
    %6731 = vmatpush1.msra.mxu0 0.0
    %6732 = vmatprep.subr.mxu0 0.0
    %6733 = vmatpush1.msra.mxu0 0.0
    %6734 = vmatprep.subr.mxu0 0.0
    %6735 = vmatpush1.msra.mxu0 0.0
    %6736 = vmatprep.subr.mxu0 0.0
    %6737 = vmatpush1.msra.mxu0 0.0
    %6738 = vmatprep.subr.mxu0 0.0
    %6739 = vmatpush1.msra.mxu0 0.0
    %6740 = vmatprep.subr.mxu0 0.0
    %6741 = vmatpush1.msra.mxu0 0.0
    %6742 = vmatprep.subr.mxu0 0.0
    %6743 = vmatpush1.msra.mxu0 0.0
    %6744 = vmatprep.subr.mxu0 0.0
    %6745 = vmatpush1.msra.mxu0 0.0
    %6746 = vmatprep.subr.mxu0 0.0
    %6747 = vmatpush1.msra.mxu0 0.0
    %6748 = vmatprep.subr.mxu0 0.0
    %6749 = vmatpush1.msra.mxu0 0.0
    %6750 = vmatprep.subr.mxu0 0.0
    %6751 = vmatpush1.msra.mxu0 0.0
    %6752 = vmatprep.subr.mxu0 0.0
    %6753 = vmatpush1.msra.mxu0 0.0
    %6754 = vmatprep.subr.mxu0 0.0
    %6755 = vmatpush1.msra.mxu0 0.0
    %6756 = vmatprep.subr.mxu0 0.0
    %6757 = vmatpush1.msra.mxu0 0.0
    %6758 = vmatprep.subr.mxu0 0.0
    %6759 = vmatpush1.msra.mxu0 0.0
    %6760 = vmatprep.subr.mxu0 0.0
    %6761 = vmatpush1.msra.mxu0 0.0
    %6762 = vmatprep.subr.mxu0 0.0
    %6763 = vmatpush1.msra.mxu0 0.0
    %6764 = vmatprep.subr.mxu0 0.0
    %6765 = vmatpush1.msra.mxu0 0.0
    %6766 = vmatprep.subr.mxu0 0.0
    %6767 = vmatpush1.msra.mxu0 0.0
    %6768 = vmatprep.subr.mxu0 0.0
    %6769 = vmatpush1.msra.mxu0 0.0
    %6770 = vmatprep.subr.mxu0 0.0
    %6771 = vmatpush1.msra.mxu0 0.0
    %6772 = vmatprep.subr.mxu0 0.0
    %6773 = vmatpush1.msra.mxu0 0.0
    %6774 = vmatprep.subr.mxu0 0.0
    %6775 = vmatpush1.msra.mxu0 0.0
    %6776 = vmatprep.subr.mxu0 0.0
    %6777 = vmatpush1.msra.mxu0 0.0
    %6778 = vmatprep.subr.mxu0 0.0
    %6779 = vmatpush1.msra.mxu0 0.0
    %6780 = vmatprep.subr.mxu0 0.0
    %6781 = vmatpush1.msra.mxu0 0.0
    %6782 = vmatprep.subr.mxu0 0.0
    %6783 = vmatpush1.msra.mxu0 0.0
    %6784 = vmatprep.subr.mxu0 0.0
    %6785 = vmatpush1.msra.mxu0 0.0
    %6786 = vmatprep.mubr.f32.mxu0 0.0
    %6787 = vmatmul.mubr.f32.gmra.mrb[0].mxu0 %v6720
    %v6788 = vpop.f32.mrb[0].mxu0
    %v6789 = vadd.f32 0.0, %v6788
    %v6790 = vpop.f32.mrb[0].mxu0
    %6791 = vdwg.mxu0
    %v6793 = vsel %vm6273, %v6716, 0
    %vm6795 = vcmask 1041408
    %v6797 = vsel %vm6795, %v6398, 0
    %6799 = vmatprep.subr.mxu0 0.0
    %6800 = vmatpush1.msra.mxu0 %v6797
    %6801 = vmatprep.subr.mxu0 0.0
    %6802 = vmatpush1.msra.mxu0 0.0
    %6803 = vmatprep.subr.mxu0 0.0
    %6804 = vmatpush1.msra.mxu0 0.0
    %6805 = vmatprep.subr.mxu0 0.0
    %6806 = vmatpush1.msra.mxu0 0.0
    %6807 = vmatprep.subr.mxu0 0.0
    %6808 = vmatpush1.msra.mxu0 0.0
    %6809 = vmatprep.subr.mxu0 0.0
    %6810 = vmatpush1.msra.mxu0 0.0
    %6811 = vmatprep.subr.mxu0 0.0
    %6812 = vmatpush1.msra.mxu0 0.0
    %6813 = vmatprep.subr.mxu0 0.0
    %6814 = vmatpush1.msra.mxu0 0.0
    %6815 = vmatprep.subr.mxu0 0.0
    %6816 = vmatpush1.msra.mxu0 0.0
    %6817 = vmatprep.subr.mxu0 0.0
    %6818 = vmatpush1.msra.mxu0 0.0
    %6819 = vmatprep.subr.mxu0 0.0
    %6820 = vmatpush1.msra.mxu0 0.0
    %6821 = vmatprep.subr.mxu0 0.0
    %6822 = vmatpush1.msra.mxu0 0.0
    %6823 = vmatprep.subr.mxu0 0.0
    %6824 = vmatpush1.msra.mxu0 0.0
    %6825 = vmatprep.subr.mxu0 0.0
    %6826 = vmatpush1.msra.mxu0 0.0
    %6827 = vmatprep.subr.mxu0 0.0
    %6828 = vmatpush1.msra.mxu0 0.0
    %6829 = vmatprep.subr.mxu0 0.0
    %6830 = vmatpush1.msra.mxu0 0.0
    %6831 = vmatprep.subr.mxu0 0.0
    %6832 = vmatpush1.msra.mxu0 0.0
    %6833 = vmatprep.subr.mxu0 0.0
    %6834 = vmatpush1.msra.mxu0 0.0
    %6835 = vmatprep.subr.mxu0 0.0
    %6836 = vmatpush1.msra.mxu0 0.0
    %6837 = vmatprep.subr.mxu0 0.0
    %6838 = vmatpush1.msra.mxu0 0.0
    %6839 = vmatprep.subr.mxu0 0.0
    %6840 = vmatpush1.msra.mxu0 0.0
    %6841 = vmatprep.subr.mxu0 0.0
    %6842 = vmatpush1.msra.mxu0 0.0
    %6843 = vmatprep.subr.mxu0 0.0
    %6844 = vmatpush1.msra.mxu0 0.0
    %6845 = vmatprep.subr.mxu0 0.0
    %6846 = vmatpush1.msra.mxu0 0.0
    %6847 = vmatprep.subr.mxu0 0.0
    %6848 = vmatpush1.msra.mxu0 0.0
    %6849 = vmatprep.subr.mxu0 0.0
    %6850 = vmatpush1.msra.mxu0 0.0
    %6851 = vmatprep.subr.mxu0 0.0
    %6852 = vmatpush1.msra.mxu0 0.0
    %6853 = vmatprep.subr.mxu0 0.0
    %6854 = vmatpush1.msra.mxu0 0.0
    %6855 = vmatprep.subr.mxu0 0.0
    %6856 = vmatpush1.msra.mxu0 0.0
    %6857 = vmatprep.subr.mxu0 0.0
    %6858 = vmatpush1.msra.mxu0 0.0
    %6859 = vmatprep.subr.mxu0 0.0
    %6860 = vmatpush1.msra.mxu0 0.0
    %6861 = vmatprep.subr.mxu0 0.0
    %6862 = vmatpush1.msra.mxu0 0.0
    %6863 = vmatprep.mubr.f32.mxu0 0.0
    %6864 = vmatmul.mubr.f32.gmra.mrb[0].mxu0 %v6793
    %v6865 = vpop.f32.mrb[0].mxu0
    %v6866 = vadd.f32 0.0, %v6865
    %v6867 = vpop.f32.mrb[0].mxu0
    %6868 = vdwg.mxu0
    %v6870 = vsel %vm6273, %v6789, 0
    %v6873 = vsel %vm6795, %v6503, 0
    %6875 = vmatprep.subr.mxu0 0.0
    %6876 = vmatpush1.msra.mxu0 %v6873
    %6877 = vmatprep.subr.mxu0 0.0
    %6878 = vmatpush1.msra.mxu0 0.0
    %6879 = vmatprep.subr.mxu0 0.0
    %6880 = vmatpush1.msra.mxu0 0.0
    %6881 = vmatprep.subr.mxu0 0.0
    %6882 = vmatpush1.msra.mxu0 0.0
    %6883 = vmatprep.subr.mxu0 0.0
    %6884 = vmatpush1.msra.mxu0 0.0
    %6885 = vmatprep.subr.mxu0 0.0
    %6886 = vmatpush1.msra.mxu0 0.0
    %6887 = vmatprep.subr.mxu0 0.0
    %6888 = vmatpush1.msra.mxu0 0.0
    %6889 = vmatprep.subr.mxu0 0.0
    %6890 = vmatpush1.msra.mxu0 0.0
    %6891 = vmatprep.subr.mxu0 0.0
    %6892 = vmatpush1.msra.mxu0 0.0
    %6893 = vmatprep.subr.mxu0 0.0
    %6894 = vmatpush1.msra.mxu0 0.0
    %6895 = vmatprep.subr.mxu0 0.0
    %6896 = vmatpush1.msra.mxu0 0.0
    %6897 = vmatprep.subr.mxu0 0.0
    %6898 = vmatpush1.msra.mxu0 0.0
    %6899 = vmatprep.subr.mxu0 0.0
    %6900 = vmatpush1.msra.mxu0 0.0
    %6901 = vmatprep.subr.mxu0 0.0
    %6902 = vmatpush1.msra.mxu0 0.0
    %6903 = vmatprep.subr.mxu0 0.0
    %6904 = vmatpush1.msra.mxu0 0.0
    %6905 = vmatprep.subr.mxu0 0.0
    %6906 = vmatpush1.msra.mxu0 0.0
    %6907 = vmatprep.subr.mxu0 0.0
    %6908 = vmatpush1.msra.mxu0 0.0
    %6909 = vmatprep.subr.mxu0 0.0
    %6910 = vmatpush1.msra.mxu0 0.0
    %6911 = vmatprep.subr.mxu0 0.0
    %6912 = vmatpush1.msra.mxu0 0.0
    %6913 = vmatprep.subr.mxu0 0.0
    %6914 = vmatpush1.msra.mxu0 0.0
    %6915 = vmatprep.subr.mxu0 0.0
    %6916 = vmatpush1.msra.mxu0 0.0
    %6917 = vmatprep.subr.mxu0 0.0
    %6918 = vmatpush1.msra.mxu0 0.0
    %6919 = vmatprep.subr.mxu0 0.0
    %6920 = vmatpush1.msra.mxu0 0.0
    %6921 = vmatprep.subr.mxu0 0.0
    %6922 = vmatpush1.msra.mxu0 0.0
    %6923 = vmatprep.subr.mxu0 0.0
    %6924 = vmatpush1.msra.mxu0 0.0
    %6925 = vmatprep.subr.mxu0 0.0
    %6926 = vmatpush1.msra.mxu0 0.0
    %6927 = vmatprep.subr.mxu0 0.0
    %6928 = vmatpush1.msra.mxu0 0.0
    %6929 = vmatprep.subr.mxu0 0.0
    %6930 = vmatpush1.msra.mxu0 0.0
    %6931 = vmatprep.subr.mxu0 0.0
    %6932 = vmatpush1.msra.mxu0 0.0
    %6933 = vmatprep.subr.mxu0 0.0
    %6934 = vmatpush1.msra.mxu0 0.0
    %6935 = vmatprep.subr.mxu0 0.0
    %6936 = vmatpush1.msra.mxu0 0.0
    %6937 = vmatprep.subr.mxu0 0.0
    %6938 = vmatpush1.msra.mxu0 0.0
    %6939 = vmatprep.mubr.f32.mxu0 0.0
    %6940 = vmatmul.mubr.f32.gmra.mrb[0].mxu0 %v6870
    %v6941 = vpop.f32.mrb[0].mxu0
    %v6942 = vadd.f32 0.0, %v6941
    %v6943 = vpop.f32.mrb[0].mxu0
    %6944 = vdwg.mxu0
    %vm6945 = vcmask 9216
    %v6946 = vsel %vm6945, %v6716, 0.0
    %6947 = vadd.xlane.f32.xlu0 %v6946
    %v6948 = vpop.xlane.xlu0 %6947
    %v6949 = vsel %vm6945, %v6789, 0.0
    %6950 = vadd.xlane.f32.xlu0 %v6949
    %v6951 = vpop.xlane.xlu0 %6950
    %v6952 = vmax.f32 %v6948, 1.0
    %v6953 = vmax.f32 %v6951, 1.0
    %v6954 = vrcp.pop %v6952
    %v6955 = vrcp.pop %v6953
    %v6956 = vmul.f32 %v6866, %v6954
    %v6957 = vmul.f32 %v6942, %v6955
    %s6958 = scalar_lea.vmem [#allocation8], 3328
    %v6959 = vld [vmem:[%s6958] sm:$0xff]
    %v6960 = vld [vmem:[%s6958 + $0x8] sm:$0xff]
    %v6961 = vld [vmem:[%s6958 + $0x10] sm:$0xff]
    %v6962 = vld [vmem:[%s6958 + $0x18] sm:$0xff]
    %v6963 = vld [vmem:[%s6958 + $0x20] sm:$0xff]
    %v6964 = vld [vmem:[%s6958 + $0x28] sm:$0xff]
    %v6965 = vld [vmem:[%s6958 + $0x30] sm:$0xff]
    %v6966 = vld [vmem:[%s6958 + $0x38] sm:$0xff]
    %v6967 = vld [vmem:[%s6958 + $0x40] sm:$0xff]
    %v6968 = vld [vmem:[%s6958 + $0x48] sm:$0xff]
    %v6969 = vld [vmem:[%s6958 + $0x50] sm:$0xff]
    %v6970 = vld [vmem:[%s6958 + $0x58] sm:$0xff]
    %v6971 = vld [vmem:[%s6958 + $0x60] sm:$0xff]
    %v6972 = vld [vmem:[%s6958 + $0x68] sm:$0xff]
    %v6973 = vld [vmem:[%s6958 + $0x70] sm:$0xff]
    %v6974 = vld [vmem:[%s6958 + $0x78] sm:$0xff]
    %v6977 = vcombine.low %v6956, %v6957
    %v6979 = vunpack.c.l.s4 1983009808
    %v6980 = vunpack.c.0.s8 %v6979
    %v6981 = vlaneseq
    %v6982 = vshrl.u32 %v6981, 7
    %v6983 = vsub.s32 %v6980, %v6982
    %v6984 = vrot.slane %v6977, %v6983
    %6986 = vmatprep.subr.mxu0 0.0
    %6987 = vmatpush1.msra.mxu0 %v6959
    %6988 = vmatprep.subr.mxu0 0.0
    %6989 = vmatpush1.msra.mxu0 %v6960
    %6990 = vmatprep.subr.mxu0 0.0
    %6991 = vmatpush1.msra.mxu0 %v6961
    %6992 = vmatprep.subr.mxu0 0.0
    %6993 = vmatpush1.msra.mxu0 %v6962
    %6994 = vmatprep.subr.mxu0 0.0
    %6995 = vmatpush1.msra.mxu0 %v6963
    %6996 = vmatprep.subr.mxu0 0.0
    %6997 = vmatpush1.msra.mxu0 %v6964
    %6998 = vmatprep.subr.mxu0 0.0
    %6999 = vmatpush1.msra.mxu0 %v6965
    %7000 = vmatprep.subr.mxu0 0.0
    %7001 = vmatpush1.msra.mxu0 %v6966
    %7002 = vmatprep.subr.mxu0 0.0
    %7003 = vmatpush1.msra.mxu0 %v6967
    %7004 = vmatprep.subr.mxu0 0.0
    %7005 = vmatpush1.msra.mxu0 %v6968
    %7006 = vmatprep.subr.mxu0 0.0
    %7007 = vmatpush1.msra.mxu0 %v6969
    %7008 = vmatprep.subr.mxu0 0.0
    %7009 = vmatpush1.msra.mxu0 %v6970
    %7010 = vmatprep.subr.mxu0 0.0
    %7011 = vmatpush1.msra.mxu0 %v6971
    %7012 = vmatprep.subr.mxu0 0.0
    %7013 = vmatpush1.msra.mxu0 %v6972
    %7014 = vmatprep.subr.mxu0 0.0
    %7015 = vmatpush1.msra.mxu0 %v6973
    %7016 = vmatprep.subr.mxu0 0.0
    %7017 = vmatpush1.msra.mxu0 %v6974
    %7018 = vmatprep.subr.mxu0 0.0
    %7019 = vmatpush1.msra.mxu0 0.0
    %7020 = vmatprep.subr.mxu0 0.0
    %7021 = vmatpush1.msra.mxu0 0.0
    %7022 = vmatprep.subr.mxu0 0.0
    %7023 = vmatpush1.msra.mxu0 0.0
    %7024 = vmatprep.subr.mxu0 0.0
    %7025 = vmatpush1.msra.mxu0 0.0
    %7026 = vmatprep.subr.mxu0 0.0
    %7027 = vmatpush1.msra.mxu0 0.0
    %7028 = vmatprep.subr.mxu0 0.0
    %7029 = vmatpush1.msra.mxu0 0.0
    %7030 = vmatprep.subr.mxu0 0.0
    %7031 = vmatpush1.msra.mxu0 0.0
    %7032 = vmatprep.subr.mxu0 0.0
    %7033 = vmatpush1.msra.mxu0 0.0
    %7034 = vmatprep.subr.mxu0 0.0
    %7035 = vmatpush1.msra.mxu0 0.0
    %7036 = vmatprep.subr.mxu0 0.0
    %7037 = vmatpush1.msra.mxu0 0.0
    %7038 = vmatprep.subr.mxu0 0.0
    %7039 = vmatpush1.msra.mxu0 0.0
    %7040 = vmatprep.subr.mxu0 0.0
    %7041 = vmatpush1.msra.mxu0 0.0
    %7042 = vmatprep.subr.mxu0 0.0
    %7043 = vmatpush1.msra.mxu0 0.0
    %7044 = vmatprep.subr.mxu0 0.0
    %7045 = vmatpush1.msra.mxu0 0.0
    %7046 = vmatprep.subr.mxu0 0.0
    %7047 = vmatpush1.msra.mxu0 0.0
    %7048 = vmatprep.subr.mxu0 0.0
    %7049 = vmatpush1.msra.mxu0 0.0
    %7050 = vmatprep.mubr.f32.mxu0 0.0
    %7051 = vmatmul.mubr.f32.gmra.mrb[0].mxu0 %v6984
    %v7052 = vpop.f32.mrb[0].mxu0
    %v7053 = vadd.f32 0.0, %v7052
    %v7054 = vpop.f32.mrb[0].mxu0
    %7055 = vdwg.mxu0
    %v7058 = vunpack.c.l.s4 1983009808
    %v7059 = vunpack.c.0.s8 %v7058
    %v7060 = vlaneseq
    %v7061 = vshrl.u32 %v7060, 7
    %v7062 = vsub.s32 %v7059, %v7061
    %v7063 = vrot.slane %v7053, %v7062
    %v7064 = vcombine.high %v7063, %v7063
    %s7067 = scalar_lea.vmem [#allocation8], 3456
    %v7068 = vld [vmem:[%s7067] sm:$0xff]
    %v7069 = vld [vmem:[%s7067 + $0x8] sm:$0xff]
    %v7070 = vld [vmem:[%s7067 + $0x10] sm:$0xff]
    %v7071 = vld [vmem:[%s7067 + $0x18] sm:$0xff]
    %v7072 = vld [vmem:[%s7067 + $0x20] sm:$0xff]
    %v7073 = vld [vmem:[%s7067 + $0x28] sm:$0xff]
    %v7074 = vld [vmem:[%s7067 + $0x30] sm:$0xff]
    %v7075 = vld [vmem:[%s7067 + $0x38] sm:$0xff]
    %v7076 = vld [vmem:[%s7067 + $0x40] sm:$0xff]
    %v7077 = vld [vmem:[%s7067 + $0x48] sm:$0xff]
    %v7078 = vld [vmem:[%s7067 + $0x50] sm:$0xff]
    %v7079 = vld [vmem:[%s7067 + $0x58] sm:$0xff]
    %v7080 = vld [vmem:[%s7067 + $0x60] sm:$0xff]
    %v7081 = vld [vmem:[%s7067 + $0x68] sm:$0xff]
    %v7082 = vld [vmem:[%s7067 + $0x70] sm:$0xff]
    %v7083 = vld [vmem:[%s7067 + $0x78] sm:$0xff]
    %v7084 = vcombine.low %v6398, %v6503
    %v7086 = vunpack.c.l.s4 1983009808
    %v7087 = vunpack.c.0.s8 %v7086
    %v7088 = vlaneseq
    %v7089 = vshrl.u32 %v7088, 7
    %v7090 = vsub.s32 %v7087, %v7089
    %v7091 = vrot.slane %v7084, %v7090
    %7093 = vmatprep.subr.mxu0 0.0
    %7094 = vmatpush1.msra.mxu0 %v7068
    %7095 = vmatprep.subr.mxu0 0.0
    %7096 = vmatpush1.msra.mxu0 %v7069
    %7097 = vmatprep.subr.mxu0 0.0
    %7098 = vmatpush1.msra.mxu0 %v7070
    %7099 = vmatprep.subr.mxu0 0.0
    %7100 = vmatpush1.msra.mxu0 %v7071
    %7101 = vmatprep.subr.mxu0 0.0
    %7102 = vmatpush1.msra.mxu0 %v7072
    %7103 = vmatprep.subr.mxu0 0.0
    %7104 = vmatpush1.msra.mxu0 %v7073
    %7105 = vmatprep.subr.mxu0 0.0
    %7106 = vmatpush1.msra.mxu0 %v7074
    %7107 = vmatprep.subr.mxu0 0.0
    %7108 = vmatpush1.msra.mxu0 %v7075
    %7109 = vmatprep.subr.mxu0 0.0
    %7110 = vmatpush1.msra.mxu0 %v7076
    %7111 = vmatprep.subr.mxu0 0.0
    %7112 = vmatpush1.msra.mxu0 %v7077
    %7113 = vmatprep.subr.mxu0 0.0
    %7114 = vmatpush1.msra.mxu0 %v7078
    %7115 = vmatprep.subr.mxu0 0.0
    %7116 = vmatpush1.msra.mxu0 %v7079
    %7117 = vmatprep.subr.mxu0 0.0
    %7118 = vmatpush1.msra.mxu0 %v7080
    %7119 = vmatprep.subr.mxu0 0.0
    %7120 = vmatpush1.msra.mxu0 %v7081
    %7121 = vmatprep.subr.mxu0 0.0
    %7122 = vmatpush1.msra.mxu0 %v7082
    %7123 = vmatprep.subr.mxu0 0.0
    %7124 = vmatpush1.msra.mxu0 %v7083
    %7125 = vmatprep.subr.mxu0 0.0
    %7126 = vmatpush1.msra.mxu0 0.0
    %7127 = vmatprep.subr.mxu0 0.0
    %7128 = vmatpush1.msra.mxu0 0.0
    %7129 = vmatprep.subr.mxu0 0.0
    %7130 = vmatpush1.msra.mxu0 0.0
    %7131 = vmatprep.subr.mxu0 0.0
    %7132 = vmatpush1.msra.mxu0 0.0
    %7133 = vmatprep.subr.mxu0 0.0
    %7134 = vmatpush1.msra.mxu0 0.0
    %7135 = vmatprep.subr.mxu0 0.0
    %7136 = vmatpush1.msra.mxu0 0.0
    %7137 = vmatprep.subr.mxu0 0.0
    %7138 = vmatpush1.msra.mxu0 0.0
    %7139 = vmatprep.subr.mxu0 0.0
    %7140 = vmatpush1.msra.mxu0 0.0
    %7141 = vmatprep.subr.mxu0 0.0
    %7142 = vmatpush1.msra.mxu0 0.0
    %7143 = vmatprep.subr.mxu0 0.0
    %7144 = vmatpush1.msra.mxu0 0.0
    %7145 = vmatprep.subr.mxu0 0.0
    %7146 = vmatpush1.msra.mxu0 0.0
    %7147 = vmatprep.subr.mxu0 0.0
    %7148 = vmatpush1.msra.mxu0 0.0
    %7149 = vmatprep.subr.mxu0 0.0
    %7150 = vmatpush1.msra.mxu0 0.0
    %7151 = vmatprep.subr.mxu0 0.0
    %7152 = vmatpush1.msra.mxu0 0.0
    %7153 = vmatprep.subr.mxu0 0.0
    %7154 = vmatpush1.msra.mxu0 0.0
    %7155 = vmatprep.subr.mxu0 0.0
    %7156 = vmatpush1.msra.mxu0 0.0
    %7157 = vmatprep.mubr.f32.mxu0 0.0
    %7158 = vmatmul.mubr.f32.gmra.mrb[0].mxu0 %v7091
    %v7159 = vpop.f32.mrb[0].mxu0
    %v7160 = vadd.f32 0.0, %v7159
    %v7161 = vpop.f32.mrb[0].mxu0
    %7162 = vdwg.mxu0
    %v7165 = vunpack.c.l.s4 1983009808
    %v7166 = vunpack.c.0.s8 %v7165
    %v7167 = vlaneseq
    %v7168 = vshrl.u32 %v7167, 7
    %v7169 = vsub.s32 %v7166, %v7168
    %v7170 = vrot.slane %v7160, %v7169
    %v7171 = vcombine.high %v7170, %v7170
    %v7174 = vadd.f32 %v7063, %v7170
    %v7175 = vadd.f32 %v7064, %v7171
    %v7176 = vld [vmem:[#allocation10 + $0x26] sm:$0x1]
    %v7177 = vlaneseq
    %v7178 = vshrl.u32 %v7177, 7
    %v7179 = vsub.s32 0, %v7178
    %v7180 = vrot.slane %v7176, %v7179
    %v7181 = vadd.f32 %v7174, %v7180
    %v7182 = vadd.f32 %v7175, %v7180
    %v7183 = vmax.f32 %v7181, 0.0
    %v7184 = vmax.f32 %v7182, 0.0
    %v7185 = vsel %vm6795, %v7183, 0.0
    %v7186 = vsel %vm6795, %v7184, 0.0
    %v7187 = vadd.f32 %v7185, %v7186
    %v7188 = vrot.slane %v7187, 4
    %v7189 = vadd.f32 %v7187, %v7188
    %v7190 = vrot.slane %v7189, 2
    %v7191 = vadd.f32 %v7189, %v7190
    %v7192 = vrot.slane %v7191, 1
    %v7193 = vadd.f32 %v7191, %v7192
    %v7194 = vrcp.pop 4.0
    %v7195 = vmul.f32 %v7193, %v7194
    %v7196 = vsub.f32 %v7183, %v7195
    %v7197 = vsub.f32 %v7184, %v7195
    %v7198 = vmul.f32 %v7196, %v7196
    %v7199 = vmul.f32 %v7197, %v7197
    %v7200 = vsel %vm6795, %v7198, 0.0
    %v7201 = vsel %vm6795, %v7199, 0.0
    %v7202 = vadd.f32 %v7200, %v7201
    %v7203 = vrot.slane %v7202, 4
    %v7204 = vadd.f32 %v7202, %v7203
    %v7205 = vrot.slane %v7204, 2
    %v7206 = vadd.f32 %v7204, %v7205
    %v7207 = vrot.slane %v7206, 1
    %v7208 = vadd.f32 %v7206, %v7207
    %v7209 = vmul.f32 %v7208, %v7194
    %v7210 = vadd.f32 %v7209, 1e-05
    %v7211 = vrsqrt.pop %v7210
    %v7212 = vmul.f32 %v7196, %v7211
    %v7213 = vmul.f32 %v7197, %v7211
    %v7214 = vld [vmem:[#allocation10 + $0x27] sm:$0x1]
    %v7215 = vlaneseq
    %v7216 = vshrl.u32 %v7215, 7
    %v7217 = vsub.s32 0, %v7216
    %v7218 = vrot.slane %v7214, %v7217
    %v7219 = vmul.f32 %v7212, %v7218
    %v7220 = vmul.f32 %v7213, %v7218
    %v7221 = vld [vmem:[#allocation10 + $0x28] sm:$0x1]
    %v7222 = vlaneseq
    %v7223 = vshrl.u32 %v7222, 7
    %v7224 = vsub.s32 0, %v7223
    %v7225 = vrot.slane %v7221, %v7224
    %v7226 = vadd.f32 %v7219, %v7225
    %v7227 = vadd.f32 %v7220, %v7225
    %v7229 = vsel %vm6795, %v7226, 0
    %7231 = vmatprep.subr.mxu0 0.0
    %7232 = vmatpush1.msra.mxu0 %v7229
    %7233 = vmatprep.subr.mxu0 0.0
    %7234 = vmatpush1.msra.mxu0 0.0
    %7235 = vmatprep.subr.mxu0 0.0
    %7236 = vmatpush1.msra.mxu0 0.0
    %7237 = vmatprep.subr.mxu0 0.0
    %7238 = vmatpush1.msra.mxu0 0.0
    %7239 = vmatprep.subr.mxu0 0.0
    %7240 = vmatpush1.msra.mxu0 0.0
    %7241 = vmatprep.subr.mxu0 0.0
    %7242 = vmatpush1.msra.mxu0 0.0
    %7243 = vmatprep.subr.mxu0 0.0
    %7244 = vmatpush1.msra.mxu0 0.0
    %7245 = vmatprep.subr.mxu0 0.0
    %7246 = vmatpush1.msra.mxu0 0.0
    %7247 = vmatprep.subr.mxu0 0.0
    %7248 = vmatpush1.msra.mxu0 0.0
    %7249 = vmatprep.subr.mxu0 0.0
    %7250 = vmatpush1.msra.mxu0 0.0
    %7251 = vmatprep.subr.mxu0 0.0
    %7252 = vmatpush1.msra.mxu0 0.0
    %7253 = vmatprep.subr.mxu0 0.0
    %7254 = vmatpush1.msra.mxu0 0.0
    %7255 = vmatprep.subr.mxu0 0.0
    %7256 = vmatpush1.msra.mxu0 0.0
    %7257 = vmatprep.subr.mxu0 0.0
    %7258 = vmatpush1.msra.mxu0 0.0
    %7259 = vmatprep.subr.mxu0 0.0
    %7260 = vmatpush1.msra.mxu0 0.0
    %7261 = vmatprep.subr.mxu0 0.0
    %7262 = vmatpush1.msra.mxu0 0.0
    %7263 = vmatprep.subr.mxu0 0.0
    %7264 = vmatpush1.msra.mxu0 0.0
    %7265 = vmatprep.subr.mxu0 0.0
    %7266 = vmatpush1.msra.mxu0 0.0
    %7267 = vmatprep.subr.mxu0 0.0
    %7268 = vmatpush1.msra.mxu0 0.0
    %7269 = vmatprep.subr.mxu0 0.0
    %7270 = vmatpush1.msra.mxu0 0.0
    %7271 = vmatprep.subr.mxu0 0.0
    %7272 = vmatpush1.msra.mxu0 0.0
    %7273 = vmatprep.subr.mxu0 0.0
    %7274 = vmatpush1.msra.mxu0 0.0
    %7275 = vmatprep.subr.mxu0 0.0
    %7276 = vmatpush1.msra.mxu0 0.0
    %7277 = vmatprep.subr.mxu0 0.0
    %7278 = vmatpush1.msra.mxu0 0.0
    %7279 = vmatprep.subr.mxu0 0.0
    %7280 = vmatpush1.msra.mxu0 0.0
    %7281 = vmatprep.subr.mxu0 0.0
    %7282 = vmatpush1.msra.mxu0 0.0
    %7283 = vmatprep.subr.mxu0 0.0
    %7284 = vmatpush1.msra.mxu0 0.0
    %7285 = vmatprep.subr.mxu0 0.0
    %7286 = vmatpush1.msra.mxu0 0.0
    %7287 = vmatprep.subr.mxu0 0.0
    %7288 = vmatpush1.msra.mxu0 0.0
    %7289 = vmatprep.subr.mxu0 0.0
    %7290 = vmatpush1.msra.mxu0 0.0
    %7291 = vmatprep.subr.mxu0 0.0
    %7292 = vmatpush1.msra.mxu0 0.0
    %7293 = vmatprep.subr.mxu0 0.0
    %7294 = vmatpush1.msra.mxu0 0.0
    %7295 = vmatprep.mubr.f32.mxu0 0.0
    %7296 = vmatmul.mubr.f32.gmra.mrb[0].mxu0 %v6793
    %v7297 = vpop.f32.mrb[0].mxu0
    %v7298 = vadd.f32 0.0, %v7297
    %v7299 = vpop.f32.mrb[0].mxu0
    %7300 = vdwg.mxu0
    %v7302 = vsel %vm6795, %v7227, 0
    %7304 = vmatprep.subr.mxu0 0.0
    %7305 = vmatpush1.msra.mxu0 %v7302
    %7306 = vmatprep.subr.mxu0 0.0
    %7307 = vmatpush1.msra.mxu0 0.0
    %7308 = vmatprep.subr.mxu0 0.0
    %7309 = vmatpush1.msra.mxu0 0.0
    %7310 = vmatprep.subr.mxu0 0.0
    %7311 = vmatpush1.msra.mxu0 0.0
    %7312 = vmatprep.subr.mxu0 0.0
    %7313 = vmatpush1.msra.mxu0 0.0
    %7314 = vmatprep.subr.mxu0 0.0
    %7315 = vmatpush1.msra.mxu0 0.0
    %7316 = vmatprep.subr.mxu0 0.0
    %7317 = vmatpush1.msra.mxu0 0.0
    %7318 = vmatprep.subr.mxu0 0.0
    %7319 = vmatpush1.msra.mxu0 0.0
    %7320 = vmatprep.subr.mxu0 0.0
    %7321 = vmatpush1.msra.mxu0 0.0
    %7322 = vmatprep.subr.mxu0 0.0
    %7323 = vmatpush1.msra.mxu0 0.0
    %7324 = vmatprep.subr.mxu0 0.0
    %7325 = vmatpush1.msra.mxu0 0.0
    %7326 = vmatprep.subr.mxu0 0.0
    %7327 = vmatpush1.msra.mxu0 0.0
    %7328 = vmatprep.subr.mxu0 0.0
    %7329 = vmatpush1.msra.mxu0 0.0
    %7330 = vmatprep.subr.mxu0 0.0
    %7331 = vmatpush1.msra.mxu0 0.0
    %7332 = vmatprep.subr.mxu0 0.0
    %7333 = vmatpush1.msra.mxu0 0.0
    %7334 = vmatprep.subr.mxu0 0.0
    %7335 = vmatpush1.msra.mxu0 0.0
    %7336 = vmatprep.subr.mxu0 0.0
    %7337 = vmatpush1.msra.mxu0 0.0
    %7338 = vmatprep.subr.mxu0 0.0
    %7339 = vmatpush1.msra.mxu0 0.0
    %7340 = vmatprep.subr.mxu0 0.0
    %7341 = vmatpush1.msra.mxu0 0.0
    %7342 = vmatprep.subr.mxu0 0.0
    %7343 = vmatpush1.msra.mxu0 0.0
    %7344 = vmatprep.subr.mxu0 0.0
    %7345 = vmatpush1.msra.mxu0 0.0
    %7346 = vmatprep.subr.mxu0 0.0
    %7347 = vmatpush1.msra.mxu0 0.0
    %7348 = vmatprep.subr.mxu0 0.0
    %7349 = vmatpush1.msra.mxu0 0.0
    %7350 = vmatprep.subr.mxu0 0.0
    %7351 = vmatpush1.msra.mxu0 0.0
    %7352 = vmatprep.subr.mxu0 0.0
    %7353 = vmatpush1.msra.mxu0 0.0
    %7354 = vmatprep.subr.mxu0 0.0
    %7355 = vmatpush1.msra.mxu0 0.0
    %7356 = vmatprep.subr.mxu0 0.0
    %7357 = vmatpush1.msra.mxu0 0.0
    %7358 = vmatprep.subr.mxu0 0.0
    %7359 = vmatpush1.msra.mxu0 0.0
    %7360 = vmatprep.subr.mxu0 0.0
    %7361 = vmatpush1.msra.mxu0 0.0
    %7362 = vmatprep.subr.mxu0 0.0
    %7363 = vmatpush1.msra.mxu0 0.0
    %7364 = vmatprep.subr.mxu0 0.0
    %7365 = vmatpush1.msra.mxu0 0.0
    %7366 = vmatprep.subr.mxu0 0.0
    %7367 = vmatpush1.msra.mxu0 0.0
    %7368 = vmatprep.mubr.f32.mxu0 0.0
    %7369 = vmatmul.mubr.f32.gmra.mrb[0].mxu0 %v6870
    %v7370 = vpop.f32.mrb[0].mxu0
    %v7371 = vadd.f32 0.0, %v7370
    %v7372 = vpop.f32.mrb[0].mxu0
    %7373 = vdwg.mxu0
    %v7374 = vmul.f32 %v7298, %v6954
    %v7375 = vmul.f32 %v7371, %v6955
    %s7376 = scalar_lea.vmem [#allocation8], 3584
    %v7377 = vld [vmem:[%s7376] sm:$0xff]
    %v7378 = vld [vmem:[%s7376 + $0x8] sm:$0xff]
    %v7379 = vld [vmem:[%s7376 + $0x10] sm:$0xff]
    %v7380 = vld [vmem:[%s7376 + $0x18] sm:$0xff]
    %v7381 = vld [vmem:[%s7376 + $0x20] sm:$0xff]
    %v7382 = vld [vmem:[%s7376 + $0x28] sm:$0xff]
    %v7383 = vld [vmem:[%s7376 + $0x30] sm:$0xff]
    %v7384 = vld [vmem:[%s7376 + $0x38] sm:$0xff]
    %v7385 = vld [vmem:[%s7376 + $0x40] sm:$0xff]
    %v7386 = vld [vmem:[%s7376 + $0x48] sm:$0xff]
    %v7387 = vld [vmem:[%s7376 + $0x50] sm:$0xff]
    %v7388 = vld [vmem:[%s7376 + $0x58] sm:$0xff]
    %v7389 = vld [vmem:[%s7376 + $0x60] sm:$0xff]
    %v7390 = vld [vmem:[%s7376 + $0x68] sm:$0xff]
    %v7391 = vld [vmem:[%s7376 + $0x70] sm:$0xff]
    %v7392 = vld [vmem:[%s7376 + $0x78] sm:$0xff]
    %v7395 = vcombine.low %v7374, %v7375
    %v7397 = vunpack.c.l.s4 1983009808
    %v7398 = vunpack.c.0.s8 %v7397
    %v7399 = vlaneseq
    %v7400 = vshrl.u32 %v7399, 7
    %v7401 = vsub.s32 %v7398, %v7400
    %v7402 = vrot.slane %v7395, %v7401
    %7404 = vmatprep.subr.mxu0 0.0
    %7405 = vmatpush1.msra.mxu0 %v7377
    %7406 = vmatprep.subr.mxu0 0.0
    %7407 = vmatpush1.msra.mxu0 %v7378
    %7408 = vmatprep.subr.mxu0 0.0
    %7409 = vmatpush1.msra.mxu0 %v7379
    %7410 = vmatprep.subr.mxu0 0.0
    %7411 = vmatpush1.msra.mxu0 %v7380
    %7412 = vmatprep.subr.mxu0 0.0
    %7413 = vmatpush1.msra.mxu0 %v7381
    %7414 = vmatprep.subr.mxu0 0.0
    %7415 = vmatpush1.msra.mxu0 %v7382
    %7416 = vmatprep.subr.mxu0 0.0
    %7417 = vmatpush1.msra.mxu0 %v7383
    %7418 = vmatprep.subr.mxu0 0.0
    %7419 = vmatpush1.msra.mxu0 %v7384
    %7420 = vmatprep.subr.mxu0 0.0
    %7421 = vmatpush1.msra.mxu0 %v7385
    %7422 = vmatprep.subr.mxu0 0.0
    %7423 = vmatpush1.msra.mxu0 %v7386
    %7424 = vmatprep.subr.mxu0 0.0
    %7425 = vmatpush1.msra.mxu0 %v7387
    %7426 = vmatprep.subr.mxu0 0.0
    %7427 = vmatpush1.msra.mxu0 %v7388
    %7428 = vmatprep.subr.mxu0 0.0
    %7429 = vmatpush1.msra.mxu0 %v7389
    %7430 = vmatprep.subr.mxu0 0.0
    %7431 = vmatpush1.msra.mxu0 %v7390
    %7432 = vmatprep.subr.mxu0 0.0
    %7433 = vmatpush1.msra.mxu0 %v7391
    %7434 = vmatprep.subr.mxu0 0.0
    %7435 = vmatpush1.msra.mxu0 %v7392
    %7436 = vmatprep.subr.mxu0 0.0
    %7437 = vmatpush1.msra.mxu0 0.0
    %7438 = vmatprep.subr.mxu0 0.0
    %7439 = vmatpush1.msra.mxu0 0.0
    %7440 = vmatprep.subr.mxu0 0.0
    %7441 = vmatpush1.msra.mxu0 0.0
    %7442 = vmatprep.subr.mxu0 0.0
    %7443 = vmatpush1.msra.mxu0 0.0
    %7444 = vmatprep.subr.mxu0 0.0
    %7445 = vmatpush1.msra.mxu0 0.0
    %7446 = vmatprep.subr.mxu0 0.0
    %7447 = vmatpush1.msra.mxu0 0.0
    %7448 = vmatprep.subr.mxu0 0.0
    %7449 = vmatpush1.msra.mxu0 0.0
    %7450 = vmatprep.subr.mxu0 0.0
    %7451 = vmatpush1.msra.mxu0 0.0
    %7452 = vmatprep.subr.mxu0 0.0
    %7453 = vmatpush1.msra.mxu0 0.0
    %7454 = vmatprep.subr.mxu0 0.0
    %7455 = vmatpush1.msra.mxu0 0.0
    %7456 = vmatprep.subr.mxu0 0.0
    %7457 = vmatpush1.msra.mxu0 0.0
    %7458 = vmatprep.subr.mxu0 0.0
    %7459 = vmatpush1.msra.mxu0 0.0
    %7460 = vmatprep.subr.mxu0 0.0
    %7461 = vmatpush1.msra.mxu0 0.0
    %7462 = vmatprep.subr.mxu0 0.0
    %7463 = vmatpush1.msra.mxu0 0.0
    %7464 = vmatprep.subr.mxu0 0.0
    %7465 = vmatpush1.msra.mxu0 0.0
    %7466 = vmatprep.subr.mxu0 0.0
    %7467 = vmatpush1.msra.mxu0 0.0
    %7468 = vmatprep.mubr.f32.mxu0 0.0
    %7469 = vmatmul.mubr.f32.gmra.mrb[0].mxu0 %v7402
    %v7470 = vpop.f32.mrb[0].mxu0
    %v7471 = vadd.f32 0.0, %v7470
    %v7472 = vpop.f32.mrb[0].mxu0
    %7473 = vdwg.mxu0
    %v7476 = vunpack.c.l.s4 1983009808
    %v7477 = vunpack.c.0.s8 %v7476
    %v7478 = vlaneseq
    %v7479 = vshrl.u32 %v7478, 7
    %v7480 = vsub.s32 %v7477, %v7479
    %v7481 = vrot.slane %v7471, %v7480
    %v7482 = vcombine.high %v7481, %v7481
    %s7485 = scalar_lea.vmem [#allocation8], 3712
    %v7486 = vld [vmem:[%s7485] sm:$0xff]
    %v7487 = vld [vmem:[%s7485 + $0x8] sm:$0xff]
    %v7488 = vld [vmem:[%s7485 + $0x10] sm:$0xff]
    %v7489 = vld [vmem:[%s7485 + $0x18] sm:$0xff]
    %v7490 = vld [vmem:[%s7485 + $0x20] sm:$0xff]
    %v7491 = vld [vmem:[%s7485 + $0x28] sm:$0xff]
    %v7492 = vld [vmem:[%s7485 + $0x30] sm:$0xff]
    %v7493 = vld [vmem:[%s7485 + $0x38] sm:$0xff]
    %v7494 = vld [vmem:[%s7485 + $0x40] sm:$0xff]
    %v7495 = vld [vmem:[%s7485 + $0x48] sm:$0xff]
    %v7496 = vld [vmem:[%s7485 + $0x50] sm:$0xff]
    %v7497 = vld [vmem:[%s7485 + $0x58] sm:$0xff]
    %v7498 = vld [vmem:[%s7485 + $0x60] sm:$0xff]
    %v7499 = vld [vmem:[%s7485 + $0x68] sm:$0xff]
    %v7500 = vld [vmem:[%s7485 + $0x70] sm:$0xff]
    %v7501 = vld [vmem:[%s7485 + $0x78] sm:$0xff]
    %v7502 = vcombine.low %v7226, %v7227
    %v7504 = vunpack.c.l.s4 1983009808
    %v7505 = vunpack.c.0.s8 %v7504
    %v7506 = vlaneseq
    %v7507 = vshrl.u32 %v7506, 7
    %v7508 = vsub.s32 %v7505, %v7507
    %v7509 = vrot.slane %v7502, %v7508
    %7511 = vmatprep.subr.mxu0 0.0
    %7512 = vmatpush1.msra.mxu0 %v7486
    %7513 = vmatprep.subr.mxu0 0.0
    %7514 = vmatpush1.msra.mxu0 %v7487
    %7515 = vmatprep.subr.mxu0 0.0
    %7516 = vmatpush1.msra.mxu0 %v7488
    %7517 = vmatprep.subr.mxu0 0.0
    %7518 = vmatpush1.msra.mxu0 %v7489
    %7519 = vmatprep.subr.mxu0 0.0
    %7520 = vmatpush1.msra.mxu0 %v7490
    %7521 = vmatprep.subr.mxu0 0.0
    %7522 = vmatpush1.msra.mxu0 %v7491
    %7523 = vmatprep.subr.mxu0 0.0
    %7524 = vmatpush1.msra.mxu0 %v7492
    %7525 = vmatprep.subr.mxu0 0.0
    %7526 = vmatpush1.msra.mxu0 %v7493
    %7527 = vmatprep.subr.mxu0 0.0
    %7528 = vmatpush1.msra.mxu0 %v7494
    %7529 = vmatprep.subr.mxu0 0.0
    %7530 = vmatpush1.msra.mxu0 %v7495
    %7531 = vmatprep.subr.mxu0 0.0
    %7532 = vmatpush1.msra.mxu0 %v7496
    %7533 = vmatprep.subr.mxu0 0.0
    %7534 = vmatpush1.msra.mxu0 %v7497
    %7535 = vmatprep.subr.mxu0 0.0
    %7536 = vmatpush1.msra.mxu0 %v7498
    %7537 = vmatprep.subr.mxu0 0.0
    %7538 = vmatpush1.msra.mxu0 %v7499
    %7539 = vmatprep.subr.mxu0 0.0
    %7540 = vmatpush1.msra.mxu0 %v7500
    %7541 = vmatprep.subr.mxu0 0.0
    %7542 = vmatpush1.msra.mxu0 %v7501
    %7543 = vmatprep.subr.mxu0 0.0
    %7544 = vmatpush1.msra.mxu0 0.0
    %7545 = vmatprep.subr.mxu0 0.0
    %7546 = vmatpush1.msra.mxu0 0.0
    %7547 = vmatprep.subr.mxu0 0.0
    %7548 = vmatpush1.msra.mxu0 0.0
    %7549 = vmatprep.subr.mxu0 0.0
    %7550 = vmatpush1.msra.mxu0 0.0
    %7551 = vmatprep.subr.mxu0 0.0
    %7552 = vmatpush1.msra.mxu0 0.0
    %7553 = vmatprep.subr.mxu0 0.0
    %7554 = vmatpush1.msra.mxu0 0.0
    %7555 = vmatprep.subr.mxu0 0.0
    %7556 = vmatpush1.msra.mxu0 0.0
    %7557 = vmatprep.subr.mxu0 0.0
    %7558 = vmatpush1.msra.mxu0 0.0
    %7559 = vmatprep.subr.mxu0 0.0
    %7560 = vmatpush1.msra.mxu0 0.0
    %7561 = vmatprep.subr.mxu0 0.0
    %7562 = vmatpush1.msra.mxu0 0.0
    %7563 = vmatprep.subr.mxu0 0.0
    %7564 = vmatpush1.msra.mxu0 0.0
    %7565 = vmatprep.subr.mxu0 0.0
    %7566 = vmatpush1.msra.mxu0 0.0
    %7567 = vmatprep.subr.mxu0 0.0
    %7568 = vmatpush1.msra.mxu0 0.0
    %7569 = vmatprep.subr.mxu0 0.0
    %7570 = vmatpush1.msra.mxu0 0.0
    %7571 = vmatprep.subr.mxu0 0.0
    %7572 = vmatpush1.msra.mxu0 0.0
    %7573 = vmatprep.subr.mxu0 0.0
    %7574 = vmatpush1.msra.mxu0 0.0
    %7575 = vmatprep.mubr.f32.mxu0 0.0
    %7576 = vmatmul.mubr.f32.gmra.mrb[0].mxu0 %v7509
    %v7577 = vpop.f32.mrb[0].mxu0
    %v7578 = vadd.f32 0.0, %v7577
    %v7579 = vpop.f32.mrb[0].mxu0
    %7580 = vdwg.mxu0
    %v7583 = vunpack.c.l.s4 1983009808
    %v7584 = vunpack.c.0.s8 %v7583
    %v7585 = vlaneseq
    %v7586 = vshrl.u32 %v7585, 7
    %v7587 = vsub.s32 %v7584, %v7586
    %v7588 = vrot.slane %v7578, %v7587
    %v7589 = vcombine.high %v7588, %v7588
    %v7592 = vadd.f32 %v7481, %v7588
    %v7593 = vadd.f32 %v7482, %v7589
    %v7594 = vld [vmem:[#allocation10 + $0x29] sm:$0x1]
    %v7595 = vlaneseq
    %v7596 = vshrl.u32 %v7595, 7
    %v7597 = vsub.s32 0, %v7596
    %v7598 = vrot.slane %v7594, %v7597
    %v7599 = vadd.f32 %v7592, %v7598
    %v7600 = vadd.f32 %v7593, %v7598
    %v7601 = vmax.f32 %v7599, 0.0
    %v7602 = vmax.f32 %v7600, 0.0
    %v7603 = vsel %vm6795, %v7601, 0.0
    %v7604 = vsel %vm6795, %v7602, 0.0
    %v7605 = vadd.f32 %v7603, %v7604
    %v7606 = vrot.slane %v7605, 4
    %v7607 = vadd.f32 %v7605, %v7606
    %v7608 = vrot.slane %v7607, 2
    %v7609 = vadd.f32 %v7607, %v7608
    %v7610 = vrot.slane %v7609, 1
    %v7611 = vadd.f32 %v7609, %v7610
    %v7612 = vmul.f32 %v7611, %v7194
    %v7613 = vsub.f32 %v7601, %v7612
    %v7614 = vsub.f32 %v7602, %v7612
    %v7615 = vmul.f32 %v7613, %v7613
    %v7616 = vmul.f32 %v7614, %v7614
    %v7617 = vsel %vm6795, %v7615, 0.0
    %v7618 = vsel %vm6795, %v7616, 0.0
    %v7619 = vadd.f32 %v7617, %v7618
    %v7620 = vrot.slane %v7619, 4
    %v7621 = vadd.f32 %v7619, %v7620
    %v7622 = vrot.slane %v7621, 2
    %v7623 = vadd.f32 %v7621, %v7622
    %v7624 = vrot.slane %v7623, 1
    %v7625 = vadd.f32 %v7623, %v7624
    %v7626 = vmul.f32 %v7625, %v7194
    %v7627 = vadd.f32 %v7626, 1e-05
    %v7628 = vrsqrt.pop %v7627
    %v7629 = vmul.f32 %v7613, %v7628
    %v7630 = vmul.f32 %v7614, %v7628
    %v7631 = vld [vmem:[#allocation10 + $0x2a] sm:$0x1]
    %v7632 = vlaneseq
    %v7633 = vshrl.u32 %v7632, 7
    %v7634 = vsub.s32 0, %v7633
    %v7635 = vrot.slane %v7631, %v7634
    %v7636 = vmul.f32 %v7629, %v7635
    %v7637 = vmul.f32 %v7630, %v7635
    %v7638 = vld [vmem:[#allocation10 + $0x2b] sm:$0x1]
    %v7639 = vlaneseq
    %v7640 = vshrl.u32 %v7639, 7
    %v7641 = vsub.s32 0, %v7640
    %v7642 = vrot.slane %v7638, %v7641
    %v7643 = vadd.f32 %v7636, %v7642
    %v7644 = vadd.f32 %v7637, %v7642
    %v7646 = vsel %vm6795, %v7643, 0
    %7648 = vmatprep.subr.mxu0 0.0
    %7649 = vmatpush1.msra.mxu0 %v7646
    %7650 = vmatprep.subr.mxu0 0.0
    %7651 = vmatpush1.msra.mxu0 0.0
    %7652 = vmatprep.subr.mxu0 0.0
    %7653 = vmatpush1.msra.mxu0 0.0
    %7654 = vmatprep.subr.mxu0 0.0
    %7655 = vmatpush1.msra.mxu0 0.0
    %7656 = vmatprep.subr.mxu0 0.0
    %7657 = vmatpush1.msra.mxu0 0.0
    %7658 = vmatprep.subr.mxu0 0.0
    %7659 = vmatpush1.msra.mxu0 0.0
    %7660 = vmatprep.subr.mxu0 0.0
    %7661 = vmatpush1.msra.mxu0 0.0
    %7662 = vmatprep.subr.mxu0 0.0
    %7663 = vmatpush1.msra.mxu0 0.0
    %7664 = vmatprep.subr.mxu0 0.0
    %7665 = vmatpush1.msra.mxu0 0.0
    %7666 = vmatprep.subr.mxu0 0.0
    %7667 = vmatpush1.msra.mxu0 0.0
    %7668 = vmatprep.subr.mxu0 0.0
    %7669 = vmatpush1.msra.mxu0 0.0
    %7670 = vmatprep.subr.mxu0 0.0
    %7671 = vmatpush1.msra.mxu0 0.0
    %7672 = vmatprep.subr.mxu0 0.0
    %7673 = vmatpush1.msra.mxu0 0.0
    %7674 = vmatprep.subr.mxu0 0.0
    %7675 = vmatpush1.msra.mxu0 0.0
    %7676 = vmatprep.subr.mxu0 0.0
    %7677 = vmatpush1.msra.mxu0 0.0
    %7678 = vmatprep.subr.mxu0 0.0
    %7679 = vmatpush1.msra.mxu0 0.0
    %7680 = vmatprep.subr.mxu0 0.0
    %7681 = vmatpush1.msra.mxu0 0.0
    %7682 = vmatprep.subr.mxu0 0.0
    %7683 = vmatpush1.msra.mxu0 0.0
    %7684 = vmatprep.subr.mxu0 0.0
    %7685 = vmatpush1.msra.mxu0 0.0
    %7686 = vmatprep.subr.mxu0 0.0
    %7687 = vmatpush1.msra.mxu0 0.0
    %7688 = vmatprep.subr.mxu0 0.0
    %7689 = vmatpush1.msra.mxu0 0.0
    %7690 = vmatprep.subr.mxu0 0.0
    %7691 = vmatpush1.msra.mxu0 0.0
    %7692 = vmatprep.subr.mxu0 0.0
    %7693 = vmatpush1.msra.mxu0 0.0
    %7694 = vmatprep.subr.mxu0 0.0
    %7695 = vmatpush1.msra.mxu0 0.0
    %7696 = vmatprep.subr.mxu0 0.0
    %7697 = vmatpush1.msra.mxu0 0.0
    %7698 = vmatprep.subr.mxu0 0.0
    %7699 = vmatpush1.msra.mxu0 0.0
    %7700 = vmatprep.subr.mxu0 0.0
    %7701 = vmatpush1.msra.mxu0 0.0
    %7702 = vmatprep.subr.mxu0 0.0
    %7703 = vmatpush1.msra.mxu0 0.0
    %7704 = vmatprep.subr.mxu0 0.0
    %7705 = vmatpush1.msra.mxu0 0.0
    %7706 = vmatprep.subr.mxu0 0.0
    %7707 = vmatpush1.msra.mxu0 0.0
    %7708 = vmatprep.subr.mxu0 0.0
    %7709 = vmatpush1.msra.mxu0 0.0
    %7710 = vmatprep.subr.mxu0 0.0
    %7711 = vmatpush1.msra.mxu0 0.0
    %7712 = vmatprep.mubr.f32.mxu0 0.0
    %7713 = vmatmul.mubr.f32.gmra.mrb[0].mxu0 %v6793
    %v7714 = vpop.f32.mrb[0].mxu0
    %v7715 = vadd.f32 0.0, %v7714
    %v7716 = vpop.f32.mrb[0].mxu0
    %7717 = vdwg.mxu0
    %v7719 = vsel %vm6795, %v7644, 0
    %7721 = vmatprep.subr.mxu0 0.0
    %7722 = vmatpush1.msra.mxu0 %v7719
    %7723 = vmatprep.subr.mxu0 0.0
    %7724 = vmatpush1.msra.mxu0 0.0
    %7725 = vmatprep.subr.mxu0 0.0
    %7726 = vmatpush1.msra.mxu0 0.0
    %7727 = vmatprep.subr.mxu0 0.0
    %7728 = vmatpush1.msra.mxu0 0.0
    %7729 = vmatprep.subr.mxu0 0.0
    %7730 = vmatpush1.msra.mxu0 0.0
    %7731 = vmatprep.subr.mxu0 0.0
    %7732 = vmatpush1.msra.mxu0 0.0
    %7733 = vmatprep.subr.mxu0 0.0
    %7734 = vmatpush1.msra.mxu0 0.0
    %7735 = vmatprep.subr.mxu0 0.0
    %7736 = vmatpush1.msra.mxu0 0.0
    %7737 = vmatprep.subr.mxu0 0.0
    %7738 = vmatpush1.msra.mxu0 0.0
    %7739 = vmatprep.subr.mxu0 0.0
    %7740 = vmatpush1.msra.mxu0 0.0
    %7741 = vmatprep.subr.mxu0 0.0
    %7742 = vmatpush1.msra.mxu0 0.0
    %7743 = vmatprep.subr.mxu0 0.0
    %7744 = vmatpush1.msra.mxu0 0.0
    %7745 = vmatprep.subr.mxu0 0.0
    %7746 = vmatpush1.msra.mxu0 0.0
    %7747 = vmatprep.subr.mxu0 0.0
    %7748 = vmatpush1.msra.mxu0 0.0
    %7749 = vmatprep.subr.mxu0 0.0
    %7750 = vmatpush1.msra.mxu0 0.0
    %7751 = vmatprep.subr.mxu0 0.0
    %7752 = vmatpush1.msra.mxu0 0.0
    %7753 = vmatprep.subr.mxu0 0.0
    %7754 = vmatpush1.msra.mxu0 0.0
    %7755 = vmatprep.subr.mxu0 0.0
    %7756 = vmatpush1.msra.mxu0 0.0
    %7757 = vmatprep.subr.mxu0 0.0
    %7758 = vmatpush1.msra.mxu0 0.0
    %7759 = vmatprep.subr.mxu0 0.0
    %7760 = vmatpush1.msra.mxu0 0.0
    %7761 = vmatprep.subr.mxu0 0.0
    %7762 = vmatpush1.msra.mxu0 0.0
    %7763 = vmatprep.subr.mxu0 0.0
    %7764 = vmatpush1.msra.mxu0 0.0
    %7765 = vmatprep.subr.mxu0 0.0
    %7766 = vmatpush1.msra.mxu0 0.0
    %7767 = vmatprep.subr.mxu0 0.0
    %7768 = vmatpush1.msra.mxu0 0.0
    %7769 = vmatprep.subr.mxu0 0.0
    %7770 = vmatpush1.msra.mxu0 0.0
    %7771 = vmatprep.subr.mxu0 0.0
    %7772 = vmatpush1.msra.mxu0 0.0
    %7773 = vmatprep.subr.mxu0 0.0
    %7774 = vmatpush1.msra.mxu0 0.0
    %7775 = vmatprep.subr.mxu0 0.0
    %7776 = vmatpush1.msra.mxu0 0.0
    %7777 = vmatprep.subr.mxu0 0.0
    %7778 = vmatpush1.msra.mxu0 0.0
    %7779 = vmatprep.subr.mxu0 0.0
    %7780 = vmatpush1.msra.mxu0 0.0
    %7781 = vmatprep.subr.mxu0 0.0
    %7782 = vmatpush1.msra.mxu0 0.0
    %7783 = vmatprep.subr.mxu0 0.0
    %7784 = vmatpush1.msra.mxu0 0.0
    %7785 = vmatprep.mubr.f32.mxu0 0.0
    %7786 = vmatmul.mubr.f32.gmra.mrb[0].mxu0 %v6870
    %v7787 = vpop.f32.mrb[0].mxu0
    %v7788 = vadd.f32 0.0, %v7787
    %v7789 = vpop.f32.mrb[0].mxu0
    %7790 = vdwg.mxu0
    %v7791 = vmul.f32 %v7715, %v6954
    %v7792 = vmul.f32 %v7788, %v6955
    %s7793 = scalar_lea.vmem [#allocation8], 3840
    %v7794 = vld [vmem:[%s7793] sm:$0xff]
    %v7795 = vld [vmem:[%s7793 + $0x8] sm:$0xff]
    %v7796 = vld [vmem:[%s7793 + $0x10] sm:$0xff]
    %v7797 = vld [vmem:[%s7793 + $0x18] sm:$0xff]
    %v7798 = vld [vmem:[%s7793 + $0x20] sm:$0xff]
    %v7799 = vld [vmem:[%s7793 + $0x28] sm:$0xff]
    %v7800 = vld [vmem:[%s7793 + $0x30] sm:$0xff]
    %v7801 = vld [vmem:[%s7793 + $0x38] sm:$0xff]
    %v7802 = vld [vmem:[%s7793 + $0x40] sm:$0xff]
    %v7803 = vld [vmem:[%s7793 + $0x48] sm:$0xff]
    %v7804 = vld [vmem:[%s7793 + $0x50] sm:$0xff]
    %v7805 = vld [vmem:[%s7793 + $0x58] sm:$0xff]
    %v7806 = vld [vmem:[%s7793 + $0x60] sm:$0xff]
    %v7807 = vld [vmem:[%s7793 + $0x68] sm:$0xff]
    %v7808 = vld [vmem:[%s7793 + $0x70] sm:$0xff]
    %v7809 = vld [vmem:[%s7793 + $0x78] sm:$0xff]
    %v7812 = vcombine.low %v7791, %v7792
    %v7814 = vunpack.c.l.s4 1983009808
    %v7815 = vunpack.c.0.s8 %v7814
    %v7816 = vlaneseq
    %v7817 = vshrl.u32 %v7816, 7
    %v7818 = vsub.s32 %v7815, %v7817
    %v7819 = vrot.slane %v7812, %v7818
    %7821 = vmatprep.subr.mxu0 0.0
    %7822 = vmatpush1.msra.mxu0 %v7794
    %7823 = vmatprep.subr.mxu0 0.0
    %7824 = vmatpush1.msra.mxu0 %v7795
    %7825 = vmatprep.subr.mxu0 0.0
    %7826 = vmatpush1.msra.mxu0 %v7796
    %7827 = vmatprep.subr.mxu0 0.0
    %7828 = vmatpush1.msra.mxu0 %v7797
    %7829 = vmatprep.subr.mxu0 0.0
    %7830 = vmatpush1.msra.mxu0 %v7798
    %7831 = vmatprep.subr.mxu0 0.0
    %7832 = vmatpush1.msra.mxu0 %v7799
    %7833 = vmatprep.subr.mxu0 0.0
    %7834 = vmatpush1.msra.mxu0 %v7800
    %7835 = vmatprep.subr.mxu0 0.0
    %7836 = vmatpush1.msra.mxu0 %v7801
    %7837 = vmatprep.subr.mxu0 0.0
    %7838 = vmatpush1.msra.mxu0 %v7802
    %7839 = vmatprep.subr.mxu0 0.0
    %7840 = vmatpush1.msra.mxu0 %v7803
    %7841 = vmatprep.subr.mxu0 0.0
    %7842 = vmatpush1.msra.mxu0 %v7804
    %7843 = vmatprep.subr.mxu0 0.0
    %7844 = vmatpush1.msra.mxu0 %v7805
    %7845 = vmatprep.subr.mxu0 0.0
    %7846 = vmatpush1.msra.mxu0 %v7806
    %7847 = vmatprep.subr.mxu0 0.0
    %7848 = vmatpush1.msra.mxu0 %v7807
    %7849 = vmatprep.subr.mxu0 0.0
    %7850 = vmatpush1.msra.mxu0 %v7808
    %7851 = vmatprep.subr.mxu0 0.0
    %7852 = vmatpush1.msra.mxu0 %v7809
    %7853 = vmatprep.subr.mxu0 0.0
    %7854 = vmatpush1.msra.mxu0 0.0
    %7855 = vmatprep.subr.mxu0 0.0
    %7856 = vmatpush1.msra.mxu0 0.0
    %7857 = vmatprep.subr.mxu0 0.0
    %7858 = vmatpush1.msra.mxu0 0.0
    %7859 = vmatprep.subr.mxu0 0.0
    %7860 = vmatpush1.msra.mxu0 0.0
    %7861 = vmatprep.subr.mxu0 0.0
    %7862 = vmatpush1.msra.mxu0 0.0
    %7863 = vmatprep.subr.mxu0 0.0
    %7864 = vmatpush1.msra.mxu0 0.0
    %7865 = vmatprep.subr.mxu0 0.0
    %7866 = vmatpush1.msra.mxu0 0.0
    %7867 = vmatprep.subr.mxu0 0.0
    %7868 = vmatpush1.msra.mxu0 0.0
    %7869 = vmatprep.subr.mxu0 0.0
    %7870 = vmatpush1.msra.mxu0 0.0
    %7871 = vmatprep.subr.mxu0 0.0
    %7872 = vmatpush1.msra.mxu0 0.0
    %7873 = vmatprep.subr.mxu0 0.0
    %7874 = vmatpush1.msra.mxu0 0.0
    %7875 = vmatprep.subr.mxu0 0.0
    %7876 = vmatpush1.msra.mxu0 0.0
    %7877 = vmatprep.subr.mxu0 0.0
    %7878 = vmatpush1.msra.mxu0 0.0
    %7879 = vmatprep.subr.mxu0 0.0
    %7880 = vmatpush1.msra.mxu0 0.0
    %7881 = vmatprep.subr.mxu0 0.0
    %7882 = vmatpush1.msra.mxu0 0.0
    %7883 = vmatprep.subr.mxu0 0.0
    %7884 = vmatpush1.msra.mxu0 0.0
    %7885 = vmatprep.mubr.f32.mxu0 0.0
    %7886 = vmatmul.mubr.f32.gmra.mrb[0].mxu0 %v7819
    %v7887 = vpop.f32.mrb[0].mxu0
    %v7888 = vadd.f32 0.0, %v7887
    %v7889 = vpop.f32.mrb[0].mxu0
    %7890 = vdwg.mxu0
    %v7893 = vunpack.c.l.s4 1983009808
    %v7894 = vunpack.c.0.s8 %v7893
    %v7895 = vlaneseq
    %v7896 = vshrl.u32 %v7895, 7
    %v7897 = vsub.s32 %v7894, %v7896
    %v7898 = vrot.slane %v7888, %v7897
    %v7899 = vcombine.high %v7898, %v7898
    %s7902 = scalar_lea.vmem [#allocation8], 3968
    %v7903 = vld [vmem:[%s7902] sm:$0xff]
    %v7904 = vld [vmem:[%s7902 + $0x8] sm:$0xff]
    %v7905 = vld [vmem:[%s7902 + $0x10] sm:$0xff]
    %v7906 = vld [vmem:[%s7902 + $0x18] sm:$0xff]
    %v7907 = vld [vmem:[%s7902 + $0x20] sm:$0xff]
    %v7908 = vld [vmem:[%s7902 + $0x28] sm:$0xff]
    %v7909 = vld [vmem:[%s7902 + $0x30] sm:$0xff]
    %v7910 = vld [vmem:[%s7902 + $0x38] sm:$0xff]
    %v7911 = vld [vmem:[%s7902 + $0x40] sm:$0xff]
    %v7912 = vld [vmem:[%s7902 + $0x48] sm:$0xff]
    %v7913 = vld [vmem:[%s7902 + $0x50] sm:$0xff]
    %v7914 = vld [vmem:[%s7902 + $0x58] sm:$0xff]
    %v7915 = vld [vmem:[%s7902 + $0x60] sm:$0xff]
    %v7916 = vld [vmem:[%s7902 + $0x68] sm:$0xff]
    %v7917 = vld [vmem:[%s7902 + $0x70] sm:$0xff]
    %v7918 = vld [vmem:[%s7902 + $0x78] sm:$0xff]
    %v7919 = vcombine.low %v7643, %v7644
    %v7921 = vunpack.c.l.s4 1983009808
    %v7922 = vunpack.c.0.s8 %v7921
    %v7923 = vlaneseq
    %v7924 = vshrl.u32 %v7923, 7
    %v7925 = vsub.s32 %v7922, %v7924
    %v7926 = vrot.slane %v7919, %v7925
    %7928 = vmatprep.subr.mxu0 0.0
    %7929 = vmatpush1.msra.mxu0 %v7903
    %7930 = vmatprep.subr.mxu0 0.0
    %7931 = vmatpush1.msra.mxu0 %v7904
    %7932 = vmatprep.subr.mxu0 0.0
    %7933 = vmatpush1.msra.mxu0 %v7905
    %7934 = vmatprep.subr.mxu0 0.0
    %7935 = vmatpush1.msra.mxu0 %v7906
    %7936 = vmatprep.subr.mxu0 0.0
    %7937 = vmatpush1.msra.mxu0 %v7907
    %7938 = vmatprep.subr.mxu0 0.0
    %7939 = vmatpush1.msra.mxu0 %v7908
    %7940 = vmatprep.subr.mxu0 0.0
    %7941 = vmatpush1.msra.mxu0 %v7909
    %7942 = vmatprep.subr.mxu0 0.0
    %7943 = vmatpush1.msra.mxu0 %v7910
    %7944 = vmatprep.subr.mxu0 0.0
    %7945 = vmatpush1.msra.mxu0 %v7911
    %7946 = vmatprep.subr.mxu0 0.0
    %7947 = vmatpush1.msra.mxu0 %v7912
    %7948 = vmatprep.subr.mxu0 0.0
    %7949 = vmatpush1.msra.mxu0 %v7913
    %7950 = vmatprep.subr.mxu0 0.0
    %7951 = vmatpush1.msra.mxu0 %v7914
    %7952 = vmatprep.subr.mxu0 0.0
    %7953 = vmatpush1.msra.mxu0 %v7915
    %7954 = vmatprep.subr.mxu0 0.0
    %7955 = vmatpush1.msra.mxu0 %v7916
    %7956 = vmatprep.subr.mxu0 0.0
    %7957 = vmatpush1.msra.mxu0 %v7917
    %7958 = vmatprep.subr.mxu0 0.0
    %7959 = vmatpush1.msra.mxu0 %v7918
    %7960 = vmatprep.subr.mxu0 0.0
    %7961 = vmatpush1.msra.mxu0 0.0
    %7962 = vmatprep.subr.mxu0 0.0
    %7963 = vmatpush1.msra.mxu0 0.0
    %7964 = vmatprep.subr.mxu0 0.0
    %7965 = vmatpush1.msra.mxu0 0.0
    %7966 = vmatprep.subr.mxu0 0.0
    %7967 = vmatpush1.msra.mxu0 0.0
    %7968 = vmatprep.subr.mxu0 0.0
    %7969 = vmatpush1.msra.mxu0 0.0
    %7970 = vmatprep.subr.mxu0 0.0
    %7971 = vmatpush1.msra.mxu0 0.0
    %7972 = vmatprep.subr.mxu0 0.0
    %7973 = vmatpush1.msra.mxu0 0.0
    %7974 = vmatprep.subr.mxu0 0.0
    %7975 = vmatpush1.msra.mxu0 0.0
    %7976 = vmatprep.subr.mxu0 0.0
    %7977 = vmatpush1.msra.mxu0 0.0
    %7978 = vmatprep.subr.mxu0 0.0
    %7979 = vmatpush1.msra.mxu0 0.0
    %7980 = vmatprep.subr.mxu0 0.0
    %7981 = vmatpush1.msra.mxu0 0.0
    %7982 = vmatprep.subr.mxu0 0.0
    %7983 = vmatpush1.msra.mxu0 0.0
    %7984 = vmatprep.subr.mxu0 0.0
    %7985 = vmatpush1.msra.mxu0 0.0
    %7986 = vmatprep.subr.mxu0 0.0
    %7987 = vmatpush1.msra.mxu0 0.0
    %7988 = vmatprep.subr.mxu0 0.0
    %7989 = vmatpush1.msra.mxu0 0.0
    %7990 = vmatprep.subr.mxu0 0.0
    %7991 = vmatpush1.msra.mxu0 0.0
    %7992 = vmatprep.mubr.f32.mxu0 0.0
    %7993 = vmatmul.mubr.f32.gmra.mrb[0].mxu0 %v7926
    %v7994 = vpop.f32.mrb[0].mxu0
    %v7995 = vadd.f32 0.0, %v7994
    %v7996 = vpop.f32.mrb[0].mxu0
    %7997 = vdwg.mxu0
    %v8000 = vunpack.c.l.s4 1983009808
    %v8001 = vunpack.c.0.s8 %v8000
    %v8002 = vlaneseq
    %v8003 = vshrl.u32 %v8002, 7
    %v8004 = vsub.s32 %v8001, %v8003
    %v8005 = vrot.slane %v7995, %v8004
    %v8006 = vcombine.high %v8005, %v8005
    %v8009 = vadd.f32 %v7898, %v8005
    %v8010 = vadd.f32 %v7899, %v8006
    %v8011 = vld [vmem:[#allocation10 + $0x2c] sm:$0x1]
    %v8012 = vlaneseq
    %v8013 = vshrl.u32 %v8012, 7
    %v8014 = vsub.s32 0, %v8013
    %v8015 = vrot.slane %v8011, %v8014
    %v8016 = vadd.f32 %v8009, %v8015
    %v8017 = vadd.f32 %v8010, %v8015
    %v8018 = vmax.f32 %v8016, 0.0
    %v8019 = vmax.f32 %v8017, 0.0
    %v8020 = vsel %vm6795, %v8018, 0.0
    %v8021 = vsel %vm6795, %v8019, 0.0
    %v8022 = vadd.f32 %v8020, %v8021
    %v8023 = vrot.slane %v8022, 4
    %v8024 = vadd.f32 %v8022, %v8023
    %v8025 = vrot.slane %v8024, 2
    %v8026 = vadd.f32 %v8024, %v8025
    %v8027 = vrot.slane %v8026, 1
    %v8028 = vadd.f32 %v8026, %v8027
    %v8029 = vmul.f32 %v8028, %v7194
    %v8030 = vsub.f32 %v8018, %v8029
    %v8031 = vsub.f32 %v8019, %v8029
    %v8032 = vmul.f32 %v8030, %v8030
    %v8033 = vmul.f32 %v8031, %v8031
    %v8034 = vsel %vm6795, %v8032, 0.0
    %v8035 = vsel %vm6795, %v8033, 0.0
    %v8036 = vadd.f32 %v8034, %v8035
    %v8037 = vrot.slane %v8036, 4
    %v8038 = vadd.f32 %v8036, %v8037
    %v8039 = vrot.slane %v8038, 2
    %v8040 = vadd.f32 %v8038, %v8039
    %v8041 = vrot.slane %v8040, 1
    %v8042 = vadd.f32 %v8040, %v8041
    %v8043 = vmul.f32 %v8042, %v7194
    %v8044 = vadd.f32 %v8043, 1e-05
    %v8045 = vrsqrt.pop %v8044
    %v8046 = vmul.f32 %v8030, %v8045
    %v8047 = vmul.f32 %v8031, %v8045
    %v8048 = vld [vmem:[#allocation10 + $0x2d] sm:$0x1]
    %v8049 = vlaneseq
    %v8050 = vshrl.u32 %v8049, 7
    %v8051 = vsub.s32 0, %v8050
    %v8052 = vrot.slane %v8048, %v8051
    %v8053 = vmul.f32 %v8046, %v8052
    %v8054 = vmul.f32 %v8047, %v8052
    %v8055 = vld [vmem:[#allocation10 + $0x2e] sm:$0x1]
    %v8056 = vlaneseq
    %v8057 = vshrl.u32 %v8056, 7
    %v8058 = vsub.s32 0, %v8057
    %v8059 = vrot.slane %v8055, %v8058
    %v8060 = vadd.f32 %v8053, %v8059
    %v8061 = vadd.f32 %v8054, %v8059
    %v8062 = vadd.f32 %v7226, %v7643
    %v8063 = vadd.f32 %v7227, %v7644
    %v8064 = vadd.f32 %v8062, %v8060
    %v8065 = vadd.f32 %v8063, %v8061
    %v8066 = vsel %vm6795, %v8064, 0.0
    %v8067 = vrot.slane %v8066, 4
    %v8068 = vadd.f32 %v8066, %v8067
    %v8069 = vrot.slane %v8068, 2
    %v8070 = vadd.f32 %v8068, %v8069
    %v8071 = vrot.slane %v8070, 1
    %v8072 = vadd.f32 %v8070, %v8071
    %v8073 = vsel %vm6795, %v8065, 0.0
    %v8074 = vrot.slane %v8073, 4
    %v8075 = vadd.f32 %v8073, %v8074
    %v8076 = vrot.slane %v8075, 2
    %v8077 = vadd.f32 %v8075, %v8076
    %v8078 = vrot.slane %v8077, 1
    %v8079 = vadd.f32 %v8077, %v8078
    %v8080 = vrcp.pop 2.0
    %v8081 = vmul.f32 %v8072, %v8080
    %v8082 = vmul.f32 %v8079, %v8080
    %s8083 = scalar_lea.vmem [#allocation8], 4096
    %v8084 = vld [vmem:[%s8083] sm:$0xff]
    %v8085 = vld [vmem:[%s8083 + $0x8] sm:$0xff]
    %v8086 = vld [vmem:[%s8083 + $0x10] sm:$0xff]
    %v8087 = vld [vmem:[%s8083 + $0x18] sm:$0xff]
    %v8088 = vld [vmem:[%s8083 + $0x20] sm:$0xff]
    %v8089 = vld [vmem:[%s8083 + $0x28] sm:$0xff]
    %v8090 = vld [vmem:[%s8083 + $0x30] sm:$0xff]
    %v8091 = vld [vmem:[%s8083 + $0x38] sm:$0xff]
    %v8092 = vld [vmem:[%s8083 + $0x40] sm:$0xff]
    %v8093 = vld [vmem:[%s8083 + $0x48] sm:$0xff]
    %v8094 = vld [vmem:[%s8083 + $0x50] sm:$0xff]
    %v8095 = vld [vmem:[%s8083 + $0x58] sm:$0xff]
    %v8096 = vld [vmem:[%s8083 + $0x60] sm:$0xff]
    %v8097 = vld [vmem:[%s8083 + $0x68] sm:$0xff]
    %v8098 = vld [vmem:[%s8083 + $0x70] sm:$0xff]
    %v8099 = vld [vmem:[%s8083 + $0x78] sm:$0xff]
    %v8100 = vld [vmem:[#allocation10 + $0x2f] sm:$0x1]
    %v8101 = vlaneseq
    %v8102 = vshrl.u32 %v8101, 7
    %v8103 = vsub.s32 0, %v8102
    %v8104 = vrot.slane %v8100, %v8103
    %vm8107 = vcmask 1041409
    %v8108 = vsel %vm8107, %v8082, %v8081
    %8110 = vmatprep.subr.mxu0 0.0
    %8111 = vmatpush1.msra.mxu0 %v8084
    %8112 = vmatprep.subr.mxu0 0.0
    %8113 = vmatpush1.msra.mxu0 %v8085
    %8114 = vmatprep.subr.mxu0 0.0
    %8115 = vmatpush1.msra.mxu0 %v8086
    %8116 = vmatprep.subr.mxu0 0.0
    %8117 = vmatpush1.msra.mxu0 %v8087
    %8118 = vmatprep.subr.mxu0 0.0
    %8119 = vmatpush1.msra.mxu0 %v8088
    %8120 = vmatprep.subr.mxu0 0.0
    %8121 = vmatpush1.msra.mxu0 %v8089
    %8122 = vmatprep.subr.mxu0 0.0
    %8123 = vmatpush1.msra.mxu0 %v8090
    %8124 = vmatprep.subr.mxu0 0.0
    %8125 = vmatpush1.msra.mxu0 %v8091
    %8126 = vmatprep.subr.mxu0 0.0
    %8127 = vmatpush1.msra.mxu0 %v8092
    %8128 = vmatprep.subr.mxu0 0.0
    %8129 = vmatpush1.msra.mxu0 %v8093
    %8130 = vmatprep.subr.mxu0 0.0
    %8131 = vmatpush1.msra.mxu0 %v8094
    %8132 = vmatprep.subr.mxu0 0.0
    %8133 = vmatpush1.msra.mxu0 %v8095
    %8134 = vmatprep.subr.mxu0 0.0
    %8135 = vmatpush1.msra.mxu0 %v8096
    %8136 = vmatprep.subr.mxu0 0.0
    %8137 = vmatpush1.msra.mxu0 %v8097
    %8138 = vmatprep.subr.mxu0 0.0
    %8139 = vmatpush1.msra.mxu0 %v8098
    %8140 = vmatprep.subr.mxu0 0.0
    %8141 = vmatpush1.msra.mxu0 %v8099
    %8142 = vmatprep.subr.mxu0 0.0
    %8143 = vmatpush1.msra.mxu0 0.0
    %8144 = vmatprep.subr.mxu0 0.0
    %8145 = vmatpush1.msra.mxu0 0.0
    %8146 = vmatprep.subr.mxu0 0.0
    %8147 = vmatpush1.msra.mxu0 0.0
    %8148 = vmatprep.subr.mxu0 0.0
    %8149 = vmatpush1.msra.mxu0 0.0
    %8150 = vmatprep.subr.mxu0 0.0
    %8151 = vmatpush1.msra.mxu0 0.0
    %8152 = vmatprep.subr.mxu0 0.0
    %8153 = vmatpush1.msra.mxu0 0.0
    %8154 = vmatprep.subr.mxu0 0.0
    %8155 = vmatpush1.msra.mxu0 0.0
    %8156 = vmatprep.subr.mxu0 0.0
    %8157 = vmatpush1.msra.mxu0 0.0
    %8158 = vmatprep.subr.mxu0 0.0
    %8159 = vmatpush1.msra.mxu0 0.0
    %8160 = vmatprep.subr.mxu0 0.0
    %8161 = vmatpush1.msra.mxu0 0.0
    %8162 = vmatprep.subr.mxu0 0.0
    %8163 = vmatpush1.msra.mxu0 0.0
    %8164 = vmatprep.subr.mxu0 0.0
    %8165 = vmatpush1.msra.mxu0 0.0
    %8166 = vmatprep.subr.mxu0 0.0
    %8167 = vmatpush1.msra.mxu0 0.0
    %8168 = vmatprep.subr.mxu0 0.0
    %8169 = vmatpush1.msra.mxu0 0.0
    %8170 = vmatprep.subr.mxu0 0.0
    %8171 = vmatpush1.msra.mxu0 0.0
    %8172 = vmatprep.subr.mxu0 0.0
    %8173 = vmatpush1.msra.mxu0 0.0
    %8174 = vmatprep.mubr.f32.mxu0 0.0
    %8175 = vmatmul.mubr.f32.gmra.mrb[0].mxu0 %v8108
    %v8176 = vpop.f32.mrb[0].mxu0
    %v8177 = vadd.f32 %v8104, %v8176
    %v8178 = vpop.f32.mrb[0].mxu0
    %8179 = vdwg.mxu0
    %v8180 = vmax.f32 %v8177, 0.0
    %s8181 = scalar_lea.vmem [#allocation8], 4224
    %v8182 = vld [vmem:[%s8181] sm:$0xff]
    %v8183 = vld [vmem:[%s8181 + $0x8] sm:$0xff]
    %v8184 = vld [vmem:[%s8181 + $0x10] sm:$0xff]
    %v8185 = vld [vmem:[%s8181 + $0x18] sm:$0xff]
    %v8186 = vld [vmem:[%s8181 + $0x20] sm:$0xff]
    %v8187 = vld [vmem:[%s8181 + $0x28] sm:$0xff]
    %v8188 = vld [vmem:[%s8181 + $0x30] sm:$0xff]
    %v8189 = vld [vmem:[%s8181 + $0x38] sm:$0xff]
    %v8190 = vld [vmem:[%s8181 + $0x40] sm:$0xff]
    %v8191 = vld [vmem:[%s8181 + $0x48] sm:$0xff]
    %v8192 = vld [vmem:[%s8181 + $0x50] sm:$0xff]
    %v8193 = vld [vmem:[%s8181 + $0x58] sm:$0xff]
    %v8194 = vld [vmem:[%s8181 + $0x60] sm:$0xff]
    %v8195 = vld [vmem:[%s8181 + $0x68] sm:$0xff]
    %v8196 = vld [vmem:[%s8181 + $0x70] sm:$0xff]
    %v8197 = vld [vmem:[%s8181 + $0x78] sm:$0xff]
    %v8198 = vld [vmem:[#allocation10 + $0x30] sm:$0x1]
    %v8199 = vlaneseq
    %v8200 = vshrl.u32 %v8199, 7
    %v8201 = vsub.s32 0, %v8200
    %v8202 = vrot.slane %v8198, %v8201
    %8203 = vmatprep.subr.mxu0 0.0
    %8204 = vmatpush1.msra.mxu0 %v8182
    %8205 = vmatprep.subr.mxu0 0.0
    %8206 = vmatpush1.msra.mxu0 %v8183
    %8207 = vmatprep.subr.mxu0 0.0
    %8208 = vmatpush1.msra.mxu0 %v8184
    %8209 = vmatprep.subr.mxu0 0.0
    %8210 = vmatpush1.msra.mxu0 %v8185
    %8211 = vmatprep.subr.mxu0 0.0
    %8212 = vmatpush1.msra.mxu0 %v8186
    %8213 = vmatprep.subr.mxu0 0.0
    %8214 = vmatpush1.msra.mxu0 %v8187
    %8215 = vmatprep.subr.mxu0 0.0
    %8216 = vmatpush1.msra.mxu0 %v8188
    %8217 = vmatprep.subr.mxu0 0.0
    %8218 = vmatpush1.msra.mxu0 %v8189
    %8219 = vmatprep.subr.mxu0 0.0
    %8220 = vmatpush1.msra.mxu0 %v8190
    %8221 = vmatprep.subr.mxu0 0.0
    %8222 = vmatpush1.msra.mxu0 %v8191
    %8223 = vmatprep.subr.mxu0 0.0
    %8224 = vmatpush1.msra.mxu0 %v8192
    %8225 = vmatprep.subr.mxu0 0.0
    %8226 = vmatpush1.msra.mxu0 %v8193
    %8227 = vmatprep.subr.mxu0 0.0
    %8228 = vmatpush1.msra.mxu0 %v8194
    %8229 = vmatprep.subr.mxu0 0.0
    %8230 = vmatpush1.msra.mxu0 %v8195
    %8231 = vmatprep.subr.mxu0 0.0
    %8232 = vmatpush1.msra.mxu0 %v8196
    %8233 = vmatprep.subr.mxu0 0.0
    %8234 = vmatpush1.msra.mxu0 %v8197
    %8235 = vmatprep.subr.mxu0 0.0
    %8236 = vmatpush1.msra.mxu0 0.0
    %8237 = vmatprep.subr.mxu0 0.0
    %8238 = vmatpush1.msra.mxu0 0.0
    %8239 = vmatprep.subr.mxu0 0.0
    %8240 = vmatpush1.msra.mxu0 0.0
    %8241 = vmatprep.subr.mxu0 0.0
    %8242 = vmatpush1.msra.mxu0 0.0
    %8243 = vmatprep.subr.mxu0 0.0
    %8244 = vmatpush1.msra.mxu0 0.0
    %8245 = vmatprep.subr.mxu0 0.0
    %8246 = vmatpush1.msra.mxu0 0.0
    %8247 = vmatprep.subr.mxu0 0.0
    %8248 = vmatpush1.msra.mxu0 0.0
    %8249 = vmatprep.subr.mxu0 0.0
    %8250 = vmatpush1.msra.mxu0 0.0
    %8251 = vmatprep.subr.mxu0 0.0
    %8252 = vmatpush1.msra.mxu0 0.0
    %8253 = vmatprep.subr.mxu0 0.0
    %8254 = vmatpush1.msra.mxu0 0.0
    %8255 = vmatprep.subr.mxu0 0.0
    %8256 = vmatpush1.msra.mxu0 0.0
    %8257 = vmatprep.subr.mxu0 0.0
    %8258 = vmatpush1.msra.mxu0 0.0
    %8259 = vmatprep.subr.mxu0 0.0
    %8260 = vmatpush1.msra.mxu0 0.0
    %8261 = vmatprep.subr.mxu0 0.0
    %8262 = vmatpush1.msra.mxu0 0.0
    %8263 = vmatprep.subr.mxu0 0.0
    %8264 = vmatpush1.msra.mxu0 0.0
    %8265 = vmatprep.subr.mxu0 0.0
    %8266 = vmatpush1.msra.mxu0 0.0
    %8267 = vmatprep.mubr.f32.mxu0 0.0
    %8268 = vmatmul.mubr.f32.gmra.mrb[0].mxu0 %v8180
    %v8269 = vpop.f32.mrb[0].mxu0
    %v8270 = vadd.f32 %v8202, %v8269
    %v8271 = vpop.f32.mrb[0].mxu0
    %8272 = vdwg.mxu0
    %vm8273 = vcmask 17408
    %v8274 = vsel %vm8273, %v8270, -inf
    %8275 = vmax.xlane.f32.xlu0 %v8274
    %v8276 = vpop.xlane.xlu0 %8275
    %v8277 = vsub.f32 %v8270, %v8276
    %v8278 = vmul.f32 %v8277, 1.442695
    %v8279 = vpow.pop %v8278
    %v8280 = vsel %vm8273, %v8279, 0.0
    %8281 = vadd.xlane.f32.xlu0 %v8280
    %v8282 = vpop.xlane.xlu0 %8281
    %v8283 = vlog2.pop %v8282
    %v8284 = vmul.f32 %v8283, 0.6931472
    %v8285 = vsub.f32 %v8277, %v8284
    %8286 = vst.msk [vmem:[#allocation11] sm:$0x3] %vm8273, %v8285
    // Predicated region
    $region42: #{tpu_custom_call.1} parent=1 // pred_check
      _
    $region43: #{tpu_custom_call.1} parent=1 // pred_check_branch
      %8288 = sbr.rel (0) target = $region45
    $region44: #{tpu_custom_call.1} parent=1 // pred_region
      %s8290 = ssub.s32 32, 32
      %8291 = vsyncadd [#allocation4], %s8290
      %s8293 = sshll.u32 [#allocation11], 4
      %s8294 = int_to_ptr.vmem [resolvable:$true] %s8293
      %8296 = dma.vmem_to_hbm [thread:$0]  %s8294, 32, %s5, [#allocation4]
    $region45: #{tpu_custom_call.1} parent=1 // pred_fallthru
      _
    // Predicated region
    $region46: #{tpu_custom_call.1} parent=1 // pred_check
      _
    $region47: #{tpu_custom_call.1} parent=1 // pred_check_branch
      %8298 = sbr.rel (0) target = $region49
    $region48: #{tpu_custom_call.1} parent=1 // pred_region
      %8299 = dma.done [#allocation4], 32
    $region49: #{tpu_custom_call.1} parent=1 // pred_fallthru
      _
    %8300 = vsyncpa [#allocation3], 1
    %8301 = vsyncpa [#allocation6], 1
    %8302 = vsyncpa [#allocation9], 1
    %8303 = vsyncpa [#allocation4], 1

</llo_original>
